<compile_context>
chip_gen: v5e
topology: v5e:2x2
jax: 0.10.0
libtpu: 0.0.40
codegen_flags: <defaults>
</compile_context>

<pallas_src>
import functools

import jax
import jax.numpy as jnp
import numpy as np
from jax.experimental import pallas as pl
from jax.experimental.pallas import tpu as pltpu

EPS = 1e-5                      # PyTorch BatchNorm2d default eps
LANE = 128                      # TPU lane width
VMEM_LIMIT = 48 * 1024 * 1024   # safe scoped-VMEM limit on v5e / v6e / v7x


# ----------------------------------------------------------------------------
# small helpers
# ----------------------------------------------------------------------------
def _round_up(x, m):
    return ((x + m - 1) // m) * m


def _pad_last(a, target):
    pad = target - a.shape[-1]
    if pad == 0:
        return a
    return jnp.pad(a, [(0, 0)] * (a.ndim - 1) + [(0, pad)])


def _largest_divisor(n, cap):
    cap = max(1, min(n, cap))
    for d in range(cap, 0, -1):
        if n % d == 0:
            return d
    return 1


# ----------------------------------------------------------------------------
# Pallas kernels
# ----------------------------------------------------------------------------
def _upconv_kernel(x_ref, w_ref, b_ref, o_ref, *, cdt):
    # x_ref: (TM, W1, Cd_p)   rows of the decoder feature map
    # w_ref: (1, 2, Cd_p, Cd_p)  weights for this kh (grid axis 1), [kw, ci, co]
    # b_ref: (1, Cd_p)
    # o_ref: (TM, 1, W1, 2, Cd_p)  -> [row, kh, j, kw, co]
    tm, w1, cdp = x_ref.shape
    x2d = x_ref[...].astype(cdt).reshape(tm * w1, cdp)
    b = b_ref[...]
    for kw in range(2):
        out = jnp.dot(x2d, w_ref[0, kw].astype(cdt),
                      preferred_element_type=jnp.float32) + b
        o_ref[:, 0, :, kw, :] = out.reshape(tm, w1, cdp).astype(o_ref.dtype)


def _conv3x3_stats_kernel(xa_ref, xb1_ref, xb2_ref, w_ref, b_ref,
                          y_ref, st_ref, win_ref, *, th, wd, cdt):
    # xa_ref : (1, TH, W+2, Cin_p)   main row block of the padded input
    # xb1/2  : (1, 1,  W+2, Cin_p)   the two halo rows below the block
    # w_ref  : (3, 3, Cin_p, Cout_p) HWIO weights
    # b_ref  : (1, Cout_p)
    # y_ref  : (1, TH, W, Cout_p)    conv + bias output (f32, pre-BN)
    # st_ref : (1, 1, 2, Cout_p)     per-tile [sum, sum of squares]
    # win_ref: (TH+2, W+2, Cin_p)    VMEM scratch window (compute dtype)
    cin = xa_ref.shape[-1]
    cout = w_ref.shape[-1]

    win_ref[0:th] = xa_ref[0].astype(win_ref.dtype)
    win_ref[th] = xb1_ref[0, 0].astype(win_ref.dtype)
    win_ref[th + 1] = xb2_ref[0, 0].astype(win_ref.dtype)

    acc = jnp.zeros((th * wd, cout), jnp.float32)
    for dy in range(3):
        for dx in range(3):
            xs = win_ref[dy:dy + th, dx:dx + wd, :].reshape(th * wd, cin)
            acc = acc + jnp.dot(xs, w_ref[dy, dx].astype(cdt),
                                preferred_element_type=jnp.float32)

    yb = acc + b_ref[...]                               # (TH*W, Cout_p) f32
    y_ref[0] = yb.reshape(th, wd, cout).astype(y_ref.dtype)
    st_ref[0, 0, 0:1, :] = jnp.sum(yb, axis=0, keepdims=True)
    st_ref[0, 0, 1:2, :] = jnp.sum(yb * yb, axis=0, keepdims=True)


def _bn_relu_kernel(y_ref, sc_ref, sh_ref, o_ref):
    # y_ref: (TR, W, C) f32, sc/sh: (1, C) -> out = max(y*scale + shift, 0)
    z = y_ref[...] * sc_ref[...] + sh_ref[...]
    o_ref[...] = jnp.maximum(z, 0.0).astype(o_ref.dtype)


# ----------------------------------------------------------------------------
# wrappers around pallas_call
# ----------------------------------------------------------------------------
def _upconv(x_rows, w_up, b_up, cdt):
    # x_rows: (M, W1, Cd_p),  w_up: (2, 2, Cd_p, Cd_p),  b_up: (1, Cd_p)
    M, W1, Cd_p = x_rows.shape
    tm = _largest_divisor(M, min(256, max(1, (2 << 20) // (W1 * Cd_p * 4))))
    grid = (M // tm, 2)

    flops = 8 * M * W1 * Cd_p * Cd_p
    bytes_acc = (x_rows.size + M * 4 * W1 * Cd_p + w_up.size + b_up.size) * 4

    out = pl.pallas_call(
        functools.partial(_upconv_kernel, cdt=cdt),
        out_shape=jax.ShapeDtypeStruct((M, 2, W1, 2, Cd_p), jnp.float32),
        grid=grid,
        in_specs=[
            pl.BlockSpec((tm, W1, Cd_p), lambda i, kh: (i, 0, 0)),
            pl.BlockSpec((1, 2, Cd_p, Cd_p), lambda i, kh: (kh, 0, 0, 0)),
            pl.BlockSpec((1, Cd_p), lambda i, kh: (0, 0)),
        ],
        out_specs=pl.BlockSpec((tm, 1, W1, 2, Cd_p),
                               lambda i, kh: (i, kh, 0, 0, 0)),
        compiler_params=pltpu.CompilerParams(
            dimension_semantics=("parallel", "parallel"),
            vmem_limit_bytes=VMEM_LIMIT),
        cost_estimate=pl.CostEstimate(flops=int(flops), transcendentals=0,
                                      bytes_accessed=int(bytes_acc)),
    )(x_rows, w_up, b_up)
    return out


def _conv_bn_relu(x, wp, bp, gamma, beta, cdt, out_dtype):
    # x: (N, H, W, Cin_p) NHWC, wp: (3,3,Cin_p,Cout_p), bp: (1,Cout_p)
    N, H, W, Cin_p = x.shape
    Cout_p = wp.shape[-1]
    xpad = jnp.pad(x, ((0, 0), (1, 1), (1, 1), (0, 0)))   # spatial SAME padding

    # ---- pass 1: conv + bias, tiled over (N, H-tiles); per-tile BN partials
    row_bytes = (W + 2) * Cin_p * 4
    th = _largest_divisor(H, min(32, max(1, (4 << 20) // row_bytes)))
    ht = H // th

    flops = 2 * N * H * W * 9 * Cin_p * Cout_p
    bytes_acc = (xpad.size + N * H * W * Cout_p + N * ht * 2 * Cout_p
                 + wp.size) * 4

    y, stats = pl.pallas_call(
        functools.partial(_conv3x3_stats_kernel, th=th, wd=W, cdt=cdt),
        out_shape=(jax.ShapeDtypeStruct((N, H, W, Cout_p), jnp.float32),
                   jax.ShapeDtypeStruct((N, ht, 2, Cout_p), jnp.float32)),
        grid=(N, ht),
        in_specs=[
            # main TH-row block of the padded input
            pl.BlockSpec((1, th, W + 2, Cin_p), lambda n, i: (n, i, 0, 0)),
            # two 1-row halo blocks of the SAME array (block size 1 => row idx)
            pl.BlockSpec((1, 1, W + 2, Cin_p),
                         lambda n, i: (n, (i + 1) * th, 0, 0)),
            pl.BlockSpec((1, 1, W + 2, Cin_p),
                         lambda n, i: (n, (i + 1) * th + 1, 0, 0)),
            pl.BlockSpec((3, 3, Cin_p, Cout_p), lambda n, i: (0, 0, 0, 0)),
            pl.BlockSpec((1, Cout_p), lambda n, i: (0, 0)),
        ],
        out_specs=(pl.BlockSpec((1, th, W, Cout_p), lambda n, i: (n, i, 0, 0)),
                   pl.BlockSpec((1, 1, 2, Cout_p), lambda n, i: (n, i, 0, 0))),
        scratch_shapes=[pltpu.VMEM((th + 2, W + 2, Cin_p), cdt)],
        compiler_params=pltpu.CompilerParams(
            dimension_semantics=("parallel", "parallel"),
            vmem_limit_bytes=VMEM_LIMIT),
        cost_estimate=pl.CostEstimate(flops=int(flops), transcendentals=0,
                                      bytes_accessed=int(bytes_acc)),
    )(xpad, xpad, xpad, wp, bp)

    # ---- tiny reduction (plain JAX) -> exact batch statistics (biased var)
    cnt = N * H * W
    tot = jnp.sum(stats, axis=(0, 1))                    # (2, Cout_p)
    mean = tot[0] / cnt
    var = jnp.maximum(tot[1] / cnt - mean * mean, 0.0)
    scale = gamma * jax.lax.rsqrt(var + EPS)             # (Cout_p,)
    shift = beta - mean * scale

    # ---- pass 2: y * scale + shift, ReLU  (tiled elementwise)
    y_rows = y.reshape(N * H, W, Cout_p)
    tr = _largest_divisor(N * H,
                          min(64, max(1, (2 << 20) // (W * Cout_p * 4))))
    out = pl.pallas_call(
        _bn_relu_kernel,
        out_shape=jax.ShapeDtypeStruct((N * H, W, Cout_p), out_dtype),
        grid=((N * H) // tr,),
        in_specs=[pl.BlockSpec((tr, W, Cout_p), lambda i: (i, 0, 0)),
                  pl.BlockSpec((1, Cout_p), lambda i: (0, 0)),
                  pl.BlockSpec((1, Cout_p), lambda i: (0, 0))],
        out_specs=pl.BlockSpec((tr, W, Cout_p), lambda i: (i, 0, 0)),
        compiler_params=pltpu.CompilerParams(
            dimension_semantics=("parallel",),
            vmem_limit_bytes=VMEM_LIMIT),
    )(y_rows, scale[None, :], shift[None, :])
    return out.reshape(N, H, W, Cout_p)


# ----------------------------------------------------------------------------
# full forward pass (NCHW public API, NHWC + lane-padded channels internally)
# ----------------------------------------------------------------------------
def up_forward(params, x1_nchw, x2_nchw, compute_dtype=jnp.float32):
    f32 = jnp.float32
    x1 = jnp.transpose(x1_nchw, (0, 2, 3, 1)).astype(f32)   # (N, H1, W1, Cd)
    x2 = jnp.transpose(x2_nchw, (0, 2, 3, 1)).astype(f32)   # (N, H2, W2, Ce)
    N, H1, W1, Cd = x1.shape
    _, H2, W2, Ce = x2.shape
    Cout = params["c1_w"].shape[0]

    Cd_p = _round_up(Cd, LANE)
    Ce_p = _round_up(Ce, LANE)
    Cout_p = _round_up(Cout, LANE)

    # --- ConvTranspose2d(Cd, Cd, k=2, s=2) ----------------------------------
    wt = params["up_w"]                                   # (Cd, Cd, 2, 2)
    w_up = jnp.zeros((2, 2, Cd_p, Cd_p), f32).at[:, :, :Cd, :Cd].set(
        jnp.transpose(wt, (2, 3, 0, 1)))                  # [kh, kw, ci, co]
    b_up = jnp.zeros((1, Cd_p), f32).at[0, :Cd].set(params["up_b"])

    x1_rows = _pad_last(x1, Cd_p).reshape(N * H1, W1, Cd_p)
    y_up = _upconv(x1_rows, w_up, b_up, compute_dtype)    # (N*H1, 2, W1, 2, C)
    y_up = y_up.reshape(N, 2 * H1, 2 * W1, Cd_p)          # free reshape

    # --- F.pad to encoder spatial size, concat on channels ------------------
    diffY = H2 - y_up.shape[1]
    diffX = W2 - y_up.shape[2]
    y_up = jnp.pad(y_up, ((0, 0),
                          (diffY // 2, diffY - diffY // 2),
                          (diffX // 2, diffX - diffX // 2),
                          (0, 0)))
    xcat = jnp.concatenate([_pad_last(x2, Ce_p), y_up], axis=-1)

    # --- DoubleConv weights, lane-padded -------------------------------------
    def dc_weight(w_t, cin_map, cin_p_tot):
        w_hwio = jnp.transpose(w_t, (2, 3, 1, 0))         # (3,3,Cin,Cout)
        wp = jnp.zeros((3, 3, cin_p_tot, Cout_p), f32)
        for lo, hi, dst in cin_map:
            wp = wp.at[:, :, dst:dst + (hi - lo), :Cout].set(
                w_hwio[:, :, lo:hi, :])
        return wp

    w1p = dc_weight(params["c1_w"], [(0, Ce, 0), (Ce, Ce + Cd, Ce_p)],
                    Ce_p + Cd_p)
    b1p = jnp.zeros((1, Cout_p), f32).at[0, :Cout].set(params["c1_b"])
    g1p = jnp.zeros((Cout_p,), f32).at[:Cout].set(params["bn1_g"])
    be1p = jnp.zeros((Cout_p,), f32).at[:Cout].set(params["bn1_b"])

    w2p = dc_weight(params["c2_w"], [(0, Cout, 0)], Cout_p)
    b2p = jnp.zeros((1, Cout_p), f32).at[0, :Cout].set(params["c2_b"])
    g2p = jnp.zeros((Cout_p,), f32).at[:Cout].set(params["bn2_g"])
    be2p = jnp.zeros((Cout_p,), f32).at[:Cout].set(params["bn2_b"])

    # --- (Conv3x3 + BN + ReLU) * 2 -------------------------------------------
    h = _conv_bn_relu(xcat.astype(compute_dtype), w1p, b1p, g1p, be1p,
                      compute_dtype, out_dtype=compute_dtype)
    h = _conv_bn_relu(h, w2p, b2p, g2p, be2p, compute_dtype, out_dtype=f32)

    out = h[..., :Cout]
    return jnp.transpose(out, (0, 3, 1, 2))               # back to NCHW


# ----------------------------------------------------------------------------
# Pure-JAX reference (correctness check)
# ----------------------------------------------------------------------------
def _conv3x3_ref(x_nhwc, w, b):
    out = jax.lax.conv_general_dilated(
        x_nhwc, jnp.transpose(w, (2, 3, 1, 0)), (1, 1), "SAME",
        dimension_numbers=("NHWC", "HWIO", "NHWC"))
    return out + b.reshape(1, 1, 1, -1)


def _bn_relu_ref(x_nhwc, g, b):
    mean = jnp.mean(x_nhwc, axis=(0, 1, 2), keepdims=True)
    var = jnp.mean((x_nhwc - mean) ** 2, axis=(0, 1, 2), keepdims=True)
    y = (x_nhwc - mean) * jax.lax.rsqrt(var + EPS)
    return jnp.maximum(y * g.reshape(1, 1, 1, -1) + b.reshape(1, 1, 1, -1), 0.0)


def up_forward_ref(params, x1_nchw, x2_nchw):
    x1 = jnp.transpose(x1_nchw, (0, 2, 3, 1)).astype(jnp.float32)
    x2 = jnp.transpose(x2_nchw, (0, 2, 3, 1)).astype(jnp.float32)
    N, H1, W1, Cd = x1.shape
    wt = params["up_w"]
    Co = wt.shape[1]
    y = jnp.einsum("nijc,cokl->nikjlo", x1, wt).reshape(N, 2 * H1, 2 * W1, Co)
    y = y + params["up_b"].reshape(1, 1, 1, -1)
    diffY = x2.shape[1] - y.shape[1]
    diffX = x2.shape[2] - y.shape[2]
    y = jnp.pad(y, ((0, 0),
                    (diffY // 2, diffY - diffY // 2),
                    (diffX // 2, diffX - diffX // 2), (0, 0)))
    x = jnp.concatenate([x2, y], axis=-1)
    h = _bn_relu_ref(_conv3x3_ref(x, params["c1_w"], params["c1_b"]),
                     params["bn1_g"], params["bn1_b"])
    h = _bn_relu_ref(_conv3x3_ref(h, params["c2_w"], params["c2_b"]),
                     params["bn2_g"], params["bn2_b"])
    return jnp.transpose(h, (0, 3, 1, 2))


# ----------------------------------------------------------------------------
if __name__ == "__main__":
    # Decoder feature x1 (N, Cd, 8, 8), encoder skip x2 (N, Ce, 16, 16)
    N, Cd, Ce, Cout = 2, 4, 4, 8
    H1 = W1 = 8

    key = jax.random.PRNGKey(0)
    ks = jax.random.split(key, 12)
    params = {
        "up_w": 0.2 * jax.random.normal(ks[0], (Cd, Cd, 2, 2), jnp.float32),
        "up_b": 0.1 * jax.random.normal(ks[1], (Cd,), jnp.float32),
        "c1_w": 0.2 * jax.random.normal(ks[2], (Cout, Cd + Ce, 3, 3), jnp.float32),
        "c1_b": 0.1 * jax.random.normal(ks[3], (Cout,), jnp.float32),
        "bn1_g": 1.0 + 0.1 * jax.random.normal(ks[4], (Cout,), jnp.float32),
        "bn1_b": 0.1 * jax.random.normal(ks[5], (Cout,), jnp.float32),
        "c2_w": 0.2 * jax.random.normal(ks[6], (Cout, Cout, 3, 3), jnp.float32),
        "c2_b": 0.1 * jax.random.normal(ks[7], (Cout,), jnp.float32),
        "bn2_g": 1.0 + 0.1 * jax.random.normal(ks[8], (Cout,), jnp.float32),
        "bn2_b": 0.1 * jax.random.normal(ks[9], (Cout,), jnp.float32),
    }

    x1 = jax.random.normal(ks[10], (N, Cd, H1, W1), jnp.float32)        # NCHW
    x2 = jax.random.normal(ks[11], (N, Ce, 2 * H1, 2 * W1), jnp.float32)

    fwd_f32 = jax.jit(functools.partial(up_forward, compute_dtype=jnp.float32))
    fwd_bf16 = jax.jit(functools.partial(up_forward, compute_dtype=jnp.bfloat16))

    out = jax.block_until_ready(fwd_f32(params, x1, x2))
    assert out.shape == (N, Cout, 2 * H1, 2 * W1)

    ref = jax.block_until_ready(up_forward_ref(params, x1, x2))
    np.testing.assert_allclose(np.asarray(out), np.asarray(ref),
                               rtol=1e-4, atol=1e-4)

    # bf16 MXU operands (v6e/v7x path): f32 accumulation + f32 BN statistics
    out_bf16 = jax.block_until_ready(fwd_bf16(params, x1, x2))
    np.testing.assert_allclose(np.asarray(out_bf16), np.asarray(ref),
                               rtol=1e-1, atol=1e-1)

    print("KERNEL_OK")
</pallas_src>

<mosaic_0001>
module attributes {stable_mosaic.version = 11 : i64} {
  func.func @_upconv_kernel(%arg0: i32, %arg1: i32, %arg2: memref<16x8x128xf32, #tpu.memory_space<vmem>>, %arg3: memref<1x2x128x128xf32, #tpu.memory_space<vmem>>, %arg4: memref<1x128xf32, #tpu.memory_space<vmem>>, %arg5: memref<16x1x8x2x128xf32, #tpu.memory_space<vmem>>) attributes {dimension_semantics = [#tpu.dimension_semantics<parallel>, #tpu.dimension_semantics<parallel>], iteration_bounds = array<i64: 1, 2>, scalar_prefetch = 0 : i64, scratch_operands = 0 : i64, tpu.core_type = #tpu.core_type<tc>, window_params = [{transform_indices = @transform_0, window_bounds = array<i64: 16, 8, 128>}, {transform_indices = @transform_1, window_bounds = array<i64: 1, 2, 128, 128>}, {pipeline_mode = #tpu.pipeline_mode<synchronous>, transform_indices = @transform_2, window_bounds = array<i64: 1, 128>}, {transform_indices = @transform_3, window_bounds = array<i64: 16, 1, 8, 2, 128>}]} {
    %c0 = arith.constant 0 : index
    %c0_0 = arith.constant 0 : index
    %c0_1 = arith.constant 0 : index
    %0 = vector.load %arg2[%c0, %c0_0, %c0_1] : memref<16x8x128xf32, #tpu.memory_space<vmem>>, vector<16x8x128xf32>
    %1 = vector.shape_cast %0 : vector<16x8x128xf32> to vector<128x128xf32>
    %c0_2 = arith.constant 0 : index
    %c0_3 = arith.constant 0 : index
    %2 = vector.load %arg4[%c0_2, %c0_3] : memref<1x128xf32, #tpu.memory_space<vmem>>, vector<1x128xf32>
    %c0_4 = arith.constant 0 : index
    %c0_5 = arith.constant 0 : index
    %c0_6 = arith.constant 0 : index
    %c0_7 = arith.constant 0 : index
    %3 = vector.load %arg3[%c0_4, %c0_5, %c0_6, %c0_7] : memref<1x2x128x128xf32, #tpu.memory_space<vmem>>, vector<1x1x128x128xf32>
    %4 = vector.shape_cast %3 : vector<1x1x128x128xf32> to vector<128x128xf32>
    %cst = arith.constant dense<0.000000e+00> : vector<128x128xf32>
    %5 = tpu.matmul %1, %4, %cst {dimension_numbers = #tpu.dot_dimension_numbers<[1], [0], [0], [1], [0, 0, 1, 1], [], []>} : vector<128x128xf32>, vector<128x128xf32>, vector<128x128xf32> -> vector<128x128xf32>
    %6 = vector.broadcast %2 : vector<1x128xf32> to vector<128x128xf32>
    %7 = arith.addf %5, %6 : vector<128x128xf32>
    %8 = vector.shape_cast %7 : vector<128x128xf32> to vector<16x8x128xf32>
    %c0_8 = arith.constant 0 : index
    %c0_9 = arith.constant 0 : index
    %c0_10 = arith.constant 0 : index
    %c0_11 = arith.constant 0 : index
    %c0_12 = arith.constant 0 : index
    %9 = vector.load %arg5[%c0_8, %c0_9, %c0_10, %c0_11, %c0_12] : memref<16x1x8x2x128xf32, #tpu.memory_space<vmem>>, vector<16x1x8x1x128xf32>
    %10 = vector.shape_cast %9 : vector<16x1x8x1x128xf32> to vector<16x8x128xf32>
    %11 = vector.shape_cast %8 : vector<16x8x128xf32> to vector<16x1x8x1x128xf32>
    tpu.vector_store %arg5[%c0_8, %c0_9, %c0_10, %c0_11, %c0_12], %11 {strides = array<i32>} : memref<16x1x8x2x128xf32, #tpu.memory_space<vmem>>, vector<16x1x8x1x128xf32>,
    %c0_13 = arith.constant 0 : index
    %c1 = arith.constant 1 : index
    %c0_14 = arith.constant 0 : index
    %c0_15 = arith.constant 0 : index
    %12 = vector.load %arg3[%c0_13, %c1, %c0_14, %c0_15] : memref<1x2x128x128xf32, #tpu.memory_space<vmem>>, vector<1x1x128x128xf32>
    %13 = vector.shape_cast %12 : vector<1x1x128x128xf32> to vector<128x128xf32>
    %cst_16 = arith.constant dense<0.000000e+00> : vector<128x128xf32>
    %14 = tpu.matmul %1, %13, %cst_16 {dimension_numbers = #tpu.dot_dimension_numbers<[1], [0], [0], [1], [0, 0, 1, 1], [], []>} : vector<128x128xf32>, vector<128x128xf32>, vector<128x128xf32> -> vector<128x128xf32>
    %15 = vector.broadcast %2 : vector<1x128xf32> to vector<128x128xf32>
    %16 = arith.addf %14, %15 : vector<128x128xf32>
    %17 = vector.shape_cast %16 : vector<128x128xf32> to vector<16x8x128xf32>
    %c0_17 = arith.constant 0 : index
    %c0_18 = arith.constant 0 : index
    %c0_19 = arith.constant 0 : index
    %c1_20 = arith.constant 1 : index
    %c0_21 = arith.constant 0 : index
    %18 = vector.load %arg5[%c0_17, %c0_18, %c0_19, %c1_20, %c0_21] : memref<16x1x8x2x128xf32, #tpu.memory_space<vmem>>, vector<16x1x8x1x128xf32>
    %19 = vector.shape_cast %18 : vector<16x1x8x1x128xf32> to vector<16x8x128xf32>
    %20 = vector.shape_cast %17 : vector<16x8x128xf32> to vector<16x1x8x1x128xf32>
    tpu.vector_store %arg5[%c0_17, %c0_18, %c0_19, %c1_20, %c0_21], %20 {strides = array<i32>} : memref<16x1x8x2x128xf32, #tpu.memory_space<vmem>>, vector<16x1x8x1x128xf32>,
    return
  }
  func.func @transform_0(%arg0: i32, %arg1: i32) -> (i32, i32, i32) {
    %c0_i32 = arith.constant 0 : i32
    %c0_i32_0 = arith.constant 0 : i32
    %c0_i32_1 = arith.constant 0 : i32
    return %arg0, %c0_i32, %c0_i32_0 : i32, i32, i32
  }
  func.func @transform_1(%arg0: i32, %arg1: i32) -> (i32, i32, i32, i32) {
    %c0_i32 = arith.constant 0 : i32
    %c0_i32_0 = arith.constant 0 : i32
    %c0_i32_1 = arith.constant 0 : i32
    %c0_i32_2 = arith.constant 0 : i32
    return %arg1, %c0_i32, %c0_i32_0, %c0_i32_1 : i32, i32, i32, i32
  }
  func.func @transform_2(%arg0: i32, %arg1: i32) -> (i32, i32) {
    %c0_i32 = arith.constant 0 : i32
    %c0_i32_0 = arith.constant 0 : i32
    %c0_i32_1 = arith.constant 0 : i32
    return %c0_i32, %c0_i32_0 : i32, i32
  }
  func.func @transform_3(%arg0: i32, %arg1: i32) -> (i32, i32, i32, i32, i32) {
    %c0_i32 = arith.constant 0 : i32
    %c0_i32_0 = arith.constant 0 : i32
    %c0_i32_1 = arith.constant 0 : i32
    %c0_i32_2 = arith.constant 0 : i32
    return %arg0, %arg1, %c0_i32, %c0_i32_0, %c0_i32_1 : i32, i32, i32, i32, i32
  }
}

module attributes {stable_mosaic.version = 11 : i64} {
  func.func @_conv3x3_stats_kernel(%arg0: i32, %arg1: i32, %arg2: memref<1x16x18x256xf32, #tpu.memory_space<vmem>>, %arg3: memref<1x1x18x256xf32, #tpu.memory_space<vmem>>, %arg4: memref<1x1x18x256xf32, #tpu.memory_space<vmem>>, %arg5: memref<3x3x256x128xf32, #tpu.memory_space<vmem>>, %arg6: memref<1x128xf32, #tpu.memory_space<vmem>>, %arg7: memref<1x16x16x128xf32, #tpu.memory_space<vmem>>, %arg8: memref<1x1x2x128xf32, #tpu.memory_space<vmem>>, %arg9: memref<18x18x256xf32, #tpu.memory_space<vmem>>) attributes {dimension_semantics = [#tpu.dimension_semantics<parallel>, #tpu.dimension_semantics<parallel>], iteration_bounds = array<i64: 2, 1>, scalar_prefetch = 0 : i64, scratch_operands = 1 : i64, tpu.core_type = #tpu.core_type<tc>, window_params = [{transform_indices = @transform_0, window_bounds = array<i64: 1, 16, 18, 256>}, {transform_indices = @transform_1, window_bounds = array<i64: 1, 1, 18, 256>}, {transform_indices = @transform_2, window_bounds = array<i64: 1, 1, 18, 256>}, {pipeline_mode = #tpu.pipeline_mode<synchronous>, transform_indices = @transform_3, window_bounds = array<i64: 3, 3, 256, 128>}, {pipeline_mode = #tpu.pipeline_mode<synchronous>, transform_indices = @transform_4, window_bounds = array<i64: 1, 128>}, {transform_indices = @transform_5, window_bounds = array<i64: 1, 16, 16, 128>}, {transform_indices = @transform_6, window_bounds = array<i64: 1, 1, 2, 128>}]} {
    %c0 = arith.constant 0 : index
    %c0_0 = arith.constant 0 : index
    %c0_1 = arith.constant 0 : index
    %c0_2 = arith.constant 0 : index
    %0 = vector.load %arg2[%c0, %c0_0, %c0_1, %c0_2] : memref<1x16x18x256xf32, #tpu.memory_space<vmem>>, vector<1x16x18x256xf32>
    %1 = vector.shape_cast %0 : vector<1x16x18x256xf32> to vector<16x18x256xf32>
    %c0_3 = arith.constant 0 : index
    %c0_4 = arith.constant 0 : index
    %c0_5 = arith.constant 0 : index
    %2 = vector.load %arg9[%c0_3, %c0_4, %c0_5] : memref<18x18x256xf32, #tpu.memory_space<vmem>>, vector<16x18x256xf32>
    tpu.vector_store %arg9[%c0_3, %c0_4, %c0_5], %1 {strides = array<i32>} : memref<18x18x256xf32, #tpu.memory_space<vmem>>, vector<16x18x256xf32>,
    %c0_6 = arith.constant 0 : index
    %c0_7 = arith.constant 0 : index
    %c0_8 = arith.constant 0 : index
    %c0_9 = arith.constant 0 : index
    %3 = vector.load %arg3[%c0_6, %c0_7, %c0_8, %c0_9] : memref<1x1x18x256xf32, #tpu.memory_space<vmem>>, vector<1x1x18x256xf32>
    %4 = vector.shape_cast %3 : vector<1x1x18x256xf32> to vector<18x256xf32>
    %c16 = arith.constant 16 : index
    %c0_10 = arith.constant 0 : index
    %c0_11 = arith.constant 0 : index
    %5 = vector.load %arg9[%c16, %c0_10, %c0_11] : memref<18x18x256xf32, #tpu.memory_space<vmem>>, vector<1x18x256xf32>
    %6 = vector.shape_cast %5 : vector<1x18x256xf32> to vector<18x256xf32>
    %7 = vector.shape_cast %4 : vector<18x256xf32> to vector<1x18x256xf32>
    tpu.vector_store %arg9[%c16, %c0_10, %c0_11], %7 {strides = array<i32>} : memref<18x18x256xf32, #tpu.memory_space<vmem>>, vector<1x18x256xf32>,
    %c0_12 = arith.constant 0 : index
    %c0_13 = arith.constant 0 : index
    %c0_14 = arith.constant 0 : index
    %c0_15 = arith.constant 0 : index
    %8 = vector.load %arg4[%c0_12, %c0_13, %c0_14, %c0_15] : memref<1x1x18x256xf32, #tpu.memory_space<vmem>>, vector<1x1x18x256xf32>
    %9 = vector.shape_cast %8 : vector<1x1x18x256xf32> to vector<18x256xf32>
    %c17 = arith.constant 17 : index
    %c0_16 = arith.constant 0 : index
    %c0_17 = arith.constant 0 : index
    %10 = vector.load %arg9[%c17, %c0_16, %c0_17] : memref<18x18x256xf32, #tpu.memory_space<vmem>>, vector<1x18x256xf32>
    %11 = vector.shape_cast %10 : vector<1x18x256xf32> to vector<18x256xf32>
    %12 = vector.shape_cast %9 : vector<18x256xf32> to vector<1x18x256xf32>
    tpu.vector_store %arg9[%c17, %c0_16, %c0_17], %12 {strides = array<i32>} : memref<18x18x256xf32, #tpu.memory_space<vmem>>, vector<1x18x256xf32>,
    %cst = arith.constant 0.000000e+00 : f32
    %13 = vector.broadcast %cst : f32 to vector<256x128xf32>
    %c0_18 = arith.constant 0 : index
    %c0_19 = arith.constant 0 : index
    %c0_20 = arith.constant 0 : index
    %14 = vector.load %arg9[%c0_18, %c0_19, %c0_20] : memref<18x18x256xf32, #tpu.memory_space<vmem>>, vector<16x16x256xf32>
    %15 = vector.shape_cast %14 : vector<16x16x256xf32> to vector<256x256xf32>
    %c0_21 = arith.constant 0 : index
    %c0_22 = arith.constant 0 : index
    %c0_23 = arith.constant 0 : index
    %c0_24 = arith.constant 0 : index
    %16 = vector.load %arg5[%c0_21, %c0_22, %c0_23, %c0_24] : memref<3x3x256x128xf32, #tpu.memory_space<vmem>>, vector<1x1x256x128xf32>
    %17 = vector.shape_cast %16 : vector<1x1x256x128xf32> to vector<256x128xf32>
    %cst_25 = arith.constant dense<0.000000e+00> : vector<256x128xf32>
    %18 = tpu.matmul %15, %17, %cst_25 {dimension_numbers = #tpu.dot_dimension_numbers<[1], [0], [0], [1], [0, 0, 1, 1], [], []>} : vector<256x256xf32>, vector<256x128xf32>, vector<256x128xf32> -> vector<256x128xf32>
    %19 = arith.addf %13, %18 : vector<256x128xf32>
    %c0_26 = arith.constant 0 : index
    %c1 = arith.constant 1 : index
    %c0_27 = arith.constant 0 : index
    %20 = vector.load %arg9[%c0_26, %c1, %c0_27] : memref<18x18x256xf32, #tpu.memory_space<vmem>>, vector<16x16x256xf32>
    %21 = vector.shape_cast %20 : vector<16x16x256xf32> to vector<256x256xf32>
    %c0_28 = arith.constant 0 : index
    %c1_29 = arith.constant 1 : index
    %c0_30 = arith.constant 0 : index
    %c0_31 = arith.constant 0 : index
    %22 = vector.load %arg5[%c0_28, %c1_29, %c0_30, %c0_31] : memref<3x3x256x128xf32, #tpu.memory_space<vmem>>, vector<1x1x256x128xf32>
    %23 = vector.shape_cast %22 : vector<1x1x256x128xf32> to vector<256x128xf32>
    %cst_32 = arith.constant dense<0.000000e+00> : vector<256x128xf32>
    %24 = tpu.matmul %21, %23, %cst_32 {dimension_numbers = #tpu.dot_dimension_numbers<[1], [0], [0], [1], [0, 0, 1, 1], [], []>} : vector<256x256xf32>, vector<256x128xf32>, vector<256x128xf32> -> vector<256x128xf32>
    %25 = arith.addf %19, %24 : vector<256x128xf32>
    %c0_33 = arith.constant 0 : index
    %c2 = arith.constant 2 : index
    %c0_34 = arith.constant 0 : index
    %26 = vector.load %arg9[%c0_33, %c2, %c0_34] : memref<18x18x256xf32, #tpu.memory_space<vmem>>, vector<16x16x256xf32>
    %27 = vector.shape_cast %26 : vector<16x16x256xf32> to vector<256x256xf32>
    %c0_35 = arith.constant 0 : index
    %c2_36 = arith.constant 2 : index
    %c0_37 = arith.constant 0 : index
    %c0_38 = arith.constant 0 : index
    %28 = vector.load %arg5[%c0_35, %c2_36, %c0_37, %c0_38] : memref<3x3x256x128xf32, #tpu.memory_space<vmem>>, vector<1x1x256x128xf32>
    %29 = vector.shape_cast %28 : vector<1x1x256x128xf32> to vector<256x128xf32>
    %cst_39 = arith.constant dense<0.000000e+00> : vector<256x128xf32>
    %30 = tpu.matmul %27, %29, %cst_39 {dimension_numbers = #tpu.dot_dimension_numbers<[1], [0], [0], [1], [0, 0, 1, 1], [], []>} : vector<256x256xf32>, vector<256x128xf32>, vector<256x128xf32> -> vector<256x128xf32>
    %31 = arith.addf %25, %30 : vector<256x128xf32>
    %c1_40 = arith.constant 1 : index
    %c0_41 = arith.constant 0 : index
    %c0_42 = arith.constant 0 : index
    %32 = vector.load %arg9[%c1_40, %c0_41, %c0_42] : memref<18x18x256xf32, #tpu.memory_space<vmem>>, vector<16x16x256xf32>
    %33 = vector.shape_cast %32 : vector<16x16x256xf32> to vector<256x256xf32>
    %c1_43 = arith.constant 1 : index
    %c0_44 = arith.constant 0 : index
    %c0_45 = arith.constant 0 : index
    %c0_46 = arith.constant 0 : index
    %34 = vector.load %arg5[%c1_43, %c0_44, %c0_45, %c0_46] : memref<3x3x256x128xf32, #tpu.memory_space<vmem>>, vector<1x1x256x128xf32>
    %35 = vector.shape_cast %34 : vector<1x1x256x128xf32> to vector<256x128xf32>
    %cst_47 = arith.constant dense<0.000000e+00> : vector<256x128xf32>
    %36 = tpu.matmul %33, %35, %cst_47 {dimension_numbers = #tpu.dot_dimension_numbers<[1], [0], [0], [1], [0, 0, 1, 1], [], []>} : vector<256x256xf32>, vector<256x128xf32>, vector<256x128xf32> -> vector<256x128xf32>
    %37 = arith.addf %31, %36 : vector<256x128xf32>
    %c1_48 = arith.constant 1 : index
    %c1_49 = arith.constant 1 : index
    %c0_50 = arith.constant 0 : index
    %38 = vector.load %arg9[%c1_48, %c1_49, %c0_50] : memref<18x18x256xf32, #tpu.memory_space<vmem>>, vector<16x16x256xf32>
    %39 = vector.shape_cast %38 : vector<16x16x256xf32> to vector<256x256xf32>
    %c1_51 = arith.constant 1 : index
    %c1_52 = arith.constant 1 : index
    %c0_53 = arith.constant 0 : index
    %c0_54 = arith.constant 0 : index
    %40 = vector.load %arg5[%c1_51, %c1_52, %c0_53, %c0_54] : memref<3x3x256x128xf32, #tpu.memory_space<vmem>>, vector<1x1x256x128xf32>
    %41 = vector.shape_cast %40 : vector<1x1x256x128xf32> to vector<256x128xf32>
    %cst_55 = arith.constant dense<0.000000e+00> : vector<256x128xf32>
    %42 = tpu.matmul %39, %41, %cst_55 {dimension_numbers = #tpu.dot_dimension_numbers<[1], [0], [0], [1], [0, 0, 1, 1], [], []>} : vector<256x256xf32>, vector<256x128xf32>, vector<256x128xf32> -> vector<256x128xf32>
    %43 = arith.addf %37, %42 : vector<256x128xf32>
    %c1_56 = arith.constant 1 : index
    %c2_57 = arith.constant 2 : index
    %c0_58 = arith.constant 0 : index
    %44 = vector.load %arg9[%c1_56, %c2_57, %c0_58] : memref<18x18x256xf32, #tpu.memory_space<vmem>>, vector<16x16x256xf32>
    %45 = vector.shape_cast %44 : vector<16x16x256xf32> to vector<256x256xf32>
    %c1_59 = arith.constant 1 : index
    %c2_60 = arith.constant 2 : index
    %c0_61 = arith.constant 0 : index
    %c0_62 = arith.constant 0 : index
    %46 = vector.load %arg5[%c1_59, %c2_60, %c0_61, %c0_62] : memref<3x3x256x128xf32, #tpu.memory_space<vmem>>, vector<1x1x256x128xf32>
    %47 = vector.shape_cast %46 : vector<1x1x256x128xf32> to vector<256x128xf32>
    %cst_63 = arith.constant dense<0.000000e+00> : vector<256x128xf32>
    %48 = tpu.matmul %45, %47, %cst_63 {dimension_numbers = #tpu.dot_dimension_numbers<[1], [0], [0], [1], [0, 0, 1, 1], [], []>} : vector<256x256xf32>, vector<256x128xf32>, vector<256x128xf32> -> vector<256x128xf32>
    %49 = arith.addf %43, %48 : vector<256x128xf32>
    %c2_64 = arith.constant 2 : index
    %c0_65 = arith.constant 0 : index
    %c0_66 = arith.constant 0 : index
    %50 = vector.load %arg9[%c2_64, %c0_65, %c0_66] : memref<18x18x256xf32, #tpu.memory_space<vmem>>, vector<16x16x256xf32>
    %51 = vector.shape_cast %50 : vector<16x16x256xf32> to vector<256x256xf32>
    %c2_67 = arith.constant 2 : index
    %c0_68 = arith.constant 0 : index
    %c0_69 = arith.constant 0 : index
    %c0_70 = arith.constant 0 : index
    %52 = vector.load %arg5[%c2_67, %c0_68, %c0_69, %c0_70] : memref<3x3x256x128xf32, #tpu.memory_space<vmem>>, vector<1x1x256x128xf32>
    %53 = vector.shape_cast %52 : vector<1x1x256x128xf32> to vector<256x128xf32>
    %cst_71 = arith.constant dense<0.000000e+00> : vector<256x128xf32>
    %54 = tpu.matmul %51, %53, %cst_71 {dimension_numbers = #tpu.dot_dimension_numbers<[1], [0], [0], [1], [0, 0, 1, 1], [], []>} : vector<256x256xf32>, vector<256x128xf32>, vector<256x128xf32> -> vector<256x128xf32>
    %55 = arith.addf %49, %54 : vector<256x128xf32>
    %c2_72 = arith.constant 2 : index
    %c1_73 = arith.constant 1 : index
    %c0_74 = arith.constant 0 : index
    %56 = vector.load %arg9[%c2_72, %c1_73, %c0_74] : memref<18x18x256xf32, #tpu.memory_space<vmem>>, vector<16x16x256xf32>
    %57 = vector.shape_cast %56 : vector<16x16x256xf32> to vector<256x256xf32>
    %c2_75 = arith.constant 2 : index
    %c1_76 = arith.constant 1 : index
    %c0_77 = arith.constant 0 : index
    %c0_78 = arith.constant 0 : index
    %58 = vector.load %arg5[%c2_75, %c1_76, %c0_77, %c0_78] : memref<3x3x256x128xf32, #tpu.memory_space<vmem>>, vector<1x1x256x128xf32>
    %59 = vector.shape_cast %58 : vector<1x1x256x128xf32> to vector<256x128xf32>
    %cst_79 = arith.constant dense<0.000000e+00> : vector<256x128xf32>
    %60 = tpu.matmul %57, %59, %cst_79 {dimension_numbers = #tpu.dot_dimension_numbers<[1], [0], [0], [1], [0, 0, 1, 1], [], []>} : vector<256x256xf32>, vector<256x128xf32>, vector<256x128xf32> -> vector<256x128xf32>
    %61 = arith.addf %55, %60 : vector<256x128xf32>
    %c2_80 = arith.constant 2 : index
    %c2_81 = arith.constant 2 : index
    %c0_82 = arith.constant 0 : index
    %62 = vector.load %arg9[%c2_80, %c2_81, %c0_82] : memref<18x18x256xf32, #tpu.memory_space<vmem>>, vector<16x16x256xf32>
    %63 = vector.shape_cast %62 : vector<16x16x256xf32> to vector<256x256xf32>
    %c2_83 = arith.constant 2 : index
    %c2_84 = arith.constant 2 : index
    %c0_85 = arith.constant 0 : index
    %c0_86 = arith.constant 0 : index
    %64 = vector.load %arg5[%c2_83, %c2_84, %c0_85, %c0_86] : memref<3x3x256x128xf32, #tpu.memory_space<vmem>>, vector<1x1x256x128xf32>
    %65 = vector.shape_cast %64 : vector<1x1x256x128xf32> to vector<256x128xf32>
    %cst_87 = arith.constant dense<0.000000e+00> : vector<256x128xf32>
    %66 = tpu.matmul %63, %65, %cst_87 {dimension_numbers = #tpu.dot_dimension_numbers<[1], [0], [0], [1], [0, 0, 1, 1], [], []>} : vector<256x256xf32>, vector<256x128xf32>, vector<256x128xf32> -> vector<256x128xf32>
    %67 = arith.addf %61, %66 : vector<256x128xf32>
    %c0_88 = arith.constant 0 : index
    %c0_89 = arith.constant 0 : index
    %68 = vector.load %arg6[%c0_88, %c0_89] : memref<1x128xf32, #tpu.memory_space<vmem>>, vector<1x128xf32>
    %69 = vector.broadcast %68 : vector<1x128xf32> to vector<256x128xf32>
    %70 = arith.addf %67, %69 : vector<256x128xf32>
    %71 = vector.shape_cast %70 : vector<256x128xf32> to vector<16x16x128xf32>
    %c0_90 = arith.constant 0 : index
    %c0_91 = arith.constant 0 : index
    %c0_92 = arith.constant 0 : index
    %c0_93 = arith.constant 0 : index
    %72 = vector.load %arg7[%c0_90, %c0_91, %c0_92, %c0_93] : memref<1x16x16x128xf32, #tpu.memory_space<vmem>>, vector<1x16x16x128xf32>
    %73 = vector.shape_cast %72 : vector<1x16x16x128xf32> to vector<16x16x128xf32>
    %74 = vector.shape_cast %71 : vector<16x16x128xf32> to vector<1x16x16x128xf32>
    tpu.vector_store %arg7[%c0_90, %c0_91, %c0_92, %c0_93], %74 {strides = array<i32>} : memref<1x16x16x128xf32, #tpu.memory_space<vmem>>, vector<1x16x16x128xf32>,
    %cst_94 = arith.constant dense<0.000000e+00> : vector<128xf32>
    %75 = vector.multi_reduction <add>, %70, %cst_94 [0] : vector<256x128xf32> to vector<128xf32>
    %76 = vector.shape_cast %75 : vector<128xf32> to vector<1x128xf32>
    %c0_95 = arith.constant 0 : index
    %c0_96 = arith.constant 0 : index
    %c0_97 = arith.constant 0 : index
    %c0_98 = arith.constant 0 : index
    %77 = vector.load %arg8[%c0_95, %c0_96, %c0_97, %c0_98] : memref<1x1x2x128xf32, #tpu.memory_space<vmem>>, vector<1x1x1x128xf32>
    %78 = vector.shape_cast %77 : vector<1x1x1x128xf32> to vector<1x128xf32>
    %79 = vector.shape_cast %76 : vector<1x128xf32> to vector<1x1x1x128xf32>
    tpu.vector_store %arg8[%c0_95, %c0_96, %c0_97, %c0_98], %79 {strides = array<i32>} : memref<1x1x2x128xf32, #tpu.memory_space<vmem>>, vector<1x1x1x128xf32>,
    %80 = arith.mulf %70, %70 : vector<256x128xf32>
    %cst_99 = arith.constant dense<0.000000e+00> : vector<128xf32>
    %81 = vector.multi_reduction <add>, %80, %cst_99 [0] : vector<256x128xf32> to vector<128xf32>
    %82 = vector.shape_cast %81 : vector<128xf32> to vector<1x128xf32>
    %c0_100 = arith.constant 0 : index
    %c0_101 = arith.constant 0 : index
    %c1_102 = arith.constant 1 : index
    %c0_103 = arith.constant 0 : index
    %83 = vector.load %arg8[%c0_100, %c0_101, %c1_102, %c0_103] : memref<1x1x2x128xf32, #tpu.memory_space<vmem>>, vector<1x1x1x128xf32>
    %84 = vector.shape_cast %83 : vector<1x1x1x128xf32> to vector<1x128xf32>
    %85 = vector.shape_cast %82 : vector<1x128xf32> to vector<1x1x1x128xf32>
    tpu.vector_store %arg8[%c0_100, %c0_101, %c1_102, %c0_103], %85 {strides = array<i32>} : memref<1x1x2x128xf32, #tpu.memory_space<vmem>>, vector<1x1x1x128xf32>,
    return
  }
  func.func @transform_0(%arg0: i32, %arg1: i32) -> (i32, i32, i32, i32) {
    %c0_i32 = arith.constant 0 : i32
    %c0_i32_0 = arith.constant 0 : i32
    %c0_i32_1 = arith.constant 0 : i32
    return %arg0, %arg1, %c0_i32, %c0_i32_0 : i32, i32, i32, i32
  }
  func.func @transform_1(%arg0: i32, %arg1: i32) -> (i32, i32, i32, i32) {
    %c1_i32 = arith.constant 1 : i32
    %0 = arith.addi %arg1, %c1_i32 : i32
    %c16_i32 = arith.constant 16 : i32
    %1 = arith.muli %0, %c16_i32 : i32
    %c0_i32 = arith.constant 0 : i32
    %c0_i32_0 = arith.constant 0 : i32
    %c0_i32_1 = arith.constant 0 : i32
    return %arg0, %1, %c0_i32, %c0_i32_0 : i32, i32, i32, i32
  }
  func.func @transform_2(%arg0: i32, %arg1: i32) -> (i32, i32, i32, i32) {
    %c1_i32 = arith.constant 1 : i32
    %0 = arith.addi %arg1, %c1_i32 : i32
    %c16_i32 = arith.constant 16 : i32
    %1 = arith.muli %0, %c16_i32 : i32
    %c1_i32_0 = arith.constant 1 : i32
    %2 = arith.addi %1, %c1_i32_0 : i32
    %c0_i32 = arith.constant 0 : i32
    %c0_i32_1 = arith.constant 0 : i32
    %c0_i32_2 = arith.constant 0 : i32
    return %arg0, %2, %c0_i32, %c0_i32_1 : i32, i32, i32, i32
  }
  func.func @transform_3(%arg0: i32, %arg1: i32) -> (i32, i32, i32, i32) {
    %c0_i32 = arith.constant 0 : i32
    %c0_i32_0 = arith.constant 0 : i32
    %c0_i32_1 = arith.constant 0 : i32
    %c0_i32_2 = arith.constant 0 : i32
    %c0_i32_3 = arith.constant 0 : i32
    return %c0_i32, %c0_i32_0, %c0_i32_1, %c0_i32_2 : i32, i32, i32, i32
  }
  func.func @transform_4(%arg0: i32, %arg1: i32) -> (i32, i32) {
    %c0_i32 = arith.constant 0 : i32
    %c0_i32_0 = arith.constant 0 : i32
    %c0_i32_1 = arith.constant 0 : i32
    return %c0_i32, %c0_i32_0 : i32, i32
  }
  func.func @transform_5(%arg0: i32, %arg1: i32) -> (i32, i32, i32, i32) {
    %c0_i32 = arith.constant 0 : i32
    %c0_i32_0 = arith.constant 0 : i32
    %c0_i32_1 = arith.constant 0 : i32
    return %arg0, %arg1, %c0_i32, %c0_i32_0 : i32, i32, i32, i32
  }
  func.func @transform_6(%arg0: i32, %arg1: i32) -> (i32, i32, i32, i32) {
    %c0_i32 = arith.constant 0 : i32
    %c0_i32_0 = arith.constant 0 : i32
    %c0_i32_1 = arith.constant 0 : i32
    return %arg0, %arg1, %c0_i32, %c0_i32_0 : i32, i32, i32, i32
  }
}

module attributes {stable_mosaic.version = 11 : i64} {
  func.func @_bn_relu_kernel(%arg0: i32, %arg1: memref<32x16x128xf32, #tpu.memory_space<vmem>>, %arg2: memref<1x128xf32, #tpu.memory_space<vmem>>, %arg3: memref<1x128xf32, #tpu.memory_space<vmem>>, %arg4: memref<32x16x128xf32, #tpu.memory_space<vmem>>) attributes {dimension_semantics = [#tpu.dimension_semantics<parallel>], iteration_bounds = array<i64: 1>, scalar_prefetch = 0 : i64, scratch_operands = 0 : i64, tpu.core_type = #tpu.core_type<tc>, window_params = [{transform_indices = @transform_0, window_bounds = array<i64: 32, 16, 128>}, {pipeline_mode = #tpu.pipeline_mode<synchronous>, transform_indices = @transform_1, window_bounds = array<i64: 1, 128>}, {pipeline_mode = #tpu.pipeline_mode<synchronous>, transform_indices = @transform_2, window_bounds = array<i64: 1, 128>}, {transform_indices = @transform_3, window_bounds = array<i64: 32, 16, 128>}]} {
    %c0 = arith.constant 0 : index
    %c0_0 = arith.constant 0 : index
    %c0_1 = arith.constant 0 : index
    %0 = vector.load %arg1[%c0, %c0_0, %c0_1] : memref<32x16x128xf32, #tpu.memory_space<vmem>>, vector<32x16x128xf32>
    %c0_2 = arith.constant 0 : index
    %c0_3 = arith.constant 0 : index
    %1 = vector.load %arg2[%c0_2, %c0_3] : memref<1x128xf32, #tpu.memory_space<vmem>>, vector<1x128xf32>
    %2 = vector.shape_cast %1 : vector<1x128xf32> to vector<1x1x128xf32>
    %3 = vector.broadcast %2 : vector<1x1x128xf32> to vector<32x16x128xf32>
    %4 = arith.mulf %0, %3 : vector<32x16x128xf32>
    %c0_4 = arith.constant 0 : index
    %c0_5 = arith.constant 0 : index
    %5 = vector.load %arg3[%c0_4, %c0_5] : memref<1x128xf32, #tpu.memory_space<vmem>>, vector<1x128xf32>
    %6 = vector.shape_cast %5 : vector<1x128xf32> to vector<1x1x128xf32>
    %7 = vector.broadcast %6 : vector<1x1x128xf32> to vector<32x16x128xf32>
    %8 = arith.addf %4, %7 : vector<32x16x128xf32>
    %cst = arith.constant 0.000000e+00 : f32
    %9 = vector.broadcast %cst : f32 to vector<32x16x128xf32>
    %10 = arith.maximumf %8, %9 : vector<32x16x128xf32>
    %c0_6 = arith.constant 0 : index
    %c0_7 = arith.constant 0 : index
    %c0_8 = arith.constant 0 : index
    %11 = vector.load %arg4[%c0_6, %c0_7, %c0_8] : memref<32x16x128xf32, #tpu.memory_space<vmem>>, vector<32x16x128xf32>
    tpu.vector_store %arg4[%c0_6, %c0_7, %c0_8], %10 {strides = array<i32>} : memref<32x16x128xf32, #tpu.memory_space<vmem>>, vector<32x16x128xf32>,
    return
  }
  func.func @transform_0(%arg0: i32) -> (i32, i32, i32) {
    %c0_i32 = arith.constant 0 : i32
    %c0_i32_0 = arith.constant 0 : i32
    %c0_i32_1 = arith.constant 0 : i32
    return %arg0, %c0_i32, %c0_i32_0 : i32, i32, i32
  }
  func.func @transform_1(%arg0: i32) -> (i32, i32) {
    %c0_i32 = arith.constant 0 : i32
    %c0_i32_0 = arith.constant 0 : i32
    %c0_i32_1 = arith.constant 0 : i32
    return %c0_i32, %c0_i32_0 : i32, i32
  }
  func.func @transform_2(%arg0: i32) -> (i32, i32) {
    %c0_i32 = arith.constant 0 : i32
    %c0_i32_0 = arith.constant 0 : i32
    %c0_i32_1 = arith.constant 0 : i32
    return %c0_i32, %c0_i32_0 : i32, i32
  }
  func.func @transform_3(%arg0: i32) -> (i32, i32, i32) {
    %c0_i32 = arith.constant 0 : i32
    %c0_i32_0 = arith.constant 0 : i32
    %c0_i32_1 = arith.constant 0 : i32
    return %arg0, %c0_i32, %c0_i32_0 : i32, i32, i32
  }
}

module attributes {stable_mosaic.version = 11 : i64} {
  func.func @_conv3x3_stats_kernel(%arg0: i32, %arg1: i32, %arg2: memref<1x16x18x128xf32, #tpu.memory_space<vmem>>, %arg3: memref<1x1x18x128xf32, #tpu.memory_space<vmem>>, %arg4: memref<1x1x18x128xf32, #tpu.memory_space<vmem>>, %arg5: memref<3x3x128x128xf32, #tpu.memory_space<vmem>>, %arg6: memref<1x128xf32, #tpu.memory_space<vmem>>, %arg7: memref<1x16x16x128xf32, #tpu.memory_space<vmem>>, %arg8: memref<1x1x2x128xf32, #tpu.memory_space<vmem>>, %arg9: memref<18x18x128xf32, #tpu.memory_space<vmem>>) attributes {dimension_semantics = [#tpu.dimension_semantics<parallel>, #tpu.dimension_semantics<parallel>], iteration_bounds = array<i64: 2, 1>, scalar_prefetch = 0 : i64, scratch_operands = 1 : i64, tpu.core_type = #tpu.core_type<tc>, window_params = [{transform_indices = @transform_0, window_bounds = array<i64: 1, 16, 18, 128>}, {transform_indices = @transform_1, window_bounds = array<i64: 1, 1, 18, 128>}, {transform_indices = @transform_2, window_bounds = array<i64: 1, 1, 18, 128>}, {pipeline_mode = #tpu.pipeline_mode<synchronous>, transform_indices = @transform_3, window_bounds = array<i64: 3, 3, 128, 128>}, {pipeline_mode = #tpu.pipeline_mode<synchronous>, transform_indices = @transform_4, window_bounds = array<i64: 1, 128>}, {transform_indices = @transform_5, window_bounds = array<i64: 1, 16, 16, 128>}, {transform_indices = @transform_6, window_bounds = array<i64: 1, 1, 2, 128>}]} {
    %c0 = arith.constant 0 : index
    %c0_0 = arith.constant 0 : index
    %c0_1 = arith.constant 0 : index
    %c0_2 = arith.constant 0 : index
    %0 = vector.load %arg2[%c0, %c0_0, %c0_1, %c0_2] : memref<1x16x18x128xf32, #tpu.memory_space<vmem>>, vector<1x16x18x128xf32>
    %1 = vector.shape_cast %0 : vector<1x16x18x128xf32> to vector<16x18x128xf32>
    %c0_3 = arith.constant 0 : index
    %c0_4 = arith.constant 0 : index
    %c0_5 = arith.constant 0 : index
    %2 = vector.load %arg9[%c0_3, %c0_4, %c0_5] : memref<18x18x128xf32, #tpu.memory_space<vmem>>, vector<16x18x128xf32>
    tpu.vector_store %arg9[%c0_3, %c0_4, %c0_5], %1 {strides = array<i32>} : memref<18x18x128xf32, #tpu.memory_space<vmem>>, vector<16x18x128xf32>,
    %c0_6 = arith.constant 0 : index
    %c0_7 = arith.constant 0 : index
    %c0_8 = arith.constant 0 : index
    %c0_9 = arith.constant 0 : index
    %3 = vector.load %arg3[%c0_6, %c0_7, %c0_8, %c0_9] : memref<1x1x18x128xf32, #tpu.memory_space<vmem>>, vector<1x1x18x128xf32>
    %4 = vector.shape_cast %3 : vector<1x1x18x128xf32> to vector<18x128xf32>
    %c16 = arith.constant 16 : index
    %c0_10 = arith.constant 0 : index
    %c0_11 = arith.constant 0 : index
    %5 = vector.load %arg9[%c16, %c0_10, %c0_11] : memref<18x18x128xf32, #tpu.memory_space<vmem>>, vector<1x18x128xf32>
    %6 = vector.shape_cast %5 : vector<1x18x128xf32> to vector<18x128xf32>
    %7 = vector.shape_cast %4 : vector<18x128xf32> to vector<1x18x128xf32>
    tpu.vector_store %arg9[%c16, %c0_10, %c0_11], %7 {strides = array<i32>} : memref<18x18x128xf32, #tpu.memory_space<vmem>>, vector<1x18x128xf32>,
    %c0_12 = arith.constant 0 : index
    %c0_13 = arith.constant 0 : index
    %c0_14 = arith.constant 0 : index
    %c0_15 = arith.constant 0 : index
    %8 = vector.load %arg4[%c0_12, %c0_13, %c0_14, %c0_15] : memref<1x1x18x128xf32, #tpu.memory_space<vmem>>, vector<1x1x18x128xf32>
    %9 = vector.shape_cast %8 : vector<1x1x18x128xf32> to vector<18x128xf32>
    %c17 = arith.constant 17 : index
    %c0_16 = arith.constant 0 : index
    %c0_17 = arith.constant 0 : index
    %10 = vector.load %arg9[%c17, %c0_16, %c0_17] : memref<18x18x128xf32, #tpu.memory_space<vmem>>, vector<1x18x128xf32>
    %11 = vector.shape_cast %10 : vector<1x18x128xf32> to vector<18x128xf32>
    %12 = vector.shape_cast %9 : vector<18x128xf32> to vector<1x18x128xf32>
    tpu.vector_store %arg9[%c17, %c0_16, %c0_17], %12 {strides = array<i32>} : memref<18x18x128xf32, #tpu.memory_space<vmem>>, vector<1x18x128xf32>,
    %cst = arith.constant 0.000000e+00 : f32
    %13 = vector.broadcast %cst : f32 to vector<256x128xf32>
    %c0_18 = arith.constant 0 : index
    %c0_19 = arith.constant 0 : index
    %c0_20 = arith.constant 0 : index
    %14 = vector.load %arg9[%c0_18, %c0_19, %c0_20] : memref<18x18x128xf32, #tpu.memory_space<vmem>>, vector<16x16x128xf32>
    %15 = vector.shape_cast %14 : vector<16x16x128xf32> to vector<256x128xf32>
    %c0_21 = arith.constant 0 : index
    %c0_22 = arith.constant 0 : index
    %c0_23 = arith.constant 0 : index
    %c0_24 = arith.constant 0 : index
    %16 = vector.load %arg5[%c0_21, %c0_22, %c0_23, %c0_24] : memref<3x3x128x128xf32, #tpu.memory_space<vmem>>, vector<1x1x128x128xf32>
    %17 = vector.shape_cast %16 : vector<1x1x128x128xf32> to vector<128x128xf32>
    %cst_25 = arith.constant dense<0.000000e+00> : vector<256x128xf32>
    %18 = tpu.matmul %15, %17, %cst_25 {dimension_numbers = #tpu.dot_dimension_numbers<[1], [0], [0], [1], [0, 0, 1, 1], [], []>} : vector<256x128xf32>, vector<128x128xf32>, vector<256x128xf32> -> vector<256x128xf32>
    %19 = arith.addf %13, %18 : vector<256x128xf32>
    %c0_26 = arith.constant 0 : index
    %c1 = arith.constant 1 : index
    %c0_27 = arith.constant 0 : index
    %20 = vector.load %arg9[%c0_26, %c1, %c0_27] : memref<18x18x128xf32, #tpu.memory_space<vmem>>, vector<16x16x128xf32>
    %21 = vector.shape_cast %20 : vector<16x16x128xf32> to vector<256x128xf32>
    %c0_28 = arith.constant 0 : index
    %c1_29 = arith.constant 1 : index
    %c0_30 = arith.constant 0 : index
    %c0_31 = arith.constant 0 : index
    %22 = vector.load %arg5[%c0_28, %c1_29, %c0_30, %c0_31] : memref<3x3x128x128xf32, #tpu.memory_space<vmem>>, vector<1x1x128x128xf32>
    %23 = vector.shape_cast %22 : vector<1x1x128x128xf32> to vector<128x128xf32>
    %cst_32 = arith.constant dense<0.000000e+00> : vector<256x128xf32>
    %24 = tpu.matmul %21, %23, %cst_32 {dimension_numbers = #tpu.dot_dimension_numbers<[1], [0], [0], [1], [0, 0, 1, 1], [], []>} : vector<256x128xf32>, vector<128x128xf32>, vector<256x128xf32> -> vector<256x128xf32>
    %25 = arith.addf %19, %24 : vector<256x128xf32>
    %c0_33 = arith.constant 0 : index
    %c2 = arith.constant 2 : index
    %c0_34 = arith.constant 0 : index
    %26 = vector.load %arg9[%c0_33, %c2, %c0_34] : memref<18x18x128xf32, #tpu.memory_space<vmem>>, vector<16x16x128xf32>
    %27 = vector.shape_cast %26 : vector<16x16x128xf32> to vector<256x128xf32>
    %c0_35 = arith.constant 0 : index
    %c2_36 = arith.constant 2 : index
    %c0_37 = arith.constant 0 : index
    %c0_38 = arith.constant 0 : index
    %28 = vector.load %arg5[%c0_35, %c2_36, %c0_37, %c0_38] : memref<3x3x128x128xf32, #tpu.memory_space<vmem>>, vector<1x1x128x128xf32>
    %29 = vector.shape_cast %28 : vector<1x1x128x128xf32> to vector<128x128xf32>
    %cst_39 = arith.constant dense<0.000000e+00> : vector<256x128xf32>
    %30 = tpu.matmul %27, %29, %cst_39 {dimension_numbers = #tpu.dot_dimension_numbers<[1], [0], [0], [1], [0, 0, 1, 1], [], []>} : vector<256x128xf32>, vector<128x128xf32>, vector<256x128xf32> -> vector<256x128xf32>
    %31 = arith.addf %25, %30 : vector<256x128xf32>
    %c1_40 = arith.constant 1 : index
    %c0_41 = arith.constant 0 : index
    %c0_42 = arith.constant 0 : index
    %32 = vector.load %arg9[%c1_40, %c0_41, %c0_42] : memref<18x18x128xf32, #tpu.memory_space<vmem>>, vector<16x16x128xf32>
    %33 = vector.shape_cast %32 : vector<16x16x128xf32> to vector<256x128xf32>
    %c1_43 = arith.constant 1 : index
    %c0_44 = arith.constant 0 : index
    %c0_45 = arith.constant 0 : index
    %c0_46 = arith.constant 0 : index
    %34 = vector.load %arg5[%c1_43, %c0_44, %c0_45, %c0_46] : memref<3x3x128x128xf32, #tpu.memory_space<vmem>>, vector<1x1x128x128xf32>
    %35 = vector.shape_cast %34 : vector<1x1x128x128xf32> to vector<128x128xf32>
    %cst_47 = arith.constant dense<0.000000e+00> : vector<256x128xf32>
    %36 = tpu.matmul %33, %35, %cst_47 {dimension_numbers = #tpu.dot_dimension_numbers<[1], [0], [0], [1], [0, 0, 1, 1], [], []>} : vector<256x128xf32>, vector<128x128xf32>, vector<256x128xf32> -> vector<256x128xf32>
    %37 = arith.addf %31, %36 : vector<256x128xf32>
    %c1_48 = arith.constant 1 : index
    %c1_49 = arith.constant 1 : index
    %c0_50 = arith.constant 0 : index
    %38 = vector.load %arg9[%c1_48, %c1_49, %c0_50] : memref<18x18x128xf32, #tpu.memory_space<vmem>>, vector<16x16x128xf32>
    %39 = vector.shape_cast %38 : vector<16x16x128xf32> to vector<256x128xf32>
    %c1_51 = arith.constant 1 : index
    %c1_52 = arith.constant 1 : index
    %c0_53 = arith.constant 0 : index
    %c0_54 = arith.constant 0 : index
    %40 = vector.load %arg5[%c1_51, %c1_52, %c0_53, %c0_54] : memref<3x3x128x128xf32, #tpu.memory_space<vmem>>, vector<1x1x128x128xf32>
    %41 = vector.shape_cast %40 : vector<1x1x128x128xf32> to vector<128x128xf32>
    %cst_55 = arith.constant dense<0.000000e+00> : vector<256x128xf32>
    %42 = tpu.matmul %39, %41, %cst_55 {dimension_numbers = #tpu.dot_dimension_numbers<[1], [0], [0], [1], [0, 0, 1, 1], [], []>} : vector<256x128xf32>, vector<128x128xf32>, vector<256x128xf32> -> vector<256x128xf32>
    %43 = arith.addf %37, %42 : vector<256x128xf32>
    %c1_56 = arith.constant 1 : index
    %c2_57 = arith.constant 2 : index
    %c0_58 = arith.constant 0 : index
    %44 = vector.load %arg9[%c1_56, %c2_57, %c0_58] : memref<18x18x128xf32, #tpu.memory_space<vmem>>, vector<16x16x128xf32>
    %45 = vector.shape_cast %44 : vector<16x16x128xf32> to vector<256x128xf32>
    %c1_59 = arith.constant 1 : index
    %c2_60 = arith.constant 2 : index
    %c0_61 = arith.constant 0 : index
    %c0_62 = arith.constant 0 : index
    %46 = vector.load %arg5[%c1_59, %c2_60, %c0_61, %c0_62] : memref<3x3x128x128xf32, #tpu.memory_space<vmem>>, vector<1x1x128x128xf32>
    %47 = vector.shape_cast %46 : vector<1x1x128x128xf32> to vector<128x128xf32>
    %cst_63 = arith.constant dense<0.000000e+00> : vector<256x128xf32>
    %48 = tpu.matmul %45, %47, %cst_63 {dimension_numbers = #tpu.dot_dimension_numbers<[1], [0], [0], [1], [0, 0, 1, 1], [], []>} : vector<256x128xf32>, vector<128x128xf32>, vector<256x128xf32> -> vector<256x128xf32>
    %49 = arith.addf %43, %48 : vector<256x128xf32>
    %c2_64 = arith.constant 2 : index
    %c0_65 = arith.constant 0 : index
    %c0_66 = arith.constant 0 : index
    %50 = vector.load %arg9[%c2_64, %c0_65, %c0_66] : memref<18x18x128xf32, #tpu.memory_space<vmem>>, vector<16x16x128xf32>
    %51 = vector.shape_cast %50 : vector<16x16x128xf32> to vector<256x128xf32>
    %c2_67 = arith.constant 2 : index
    %c0_68 = arith.constant 0 : index
    %c0_69 = arith.constant 0 : index
    %c0_70 = arith.constant 0 : index
    %52 = vector.load %arg5[%c2_67, %c0_68, %c0_69, %c0_70] : memref<3x3x128x128xf32, #tpu.memory_space<vmem>>, vector<1x1x128x128xf32>
    %53 = vector.shape_cast %52 : vector<1x1x128x128xf32> to vector<128x128xf32>
    %cst_71 = arith.constant dense<0.000000e+00> : vector<256x128xf32>
    %54 = tpu.matmul %51, %53, %cst_71 {dimension_numbers = #tpu.dot_dimension_numbers<[1], [0], [0], [1], [0, 0, 1, 1], [], []>} : vector<256x128xf32>, vector<128x128xf32>, vector<256x128xf32> -> vector<256x128xf32>
    %55 = arith.addf %49, %54 : vector<256x128xf32>
    %c2_72 = arith.constant 2 : index
    %c1_73 = arith.constant 1 : index
    %c0_74 = arith.constant 0 : index
    %56 = vector.load %arg9[%c2_72, %c1_73, %c0_74] : memref<18x18x128xf32, #tpu.memory_space<vmem>>, vector<16x16x128xf32>
    %57 = vector.shape_cast %56 : vector<16x16x128xf32> to vector<256x128xf32>
    %c2_75 = arith.constant 2 : index
    %c1_76 = arith.constant 1 : index
    %c0_77 = arith.constant 0 : index
    %c0_78 = arith.constant 0 : index
    %58 = vector.load %arg5[%c2_75, %c1_76, %c0_77, %c0_78] : memref<3x3x128x128xf32, #tpu.memory_space<vmem>>, vector<1x1x128x128xf32>
    %59 = vector.shape_cast %58 : vector<1x1x128x128xf32> to vector<128x128xf32>
    %cst_79 = arith.constant dense<0.000000e+00> : vector<256x128xf32>
    %60 = tpu.matmul %57, %59, %cst_79 {dimension_numbers = #tpu.dot_dimension_numbers<[1], [0], [0], [1], [0, 0, 1, 1], [], []>} : vector<256x128xf32>, vector<128x128xf32>, vector<256x128xf32> -> vector<256x128xf32>
    %61 = arith.addf %55, %60 : vector<256x128xf32>
    %c2_80 = arith.constant 2 : index
    %c2_81 = arith.constant 2 : index
    %c0_82 = arith.constant 0 : index
    %62 = vector.load %arg9[%c2_80, %c2_81, %c0_82] : memref<18x18x128xf32, #tpu.memory_space<vmem>>, vector<16x16x128xf32>
    %63 = vector.shape_cast %62 : vector<16x16x128xf32> to vector<256x128xf32>
    %c2_83 = arith.constant 2 : index
    %c2_84 = arith.constant 2 : index
    %c0_85 = arith.constant 0 : index
    %c0_86 = arith.constant 0 : index
    %64 = vector.load %arg5[%c2_83, %c2_84, %c0_85, %c0_86] : memref<3x3x128x128xf32, #tpu.memory_space<vmem>>, vector<1x1x128x128xf32>
    %65 = vector.shape_cast %64 : vector<1x1x128x128xf32> to vector<128x128xf32>
    %cst_87 = arith.constant dense<0.000000e+00> : vector<256x128xf32>
    %66 = tpu.matmul %63, %65, %cst_87 {dimension_numbers = #tpu.dot_dimension_numbers<[1], [0], [0], [1], [0, 0, 1, 1], [], []>} : vector<256x128xf32>, vector<128x128xf32>, vector<256x128xf32> -> vector<256x128xf32>
    %67 = arith.addf %61, %66 : vector<256x128xf32>
    %c0_88 = arith.constant 0 : index
    %c0_89 = arith.constant 0 : index
    %68 = vector.load %arg6[%c0_88, %c0_89] : memref<1x128xf32, #tpu.memory_space<vmem>>, vector<1x128xf32>
    %69 = vector.broadcast %68 : vector<1x128xf32> to vector<256x128xf32>
    %70 = arith.addf %67, %69 : vector<256x128xf32>
    %71 = vector.shape_cast %70 : vector<256x128xf32> to vector<16x16x128xf32>
    %c0_90 = arith.constant 0 : index
    %c0_91 = arith.constant 0 : index
    %c0_92 = arith.constant 0 : index
    %c0_93 = arith.constant 0 : index
    %72 = vector.load %arg7[%c0_90, %c0_91, %c0_92, %c0_93] : memref<1x16x16x128xf32, #tpu.memory_space<vmem>>, vector<1x16x16x128xf32>
    %73 = vector.shape_cast %72 : vector<1x16x16x128xf32> to vector<16x16x128xf32>
    %74 = vector.shape_cast %71 : vector<16x16x128xf32> to vector<1x16x16x128xf32>
    tpu.vector_store %arg7[%c0_90, %c0_91, %c0_92, %c0_93], %74 {strides = array<i32>} : memref<1x16x16x128xf32, #tpu.memory_space<vmem>>, vector<1x16x16x128xf32>,
    %cst_94 = arith.constant dense<0.000000e+00> : vector<128xf32>
    %75 = vector.multi_reduction <add>, %70, %cst_94 [0] : vector<256x128xf32> to vector<128xf32>
    %76 = vector.shape_cast %75 : vector<128xf32> to vector<1x128xf32>
    %c0_95 = arith.constant 0 : index
    %c0_96 = arith.constant 0 : index
    %c0_97 = arith.constant 0 : index
    %c0_98 = arith.constant 0 : index
    %77 = vector.load %arg8[%c0_95, %c0_96, %c0_97, %c0_98] : memref<1x1x2x128xf32, #tpu.memory_space<vmem>>, vector<1x1x1x128xf32>
    %78 = vector.shape_cast %77 : vector<1x1x1x128xf32> to vector<1x128xf32>
    %79 = vector.shape_cast %76 : vector<1x128xf32> to vector<1x1x1x128xf32>
    tpu.vector_store %arg8[%c0_95, %c0_96, %c0_97, %c0_98], %79 {strides = array<i32>} : memref<1x1x2x128xf32, #tpu.memory_space<vmem>>, vector<1x1x1x128xf32>,
    %80 = arith.mulf %70, %70 : vector<256x128xf32>
    %cst_99 = arith.constant dense<0.000000e+00> : vector<128xf32>
    %81 = vector.multi_reduction <add>, %80, %cst_99 [0] : vector<256x128xf32> to vector<128xf32>
    %82 = vector.shape_cast %81 : vector<128xf32> to vector<1x128xf32>
    %c0_100 = arith.constant 0 : index
    %c0_101 = arith.constant 0 : index
    %c1_102 = arith.constant 1 : index
    %c0_103 = arith.constant 0 : index
    %83 = vector.load %arg8[%c0_100, %c0_101, %c1_102, %c0_103] : memref<1x1x2x128xf32, #tpu.memory_space<vmem>>, vector<1x1x1x128xf32>
    %84 = vector.shape_cast %83 : vector<1x1x1x128xf32> to vector<1x128xf32>
    %85 = vector.shape_cast %82 : vector<1x128xf32> to vector<1x1x1x128xf32>
    tpu.vector_store %arg8[%c0_100, %c0_101, %c1_102, %c0_103], %85 {strides = array<i32>} : memref<1x1x2x128xf32, #tpu.memory_space<vmem>>, vector<1x1x1x128xf32>,
    return
  }
  func.func @transform_0(%arg0: i32, %arg1: i32) -> (i32, i32, i32, i32) {
    %c0_i32 = arith.constant 0 : i32
    %c0_i32_0 = arith.constant 0 : i32
    %c0_i32_1 = arith.constant 0 : i32
    return %arg0, %arg1, %c0_i32, %c0_i32_0 : i32, i32, i32, i32
  }
  func.func @transform_1(%arg0: i32, %arg1: i32) -> (i32, i32, i32, i32) {
    %c1_i32 = arith.constant 1 : i32
    %0 = arith.addi %arg1, %c1_i32 : i32
    %c16_i32 = arith.constant 16 : i32
    %1 = arith.muli %0, %c16_i32 : i32
    %c0_i32 = arith.constant 0 : i32
    %c0_i32_0 = arith.constant 0 : i32
    %c0_i32_1 = arith.constant 0 : i32
    return %arg0, %1, %c0_i32, %c0_i32_0 : i32, i32, i32, i32
  }
  func.func @transform_2(%arg0: i32, %arg1: i32) -> (i32, i32, i32, i32) {
    %c1_i32 = arith.constant 1 : i32
    %0 = arith.addi %arg1, %c1_i32 : i32
    %c16_i32 = arith.constant 16 : i32
    %1 = arith.muli %0, %c16_i32 : i32
    %c1_i32_0 = arith.constant 1 : i32
    %2 = arith.addi %1, %c1_i32_0 : i32
    %c0_i32 = arith.constant 0 : i32
    %c0_i32_1 = arith.constant 0 : i32
    %c0_i32_2 = arith.constant 0 : i32
    return %arg0, %2, %c0_i32, %c0_i32_1 : i32, i32, i32, i32
  }
  func.func @transform_3(%arg0: i32, %arg1: i32) -> (i32, i32, i32, i32) {
    %c0_i32 = arith.constant 0 : i32
    %c0_i32_0 = arith.constant 0 : i32
    %c0_i32_1 = arith.constant 0 : i32
    %c0_i32_2 = arith.constant 0 : i32
    %c0_i32_3 = arith.constant 0 : i32
    return %c0_i32, %c0_i32_0, %c0_i32_1, %c0_i32_2 : i32, i32, i32, i32
  }
  func.func @transform_4(%arg0: i32, %arg1: i32) -> (i32, i32) {
    %c0_i32 = arith.constant 0 : i32
    %c0_i32_0 = arith.constant 0 : i32
    %c0_i32_1 = arith.constant 0 : i32
    return %c0_i32, %c0_i32_0 : i32, i32
  }
  func.func @transform_5(%arg0: i32, %arg1: i32) -> (i32, i32, i32, i32) {
    %c0_i32 = arith.constant 0 : i32
    %c0_i32_0 = arith.constant 0 : i32
    %c0_i32_1 = arith.constant 0 : i32
    return %arg0, %arg1, %c0_i32, %c0_i32_0 : i32, i32, i32, i32
  }
  func.func @transform_6(%arg0: i32, %arg1: i32) -> (i32, i32, i32, i32) {
    %c0_i32 = arith.constant 0 : i32
    %c0_i32_0 = arith.constant 0 : i32
    %c0_i32_1 = arith.constant 0 : i32
    return %arg0, %arg1, %c0_i32, %c0_i32_0 : i32, i32, i32, i32
  }
}

</mosaic_0001>

<llo_original>
// kernel: up_forward.7
$region0: #{up_forward.7}
  #allocation0 [shape = 'u32[]', space=smem, size = 0x4, offset = 0x4, fixed_abs, tag = 'smem constant byte address 0x4 - core index']
  #allocation1 [shape = 'u32[72,128]{1,0:T(1,128)}', space=vmem, size = 0x9000, scoped, tag = 'internal scratch']
  %s0 = inlined_call_operand.vmem [shape: f32[32,16,128], index: 0, kind: input, shape index: {}]
  %s1 = inlined_call_operand.vmem [shape: f32[1,128], index: 1, kind: input, shape index: {}]
  %s2 = inlined_call_operand.vmem [shape: f32[1,128], index: 2, kind: input, shape index: {}]
  %s3 = inlined_call_operand.vmem [shape: f32[32,16,128], index: 3, kind: output, shape index: {}]
  %s4 = sld [smem:[#allocation0]]
  $region22: #{up_forward.7} parent=0
    _
  %s6 = ssub.s32 1, %s4
  %s7 = scalar_select 0, %s6, %s4
  // Predicated region
  $region2: #{up_forward.7} parent=0 // pred_check
    _
  $region3: #{up_forward.7} parent=0 // pred_check_branch
    %9 = sbr.rel (0) target = $region5
  $region4: #{up_forward.7} parent=0 // pred_region
    _
  $region5: #{up_forward.7} parent=0 // pred_fallthru
    _
  // Predicated region
  $region6: #{up_forward.7} parent=0 // pred_check
    _
  $region7: #{up_forward.7} parent=0 // pred_check_branch
    %11 = sbr.rel (0) target = $region9
  $region8: #{up_forward.7} parent=0 // pred_region
    _
  $region9: #{up_forward.7} parent=0 // pred_fallthru
    _
  // Predicated region
  $region10: #{up_forward.7} parent=0 // pred_check
    _
  $region11: #{up_forward.7} parent=0 // pred_check_branch
    %13 = sbr.rel (0) target = $region13
  $region12: #{up_forward.7} parent=0 // pred_region
    _
  $region13: #{up_forward.7} parent=0 // pred_fallthru
    _
  %v14 = vld [vmem:[%s0] sm:$0xff]
  %v15 = vld [vmem:[%s0 + $0x8] sm:$0xff]
  %v16 = vld [vmem:[%s0 + $0x10] sm:$0xff]
  %v17 = vld [vmem:[%s0 + $0x18] sm:$0xff]
  %v18 = vld [vmem:[%s0 + $0x20] sm:$0xff]
  %v19 = vld [vmem:[%s0 + $0x28] sm:$0xff]
  %v20 = vld [vmem:[%s0 + $0x30] sm:$0xff]
  %v21 = vld [vmem:[%s0 + $0x38] sm:$0xff]
  %v22 = vld [vmem:[%s0 + $0x40] sm:$0xff]
  %v23 = vld [vmem:[%s0 + $0x48] sm:$0xff]
  %v24 = vld [vmem:[%s0 + $0x50] sm:$0xff]
  %v25 = vld [vmem:[%s0 + $0x58] sm:$0xff]
  %v26 = vld [vmem:[%s0 + $0x60] sm:$0xff]
  %v27 = vld [vmem:[%s0 + $0x68] sm:$0xff]
  %v28 = vld [vmem:[%s0 + $0x70] sm:$0xff]
  %v29 = vld [vmem:[%s0 + $0x78] sm:$0xff]
  %v30 = vld [vmem:[%s0 + $0x80] sm:$0xff]
  %v31 = vld [vmem:[%s0 + $0x88] sm:$0xff]
  %v32 = vld [vmem:[%s0 + $0x90] sm:$0xff]
  %v33 = vld [vmem:[%s0 + $0x98] sm:$0xff]
  %v34 = vld [vmem:[%s0 + $0xa0] sm:$0xff]
  %v35 = vld [vmem:[%s0 + $0xa8] sm:$0xff]
  %v36 = vld [vmem:[%s0 + $0xb0] sm:$0xff]
  %v37 = vld [vmem:[%s0 + $0xb8] sm:$0xff]
  %v38 = vld [vmem:[%s0 + $0xc0] sm:$0xff]
  %v39 = vld [vmem:[%s0 + $0xc8] sm:$0xff]
  %v40 = vld [vmem:[%s0 + $0xd0] sm:$0xff]
  %v41 = vld [vmem:[%s0 + $0xd8] sm:$0xff]
  %v42 = vld [vmem:[%s0 + $0xe0] sm:$0xff]
  %v43 = vld [vmem:[%s0 + $0xe8] sm:$0xff]
  %v44 = vld [vmem:[%s0 + $0xf0] sm:$0xff]
  %v45 = vld [vmem:[%s0 + $0xf8] sm:$0xff]
  %v46 = vld [vmem:[%s0 + $0x100] sm:$0xff]
  %v47 = vld [vmem:[%s0 + $0x108] sm:$0xff]
  %v48 = vld [vmem:[%s0 + $0x110] sm:$0xff]
  %v49 = vld [vmem:[%s0 + $0x118] sm:$0xff]
  %v50 = vld [vmem:[%s0 + $0x120] sm:$0xff]
  %v51 = vld [vmem:[%s0 + $0x128] sm:$0xff]
  %v52 = vld [vmem:[%s0 + $0x130] sm:$0xff]
  %v53 = vld [vmem:[%s0 + $0x138] sm:$0xff]
  %v54 = vld [vmem:[%s0 + $0x140] sm:$0xff]
  %v55 = vld [vmem:[%s0 + $0x148] sm:$0xff]
  %v56 = vld [vmem:[%s0 + $0x150] sm:$0xff]
  %v57 = vld [vmem:[%s0 + $0x158] sm:$0xff]
  %v58 = vld [vmem:[%s0 + $0x160] sm:$0xff]
  %v59 = vld [vmem:[%s0 + $0x168] sm:$0xff]
  %v60 = vld [vmem:[%s0 + $0x170] sm:$0xff]
  %v61 = vld [vmem:[%s0 + $0x178] sm:$0xff]
  %v62 = vld [vmem:[%s0 + $0x180] sm:$0xff]
  %v63 = vld [vmem:[%s0 + $0x188] sm:$0xff]
  %v64 = vld [vmem:[%s0 + $0x190] sm:$0xff]
  %v65 = vld [vmem:[%s0 + $0x198] sm:$0xff]
  %v66 = vld [vmem:[%s0 + $0x1a0] sm:$0xff]
  %v67 = vld [vmem:[%s0 + $0x1a8] sm:$0xff]
  %v68 = vld [vmem:[%s0 + $0x1b0] sm:$0xff]
  %v69 = vld [vmem:[%s0 + $0x1b8] sm:$0xff]
  %v70 = vld [vmem:[%s0 + $0x1c0] sm:$0xff]
  %v71 = vld [vmem:[%s0 + $0x1c8] sm:$0xff]
  %v72 = vld [vmem:[%s0 + $0x1d0] sm:$0xff]
  %v73 = vld [vmem:[%s0 + $0x1d8] sm:$0xff]
  %v74 = vld [vmem:[%s0 + $0x1e0] sm:$0xff]
  %v75 = vld [vmem:[%s0 + $0x1e8] sm:$0xff]
  %v76 = vld [vmem:[%s0 + $0x1f0] sm:$0xff]
  %v77 = vld [vmem:[%s0 + $0x1f8] sm:$0xff]
  %v78 = vld [vmem:[%s1] sm:$0x1]
  %v80 = vperm.slane %v78, 0
  %v82 = vmul.f32 %v14, %v80
  %v83 = vmul.f32 %v15, %v80
  %v84 = vmul.f32 %v16, %v80
  %v85 = vmul.f32 %v17, %v80
  %v86 = vmul.f32 %v18, %v80
  %v87 = vmul.f32 %v19, %v80
  %v88 = vmul.f32 %v20, %v80
  %v89 = vmul.f32 %v21, %v80
  %v90 = vmul.f32 %v22, %v80
  %v91 = vmul.f32 %v23, %v80
  %v92 = vmul.f32 %v24, %v80
  %v93 = vmul.f32 %v25, %v80
  %v94 = vmul.f32 %v26, %v80
  %v95 = vmul.f32 %v27, %v80
  %v96 = vmul.f32 %v28, %v80
  %v97 = vmul.f32 %v29, %v80
  %v98 = vmul.f32 %v30, %v80
  %v99 = vmul.f32 %v31, %v80
  %v100 = vmul.f32 %v32, %v80
  %v101 = vmul.f32 %v33, %v80
  %v102 = vmul.f32 %v34, %v80
  %v103 = vmul.f32 %v35, %v80
  %v104 = vmul.f32 %v36, %v80
  %v105 = vmul.f32 %v37, %v80
  %v106 = vmul.f32 %v38, %v80
  %v107 = vmul.f32 %v39, %v80
  %v108 = vmul.f32 %v40, %v80
  %v109 = vmul.f32 %v41, %v80
  %v110 = vmul.f32 %v42, %v80
  %v111 = vmul.f32 %v43, %v80
  %v112 = vmul.f32 %v44, %v80
  %v113 = vmul.f32 %v45, %v80
  %v114 = vmul.f32 %v46, %v80
  %v115 = vmul.f32 %v47, %v80
  %v116 = vmul.f32 %v48, %v80
  %v117 = vmul.f32 %v49, %v80
  %v118 = vmul.f32 %v50, %v80
  %v119 = vmul.f32 %v51, %v80
  %v120 = vmul.f32 %v52, %v80
  %v121 = vmul.f32 %v53, %v80
  %v122 = vmul.f32 %v54, %v80
  %v123 = vmul.f32 %v55, %v80
  %v124 = vmul.f32 %v56, %v80
  %v125 = vmul.f32 %v57, %v80
  %v126 = vmul.f32 %v58, %v80
  %v127 = vmul.f32 %v59, %v80
  %v128 = vmul.f32 %v60, %v80
  %v129 = vmul.f32 %v61, %v80
  %v130 = vmul.f32 %v62, %v80
  %v131 = vmul.f32 %v63, %v80
  %v132 = vmul.f32 %v64, %v80
  %v133 = vmul.f32 %v65, %v80
  %v134 = vmul.f32 %v66, %v80
  %v135 = vmul.f32 %v67, %v80
  %v136 = vmul.f32 %v68, %v80
  %v137 = vmul.f32 %v69, %v80
  %v138 = vmul.f32 %v70, %v80
  %v139 = vmul.f32 %v71, %v80
  %v140 = vmul.f32 %v72, %v80
  %v141 = vmul.f32 %v73, %v80
  %v142 = vmul.f32 %v74, %v80
  %v143 = vmul.f32 %v75, %v80
  %v144 = vmul.f32 %v76, %v80
  %v145 = vmul.f32 %v77, %v80
  %v146 = vld [vmem:[%s2] sm:$0x1]
  %v148 = vperm.slane %v146, 0
  %v150 = vadd.f32 %v82, %v148
  %v151 = vadd.f32 %v83, %v148
  %v152 = vadd.f32 %v84, %v148
  %v153 = vadd.f32 %v85, %v148
  %v154 = vadd.f32 %v86, %v148
  %v155 = vadd.f32 %v87, %v148
  %v156 = vadd.f32 %v88, %v148
  %v157 = vadd.f32 %v89, %v148
  %v158 = vadd.f32 %v90, %v148
  %v159 = vadd.f32 %v91, %v148
  %v160 = vadd.f32 %v92, %v148
  %v161 = vadd.f32 %v93, %v148
  %v162 = vadd.f32 %v94, %v148
  %v163 = vadd.f32 %v95, %v148
  %v164 = vadd.f32 %v96, %v148
  %v165 = vadd.f32 %v97, %v148
  %v166 = vadd.f32 %v98, %v148
  %v167 = vadd.f32 %v99, %v148
  %v168 = vadd.f32 %v100, %v148
  %v169 = vadd.f32 %v101, %v148
  %v170 = vadd.f32 %v102, %v148
  %v171 = vadd.f32 %v103, %v148
  %v172 = vadd.f32 %v104, %v148
  %v173 = vadd.f32 %v105, %v148
  %v174 = vadd.f32 %v106, %v148
  %v175 = vadd.f32 %v107, %v148
  %v176 = vadd.f32 %v108, %v148
  %v177 = vadd.f32 %v109, %v148
  %v178 = vadd.f32 %v110, %v148
  %v179 = vadd.f32 %v111, %v148
  %v180 = vadd.f32 %v112, %v148
  %v181 = vadd.f32 %v113, %v148
  %v182 = vadd.f32 %v114, %v148
  %v183 = vadd.f32 %v115, %v148
  %v184 = vadd.f32 %v116, %v148
  %v185 = vadd.f32 %v117, %v148
  %v186 = vadd.f32 %v118, %v148
  %v187 = vadd.f32 %v119, %v148
  %v188 = vadd.f32 %v120, %v148
  %v189 = vadd.f32 %v121, %v148
  %v190 = vadd.f32 %v122, %v148
  %v191 = vadd.f32 %v123, %v148
  %v192 = vadd.f32 %v124, %v148
  %v193 = vadd.f32 %v125, %v148
  %v194 = vadd.f32 %v126, %v148
  %v195 = vadd.f32 %v127, %v148
  %v196 = vadd.f32 %v128, %v148
  %v197 = vadd.f32 %v129, %v148
  %v198 = vadd.f32 %v130, %v148
  %v199 = vadd.f32 %v131, %v148
  %v200 = vadd.f32 %v132, %v148
  %v201 = vadd.f32 %v133, %v148
  %v202 = vadd.f32 %v134, %v148
  %v203 = vadd.f32 %v135, %v148
  %v204 = vadd.f32 %v136, %v148
  %v205 = vadd.f32 %v137, %v148
  %v206 = vadd.f32 %v138, %v148
  %v207 = vadd.f32 %v139, %v148
  %v208 = vadd.f32 %v140, %v148
  %v209 = vadd.f32 %v141, %v148
  %v210 = vadd.f32 %v142, %v148
  %v211 = vadd.f32 %v143, %v148
  %v212 = vadd.f32 %v144, %v148
  %v213 = vadd.f32 %v145, %v148
  %v214 = vmax.f32 %v150, 0.0
  %v215 = vmax.f32 %v151, 0.0
  %v216 = vmax.f32 %v152, 0.0
  %v217 = vmax.f32 %v153, 0.0
  %v218 = vmax.f32 %v154, 0.0
  %v219 = vmax.f32 %v155, 0.0
  %v220 = vmax.f32 %v156, 0.0
  %v221 = vmax.f32 %v157, 0.0
  %v222 = vmax.f32 %v158, 0.0
  %v223 = vmax.f32 %v159, 0.0
  %v224 = vmax.f32 %v160, 0.0
  %v225 = vmax.f32 %v161, 0.0
  %v226 = vmax.f32 %v162, 0.0
  %v227 = vmax.f32 %v163, 0.0
  %v228 = vmax.f32 %v164, 0.0
  %v229 = vmax.f32 %v165, 0.0
  %v230 = vmax.f32 %v166, 0.0
  %v231 = vmax.f32 %v167, 0.0
  %v232 = vmax.f32 %v168, 0.0
  %v233 = vmax.f32 %v169, 0.0
  %v234 = vmax.f32 %v170, 0.0
  %v235 = vmax.f32 %v171, 0.0
  %v236 = vmax.f32 %v172, 0.0
  %v237 = vmax.f32 %v173, 0.0
  %v238 = vmax.f32 %v174, 0.0
  %v239 = vmax.f32 %v175, 0.0
  %v240 = vmax.f32 %v176, 0.0
  %v241 = vmax.f32 %v177, 0.0
  %v242 = vmax.f32 %v178, 0.0
  %v243 = vmax.f32 %v179, 0.0
  %v244 = vmax.f32 %v180, 0.0
  %v245 = vmax.f32 %v181, 0.0
  %v246 = vmax.f32 %v182, 0.0
  %v247 = vmax.f32 %v183, 0.0
  %v248 = vmax.f32 %v184, 0.0
  %v249 = vmax.f32 %v185, 0.0
  %v250 = vmax.f32 %v186, 0.0
  %v251 = vmax.f32 %v187, 0.0
  %v252 = vmax.f32 %v188, 0.0
  %v253 = vmax.f32 %v189, 0.0
  %v254 = vmax.f32 %v190, 0.0
  %v255 = vmax.f32 %v191, 0.0
  %v256 = vmax.f32 %v192, 0.0
  %v257 = vmax.f32 %v193, 0.0
  %v258 = vmax.f32 %v194, 0.0
  %v259 = vmax.f32 %v195, 0.0
  %v260 = vmax.f32 %v196, 0.0
  %v261 = vmax.f32 %v197, 0.0
  %v262 = vmax.f32 %v198, 0.0
  %v263 = vmax.f32 %v199, 0.0
  %v264 = vmax.f32 %v200, 0.0
  %v265 = vmax.f32 %v201, 0.0
  %v266 = vmax.f32 %v202, 0.0
  %v267 = vmax.f32 %v203, 0.0
  %v268 = vmax.f32 %v204, 0.0
  %v269 = vmax.f32 %v205, 0.0
  %v270 = vmax.f32 %v206, 0.0
  %v271 = vmax.f32 %v207, 0.0
  %v272 = vmax.f32 %v208, 0.0
  %v273 = vmax.f32 %v209, 0.0
  %v274 = vmax.f32 %v210, 0.0
  %v275 = vmax.f32 %v211, 0.0
  %v276 = vmax.f32 %v212, 0.0
  %v277 = vmax.f32 %v213, 0.0
  %278 = vst [vmem:[%s3] sm:$0xff] %v214
  %279 = vst [vmem:[%s3 + $0x8] sm:$0xff] %v215
  %280 = vst [vmem:[%s3 + $0x10] sm:$0xff] %v216
  %281 = vst [vmem:[%s3 + $0x18] sm:$0xff] %v217
  %282 = vst [vmem:[%s3 + $0x20] sm:$0xff] %v218
  %283 = vst [vmem:[%s3 + $0x28] sm:$0xff] %v219
  %284 = vst [vmem:[%s3 + $0x30] sm:$0xff] %v220
  %285 = vst [vmem:[%s3 + $0x38] sm:$0xff] %v221
  %286 = vst [vmem:[%s3 + $0x40] sm:$0xff] %v222
  %287 = vst [vmem:[%s3 + $0x48] sm:$0xff] %v223
  %288 = vst [vmem:[%s3 + $0x50] sm:$0xff] %v224
  %289 = vst [vmem:[%s3 + $0x58] sm:$0xff] %v225
  %290 = vst [vmem:[%s3 + $0x60] sm:$0xff] %v226
  %291 = vst [vmem:[%s3 + $0x68] sm:$0xff] %v227
  %292 = vst [vmem:[%s3 + $0x70] sm:$0xff] %v228
  %293 = vst [vmem:[%s3 + $0x78] sm:$0xff] %v229
  %294 = vst [vmem:[%s3 + $0x80] sm:$0xff] %v230
  %295 = vst [vmem:[%s3 + $0x88] sm:$0xff] %v231
  %296 = vst [vmem:[%s3 + $0x90] sm:$0xff] %v232
  %297 = vst [vmem:[%s3 + $0x98] sm:$0xff] %v233
  %298 = vst [vmem:[%s3 + $0xa0] sm:$0xff] %v234
  %299 = vst [vmem:[%s3 + $0xa8] sm:$0xff] %v235
  %300 = vst [vmem:[%s3 + $0xb0] sm:$0xff] %v236
  %301 = vst [vmem:[%s3 + $0xb8] sm:$0xff] %v237
  %302 = vst [vmem:[%s3 + $0xc0] sm:$0xff] %v238
  %303 = vst [vmem:[%s3 + $0xc8] sm:$0xff] %v239
  %304 = vst [vmem:[%s3 + $0xd0] sm:$0xff] %v240
  %305 = vst [vmem:[%s3 + $0xd8] sm:$0xff] %v241
  %306 = vst [vmem:[%s3 + $0xe0] sm:$0xff] %v242
  %307 = vst [vmem:[%s3 + $0xe8] sm:$0xff] %v243
  %308 = vst [vmem:[%s3 + $0xf0] sm:$0xff] %v244
  %309 = vst [vmem:[%s3 + $0xf8] sm:$0xff] %v245
  %310 = vst [vmem:[%s3 + $0x100] sm:$0xff] %v246
  %311 = vst [vmem:[%s3 + $0x108] sm:$0xff] %v247
  %312 = vst [vmem:[%s3 + $0x110] sm:$0xff] %v248
  %313 = vst [vmem:[%s3 + $0x118] sm:$0xff] %v249
  %314 = vst [vmem:[%s3 + $0x120] sm:$0xff] %v250
  %315 = vst [vmem:[%s3 + $0x128] sm:$0xff] %v251
  %316 = vst [vmem:[%s3 + $0x130] sm:$0xff] %v252
  %317 = vst [vmem:[%s3 + $0x138] sm:$0xff] %v253
  %318 = vst [vmem:[%s3 + $0x140] sm:$0xff] %v254
  %319 = vst [vmem:[%s3 + $0x148] sm:$0xff] %v255
  %320 = vst [vmem:[%s3 + $0x150] sm:$0xff] %v256
  %321 = vst [vmem:[%s3 + $0x158] sm:$0xff] %v257
  %322 = vst [vmem:[%s3 + $0x160] sm:$0xff] %v258
  %323 = vst [vmem:[%s3 + $0x168] sm:$0xff] %v259
  %324 = vst [vmem:[%s3 + $0x170] sm:$0xff] %v260
  %325 = vst [vmem:[%s3 + $0x178] sm:$0xff] %v261
  %326 = vst [vmem:[%s3 + $0x180] sm:$0xff] %v262
  %327 = vst [vmem:[%s3 + $0x188] sm:$0xff] %v263
  %328 = vst [vmem:[%s3 + $0x190] sm:$0xff] %v264
  %329 = vst [vmem:[%s3 + $0x198] sm:$0xff] %v265
  %330 = vst [vmem:[%s3 + $0x1a0] sm:$0xff] %v266
  %331 = vst [vmem:[%s3 + $0x1a8] sm:$0xff] %v267
  %332 = vst [vmem:[%s3 + $0x1b0] sm:$0xff] %v268
  %333 = vst [vmem:[%s3 + $0x1b8] sm:$0xff] %v269
  %334 = vst [vmem:[%s3 + $0x1c0] sm:$0xff] %v270
  %335 = vst [vmem:[%s3 + $0x1c8] sm:$0xff] %v271
  %336 = vst [vmem:[%s3 + $0x1d0] sm:$0xff] %v272
  %337 = vst [vmem:[%s3 + $0x1d8] sm:$0xff] %v273
  %338 = vst [vmem:[%s3 + $0x1e0] sm:$0xff] %v274
  %339 = vst [vmem:[%s3 + $0x1e8] sm:$0xff] %v275
  %340 = vst [vmem:[%s3 + $0x1f0] sm:$0xff] %v276
  %341 = vst [vmem:[%s3 + $0x1f8] sm:$0xff] %v277
  // Predicated region
  $region14: #{up_forward.7} parent=0 // pred_check
    _
  $region15: #{up_forward.7} parent=0 // pred_check_branch
    %343 = sbr.rel (0) target = $region17
  $region16: #{up_forward.7} parent=0 // pred_region
    _
  $region17: #{up_forward.7} parent=0 // pred_fallthru
    _
  // Predicated region
  $region18: #{up_forward.7} parent=0 // pred_check
    _
  $region19: #{up_forward.7} parent=0 // pred_check_branch
    %345 = sbr.rel (0) target = $region21
  $region20: #{up_forward.7} parent=0 // pred_region
    _
  $region21: #{up_forward.7} parent=0 // pred_fallthru
    _

// kernel: up_forward.5
$region0: #{up_forward.5}
  #allocation0 [shape = 'u32[]', space=smem, size = 0x4, offset = 0x4, fixed_abs, tag = 'smem constant byte address 0x4 - core index']
  #allocation1 [shape = 'u32[72,128]{1,0:T(1,128)}', space=vmem, size = 0x9000, scoped, tag = 'internal scratch']
  %s0 = inlined_call_operand.vmem [shape: f32[16,8,128], index: 0, kind: input, shape index: {}]
  %s1 = inlined_call_operand.vmem [shape: f32[2,2,128,128], index: 1, kind: input, shape index: {}]
  %s2 = inlined_call_operand.vmem [shape: f32[1,128], index: 2, kind: input, shape index: {}]
  %s3 = inlined_call_operand.vmem [shape: f32[16,2,8,2,128], index: 3, kind: output, shape index: {}]
  %s4 = sld [smem:[#allocation0]]
  $region82: #{up_forward.5} parent=0
    _
  %s6 = ssub.s32 1, %s4
  %s7 = scalar_select 0, %s6, %s4
  $region1: #{up_forward.5} parent=0
    #allocation2 [shape = 'u8[262144]{0}', space=vmem, size = 0x40000, scoped, tag = 'output window, operand 0']
    loop: start=0, step=1, limit=4
    $region2: #{up_forward.5} parent=1 // loop_pre_header
      _
    $region3: #{up_forward.5} parent=1 // loop_header
      %s9 = sphi 0, %s13
      %p10 = scmp.ge.s32.totalorder %s9, 4
      %s16 = sphi 0, %s28
      %s17 = sphi 0, %s24
      %s18 = sphi 0, %s16
      %s19 = sphi 0, %s17
      %s20 = sphi 0, %s18
      %s21 = sphi 0, %s19
      %s31 = sphi 0, %s33
      %s34 = sphi 0, %s31
      %s35 = sphi 0, %s34
      %s51 = sphi 0, %s35
      %s57 = sphi 0, %s59
      %s60 = sphi 0, %s57
      %s61 = sphi 0, %s60
      %s77 = sphi 0, %s61
      %s81 = sphi 0, %s81
      %s83 = sphi 0, %s81
      %s84 = sphi 0, %s83
      %s98 = sphi 0, %s84
      %s106 = sphi 0, %s108
      %s109 = sphi 0, %s106
      %s110 = sphi 0, %s109
      %s126 = sphi 0, %s110
    $region4: #{up_forward.5} parent=1 // loop_header_branch
      %12 = sbr.rel (%p10) target = $region8
    $region5: #{up_forward.5} parent=1 // loop_body
      %s14 = ssub.s32 %s9, 1
      %s15 = ssub.s32 %s9, 2
      %s22 = sadd.s32 1, %s17
      %p23 = scmp.ge.s32.totalorder %s22, 2
      %s24 = scalar_select %p23, 0, %s22
      %s25 = sadd.s32 1, %s16
      %s26 = scalar_select %p23, %s25, %s16
      %p27 = scmp.ge.s32.totalorder %s26, 1
      %s28 = scalar_select %p27, 0, %s26
      %s29 = ssub.s32 %s16, %s28
      %p30 = scmp.eq.s32.totalorder %s29, 0
      %s32 = sadd.s32 %s31, 1
      %s33 = scalar_select %p30, %s31, %s32
      %p36 = pneg %p30
      %p37 = scmp.eq.s32.totalorder %s9, 1
      %p38 = por %p36, %p37
      %p39 = scmp.ne.s32.totalorder %s31, %s34
      %p40 = scmp.eq.s32.totalorder %s9, 0
      %p41 = por %p39, %p40
      %p42 = scmp.ne.s32.totalorder %s31, %s34
      %p43 = scmp.eq.s32.totalorder %s14, 1
      %p44 = por %p42, %p43
      %p45 = scmp.ne.s32.totalorder %s34, %s35
      %p46 = scmp.eq.s32.totalorder %s14, 0
      %p47 = por %p45, %p46
      %p48 = scmp.ne.s32.totalorder %s34, %s35
      %p49 = scmp.eq.s32.totalorder %s15, 1
      %p50 = por %p48, %p49
      %p52 = scmp.ne.s32.totalorder %s35, %s51
      %p53 = scmp.eq.s32.totalorder %s15, 0
      %p54 = por %p52, %p53
      %s55 = ssub.s32 %s17, %s24
      %p56 = scmp.eq.s32.totalorder %s55, 0
      %s58 = sadd.s32 %s57, 1
      %s59 = scalar_select %p56, %s57, %s58
      %p62 = pneg %p56
      %p63 = scmp.eq.s32.totalorder %s9, 1
      %p64 = por %p62, %p63
      %p65 = scmp.ne.s32.totalorder %s57, %s60
      %p66 = scmp.eq.s32.totalorder %s9, 0
      %p67 = por %p65, %p66
      %p68 = scmp.ne.s32.totalorder %s57, %s60
      %p69 = scmp.eq.s32.totalorder %s14, 1
      %p70 = por %p68, %p69
      %p71 = scmp.ne.s32.totalorder %s60, %s61
      %p72 = scmp.eq.s32.totalorder %s14, 0
      %p73 = por %p71, %p72
      %p74 = scmp.ne.s32.totalorder %s60, %s61
      %p75 = scmp.eq.s32.totalorder %s15, 1
      %p76 = por %p74, %p75
      %p78 = scmp.ne.s32.totalorder %s61, %s77
      %p79 = scmp.eq.s32.totalorder %s15, 0
      %p80 = por %p78, %p79
      %s82 = sadd.s32 %s81, 1
      %p85 = scmp.eq.s32.totalorder %s9, 1
      %p86 = scmp.ne.s32.totalorder %s81, %s83
      %p87 = scmp.eq.s32.totalorder %s9, 0
      %p88 = por %p86, %p87
      %p89 = scmp.ne.s32.totalorder %s81, %s83
      %p90 = scmp.eq.s32.totalorder %s14, 1
      %p91 = por %p89, %p90
      %p92 = scmp.ne.s32.totalorder %s83, %s84
      %p93 = scmp.eq.s32.totalorder %s14, 0
      %p94 = por %p92, %p93
      %p95 = scmp.ne.s32.totalorder %s83, %s84
      %p96 = scmp.eq.s32.totalorder %s15, 1
      %p97 = por %p95, %p96
      %p99 = scmp.ne.s32.totalorder %s84, %s98
      %p100 = scmp.eq.s32.totalorder %s15, 0
      %p101 = por %p99, %p100
      %s102 = ssub.s32 %s16, %s28
      %s103 = ssub.s32 %s17, %s24
      %s104 = sor.u32 %s102, %s103
      %p105 = scmp.eq.s32.totalorder %s104, 0
      %s107 = sadd.s32 %s106, 1
      %s108 = scalar_select %p105, %s106, %s107
      %p111 = pneg %p105
      %p112 = scmp.eq.s32.totalorder %s9, 1
      %p113 = por %p111, %p112
      %p114 = scmp.ne.s32.totalorder %s106, %s109
      %p115 = scmp.eq.s32.totalorder %s9, 0
      %p116 = por %p114, %p115
      %p117 = scmp.ne.s32.totalorder %s106, %s109
      %p118 = scmp.eq.s32.totalorder %s14, 1
      %p119 = por %p117, %p118
      %p120 = scmp.ne.s32.totalorder %s109, %s110
      %p121 = scmp.eq.s32.totalorder %s14, 0
      %p122 = por %p120, %p121
      %p123 = scmp.ne.s32.totalorder %s109, %s110
      %p124 = scmp.eq.s32.totalorder %s15, 1
      %p125 = por %p123, %p124
      %p127 = scmp.ne.s32.totalorder %s110, %s126
      %p128 = scmp.eq.s32.totalorder %s15, 0
      %p129 = por %p127, %p128
      %p130 = scmp.le.s32.totalorder 1, %s9
      %p131 = scmp.lt.s32.totalorder %s9, 3
      %p132 = pnand %p130, %p131
      %p133 = pneg %p132
      // Predicated region
      $region9: #{up_forward.5} parent=5 // pred_check
        _
      $region10: #{up_forward.5} parent=5 // pred_check_branch
        %135 = sbr.rel (%p132) target = $region12
      $region11: #{up_forward.5} parent=5 // pred_region
        %s136 = ssub.s32 %s9, 1
        // Predicated region
        $region13: #{up_forward.5} parent=11 // pred_check
          %p137 = pneg %p47
        $region14: #{up_forward.5} parent=11 // pred_check_branch
          %139 = sbr.rel (%p137) target = $region16
        $region15: #{up_forward.5} parent=11 // pred_region
          %s140 = smul.u32 16, %s18
          %p141 = scmp.lt.s32.totalorder %s140, 15
          %s142 = scalar_select %p141, %s140, 15
          %s143 = smul.addr %s142, 8
          %s144 = scalar_lea.vmem %s0, %s143
          %s145 = smul.u32 16, %s18
        $region16: #{up_forward.5} parent=11 // pred_fallthru
          _
        // Predicated region
        $region17: #{up_forward.5} parent=11 // pred_check
          %p146 = pneg %p94
        $region18: #{up_forward.5} parent=11 // pred_check_branch
          %148 = sbr.rel (%p146) target = $region20
        $region19: #{up_forward.5} parent=11 // pred_region
          _
        $region20: #{up_forward.5} parent=11 // pred_fallthru
          _
      $region12: #{up_forward.5} parent=5 // pred_fallthru
        _
      %p149 = scmp.lt.s32.totalorder %s9, 2
      // Predicated region
      $region21: #{up_forward.5} parent=5 // pred_check
        %p150 = pneg %p149
      $region22: #{up_forward.5} parent=5 // pred_check_branch
        %152 = sbr.rel (%p150) target = $region24
      $region23: #{up_forward.5} parent=5 // pred_region
        // Predicated region
        $region25: #{up_forward.5} parent=23 // pred_check
          %p153 = pneg %p67
        $region26: #{up_forward.5} parent=23 // pred_check_branch
          %155 = sbr.rel (%p153) target = $region28
        $region27: #{up_forward.5} parent=23 // pred_region
          %p156 = scmp.lt.s32.totalorder %s17, 1
          %s157 = scalar_select %p156, %s17, 1
          %s158 = smul.addr %s157, 32
          %s159 = smul.addr %s158, 8
          %s160 = scalar_lea.vmem %s1, %s159
        $region28: #{up_forward.5} parent=23 // pred_fallthru
          _
      $region24: #{up_forward.5} parent=5 // pred_fallthru
        _
      %p161 = scmp.le.s32.totalorder 1, %s9
      %p162 = scmp.lt.s32.totalorder %s9, 3
      %p163 = pnand %p161, %p162
      %p164 = pneg %p163
      // Predicated region
      $region29: #{up_forward.5} parent=5 // pred_check
        _
      $region30: #{up_forward.5} parent=5 // pred_check_branch
        %166 = sbr.rel (%p163) target = $region32
      $region31: #{up_forward.5} parent=5 // pred_region
        %s167 = ssub.s32 %s9, 1
        %s168 = smul.u32 16, %s18
        %p169 = scmp.lt.s32.totalorder %s168, 15
        %s170 = scalar_select %p169, %s168, 15
        %s171 = smul.addr %s170, 8
        %s172 = scalar_lea.vmem %s0, %s171
        %p173 = pneg %p47
        %p174 = pneg %p44
        %p175 = scmp.lt.s32.totalorder %s19, 1
        %s176 = scalar_select %p175, %s19, 1
        %s177 = smul.addr %s176, 32
        %s178 = smul.addr %s177, 8
        %s179 = scalar_lea.vmem %s1, %s178
        %p180 = pneg %p73
        %p181 = pneg %p70
        %p182 = pneg %p94
        %p183 = pneg %p91
        %p184 = pneg %p122
        %p185 = pneg %p119
        %s186 = sand.u32 %s109, 1
        %s187 = sand.u32 %s109, 1
        %s188 = smul.addr %s187, 256
        %s189 = scalar_lea.vmem [#allocation2], %s188
        %s190 = smul.u32 16, %s18
        %p191 = scmp.lt.s32.totalorder %s190, 15
        %s192 = scalar_select %p191, %s190, 15
        %s193 = smul.addr %s192, 8
        %s194 = scalar_lea.vmem %s0, %s193
        %s195 = smul.u32 16, %s18
        %p196 = scmp.lt.s32.totalorder %s19, 1
        %s197 = scalar_select %p196, %s19, 1
        %s198 = smul.addr %s197, 32
        %s199 = smul.addr %s198, 8
        %s200 = scalar_lea.vmem %s1, %s199
        %s201 = smul.u32 16, %s18
        %v202 = vld [vmem:[%s194] sm:$0xff]
        %v203 = vld [vmem:[%s194 + $0x8] sm:$0xff]
        %v204 = vld [vmem:[%s194 + $0x10] sm:$0xff]
        %v205 = vld [vmem:[%s194 + $0x18] sm:$0xff]
        %v206 = vld [vmem:[%s194 + $0x20] sm:$0xff]
        %v207 = vld [vmem:[%s194 + $0x28] sm:$0xff]
        %v208 = vld [vmem:[%s194 + $0x30] sm:$0xff]
        %v209 = vld [vmem:[%s194 + $0x38] sm:$0xff]
        %v210 = vld [vmem:[%s194 + $0x40] sm:$0xff]
        %v211 = vld [vmem:[%s194 + $0x48] sm:$0xff]
        %v212 = vld [vmem:[%s194 + $0x50] sm:$0xff]
        %v213 = vld [vmem:[%s194 + $0x58] sm:$0xff]
        %v214 = vld [vmem:[%s194 + $0x60] sm:$0xff]
        %v215 = vld [vmem:[%s194 + $0x68] sm:$0xff]
        %v216 = vld [vmem:[%s194 + $0x70] sm:$0xff]
        %v217 = vld [vmem:[%s194 + $0x78] sm:$0xff]
        %v218 = vld [vmem:[%s2] sm:$0x1]
        %v219 = vld [vmem:[%s200] sm:$0xff]
        %v220 = vld [vmem:[%s200 + $0x8] sm:$0xff]
        %v221 = vld [vmem:[%s200 + $0x10] sm:$0xff]
        %v222 = vld [vmem:[%s200 + $0x18] sm:$0xff]
        %v223 = vld [vmem:[%s200 + $0x20] sm:$0xff]
        %v224 = vld [vmem:[%s200 + $0x28] sm:$0xff]
        %v225 = vld [vmem:[%s200 + $0x30] sm:$0xff]
        %v226 = vld [vmem:[%s200 + $0x38] sm:$0xff]
        %v227 = vld [vmem:[%s200 + $0x40] sm:$0xff]
        %v228 = vld [vmem:[%s200 + $0x48] sm:$0xff]
        %v229 = vld [vmem:[%s200 + $0x50] sm:$0xff]
        %v230 = vld [vmem:[%s200 + $0x58] sm:$0xff]
        %v231 = vld [vmem:[%s200 + $0x60] sm:$0xff]
        %v232 = vld [vmem:[%s200 + $0x68] sm:$0xff]
        %v233 = vld [vmem:[%s200 + $0x70] sm:$0xff]
        %v234 = vld [vmem:[%s200 + $0x78] sm:$0xff]
        %v236 = vperm.slane %v218, 0
        %238 = vmatpush.msra.mxu0 %v234
        %239 = vmatpush.msra.mxu0 %v233
        %240 = vmatpush.msra.mxu0 %v232
        %241 = vmatpush.msra.mxu0 %v231
        %242 = vmatpush.msra.mxu0 %v230
        %243 = vmatpush.msra.mxu0 %v229
        %244 = vmatpush.msra.mxu0 %v228
        %245 = vmatpush.msra.mxu0 %v227
        %246 = vmatpush.msra.mxu0 %v226
        %247 = vmatpush.msra.mxu0 %v225
        %248 = vmatpush.msra.mxu0 %v224
        %249 = vmatpush.msra.mxu0 %v223
        %250 = vmatpush.msra.mxu0 %v222
        %251 = vmatpush.msra.mxu0 %v221
        %252 = vmatpush.msra.mxu0 %v220
        %253 = vmatpush.msra.mxu0 %v219
        %254 = vmatmul.f32.gmra.mxu0 %v202
        %v255 = vpop.f32.mrf.mxu0
        %v256 = vadd.f32 %v236, %v255
        %257 = vmatmul.f32.gmra.mxu0 %v203
        %v258 = vpop.f32.mrf.mxu0
        %v259 = vadd.f32 %v236, %v258
        %260 = vmatmul.f32.gmra.mxu0 %v204
        %v261 = vpop.f32.mrf.mxu0
        %v262 = vadd.f32 %v236, %v261
        %263 = vmatmul.f32.gmra.mxu0 %v205
        %v264 = vpop.f32.mrf.mxu0
        %v265 = vadd.f32 %v236, %v264
        %266 = vmatmul.f32.gmra.mxu0 %v206
        %v267 = vpop.f32.mrf.mxu0
        %v268 = vadd.f32 %v236, %v267
        %269 = vmatmul.f32.gmra.mxu0 %v207
        %v270 = vpop.f32.mrf.mxu0
        %v271 = vadd.f32 %v236, %v270
        %272 = vmatmul.f32.gmra.mxu0 %v208
        %v273 = vpop.f32.mrf.mxu0
        %v274 = vadd.f32 %v236, %v273
        %275 = vmatmul.f32.gmra.mxu0 %v209
        %v276 = vpop.f32.mrf.mxu0
        %v277 = vadd.f32 %v236, %v276
        %278 = vmatmul.f32.gmra.mxu0 %v210
        %v279 = vpop.f32.mrf.mxu0
        %v280 = vadd.f32 %v236, %v279
        %281 = vmatmul.f32.gmra.mxu0 %v211
        %v282 = vpop.f32.mrf.mxu0
        %v283 = vadd.f32 %v236, %v282
        %284 = vmatmul.f32.gmra.mxu0 %v212
        %v285 = vpop.f32.mrf.mxu0
        %v286 = vadd.f32 %v236, %v285
        %287 = vmatmul.f32.gmra.mxu0 %v213
        %v288 = vpop.f32.mrf.mxu0
        %v289 = vadd.f32 %v236, %v288
        %290 = vmatmul.f32.gmra.mxu0 %v214
        %v291 = vpop.f32.mrf.mxu0
        %v292 = vadd.f32 %v236, %v291
        %293 = vmatmul.f32.gmra.mxu0 %v215
        %v294 = vpop.f32.mrf.mxu0
        %v295 = vadd.f32 %v236, %v294
        %296 = vmatmul.f32.gmra.mxu0 %v216
        %v297 = vpop.f32.mrf.mxu0
        %v298 = vadd.f32 %v236, %v297
        %299 = vmatmul.f32.gmra.mxu0 %v217
        %v300 = vpop.f32.mrf.mxu0
        %v301 = vadd.f32 %v236, %v300
        %302 = vdwg.mxu0
        %v319 = vrot.slane %v256, 1
        %v320 = vrot.slane %v256, 2
        %v321 = vrot.slane %v256, 3
        %v322 = vrot.slane %v256, 4
        %v323 = vrot.slane %v256, 5
        %v324 = vrot.slane %v256, 6
        %v325 = vrot.slane %v256, 7
        %v326 = vrot.slane %v259, 1
        %v327 = vrot.slane %v259, 2
        %v328 = vrot.slane %v259, 3
        %v329 = vrot.slane %v259, 4
        %v330 = vrot.slane %v259, 5
        %v331 = vrot.slane %v259, 6
        %v332 = vrot.slane %v259, 7
        %v333 = vrot.slane %v262, 1
        %v334 = vrot.slane %v262, 2
        %v335 = vrot.slane %v262, 3
        %v336 = vrot.slane %v262, 4
        %v337 = vrot.slane %v262, 5
        %v338 = vrot.slane %v262, 6
        %v339 = vrot.slane %v262, 7
        %v340 = vrot.slane %v265, 1
        %v341 = vrot.slane %v265, 2
        %v342 = vrot.slane %v265, 3
        %v343 = vrot.slane %v265, 4
        %v344 = vrot.slane %v265, 5
        %v345 = vrot.slane %v265, 6
        %v346 = vrot.slane %v265, 7
        %v347 = vrot.slane %v268, 1
        %v348 = vrot.slane %v268, 2
        %v349 = vrot.slane %v268, 3
        %v350 = vrot.slane %v268, 4
        %v351 = vrot.slane %v268, 5
        %v352 = vrot.slane %v268, 6
        %v353 = vrot.slane %v268, 7
        %v354 = vrot.slane %v271, 1
        %v355 = vrot.slane %v271, 2
        %v356 = vrot.slane %v271, 3
        %v357 = vrot.slane %v271, 4
        %v358 = vrot.slane %v271, 5
        %v359 = vrot.slane %v271, 6
        %v360 = vrot.slane %v271, 7
        %v361 = vrot.slane %v274, 1
        %v362 = vrot.slane %v274, 2
        %v363 = vrot.slane %v274, 3
        %v364 = vrot.slane %v274, 4
        %v365 = vrot.slane %v274, 5
        %v366 = vrot.slane %v274, 6
        %v367 = vrot.slane %v274, 7
        %v368 = vrot.slane %v277, 1
        %v369 = vrot.slane %v277, 2
        %v370 = vrot.slane %v277, 3
        %v371 = vrot.slane %v277, 4
        %v372 = vrot.slane %v277, 5
        %v373 = vrot.slane %v277, 6
        %v374 = vrot.slane %v277, 7
        %v375 = vrot.slane %v280, 1
        %v376 = vrot.slane %v280, 2
        %v377 = vrot.slane %v280, 3
        %v378 = vrot.slane %v280, 4
        %v379 = vrot.slane %v280, 5
        %v380 = vrot.slane %v280, 6
        %v381 = vrot.slane %v280, 7
        %v382 = vrot.slane %v283, 1
        %v383 = vrot.slane %v283, 2
        %v384 = vrot.slane %v283, 3
        %v385 = vrot.slane %v283, 4
        %v386 = vrot.slane %v283, 5
        %v387 = vrot.slane %v283, 6
        %v388 = vrot.slane %v283, 7
        %v389 = vrot.slane %v286, 1
        %v390 = vrot.slane %v286, 2
        %v391 = vrot.slane %v286, 3
        %v392 = vrot.slane %v286, 4
        %v393 = vrot.slane %v286, 5
        %v394 = vrot.slane %v286, 6
        %v395 = vrot.slane %v286, 7
        %v396 = vrot.slane %v289, 1
        %v397 = vrot.slane %v289, 2
        %v398 = vrot.slane %v289, 3
        %v399 = vrot.slane %v289, 4
        %v400 = vrot.slane %v289, 5
        %v401 = vrot.slane %v289, 6
        %v402 = vrot.slane %v289, 7
        %v403 = vrot.slane %v292, 1
        %v404 = vrot.slane %v292, 2
        %v405 = vrot.slane %v292, 3
        %v406 = vrot.slane %v292, 4
        %v407 = vrot.slane %v292, 5
        %v408 = vrot.slane %v292, 6
        %v409 = vrot.slane %v292, 7
        %v410 = vrot.slane %v295, 1
        %v411 = vrot.slane %v295, 2
        %v412 = vrot.slane %v295, 3
        %v413 = vrot.slane %v295, 4
        %v414 = vrot.slane %v295, 5
        %v415 = vrot.slane %v295, 6
        %v416 = vrot.slane %v295, 7
        %v417 = vrot.slane %v298, 1
        %v418 = vrot.slane %v298, 2
        %v419 = vrot.slane %v298, 3
        %v420 = vrot.slane %v298, 4
        %v421 = vrot.slane %v298, 5
        %v422 = vrot.slane %v298, 6
        %v423 = vrot.slane %v298, 7
        %v424 = vrot.slane %v301, 1
        %v425 = vrot.slane %v301, 2
        %v426 = vrot.slane %v301, 3
        %v427 = vrot.slane %v301, 4
        %v428 = vrot.slane %v301, 5
        %v429 = vrot.slane %v301, 6
        %v430 = vrot.slane %v301, 7
        %543 = vst [vmem:[%s189] sm:$0x1] %v256
        %544 = vst [vmem:[%s189 + $0x2] sm:$0x1] %v319
        %545 = vst [vmem:[%s189 + $0x4] sm:$0x1] %v320
        %546 = vst [vmem:[%s189 + $0x6] sm:$0x1] %v321
        %547 = vst [vmem:[%s189 + $0x8] sm:$0x1] %v322
        %548 = vst [vmem:[%s189 + $0xa] sm:$0x1] %v323
        %549 = vst [vmem:[%s189 + $0xc] sm:$0x1] %v324
        %550 = vst [vmem:[%s189 + $0xe] sm:$0x1] %v325
        %551 = vst [vmem:[%s189 + $0x10] sm:$0x1] %v259
        %552 = vst [vmem:[%s189 + $0x12] sm:$0x1] %v326
        %553 = vst [vmem:[%s189 + $0x14] sm:$0x1] %v327
        %554 = vst [vmem:[%s189 + $0x16] sm:$0x1] %v328
        %555 = vst [vmem:[%s189 + $0x18] sm:$0x1] %v329
        %556 = vst [vmem:[%s189 + $0x1a] sm:$0x1] %v330
        %557 = vst [vmem:[%s189 + $0x1c] sm:$0x1] %v331
        %558 = vst [vmem:[%s189 + $0x1e] sm:$0x1] %v332
        %559 = vst [vmem:[%s189 + $0x20] sm:$0x1] %v262
        %560 = vst [vmem:[%s189 + $0x22] sm:$0x1] %v333
        %561 = vst [vmem:[%s189 + $0x24] sm:$0x1] %v334
        %562 = vst [vmem:[%s189 + $0x26] sm:$0x1] %v335
        %563 = vst [vmem:[%s189 + $0x28] sm:$0x1] %v336
        %564 = vst [vmem:[%s189 + $0x2a] sm:$0x1] %v337
        %565 = vst [vmem:[%s189 + $0x2c] sm:$0x1] %v338
        %566 = vst [vmem:[%s189 + $0x2e] sm:$0x1] %v339
        %567 = vst [vmem:[%s189 + $0x30] sm:$0x1] %v265
        %568 = vst [vmem:[%s189 + $0x32] sm:$0x1] %v340
        %569 = vst [vmem:[%s189 + $0x34] sm:$0x1] %v341
        %570 = vst [vmem:[%s189 + $0x36] sm:$0x1] %v342
        %571 = vst [vmem:[%s189 + $0x38] sm:$0x1] %v343
        %572 = vst [vmem:[%s189 + $0x3a] sm:$0x1] %v344
        %573 = vst [vmem:[%s189 + $0x3c] sm:$0x1] %v345
        %574 = vst [vmem:[%s189 + $0x3e] sm:$0x1] %v346
        %575 = vst [vmem:[%s189 + $0x40] sm:$0x1] %v268
        %576 = vst [vmem:[%s189 + $0x42] sm:$0x1] %v347
        %577 = vst [vmem:[%s189 + $0x44] sm:$0x1] %v348
        %578 = vst [vmem:[%s189 + $0x46] sm:$0x1] %v349
        %579 = vst [vmem:[%s189 + $0x48] sm:$0x1] %v350
        %580 = vst [vmem:[%s189 + $0x4a] sm:$0x1] %v351
        %581 = vst [vmem:[%s189 + $0x4c] sm:$0x1] %v352
        %582 = vst [vmem:[%s189 + $0x4e] sm:$0x1] %v353
        %583 = vst [vmem:[%s189 + $0x50] sm:$0x1] %v271
        %584 = vst [vmem:[%s189 + $0x52] sm:$0x1] %v354
        %585 = vst [vmem:[%s189 + $0x54] sm:$0x1] %v355
        %586 = vst [vmem:[%s189 + $0x56] sm:$0x1] %v356
        %587 = vst [vmem:[%s189 + $0x58] sm:$0x1] %v357
        %588 = vst [vmem:[%s189 + $0x5a] sm:$0x1] %v358
        %589 = vst [vmem:[%s189 + $0x5c] sm:$0x1] %v359
        %590 = vst [vmem:[%s189 + $0x5e] sm:$0x1] %v360
        %591 = vst [vmem:[%s189 + $0x60] sm:$0x1] %v274
        %592 = vst [vmem:[%s189 + $0x62] sm:$0x1] %v361
        %593 = vst [vmem:[%s189 + $0x64] sm:$0x1] %v362
        %594 = vst [vmem:[%s189 + $0x66] sm:$0x1] %v363
        %595 = vst [vmem:[%s189 + $0x68] sm:$0x1] %v364
        %596 = vst [vmem:[%s189 + $0x6a] sm:$0x1] %v365
        %597 = vst [vmem:[%s189 + $0x6c] sm:$0x1] %v366
        %598 = vst [vmem:[%s189 + $0x6e] sm:$0x1] %v367
        %599 = vst [vmem:[%s189 + $0x70] sm:$0x1] %v277
        %600 = vst [vmem:[%s189 + $0x72] sm:$0x1] %v368
        %601 = vst [vmem:[%s189 + $0x74] sm:$0x1] %v369
        %602 = vst [vmem:[%s189 + $0x76] sm:$0x1] %v370
        %603 = vst [vmem:[%s189 + $0x78] sm:$0x1] %v371
        %604 = vst [vmem:[%s189 + $0x7a] sm:$0x1] %v372
        %605 = vst [vmem:[%s189 + $0x7c] sm:$0x1] %v373
        %606 = vst [vmem:[%s189 + $0x7e] sm:$0x1] %v374
        %607 = vst [vmem:[%s189 + $0x80] sm:$0x1] %v280
        %608 = vst [vmem:[%s189 + $0x82] sm:$0x1] %v375
        %609 = vst [vmem:[%s189 + $0x84] sm:$0x1] %v376
        %610 = vst [vmem:[%s189 + $0x86] sm:$0x1] %v377
        %611 = vst [vmem:[%s189 + $0x88] sm:$0x1] %v378
        %612 = vst [vmem:[%s189 + $0x8a] sm:$0x1] %v379
        %613 = vst [vmem:[%s189 + $0x8c] sm:$0x1] %v380
        %614 = vst [vmem:[%s189 + $0x8e] sm:$0x1] %v381
        %615 = vst [vmem:[%s189 + $0x90] sm:$0x1] %v283
        %616 = vst [vmem:[%s189 + $0x92] sm:$0x1] %v382
        %617 = vst [vmem:[%s189 + $0x94] sm:$0x1] %v383
        %618 = vst [vmem:[%s189 + $0x96] sm:$0x1] %v384
        %619 = vst [vmem:[%s189 + $0x98] sm:$0x1] %v385
        %620 = vst [vmem:[%s189 + $0x9a] sm:$0x1] %v386
        %621 = vst [vmem:[%s189 + $0x9c] sm:$0x1] %v387
        %622 = vst [vmem:[%s189 + $0x9e] sm:$0x1] %v388
        %623 = vst [vmem:[%s189 + $0xa0] sm:$0x1] %v286
        %624 = vst [vmem:[%s189 + $0xa2] sm:$0x1] %v389
        %625 = vst [vmem:[%s189 + $0xa4] sm:$0x1] %v390
        %626 = vst [vmem:[%s189 + $0xa6] sm:$0x1] %v391
        %627 = vst [vmem:[%s189 + $0xa8] sm:$0x1] %v392
        %628 = vst [vmem:[%s189 + $0xaa] sm:$0x1] %v393
        %629 = vst [vmem:[%s189 + $0xac] sm:$0x1] %v394
        %630 = vst [vmem:[%s189 + $0xae] sm:$0x1] %v395
        %631 = vst [vmem:[%s189 + $0xb0] sm:$0x1] %v289
        %632 = vst [vmem:[%s189 + $0xb2] sm:$0x1] %v396
        %633 = vst [vmem:[%s189 + $0xb4] sm:$0x1] %v397
        %634 = vst [vmem:[%s189 + $0xb6] sm:$0x1] %v398
        %635 = vst [vmem:[%s189 + $0xb8] sm:$0x1] %v399
        %636 = vst [vmem:[%s189 + $0xba] sm:$0x1] %v400
        %637 = vst [vmem:[%s189 + $0xbc] sm:$0x1] %v401
        %638 = vst [vmem:[%s189 + $0xbe] sm:$0x1] %v402
        %639 = vst [vmem:[%s189 + $0xc0] sm:$0x1] %v292
        %640 = vst [vmem:[%s189 + $0xc2] sm:$0x1] %v403
        %641 = vst [vmem:[%s189 + $0xc4] sm:$0x1] %v404
        %642 = vst [vmem:[%s189 + $0xc6] sm:$0x1] %v405
        %643 = vst [vmem:[%s189 + $0xc8] sm:$0x1] %v406
        %644 = vst [vmem:[%s189 + $0xca] sm:$0x1] %v407
        %645 = vst [vmem:[%s189 + $0xcc] sm:$0x1] %v408
        %646 = vst [vmem:[%s189 + $0xce] sm:$0x1] %v409
        %647 = vst [vmem:[%s189 + $0xd0] sm:$0x1] %v295
        %648 = vst [vmem:[%s189 + $0xd2] sm:$0x1] %v410
        %649 = vst [vmem:[%s189 + $0xd4] sm:$0x1] %v411
        %650 = vst [vmem:[%s189 + $0xd6] sm:$0x1] %v412
        %651 = vst [vmem:[%s189 + $0xd8] sm:$0x1] %v413
        %652 = vst [vmem:[%s189 + $0xda] sm:$0x1] %v414
        %653 = vst [vmem:[%s189 + $0xdc] sm:$0x1] %v415
        %654 = vst [vmem:[%s189 + $0xde] sm:$0x1] %v416
        %655 = vst [vmem:[%s189 + $0xe0] sm:$0x1] %v298
        %656 = vst [vmem:[%s189 + $0xe2] sm:$0x1] %v417
        %657 = vst [vmem:[%s189 + $0xe4] sm:$0x1] %v418
        %658 = vst [vmem:[%s189 + $0xe6] sm:$0x1] %v419
        %659 = vst [vmem:[%s189 + $0xe8] sm:$0x1] %v420
        %660 = vst [vmem:[%s189 + $0xea] sm:$0x1] %v421
        %661 = vst [vmem:[%s189 + $0xec] sm:$0x1] %v422
        %662 = vst [vmem:[%s189 + $0xee] sm:$0x1] %v423
        %663 = vst [vmem:[%s189 + $0xf0] sm:$0x1] %v301
        %664 = vst [vmem:[%s189 + $0xf2] sm:$0x1] %v424
        %665 = vst [vmem:[%s189 + $0xf4] sm:$0x1] %v425
        %666 = vst [vmem:[%s189 + $0xf6] sm:$0x1] %v426
        %667 = vst [vmem:[%s189 + $0xf8] sm:$0x1] %v427
        %668 = vst [vmem:[%s189 + $0xfa] sm:$0x1] %v428
        %669 = vst [vmem:[%s189 + $0xfc] sm:$0x1] %v429
        %670 = vst [vmem:[%s189 + $0xfe] sm:$0x1] %v430
        %s671 = scalar_lea.vmem %s200, 128
        %v672 = vld [vmem:[%s671] sm:$0xff]
        %v673 = vld [vmem:[%s671 + $0x8] sm:$0xff]
        %v674 = vld [vmem:[%s671 + $0x10] sm:$0xff]
        %v675 = vld [vmem:[%s671 + $0x18] sm:$0xff]
        %v676 = vld [vmem:[%s671 + $0x20] sm:$0xff]
        %v677 = vld [vmem:[%s671 + $0x28] sm:$0xff]
        %v678 = vld [vmem:[%s671 + $0x30] sm:$0xff]
        %v679 = vld [vmem:[%s671 + $0x38] sm:$0xff]
        %v680 = vld [vmem:[%s671 + $0x40] sm:$0xff]
        %v681 = vld [vmem:[%s671 + $0x48] sm:$0xff]
        %v682 = vld [vmem:[%s671 + $0x50] sm:$0xff]
        %v683 = vld [vmem:[%s671 + $0x58] sm:$0xff]
        %v684 = vld [vmem:[%s671 + $0x60] sm:$0xff]
        %v685 = vld [vmem:[%s671 + $0x68] sm:$0xff]
        %v686 = vld [vmem:[%s671 + $0x70] sm:$0xff]
        %v687 = vld [vmem:[%s671 + $0x78] sm:$0xff]
        %688 = vmatpush.msra.mxu0 %v687
        %689 = vmatpush.msra.mxu0 %v686
        %690 = vmatpush.msra.mxu0 %v685
        %691 = vmatpush.msra.mxu0 %v684
        %692 = vmatpush.msra.mxu0 %v683
        %693 = vmatpush.msra.mxu0 %v682
        %694 = vmatpush.msra.mxu0 %v681
        %695 = vmatpush.msra.mxu0 %v680
        %696 = vmatpush.msra.mxu0 %v679
        %697 = vmatpush.msra.mxu0 %v678
        %698 = vmatpush.msra.mxu0 %v677
        %699 = vmatpush.msra.mxu0 %v676
        %700 = vmatpush.msra.mxu0 %v675
        %701 = vmatpush.msra.mxu0 %v674
        %702 = vmatpush.msra.mxu0 %v673
        %703 = vmatpush.msra.mxu0 %v672
        %704 = vmatmul.f32.gmra.mxu0 %v202
        %v705 = vpop.f32.mrf.mxu0
        %v706 = vadd.f32 %v236, %v705
        %707 = vmatmul.f32.gmra.mxu0 %v203
        %v708 = vpop.f32.mrf.mxu0
        %v709 = vadd.f32 %v236, %v708
        %710 = vmatmul.f32.gmra.mxu0 %v204
        %v711 = vpop.f32.mrf.mxu0
        %v712 = vadd.f32 %v236, %v711
        %713 = vmatmul.f32.gmra.mxu0 %v205
        %v714 = vpop.f32.mrf.mxu0
        %v715 = vadd.f32 %v236, %v714
        %716 = vmatmul.f32.gmra.mxu0 %v206
        %v717 = vpop.f32.mrf.mxu0
        %v718 = vadd.f32 %v236, %v717
        %719 = vmatmul.f32.gmra.mxu0 %v207
        %v720 = vpop.f32.mrf.mxu0
        %v721 = vadd.f32 %v236, %v720
        %722 = vmatmul.f32.gmra.mxu0 %v208
        %v723 = vpop.f32.mrf.mxu0
        %v724 = vadd.f32 %v236, %v723
        %725 = vmatmul.f32.gmra.mxu0 %v209
        %v726 = vpop.f32.mrf.mxu0
        %v727 = vadd.f32 %v236, %v726
        %728 = vmatmul.f32.gmra.mxu0 %v210
        %v729 = vpop.f32.mrf.mxu0
        %v730 = vadd.f32 %v236, %v729
        %731 = vmatmul.f32.gmra.mxu0 %v211
        %v732 = vpop.f32.mrf.mxu0
        %v733 = vadd.f32 %v236, %v732
        %734 = vmatmul.f32.gmra.mxu0 %v212
        %v735 = vpop.f32.mrf.mxu0
        %v736 = vadd.f32 %v236, %v735
        %737 = vmatmul.f32.gmra.mxu0 %v213
        %v738 = vpop.f32.mrf.mxu0
        %v739 = vadd.f32 %v236, %v738
        %740 = vmatmul.f32.gmra.mxu0 %v214
        %v741 = vpop.f32.mrf.mxu0
        %v742 = vadd.f32 %v236, %v741
        %743 = vmatmul.f32.gmra.mxu0 %v215
        %v744 = vpop.f32.mrf.mxu0
        %v745 = vadd.f32 %v236, %v744
        %746 = vmatmul.f32.gmra.mxu0 %v216
        %v747 = vpop.f32.mrf.mxu0
        %v748 = vadd.f32 %v236, %v747
        %749 = vmatmul.f32.gmra.mxu0 %v217
        %v750 = vpop.f32.mrf.mxu0
        %v751 = vadd.f32 %v236, %v750
        %752 = vdwg.mxu0
        %v769 = vrot.slane %v706, 1
        %v770 = vrot.slane %v706, 2
        %v771 = vrot.slane %v706, 3
        %v772 = vrot.slane %v706, 4
        %v773 = vrot.slane %v706, 5
        %v774 = vrot.slane %v706, 6
        %v775 = vrot.slane %v706, 7
        %v776 = vrot.slane %v709, 1
        %v777 = vrot.slane %v709, 2
        %v778 = vrot.slane %v709, 3
        %v779 = vrot.slane %v709, 4
        %v780 = vrot.slane %v709, 5
        %v781 = vrot.slane %v709, 6
        %v782 = vrot.slane %v709, 7
        %v783 = vrot.slane %v712, 1
        %v784 = vrot.slane %v712, 2
        %v785 = vrot.slane %v712, 3
        %v786 = vrot.slane %v712, 4
        %v787 = vrot.slane %v712, 5
        %v788 = vrot.slane %v712, 6
        %v789 = vrot.slane %v712, 7
        %v790 = vrot.slane %v715, 1
        %v791 = vrot.slane %v715, 2
        %v792 = vrot.slane %v715, 3
        %v793 = vrot.slane %v715, 4
        %v794 = vrot.slane %v715, 5
        %v795 = vrot.slane %v715, 6
        %v796 = vrot.slane %v715, 7
        %v797 = vrot.slane %v718, 1
        %v798 = vrot.slane %v718, 2
        %v799 = vrot.slane %v718, 3
        %v800 = vrot.slane %v718, 4
        %v801 = vrot.slane %v718, 5
        %v802 = vrot.slane %v718, 6
        %v803 = vrot.slane %v718, 7
        %v804 = vrot.slane %v721, 1
        %v805 = vrot.slane %v721, 2
        %v806 = vrot.slane %v721, 3
        %v807 = vrot.slane %v721, 4
        %v808 = vrot.slane %v721, 5
        %v809 = vrot.slane %v721, 6
        %v810 = vrot.slane %v721, 7
        %v811 = vrot.slane %v724, 1
        %v812 = vrot.slane %v724, 2
        %v813 = vrot.slane %v724, 3
        %v814 = vrot.slane %v724, 4
        %v815 = vrot.slane %v724, 5
        %v816 = vrot.slane %v724, 6
        %v817 = vrot.slane %v724, 7
        %v818 = vrot.slane %v727, 1
        %v819 = vrot.slane %v727, 2
        %v820 = vrot.slane %v727, 3
        %v821 = vrot.slane %v727, 4
        %v822 = vrot.slane %v727, 5
        %v823 = vrot.slane %v727, 6
        %v824 = vrot.slane %v727, 7
        %v825 = vrot.slane %v730, 1
        %v826 = vrot.slane %v730, 2
        %v827 = vrot.slane %v730, 3
        %v828 = vrot.slane %v730, 4
        %v829 = vrot.slane %v730, 5
        %v830 = vrot.slane %v730, 6
        %v831 = vrot.slane %v730, 7
        %v832 = vrot.slane %v733, 1
        %v833 = vrot.slane %v733, 2
        %v834 = vrot.slane %v733, 3
        %v835 = vrot.slane %v733, 4
        %v836 = vrot.slane %v733, 5
        %v837 = vrot.slane %v733, 6
        %v838 = vrot.slane %v733, 7
        %v839 = vrot.slane %v736, 1
        %v840 = vrot.slane %v736, 2
        %v841 = vrot.slane %v736, 3
        %v842 = vrot.slane %v736, 4
        %v843 = vrot.slane %v736, 5
        %v844 = vrot.slane %v736, 6
        %v845 = vrot.slane %v736, 7
        %v846 = vrot.slane %v739, 1
        %v847 = vrot.slane %v739, 2
        %v848 = vrot.slane %v739, 3
        %v849 = vrot.slane %v739, 4
        %v850 = vrot.slane %v739, 5
        %v851 = vrot.slane %v739, 6
        %v852 = vrot.slane %v739, 7
        %v853 = vrot.slane %v742, 1
        %v854 = vrot.slane %v742, 2
        %v855 = vrot.slane %v742, 3
        %v856 = vrot.slane %v742, 4
        %v857 = vrot.slane %v742, 5
        %v858 = vrot.slane %v742, 6
        %v859 = vrot.slane %v742, 7
        %v860 = vrot.slane %v745, 1
        %v861 = vrot.slane %v745, 2
        %v862 = vrot.slane %v745, 3
        %v863 = vrot.slane %v745, 4
        %v864 = vrot.slane %v745, 5
        %v865 = vrot.slane %v745, 6
        %v866 = vrot.slane %v745, 7
        %v867 = vrot.slane %v748, 1
        %v868 = vrot.slane %v748, 2
        %v869 = vrot.slane %v748, 3
        %v870 = vrot.slane %v748, 4
        %v871 = vrot.slane %v748, 5
        %v872 = vrot.slane %v748, 6
        %v873 = vrot.slane %v748, 7
        %v874 = vrot.slane %v751, 1
        %v875 = vrot.slane %v751, 2
        %v876 = vrot.slane %v751, 3
        %v877 = vrot.slane %v751, 4
        %v878 = vrot.slane %v751, 5
        %v879 = vrot.slane %v751, 6
        %v880 = vrot.slane %v751, 7
        %993 = vst [vmem:[%s189 + $0x1] sm:$0x1] %v706
        %994 = vst [vmem:[%s189 + $0x3] sm:$0x1] %v769
        %995 = vst [vmem:[%s189 + $0x5] sm:$0x1] %v770
        %996 = vst [vmem:[%s189 + $0x7] sm:$0x1] %v771
        %997 = vst [vmem:[%s189 + $0x9] sm:$0x1] %v772
        %998 = vst [vmem:[%s189 + $0xb] sm:$0x1] %v773
        %999 = vst [vmem:[%s189 + $0xd] sm:$0x1] %v774
        %1000 = vst [vmem:[%s189 + $0xf] sm:$0x1] %v775
        %1001 = vst [vmem:[%s189 + $0x11] sm:$0x1] %v709
        %1002 = vst [vmem:[%s189 + $0x13] sm:$0x1] %v776
        %1003 = vst [vmem:[%s189 + $0x15] sm:$0x1] %v777
        %1004 = vst [vmem:[%s189 + $0x17] sm:$0x1] %v778
        %1005 = vst [vmem:[%s189 + $0x19] sm:$0x1] %v779
        %1006 = vst [vmem:[%s189 + $0x1b] sm:$0x1] %v780
        %1007 = vst [vmem:[%s189 + $0x1d] sm:$0x1] %v781
        %1008 = vst [vmem:[%s189 + $0x1f] sm:$0x1] %v782
        %1009 = vst [vmem:[%s189 + $0x21] sm:$0x1] %v712
        %1010 = vst [vmem:[%s189 + $0x23] sm:$0x1] %v783
        %1011 = vst [vmem:[%s189 + $0x25] sm:$0x1] %v784
        %1012 = vst [vmem:[%s189 + $0x27] sm:$0x1] %v785
        %1013 = vst [vmem:[%s189 + $0x29] sm:$0x1] %v786
        %1014 = vst [vmem:[%s189 + $0x2b] sm:$0x1] %v787
        %1015 = vst [vmem:[%s189 + $0x2d] sm:$0x1] %v788
        %1016 = vst [vmem:[%s189 + $0x2f] sm:$0x1] %v789
        %1017 = vst [vmem:[%s189 + $0x31] sm:$0x1] %v715
        %1018 = vst [vmem:[%s189 + $0x33] sm:$0x1] %v790
        %1019 = vst [vmem:[%s189 + $0x35] sm:$0x1] %v791
        %1020 = vst [vmem:[%s189 + $0x37] sm:$0x1] %v792
        %1021 = vst [vmem:[%s189 + $0x39] sm:$0x1] %v793
        %1022 = vst [vmem:[%s189 + $0x3b] sm:$0x1] %v794
        %1023 = vst [vmem:[%s189 + $0x3d] sm:$0x1] %v795
        %1024 = vst [vmem:[%s189 + $0x3f] sm:$0x1] %v796
        %1025 = vst [vmem:[%s189 + $0x41] sm:$0x1] %v718
        %1026 = vst [vmem:[%s189 + $0x43] sm:$0x1] %v797
        %1027 = vst [vmem:[%s189 + $0x45] sm:$0x1] %v798
        %1028 = vst [vmem:[%s189 + $0x47] sm:$0x1] %v799
        %1029 = vst [vmem:[%s189 + $0x49] sm:$0x1] %v800
        %1030 = vst [vmem:[%s189 + $0x4b] sm:$0x1] %v801
        %1031 = vst [vmem:[%s189 + $0x4d] sm:$0x1] %v802
        %1032 = vst [vmem:[%s189 + $0x4f] sm:$0x1] %v803
        %1033 = vst [vmem:[%s189 + $0x51] sm:$0x1] %v721
        %1034 = vst [vmem:[%s189 + $0x53] sm:$0x1] %v804
        %1035 = vst [vmem:[%s189 + $0x55] sm:$0x1] %v805
        %1036 = vst [vmem:[%s189 + $0x57] sm:$0x1] %v806
        %1037 = vst [vmem:[%s189 + $0x59] sm:$0x1] %v807
        %1038 = vst [vmem:[%s189 + $0x5b] sm:$0x1] %v808
        %1039 = vst [vmem:[%s189 + $0x5d] sm:$0x1] %v809
        %1040 = vst [vmem:[%s189 + $0x5f] sm:$0x1] %v810
        %1041 = vst [vmem:[%s189 + $0x61] sm:$0x1] %v724
        %1042 = vst [vmem:[%s189 + $0x63] sm:$0x1] %v811
        %1043 = vst [vmem:[%s189 + $0x65] sm:$0x1] %v812
        %1044 = vst [vmem:[%s189 + $0x67] sm:$0x1] %v813
        %1045 = vst [vmem:[%s189 + $0x69] sm:$0x1] %v814
        %1046 = vst [vmem:[%s189 + $0x6b] sm:$0x1] %v815
        %1047 = vst [vmem:[%s189 + $0x6d] sm:$0x1] %v816
        %1048 = vst [vmem:[%s189 + $0x6f] sm:$0x1] %v817
        %1049 = vst [vmem:[%s189 + $0x71] sm:$0x1] %v727
        %1050 = vst [vmem:[%s189 + $0x73] sm:$0x1] %v818
        %1051 = vst [vmem:[%s189 + $0x75] sm:$0x1] %v819
        %1052 = vst [vmem:[%s189 + $0x77] sm:$0x1] %v820
        %1053 = vst [vmem:[%s189 + $0x79] sm:$0x1] %v821
        %1054 = vst [vmem:[%s189 + $0x7b] sm:$0x1] %v822
        %1055 = vst [vmem:[%s189 + $0x7d] sm:$0x1] %v823
        %1056 = vst [vmem:[%s189 + $0x7f] sm:$0x1] %v824
        %1057 = vst [vmem:[%s189 + $0x81] sm:$0x1] %v730
        %1058 = vst [vmem:[%s189 + $0x83] sm:$0x1] %v825
        %1059 = vst [vmem:[%s189 + $0x85] sm:$0x1] %v826
        %1060 = vst [vmem:[%s189 + $0x87] sm:$0x1] %v827
        %1061 = vst [vmem:[%s189 + $0x89] sm:$0x1] %v828
        %1062 = vst [vmem:[%s189 + $0x8b] sm:$0x1] %v829
        %1063 = vst [vmem:[%s189 + $0x8d] sm:$0x1] %v830
        %1064 = vst [vmem:[%s189 + $0x8f] sm:$0x1] %v831
        %1065 = vst [vmem:[%s189 + $0x91] sm:$0x1] %v733
        %1066 = vst [vmem:[%s189 + $0x93] sm:$0x1] %v832
        %1067 = vst [vmem:[%s189 + $0x95] sm:$0x1] %v833
        %1068 = vst [vmem:[%s189 + $0x97] sm:$0x1] %v834
        %1069 = vst [vmem:[%s189 + $0x99] sm:$0x1] %v835
        %1070 = vst [vmem:[%s189 + $0x9b] sm:$0x1] %v836
        %1071 = vst [vmem:[%s189 + $0x9d] sm:$0x1] %v837
        %1072 = vst [vmem:[%s189 + $0x9f] sm:$0x1] %v838
        %1073 = vst [vmem:[%s189 + $0xa1] sm:$0x1] %v736
        %1074 = vst [vmem:[%s189 + $0xa3] sm:$0x1] %v839
        %1075 = vst [vmem:[%s189 + $0xa5] sm:$0x1] %v840
        %1076 = vst [vmem:[%s189 + $0xa7] sm:$0x1] %v841
        %1077 = vst [vmem:[%s189 + $0xa9] sm:$0x1] %v842
        %1078 = vst [vmem:[%s189 + $0xab] sm:$0x1] %v843
        %1079 = vst [vmem:[%s189 + $0xad] sm:$0x1] %v844
        %1080 = vst [vmem:[%s189 + $0xaf] sm:$0x1] %v845
        %1081 = vst [vmem:[%s189 + $0xb1] sm:$0x1] %v739
        %1082 = vst [vmem:[%s189 + $0xb3] sm:$0x1] %v846
        %1083 = vst [vmem:[%s189 + $0xb5] sm:$0x1] %v847
        %1084 = vst [vmem:[%s189 + $0xb7] sm:$0x1] %v848
        %1085 = vst [vmem:[%s189 + $0xb9] sm:$0x1] %v849
        %1086 = vst [vmem:[%s189 + $0xbb] sm:$0x1] %v850
        %1087 = vst [vmem:[%s189 + $0xbd] sm:$0x1] %v851
        %1088 = vst [vmem:[%s189 + $0xbf] sm:$0x1] %v852
        %1089 = vst [vmem:[%s189 + $0xc1] sm:$0x1] %v742
        %1090 = vst [vmem:[%s189 + $0xc3] sm:$0x1] %v853
        %1091 = vst [vmem:[%s189 + $0xc5] sm:$0x1] %v854
        %1092 = vst [vmem:[%s189 + $0xc7] sm:$0x1] %v855
        %1093 = vst [vmem:[%s189 + $0xc9] sm:$0x1] %v856
        %1094 = vst [vmem:[%s189 + $0xcb] sm:$0x1] %v857
        %1095 = vst [vmem:[%s189 + $0xcd] sm:$0x1] %v858
        %1096 = vst [vmem:[%s189 + $0xcf] sm:$0x1] %v859
        %1097 = vst [vmem:[%s189 + $0xd1] sm:$0x1] %v745
        %1098 = vst [vmem:[%s189 + $0xd3] sm:$0x1] %v860
        %1099 = vst [vmem:[%s189 + $0xd5] sm:$0x1] %v861
        %1100 = vst [vmem:[%s189 + $0xd7] sm:$0x1] %v862
        %1101 = vst [vmem:[%s189 + $0xd9] sm:$0x1] %v863
        %1102 = vst [vmem:[%s189 + $0xdb] sm:$0x1] %v864
        %1103 = vst [vmem:[%s189 + $0xdd] sm:$0x1] %v865
        %1104 = vst [vmem:[%s189 + $0xdf] sm:$0x1] %v866
        %1105 = vst [vmem:[%s189 + $0xe1] sm:$0x1] %v748
        %1106 = vst [vmem:[%s189 + $0xe3] sm:$0x1] %v867
        %1107 = vst [vmem:[%s189 + $0xe5] sm:$0x1] %v868
        %1108 = vst [vmem:[%s189 + $0xe7] sm:$0x1] %v869
        %1109 = vst [vmem:[%s189 + $0xe9] sm:$0x1] %v870
        %1110 = vst [vmem:[%s189 + $0xeb] sm:$0x1] %v871
        %1111 = vst [vmem:[%s189 + $0xed] sm:$0x1] %v872
        %1112 = vst [vmem:[%s189 + $0xef] sm:$0x1] %v873
        %1113 = vst [vmem:[%s189 + $0xf1] sm:$0x1] %v751
        %1114 = vst [vmem:[%s189 + $0xf3] sm:$0x1] %v874
        %1115 = vst [vmem:[%s189 + $0xf5] sm:$0x1] %v875
        %1116 = vst [vmem:[%s189 + $0xf7] sm:$0x1] %v876
        %1117 = vst [vmem:[%s189 + $0xf9] sm:$0x1] %v877
        %1118 = vst [vmem:[%s189 + $0xfb] sm:$0x1] %v878
        %1119 = vst [vmem:[%s189 + $0xfd] sm:$0x1] %v879
        %1120 = vst [vmem:[%s189 + $0xff] sm:$0x1] %v880
        %s1121 = sand.u32 %s109, 1
        %s1122 = sand.u32 %s109, 1
        %s1123 = smul.addr %s1122, 256
        %s1124 = scalar_lea.vmem [#allocation2], %s1123
        // Predicated region
        $region33: #{up_forward.5} parent=31 // pred_check
          %p1125 = pneg %p119
        $region34: #{up_forward.5} parent=31 // pred_check_branch
          %1127 = sbr.rel (%p1125) target = $region36
        $region35: #{up_forward.5} parent=31 // pred_region
          %s1128 = smul.u32 16, %s18
          %s1129 = smul.addr %s19, 8
          %s1130 = smul.addr %s1128, 16
          %s1131 = sadd.s32 %s1129, %s1130
          %s1132 = smul.addr %s1131, 2
          %s1133 = scalar_lea.vmem %s3, %s1132
          // Predicated region
          $region37: #{up_forward.5} parent=35 // pred_check
            _
          $region38: #{up_forward.5} parent=35 // pred_check_branch
            %1135 = sbr.rel (0) target = $region40
          $region39: #{up_forward.5} parent=35 // pred_region
            // Predicated region
            $region41: #{up_forward.5} parent=39 // pred_check
              _
            $region42: #{up_forward.5} parent=39 // pred_check_branch
              %1137 = sbr.rel target = $region44
            $region43: #{up_forward.5} parent=39 // pred_region
              // Predicated region
              $region56: #{up_forward.5} parent=43 // pred_check
                _
              $region57: #{up_forward.5} parent=43 // pred_check_branch
                %1407 = sbr.rel (0) target = $region59
              $region58: #{up_forward.5} parent=43 // pred_region
                loop: start=0, step=1, limit=1
                $region60: #{up_forward.5} parent=58 // loop_pre_header
                  _
                $region61: #{up_forward.5} parent=58 // loop_header
                  %s1409 = sphi 0, %s1413
                  %p1410 = scmp.ge.s32.totalorder %s1409, 1
                  %s1414 = sphi %s1124, %s1124
                  %s1415 = sphi %s1133, %s1133
                $region62: #{up_forward.5} parent=58 // loop_header_branch
                  %1412 = sbr.rel (%p1410) target = $region66
                $region63: #{up_forward.5} parent=58 // loop_body
                  _
                $region64: #{up_forward.5} parent=58 // loop_footer
                  %s1413 = sadd.s32 1, %s1409
                $region65: #{up_forward.5} parent=58 // loop_footer_branch
                  %1408 = sbr.rel target = $region61
                $region66: #{up_forward.5} parent=58 // loop_exit
                  _
                %s1417 = ssub.s32 4, 1
                loop: start=0, step=1, limit=1
                $region67: #{up_forward.5} parent=58 // loop_pre_header
                  _
                $region68: #{up_forward.5} parent=58 // loop_header
                  %s1419 = sphi 0, %s1423
                  %p1420 = scmp.ge.s32.totalorder %s1419, 1
                  %s1424 = sphi %s1124, %s1124
                  %s1425 = sphi %s1133, %s1133
                $region69: #{up_forward.5} parent=58 // loop_header_branch
                  %1422 = sbr.rel (%p1420) target = $region73
                $region70: #{up_forward.5} parent=58 // loop_body
                  %v1426 = vld [vmem:[%s1424] sm:%s1417]
                  %1427 = vst [vmem:[%s1425] sm:%s1417] %v1426
                  %v1428 = vld [vmem:[%s1424 + $0x2] sm:%s1417]
                  %1429 = vst [vmem:[%s1425 + $0x2] sm:%s1417] %v1428
                  %v1430 = vld [vmem:[%s1424 + $0x4] sm:%s1417]
                  %1431 = vst [vmem:[%s1425 + $0x4] sm:%s1417] %v1430
                  %v1432 = vld [vmem:[%s1424 + $0x6] sm:%s1417]
                  %1433 = vst [vmem:[%s1425 + $0x6] sm:%s1417] %v1432
                  %v1434 = vld [vmem:[%s1424 + $0x8] sm:%s1417]
                  %1435 = vst [vmem:[%s1425 + $0x8] sm:%s1417] %v1434
                  %v1436 = vld [vmem:[%s1424 + $0xa] sm:%s1417]
                  %1437 = vst [vmem:[%s1425 + $0xa] sm:%s1417] %v1436
                  %v1438 = vld [vmem:[%s1424 + $0xc] sm:%s1417]
                  %1439 = vst [vmem:[%s1425 + $0xc] sm:%s1417] %v1438
                  %v1440 = vld [vmem:[%s1424 + $0xe] sm:%s1417]
                  %1441 = vst [vmem:[%s1425 + $0xe] sm:%s1417] %v1440
                  %v1442 = vld [vmem:[%s1424 + $0x10] sm:%s1417]
                  %1443 = vst [vmem:[%s1425 + $0x20] sm:%s1417] %v1442
                  %v1444 = vld [vmem:[%s1424 + $0x12] sm:%s1417]
                  %1445 = vst [vmem:[%s1425 + $0x22] sm:%s1417] %v1444
                  %v1446 = vld [vmem:[%s1424 + $0x14] sm:%s1417]
                  %1447 = vst [vmem:[%s1425 + $0x24] sm:%s1417] %v1446
                  %v1448 = vld [vmem:[%s1424 + $0x16] sm:%s1417]
                  %1449 = vst [vmem:[%s1425 + $0x26] sm:%s1417] %v1448
                  %v1450 = vld [vmem:[%s1424 + $0x18] sm:%s1417]
                  %1451 = vst [vmem:[%s1425 + $0x28] sm:%s1417] %v1450
                  %v1452 = vld [vmem:[%s1424 + $0x1a] sm:%s1417]
                  %1453 = vst [vmem:[%s1425 + $0x2a] sm:%s1417] %v1452
                  %v1454 = vld [vmem:[%s1424 + $0x1c] sm:%s1417]
                  %1455 = vst [vmem:[%s1425 + $0x2c] sm:%s1417] %v1454
                  %v1456 = vld [vmem:[%s1424 + $0x1e] sm:%s1417]
                  %1457 = vst [vmem:[%s1425 + $0x2e] sm:%s1417] %v1456
                  %v1458 = vld [vmem:[%s1424 + $0x20] sm:%s1417]
                  %1459 = vst [vmem:[%s1425 + $0x40] sm:%s1417] %v1458
                  %v1460 = vld [vmem:[%s1424 + $0x22] sm:%s1417]
                  %1461 = vst [vmem:[%s1425 + $0x42] sm:%s1417] %v1460
                  %v1462 = vld [vmem:[%s1424 + $0x24] sm:%s1417]
                  %1463 = vst [vmem:[%s1425 + $0x44] sm:%s1417] %v1462
                  %v1464 = vld [vmem:[%s1424 + $0x26] sm:%s1417]
                  %1465 = vst [vmem:[%s1425 + $0x46] sm:%s1417] %v1464
                  %v1466 = vld [vmem:[%s1424 + $0x28] sm:%s1417]
                  %1467 = vst [vmem:[%s1425 + $0x48] sm:%s1417] %v1466
                  %v1468 = vld [vmem:[%s1424 + $0x2a] sm:%s1417]
                  %1469 = vst [vmem:[%s1425 + $0x4a] sm:%s1417] %v1468
                  %v1470 = vld [vmem:[%s1424 + $0x2c] sm:%s1417]
                  %1471 = vst [vmem:[%s1425 + $0x4c] sm:%s1417] %v1470
                  %v1472 = vld [vmem:[%s1424 + $0x2e] sm:%s1417]
                  %1473 = vst [vmem:[%s1425 + $0x4e] sm:%s1417] %v1472
                  %v1474 = vld [vmem:[%s1424 + $0x30] sm:%s1417]
                  %1475 = vst [vmem:[%s1425 + $0x60] sm:%s1417] %v1474
                  %v1476 = vld [vmem:[%s1424 + $0x32] sm:%s1417]
                  %1477 = vst [vmem:[%s1425 + $0x62] sm:%s1417] %v1476
                  %v1478 = vld [vmem:[%s1424 + $0x34] sm:%s1417]
                  %1479 = vst [vmem:[%s1425 + $0x64] sm:%s1417] %v1478
                  %v1480 = vld [vmem:[%s1424 + $0x36] sm:%s1417]
                  %1481 = vst [vmem:[%s1425 + $0x66] sm:%s1417] %v1480
                  %v1482 = vld [vmem:[%s1424 + $0x38] sm:%s1417]
                  %1483 = vst [vmem:[%s1425 + $0x68] sm:%s1417] %v1482
                  %v1484 = vld [vmem:[%s1424 + $0x3a] sm:%s1417]
                  %1485 = vst [vmem:[%s1425 + $0x6a] sm:%s1417] %v1484
                  %v1486 = vld [vmem:[%s1424 + $0x3c] sm:%s1417]
                  %1487 = vst [vmem:[%s1425 + $0x6c] sm:%s1417] %v1486
                  %v1488 = vld [vmem:[%s1424 + $0x3e] sm:%s1417]
                  %1489 = vst [vmem:[%s1425 + $0x6e] sm:%s1417] %v1488
                  %v1490 = vld [vmem:[%s1424 + $0x40] sm:%s1417]
                  %1491 = vst [vmem:[%s1425 + $0x80] sm:%s1417] %v1490
                  %v1492 = vld [vmem:[%s1424 + $0x42] sm:%s1417]
                  %1493 = vst [vmem:[%s1425 + $0x82] sm:%s1417] %v1492
                  %v1494 = vld [vmem:[%s1424 + $0x44] sm:%s1417]
                  %1495 = vst [vmem:[%s1425 + $0x84] sm:%s1417] %v1494
                  %v1496 = vld [vmem:[%s1424 + $0x46] sm:%s1417]
                  %1497 = vst [vmem:[%s1425 + $0x86] sm:%s1417] %v1496
                  %v1498 = vld [vmem:[%s1424 + $0x48] sm:%s1417]
                  %1499 = vst [vmem:[%s1425 + $0x88] sm:%s1417] %v1498
                  %v1500 = vld [vmem:[%s1424 + $0x4a] sm:%s1417]
                  %1501 = vst [vmem:[%s1425 + $0x8a] sm:%s1417] %v1500
                  %v1502 = vld [vmem:[%s1424 + $0x4c] sm:%s1417]
                  %1503 = vst [vmem:[%s1425 + $0x8c] sm:%s1417] %v1502
                  %v1504 = vld [vmem:[%s1424 + $0x4e] sm:%s1417]
                  %1505 = vst [vmem:[%s1425 + $0x8e] sm:%s1417] %v1504
                  %v1506 = vld [vmem:[%s1424 + $0x50] sm:%s1417]
                  %1507 = vst [vmem:[%s1425 + $0xa0] sm:%s1417] %v1506
                  %v1508 = vld [vmem:[%s1424 + $0x52] sm:%s1417]
                  %1509 = vst [vmem:[%s1425 + $0xa2] sm:%s1417] %v1508
                  %v1510 = vld [vmem:[%s1424 + $0x54] sm:%s1417]
                  %1511 = vst [vmem:[%s1425 + $0xa4] sm:%s1417] %v1510
                  %v1512 = vld [vmem:[%s1424 + $0x56] sm:%s1417]
                  %1513 = vst [vmem:[%s1425 + $0xa6] sm:%s1417] %v1512
                  %v1514 = vld [vmem:[%s1424 + $0x58] sm:%s1417]
                  %1515 = vst [vmem:[%s1425 + $0xa8] sm:%s1417] %v1514
                  %v1516 = vld [vmem:[%s1424 + $0x5a] sm:%s1417]
                  %1517 = vst [vmem:[%s1425 + $0xaa] sm:%s1417] %v1516
                  %v1518 = vld [vmem:[%s1424 + $0x5c] sm:%s1417]
                  %1519 = vst [vmem:[%s1425 + $0xac] sm:%s1417] %v1518
                  %v1520 = vld [vmem:[%s1424 + $0x5e] sm:%s1417]
                  %1521 = vst [vmem:[%s1425 + $0xae] sm:%s1417] %v1520
                  %v1522 = vld [vmem:[%s1424 + $0x60] sm:%s1417]
                  %1523 = vst [vmem:[%s1425 + $0xc0] sm:%s1417] %v1522
                  %v1524 = vld [vmem:[%s1424 + $0x62] sm:%s1417]
                  %1525 = vst [vmem:[%s1425 + $0xc2] sm:%s1417] %v1524
                  %v1526 = vld [vmem:[%s1424 + $0x64] sm:%s1417]
                  %1527 = vst [vmem:[%s1425 + $0xc4] sm:%s1417] %v1526
                  %v1528 = vld [vmem:[%s1424 + $0x66] sm:%s1417]
                  %1529 = vst [vmem:[%s1425 + $0xc6] sm:%s1417] %v1528
                  %v1530 = vld [vmem:[%s1424 + $0x68] sm:%s1417]
                  %1531 = vst [vmem:[%s1425 + $0xc8] sm:%s1417] %v1530
                  %v1532 = vld [vmem:[%s1424 + $0x6a] sm:%s1417]
                  %1533 = vst [vmem:[%s1425 + $0xca] sm:%s1417] %v1532
                  %v1534 = vld [vmem:[%s1424 + $0x6c] sm:%s1417]
                  %1535 = vst [vmem:[%s1425 + $0xcc] sm:%s1417] %v1534
                  %v1536 = vld [vmem:[%s1424 + $0x6e] sm:%s1417]
                  %1537 = vst [vmem:[%s1425 + $0xce] sm:%s1417] %v1536
                  %v1538 = vld [vmem:[%s1424 + $0x70] sm:%s1417]
                  %1539 = vst [vmem:[%s1425 + $0xe0] sm:%s1417] %v1538
                  %v1540 = vld [vmem:[%s1424 + $0x72] sm:%s1417]
                  %1541 = vst [vmem:[%s1425 + $0xe2] sm:%s1417] %v1540
                  %v1542 = vld [vmem:[%s1424 + $0x74] sm:%s1417]
                  %1543 = vst [vmem:[%s1425 + $0xe4] sm:%s1417] %v1542
                  %v1544 = vld [vmem:[%s1424 + $0x76] sm:%s1417]
                  %1545 = vst [vmem:[%s1425 + $0xe6] sm:%s1417] %v1544
                  %v1546 = vld [vmem:[%s1424 + $0x78] sm:%s1417]
                  %1547 = vst [vmem:[%s1425 + $0xe8] sm:%s1417] %v1546
                  %v1548 = vld [vmem:[%s1424 + $0x7a] sm:%s1417]
                  %1549 = vst [vmem:[%s1425 + $0xea] sm:%s1417] %v1548
                  %v1550 = vld [vmem:[%s1424 + $0x7c] sm:%s1417]
                  %1551 = vst [vmem:[%s1425 + $0xec] sm:%s1417] %v1550
                  %v1552 = vld [vmem:[%s1424 + $0x7e] sm:%s1417]
                  %1553 = vst [vmem:[%s1425 + $0xee] sm:%s1417] %v1552
                  %v1554 = vld [vmem:[%s1424 + $0x80] sm:%s1417]
                  %1555 = vst [vmem:[%s1425 + $0x100] sm:%s1417] %v1554
                  %v1556 = vld [vmem:[%s1424 + $0x82] sm:%s1417]
                  %1557 = vst [vmem:[%s1425 + $0x102] sm:%s1417] %v1556
                  %v1558 = vld [vmem:[%s1424 + $0x84] sm:%s1417]
                  %1559 = vst [vmem:[%s1425 + $0x104] sm:%s1417] %v1558
                  %v1560 = vld [vmem:[%s1424 + $0x86] sm:%s1417]
                  %1561 = vst [vmem:[%s1425 + $0x106] sm:%s1417] %v1560
                  %v1562 = vld [vmem:[%s1424 + $0x88] sm:%s1417]
                  %1563 = vst [vmem:[%s1425 + $0x108] sm:%s1417] %v1562
                  %v1564 = vld [vmem:[%s1424 + $0x8a] sm:%s1417]
                  %1565 = vst [vmem:[%s1425 + $0x10a] sm:%s1417] %v1564
                  %v1566 = vld [vmem:[%s1424 + $0x8c] sm:%s1417]
                  %1567 = vst [vmem:[%s1425 + $0x10c] sm:%s1417] %v1566
                  %v1568 = vld [vmem:[%s1424 + $0x8e] sm:%s1417]
                  %1569 = vst [vmem:[%s1425 + $0x10e] sm:%s1417] %v1568
                  %v1570 = vld [vmem:[%s1424 + $0x90] sm:%s1417]
                  %1571 = vst [vmem:[%s1425 + $0x120] sm:%s1417] %v1570
                  %v1572 = vld [vmem:[%s1424 + $0x92] sm:%s1417]
                  %1573 = vst [vmem:[%s1425 + $0x122] sm:%s1417] %v1572
                  %v1574 = vld [vmem:[%s1424 + $0x94] sm:%s1417]
                  %1575 = vst [vmem:[%s1425 + $0x124] sm:%s1417] %v1574
                  %v1576 = vld [vmem:[%s1424 + $0x96] sm:%s1417]
                  %1577 = vst [vmem:[%s1425 + $0x126] sm:%s1417] %v1576
                  %v1578 = vld [vmem:[%s1424 + $0x98] sm:%s1417]
                  %1579 = vst [vmem:[%s1425 + $0x128] sm:%s1417] %v1578
                  %v1580 = vld [vmem:[%s1424 + $0x9a] sm:%s1417]
                  %1581 = vst [vmem:[%s1425 + $0x12a] sm:%s1417] %v1580
                  %v1582 = vld [vmem:[%s1424 + $0x9c] sm:%s1417]
                  %1583 = vst [vmem:[%s1425 + $0x12c] sm:%s1417] %v1582
                  %v1584 = vld [vmem:[%s1424 + $0x9e] sm:%s1417]
                  %1585 = vst [vmem:[%s1425 + $0x12e] sm:%s1417] %v1584
                  %v1586 = vld [vmem:[%s1424 + $0xa0] sm:%s1417]
                  %1587 = vst [vmem:[%s1425 + $0x140] sm:%s1417] %v1586
                  %v1588 = vld [vmem:[%s1424 + $0xa2] sm:%s1417]
                  %1589 = vst [vmem:[%s1425 + $0x142] sm:%s1417] %v1588
                  %v1590 = vld [vmem:[%s1424 + $0xa4] sm:%s1417]
                  %1591 = vst [vmem:[%s1425 + $0x144] sm:%s1417] %v1590
                  %v1592 = vld [vmem:[%s1424 + $0xa6] sm:%s1417]
                  %1593 = vst [vmem:[%s1425 + $0x146] sm:%s1417] %v1592
                  %v1594 = vld [vmem:[%s1424 + $0xa8] sm:%s1417]
                  %1595 = vst [vmem:[%s1425 + $0x148] sm:%s1417] %v1594
                  %v1596 = vld [vmem:[%s1424 + $0xaa] sm:%s1417]
                  %1597 = vst [vmem:[%s1425 + $0x14a] sm:%s1417] %v1596
                  %v1598 = vld [vmem:[%s1424 + $0xac] sm:%s1417]
                  %1599 = vst [vmem:[%s1425 + $0x14c] sm:%s1417] %v1598
                  %v1600 = vld [vmem:[%s1424 + $0xae] sm:%s1417]
                  %1601 = vst [vmem:[%s1425 + $0x14e] sm:%s1417] %v1600
                  %v1602 = vld [vmem:[%s1424 + $0xb0] sm:%s1417]
                  %1603 = vst [vmem:[%s1425 + $0x160] sm:%s1417] %v1602
                  %v1604 = vld [vmem:[%s1424 + $0xb2] sm:%s1417]
                  %1605 = vst [vmem:[%s1425 + $0x162] sm:%s1417] %v1604
                  %v1606 = vld [vmem:[%s1424 + $0xb4] sm:%s1417]
                  %1607 = vst [vmem:[%s1425 + $0x164] sm:%s1417] %v1606
                  %v1608 = vld [vmem:[%s1424 + $0xb6] sm:%s1417]
                  %1609 = vst [vmem:[%s1425 + $0x166] sm:%s1417] %v1608
                  %v1610 = vld [vmem:[%s1424 + $0xb8] sm:%s1417]
                  %1611 = vst [vmem:[%s1425 + $0x168] sm:%s1417] %v1610
                  %v1612 = vld [vmem:[%s1424 + $0xba] sm:%s1417]
                  %1613 = vst [vmem:[%s1425 + $0x16a] sm:%s1417] %v1612
                  %v1614 = vld [vmem:[%s1424 + $0xbc] sm:%s1417]
                  %1615 = vst [vmem:[%s1425 + $0x16c] sm:%s1417] %v1614
                  %v1616 = vld [vmem:[%s1424 + $0xbe] sm:%s1417]
                  %1617 = vst [vmem:[%s1425 + $0x16e] sm:%s1417] %v1616
                  %v1618 = vld [vmem:[%s1424 + $0xc0] sm:%s1417]
                  %1619 = vst [vmem:[%s1425 + $0x180] sm:%s1417] %v1618
                  %v1620 = vld [vmem:[%s1424 + $0xc2] sm:%s1417]
                  %1621 = vst [vmem:[%s1425 + $0x182] sm:%s1417] %v1620
                  %v1622 = vld [vmem:[%s1424 + $0xc4] sm:%s1417]
                  %1623 = vst [vmem:[%s1425 + $0x184] sm:%s1417] %v1622
                  %v1624 = vld [vmem:[%s1424 + $0xc6] sm:%s1417]
                  %1625 = vst [vmem:[%s1425 + $0x186] sm:%s1417] %v1624
                  %v1626 = vld [vmem:[%s1424 + $0xc8] sm:%s1417]
                  %1627 = vst [vmem:[%s1425 + $0x188] sm:%s1417] %v1626
                  %v1628 = vld [vmem:[%s1424 + $0xca] sm:%s1417]
                  %1629 = vst [vmem:[%s1425 + $0x18a] sm:%s1417] %v1628
                  %v1630 = vld [vmem:[%s1424 + $0xcc] sm:%s1417]
                  %1631 = vst [vmem:[%s1425 + $0x18c] sm:%s1417] %v1630
                  %v1632 = vld [vmem:[%s1424 + $0xce] sm:%s1417]
                  %1633 = vst [vmem:[%s1425 + $0x18e] sm:%s1417] %v1632
                  %v1634 = vld [vmem:[%s1424 + $0xd0] sm:%s1417]
                  %1635 = vst [vmem:[%s1425 + $0x1a0] sm:%s1417] %v1634
                  %v1636 = vld [vmem:[%s1424 + $0xd2] sm:%s1417]
                  %1637 = vst [vmem:[%s1425 + $0x1a2] sm:%s1417] %v1636
                  %v1638 = vld [vmem:[%s1424 + $0xd4] sm:%s1417]
                  %1639 = vst [vmem:[%s1425 + $0x1a4] sm:%s1417] %v1638
                  %v1640 = vld [vmem:[%s1424 + $0xd6] sm:%s1417]
                  %1641 = vst [vmem:[%s1425 + $0x1a6] sm:%s1417] %v1640
                  %v1642 = vld [vmem:[%s1424 + $0xd8] sm:%s1417]
                  %1643 = vst [vmem:[%s1425 + $0x1a8] sm:%s1417] %v1642
                  %v1644 = vld [vmem:[%s1424 + $0xda] sm:%s1417]
                  %1645 = vst [vmem:[%s1425 + $0x1aa] sm:%s1417] %v1644
                  %v1646 = vld [vmem:[%s1424 + $0xdc] sm:%s1417]
                  %1647 = vst [vmem:[%s1425 + $0x1ac] sm:%s1417] %v1646
                  %v1648 = vld [vmem:[%s1424 + $0xde] sm:%s1417]
                  %1649 = vst [vmem:[%s1425 + $0x1ae] sm:%s1417] %v1648
                  %v1650 = vld [vmem:[%s1424 + $0xe0] sm:%s1417]
                  %1651 = vst [vmem:[%s1425 + $0x1c0] sm:%s1417] %v1650
                  %v1652 = vld [vmem:[%s1424 + $0xe2] sm:%s1417]
                  %1653 = vst [vmem:[%s1425 + $0x1c2] sm:%s1417] %v1652
                  %v1654 = vld [vmem:[%s1424 + $0xe4] sm:%s1417]
                  %1655 = vst [vmem:[%s1425 + $0x1c4] sm:%s1417] %v1654
                  %v1656 = vld [vmem:[%s1424 + $0xe6] sm:%s1417]
                  %1657 = vst [vmem:[%s1425 + $0x1c6] sm:%s1417] %v1656
                  %v1658 = vld [vmem:[%s1424 + $0xe8] sm:%s1417]
                  %1659 = vst [vmem:[%s1425 + $0x1c8] sm:%s1417] %v1658
                  %v1660 = vld [vmem:[%s1424 + $0xea] sm:%s1417]
                  %1661 = vst [vmem:[%s1425 + $0x1ca] sm:%s1417] %v1660
                  %v1662 = vld [vmem:[%s1424 + $0xec] sm:%s1417]
                  %1663 = vst [vmem:[%s1425 + $0x1cc] sm:%s1417] %v1662
                  %v1664 = vld [vmem:[%s1424 + $0xee] sm:%s1417]
                  %1665 = vst [vmem:[%s1425 + $0x1ce] sm:%s1417] %v1664
                  %v1666 = vld [vmem:[%s1424 + $0xf0] sm:%s1417]
                  %1667 = vst [vmem:[%s1425 + $0x1e0] sm:%s1417] %v1666
                  %v1668 = vld [vmem:[%s1424 + $0xf2] sm:%s1417]
                  %1669 = vst [vmem:[%s1425 + $0x1e2] sm:%s1417] %v1668
                  %v1670 = vld [vmem:[%s1424 + $0xf4] sm:%s1417]
                  %1671 = vst [vmem:[%s1425 + $0x1e4] sm:%s1417] %v1670
                  %v1672 = vld [vmem:[%s1424 + $0xf6] sm:%s1417]
                  %1673 = vst [vmem:[%s1425 + $0x1e6] sm:%s1417] %v1672
                  %v1674 = vld [vmem:[%s1424 + $0xf8] sm:%s1417]
                  %1675 = vst [vmem:[%s1425 + $0x1e8] sm:%s1417] %v1674
                  %v1676 = vld [vmem:[%s1424 + $0xfa] sm:%s1417]
                  %1677 = vst [vmem:[%s1425 + $0x1ea] sm:%s1417] %v1676
                  %v1678 = vld [vmem:[%s1424 + $0xfc] sm:%s1417]
                  %1679 = vst [vmem:[%s1425 + $0x1ec] sm:%s1417] %v1678
                  %v1680 = vld [vmem:[%s1424 + $0xfe] sm:%s1417]
                  %1681 = vst [vmem:[%s1425 + $0x1ee] sm:%s1417] %v1680
                $region71: #{up_forward.5} parent=58 // loop_footer
                  %s1423 = sadd.s32 1, %s1419
                $region72: #{up_forward.5} parent=58 // loop_footer_branch
                  %1418 = sbr.rel target = $region68
                $region73: #{up_forward.5} parent=58 // loop_exit
                  _
              $region59: #{up_forward.5} parent=43 // pred_fallthru
                _
            $region44: #{up_forward.5} parent=39 // pred_fallthru
              _
            // Predicated region
            $region45: #{up_forward.5} parent=39 // pred_check
              _
            $region46: #{up_forward.5} parent=39 // pred_check_branch
              %1139 = sbr.rel (0) target = $region48
            $region47: #{up_forward.5} parent=39 // pred_region
              %s1141 = ssub.s32 4, 1
              loop: start=0, step=1, limit=1
              $region49: #{up_forward.5} parent=47 // loop_pre_header
                _
              $region50: #{up_forward.5} parent=47 // loop_header
                %s1143 = sphi 0, %s1147
                %p1144 = scmp.ge.s32.totalorder %s1143, 1
                %s1148 = sphi %s1124, %s1124
                %s1149 = sphi %s1133, %s1133
              $region51: #{up_forward.5} parent=47 // loop_header_branch
                %1146 = sbr.rel (%p1144) target = $region55
              $region52: #{up_forward.5} parent=47 // loop_body
                %v1150 = vld [vmem:[%s1148] sm:%s1141]
                %1151 = vst [vmem:[%s1149] sm:%s1141] %v1150
                %v1152 = vld [vmem:[%s1148 + $0x2] sm:%s1141]
                %1153 = vst [vmem:[%s1149 + $0x2] sm:%s1141] %v1152
                %v1154 = vld [vmem:[%s1148 + $0x4] sm:%s1141]
                %1155 = vst [vmem:[%s1149 + $0x4] sm:%s1141] %v1154
                %v1156 = vld [vmem:[%s1148 + $0x6] sm:%s1141]
                %1157 = vst [vmem:[%s1149 + $0x6] sm:%s1141] %v1156
                %v1158 = vld [vmem:[%s1148 + $0x8] sm:%s1141]
                %1159 = vst [vmem:[%s1149 + $0x8] sm:%s1141] %v1158
                %v1160 = vld [vmem:[%s1148 + $0xa] sm:%s1141]
                %1161 = vst [vmem:[%s1149 + $0xa] sm:%s1141] %v1160
                %v1162 = vld [vmem:[%s1148 + $0xc] sm:%s1141]
                %1163 = vst [vmem:[%s1149 + $0xc] sm:%s1141] %v1162
                %v1164 = vld [vmem:[%s1148 + $0xe] sm:%s1141]
                %1165 = vst [vmem:[%s1149 + $0xe] sm:%s1141] %v1164
                %v1166 = vld [vmem:[%s1148 + $0x10] sm:%s1141]
                %1167 = vst [vmem:[%s1149 + $0x20] sm:%s1141] %v1166
                %v1168 = vld [vmem:[%s1148 + $0x12] sm:%s1141]
                %1169 = vst [vmem:[%s1149 + $0x22] sm:%s1141] %v1168
                %v1170 = vld [vmem:[%s1148 + $0x14] sm:%s1141]
                %1171 = vst [vmem:[%s1149 + $0x24] sm:%s1141] %v1170
                %v1172 = vld [vmem:[%s1148 + $0x16] sm:%s1141]
                %1173 = vst [vmem:[%s1149 + $0x26] sm:%s1141] %v1172
                %v1174 = vld [vmem:[%s1148 + $0x18] sm:%s1141]
                %1175 = vst [vmem:[%s1149 + $0x28] sm:%s1141] %v1174
                %v1176 = vld [vmem:[%s1148 + $0x1a] sm:%s1141]
                %1177 = vst [vmem:[%s1149 + $0x2a] sm:%s1141] %v1176
                %v1178 = vld [vmem:[%s1148 + $0x1c] sm:%s1141]
                %1179 = vst [vmem:[%s1149 + $0x2c] sm:%s1141] %v1178
                %v1180 = vld [vmem:[%s1148 + $0x1e] sm:%s1141]
                %1181 = vst [vmem:[%s1149 + $0x2e] sm:%s1141] %v1180
                %v1182 = vld [vmem:[%s1148 + $0x20] sm:%s1141]
                %1183 = vst [vmem:[%s1149 + $0x40] sm:%s1141] %v1182
                %v1184 = vld [vmem:[%s1148 + $0x22] sm:%s1141]
                %1185 = vst [vmem:[%s1149 + $0x42] sm:%s1141] %v1184
                %v1186 = vld [vmem:[%s1148 + $0x24] sm:%s1141]
                %1187 = vst [vmem:[%s1149 + $0x44] sm:%s1141] %v1186
                %v1188 = vld [vmem:[%s1148 + $0x26] sm:%s1141]
                %1189 = vst [vmem:[%s1149 + $0x46] sm:%s1141] %v1188
                %v1190 = vld [vmem:[%s1148 + $0x28] sm:%s1141]
                %1191 = vst [vmem:[%s1149 + $0x48] sm:%s1141] %v1190
                %v1192 = vld [vmem:[%s1148 + $0x2a] sm:%s1141]
                %1193 = vst [vmem:[%s1149 + $0x4a] sm:%s1141] %v1192
                %v1194 = vld [vmem:[%s1148 + $0x2c] sm:%s1141]
                %1195 = vst [vmem:[%s1149 + $0x4c] sm:%s1141] %v1194
                %v1196 = vld [vmem:[%s1148 + $0x2e] sm:%s1141]
                %1197 = vst [vmem:[%s1149 + $0x4e] sm:%s1141] %v1196
                %v1198 = vld [vmem:[%s1148 + $0x30] sm:%s1141]
                %1199 = vst [vmem:[%s1149 + $0x60] sm:%s1141] %v1198
                %v1200 = vld [vmem:[%s1148 + $0x32] sm:%s1141]
                %1201 = vst [vmem:[%s1149 + $0x62] sm:%s1141] %v1200
                %v1202 = vld [vmem:[%s1148 + $0x34] sm:%s1141]
                %1203 = vst [vmem:[%s1149 + $0x64] sm:%s1141] %v1202
                %v1204 = vld [vmem:[%s1148 + $0x36] sm:%s1141]
                %1205 = vst [vmem:[%s1149 + $0x66] sm:%s1141] %v1204
                %v1206 = vld [vmem:[%s1148 + $0x38] sm:%s1141]
                %1207 = vst [vmem:[%s1149 + $0x68] sm:%s1141] %v1206
                %v1208 = vld [vmem:[%s1148 + $0x3a] sm:%s1141]
                %1209 = vst [vmem:[%s1149 + $0x6a] sm:%s1141] %v1208
                %v1210 = vld [vmem:[%s1148 + $0x3c] sm:%s1141]
                %1211 = vst [vmem:[%s1149 + $0x6c] sm:%s1141] %v1210
                %v1212 = vld [vmem:[%s1148 + $0x3e] sm:%s1141]
                %1213 = vst [vmem:[%s1149 + $0x6e] sm:%s1141] %v1212
                %v1214 = vld [vmem:[%s1148 + $0x40] sm:%s1141]
                %1215 = vst [vmem:[%s1149 + $0x80] sm:%s1141] %v1214
                %v1216 = vld [vmem:[%s1148 + $0x42] sm:%s1141]
                %1217 = vst [vmem:[%s1149 + $0x82] sm:%s1141] %v1216
                %v1218 = vld [vmem:[%s1148 + $0x44] sm:%s1141]
                %1219 = vst [vmem:[%s1149 + $0x84] sm:%s1141] %v1218
                %v1220 = vld [vmem:[%s1148 + $0x46] sm:%s1141]
                %1221 = vst [vmem:[%s1149 + $0x86] sm:%s1141] %v1220
                %v1222 = vld [vmem:[%s1148 + $0x48] sm:%s1141]
                %1223 = vst [vmem:[%s1149 + $0x88] sm:%s1141] %v1222
                %v1224 = vld [vmem:[%s1148 + $0x4a] sm:%s1141]
                %1225 = vst [vmem:[%s1149 + $0x8a] sm:%s1141] %v1224
                %v1226 = vld [vmem:[%s1148 + $0x4c] sm:%s1141]
                %1227 = vst [vmem:[%s1149 + $0x8c] sm:%s1141] %v1226
                %v1228 = vld [vmem:[%s1148 + $0x4e] sm:%s1141]
                %1229 = vst [vmem:[%s1149 + $0x8e] sm:%s1141] %v1228
                %v1230 = vld [vmem:[%s1148 + $0x50] sm:%s1141]
                %1231 = vst [vmem:[%s1149 + $0xa0] sm:%s1141] %v1230
                %v1232 = vld [vmem:[%s1148 + $0x52] sm:%s1141]
                %1233 = vst [vmem:[%s1149 + $0xa2] sm:%s1141] %v1232
                %v1234 = vld [vmem:[%s1148 + $0x54] sm:%s1141]
                %1235 = vst [vmem:[%s1149 + $0xa4] sm:%s1141] %v1234
                %v1236 = vld [vmem:[%s1148 + $0x56] sm:%s1141]
                %1237 = vst [vmem:[%s1149 + $0xa6] sm:%s1141] %v1236
                %v1238 = vld [vmem:[%s1148 + $0x58] sm:%s1141]
                %1239 = vst [vmem:[%s1149 + $0xa8] sm:%s1141] %v1238
                %v1240 = vld [vmem:[%s1148 + $0x5a] sm:%s1141]
                %1241 = vst [vmem:[%s1149 + $0xaa] sm:%s1141] %v1240
                %v1242 = vld [vmem:[%s1148 + $0x5c] sm:%s1141]
                %1243 = vst [vmem:[%s1149 + $0xac] sm:%s1141] %v1242
                %v1244 = vld [vmem:[%s1148 + $0x5e] sm:%s1141]
                %1245 = vst [vmem:[%s1149 + $0xae] sm:%s1141] %v1244
                %v1246 = vld [vmem:[%s1148 + $0x60] sm:%s1141]
                %1247 = vst [vmem:[%s1149 + $0xc0] sm:%s1141] %v1246
                %v1248 = vld [vmem:[%s1148 + $0x62] sm:%s1141]
                %1249 = vst [vmem:[%s1149 + $0xc2] sm:%s1141] %v1248
                %v1250 = vld [vmem:[%s1148 + $0x64] sm:%s1141]
                %1251 = vst [vmem:[%s1149 + $0xc4] sm:%s1141] %v1250
                %v1252 = vld [vmem:[%s1148 + $0x66] sm:%s1141]
                %1253 = vst [vmem:[%s1149 + $0xc6] sm:%s1141] %v1252
                %v1254 = vld [vmem:[%s1148 + $0x68] sm:%s1141]
                %1255 = vst [vmem:[%s1149 + $0xc8] sm:%s1141] %v1254
                %v1256 = vld [vmem:[%s1148 + $0x6a] sm:%s1141]
                %1257 = vst [vmem:[%s1149 + $0xca] sm:%s1141] %v1256
                %v1258 = vld [vmem:[%s1148 + $0x6c] sm:%s1141]
                %1259 = vst [vmem:[%s1149 + $0xcc] sm:%s1141] %v1258
                %v1260 = vld [vmem:[%s1148 + $0x6e] sm:%s1141]
                %1261 = vst [vmem:[%s1149 + $0xce] sm:%s1141] %v1260
                %v1262 = vld [vmem:[%s1148 + $0x70] sm:%s1141]
                %1263 = vst [vmem:[%s1149 + $0xe0] sm:%s1141] %v1262
                %v1264 = vld [vmem:[%s1148 + $0x72] sm:%s1141]
                %1265 = vst [vmem:[%s1149 + $0xe2] sm:%s1141] %v1264
                %v1266 = vld [vmem:[%s1148 + $0x74] sm:%s1141]
                %1267 = vst [vmem:[%s1149 + $0xe4] sm:%s1141] %v1266
                %v1268 = vld [vmem:[%s1148 + $0x76] sm:%s1141]
                %1269 = vst [vmem:[%s1149 + $0xe6] sm:%s1141] %v1268
                %v1270 = vld [vmem:[%s1148 + $0x78] sm:%s1141]
                %1271 = vst [vmem:[%s1149 + $0xe8] sm:%s1141] %v1270
                %v1272 = vld [vmem:[%s1148 + $0x7a] sm:%s1141]
                %1273 = vst [vmem:[%s1149 + $0xea] sm:%s1141] %v1272
                %v1274 = vld [vmem:[%s1148 + $0x7c] sm:%s1141]
                %1275 = vst [vmem:[%s1149 + $0xec] sm:%s1141] %v1274
                %v1276 = vld [vmem:[%s1148 + $0x7e] sm:%s1141]
                %1277 = vst [vmem:[%s1149 + $0xee] sm:%s1141] %v1276
                %v1278 = vld [vmem:[%s1148 + $0x80] sm:%s1141]
                %1279 = vst [vmem:[%s1149 + $0x100] sm:%s1141] %v1278
                %v1280 = vld [vmem:[%s1148 + $0x82] sm:%s1141]
                %1281 = vst [vmem:[%s1149 + $0x102] sm:%s1141] %v1280
                %v1282 = vld [vmem:[%s1148 + $0x84] sm:%s1141]
                %1283 = vst [vmem:[%s1149 + $0x104] sm:%s1141] %v1282
                %v1284 = vld [vmem:[%s1148 + $0x86] sm:%s1141]
                %1285 = vst [vmem:[%s1149 + $0x106] sm:%s1141] %v1284
                %v1286 = vld [vmem:[%s1148 + $0x88] sm:%s1141]
                %1287 = vst [vmem:[%s1149 + $0x108] sm:%s1141] %v1286
                %v1288 = vld [vmem:[%s1148 + $0x8a] sm:%s1141]
                %1289 = vst [vmem:[%s1149 + $0x10a] sm:%s1141] %v1288
                %v1290 = vld [vmem:[%s1148 + $0x8c] sm:%s1141]
                %1291 = vst [vmem:[%s1149 + $0x10c] sm:%s1141] %v1290
                %v1292 = vld [vmem:[%s1148 + $0x8e] sm:%s1141]
                %1293 = vst [vmem:[%s1149 + $0x10e] sm:%s1141] %v1292
                %v1294 = vld [vmem:[%s1148 + $0x90] sm:%s1141]
                %1295 = vst [vmem:[%s1149 + $0x120] sm:%s1141] %v1294
                %v1296 = vld [vmem:[%s1148 + $0x92] sm:%s1141]
                %1297 = vst [vmem:[%s1149 + $0x122] sm:%s1141] %v1296
                %v1298 = vld [vmem:[%s1148 + $0x94] sm:%s1141]
                %1299 = vst [vmem:[%s1149 + $0x124] sm:%s1141] %v1298
                %v1300 = vld [vmem:[%s1148 + $0x96] sm:%s1141]
                %1301 = vst [vmem:[%s1149 + $0x126] sm:%s1141] %v1300
                %v1302 = vld [vmem:[%s1148 + $0x98] sm:%s1141]
                %1303 = vst [vmem:[%s1149 + $0x128] sm:%s1141] %v1302
                %v1304 = vld [vmem:[%s1148 + $0x9a] sm:%s1141]
                %1305 = vst [vmem:[%s1149 + $0x12a] sm:%s1141] %v1304
                %v1306 = vld [vmem:[%s1148 + $0x9c] sm:%s1141]
                %1307 = vst [vmem:[%s1149 + $0x12c] sm:%s1141] %v1306
                %v1308 = vld [vmem:[%s1148 + $0x9e] sm:%s1141]
                %1309 = vst [vmem:[%s1149 + $0x12e] sm:%s1141] %v1308
                %v1310 = vld [vmem:[%s1148 + $0xa0] sm:%s1141]
                %1311 = vst [vmem:[%s1149 + $0x140] sm:%s1141] %v1310
                %v1312 = vld [vmem:[%s1148 + $0xa2] sm:%s1141]
                %1313 = vst [vmem:[%s1149 + $0x142] sm:%s1141] %v1312
                %v1314 = vld [vmem:[%s1148 + $0xa4] sm:%s1141]
                %1315 = vst [vmem:[%s1149 + $0x144] sm:%s1141] %v1314
                %v1316 = vld [vmem:[%s1148 + $0xa6] sm:%s1141]
                %1317 = vst [vmem:[%s1149 + $0x146] sm:%s1141] %v1316
                %v1318 = vld [vmem:[%s1148 + $0xa8] sm:%s1141]
                %1319 = vst [vmem:[%s1149 + $0x148] sm:%s1141] %v1318
                %v1320 = vld [vmem:[%s1148 + $0xaa] sm:%s1141]
                %1321 = vst [vmem:[%s1149 + $0x14a] sm:%s1141] %v1320
                %v1322 = vld [vmem:[%s1148 + $0xac] sm:%s1141]
                %1323 = vst [vmem:[%s1149 + $0x14c] sm:%s1141] %v1322
                %v1324 = vld [vmem:[%s1148 + $0xae] sm:%s1141]
                %1325 = vst [vmem:[%s1149 + $0x14e] sm:%s1141] %v1324
                %v1326 = vld [vmem:[%s1148 + $0xb0] sm:%s1141]
                %1327 = vst [vmem:[%s1149 + $0x160] sm:%s1141] %v1326
                %v1328 = vld [vmem:[%s1148 + $0xb2] sm:%s1141]
                %1329 = vst [vmem:[%s1149 + $0x162] sm:%s1141] %v1328
                %v1330 = vld [vmem:[%s1148 + $0xb4] sm:%s1141]
                %1331 = vst [vmem:[%s1149 + $0x164] sm:%s1141] %v1330
                %v1332 = vld [vmem:[%s1148 + $0xb6] sm:%s1141]
                %1333 = vst [vmem:[%s1149 + $0x166] sm:%s1141] %v1332
                %v1334 = vld [vmem:[%s1148 + $0xb8] sm:%s1141]
                %1335 = vst [vmem:[%s1149 + $0x168] sm:%s1141] %v1334
                %v1336 = vld [vmem:[%s1148 + $0xba] sm:%s1141]
                %1337 = vst [vmem:[%s1149 + $0x16a] sm:%s1141] %v1336
                %v1338 = vld [vmem:[%s1148 + $0xbc] sm:%s1141]
                %1339 = vst [vmem:[%s1149 + $0x16c] sm:%s1141] %v1338
                %v1340 = vld [vmem:[%s1148 + $0xbe] sm:%s1141]
                %1341 = vst [vmem:[%s1149 + $0x16e] sm:%s1141] %v1340
                %v1342 = vld [vmem:[%s1148 + $0xc0] sm:%s1141]
                %1343 = vst [vmem:[%s1149 + $0x180] sm:%s1141] %v1342
                %v1344 = vld [vmem:[%s1148 + $0xc2] sm:%s1141]
                %1345 = vst [vmem:[%s1149 + $0x182] sm:%s1141] %v1344
                %v1346 = vld [vmem:[%s1148 + $0xc4] sm:%s1141]
                %1347 = vst [vmem:[%s1149 + $0x184] sm:%s1141] %v1346
                %v1348 = vld [vmem:[%s1148 + $0xc6] sm:%s1141]
                %1349 = vst [vmem:[%s1149 + $0x186] sm:%s1141] %v1348
                %v1350 = vld [vmem:[%s1148 + $0xc8] sm:%s1141]
                %1351 = vst [vmem:[%s1149 + $0x188] sm:%s1141] %v1350
                %v1352 = vld [vmem:[%s1148 + $0xca] sm:%s1141]
                %1353 = vst [vmem:[%s1149 + $0x18a] sm:%s1141] %v1352
                %v1354 = vld [vmem:[%s1148 + $0xcc] sm:%s1141]
                %1355 = vst [vmem:[%s1149 + $0x18c] sm:%s1141] %v1354
                %v1356 = vld [vmem:[%s1148 + $0xce] sm:%s1141]
                %1357 = vst [vmem:[%s1149 + $0x18e] sm:%s1141] %v1356
                %v1358 = vld [vmem:[%s1148 + $0xd0] sm:%s1141]
                %1359 = vst [vmem:[%s1149 + $0x1a0] sm:%s1141] %v1358
                %v1360 = vld [vmem:[%s1148 + $0xd2] sm:%s1141]
                %1361 = vst [vmem:[%s1149 + $0x1a2] sm:%s1141] %v1360
                %v1362 = vld [vmem:[%s1148 + $0xd4] sm:%s1141]
                %1363 = vst [vmem:[%s1149 + $0x1a4] sm:%s1141] %v1362
                %v1364 = vld [vmem:[%s1148 + $0xd6] sm:%s1141]
                %1365 = vst [vmem:[%s1149 + $0x1a6] sm:%s1141] %v1364
                %v1366 = vld [vmem:[%s1148 + $0xd8] sm:%s1141]
                %1367 = vst [vmem:[%s1149 + $0x1a8] sm:%s1141] %v1366
                %v1368 = vld [vmem:[%s1148 + $0xda] sm:%s1141]
                %1369 = vst [vmem:[%s1149 + $0x1aa] sm:%s1141] %v1368
                %v1370 = vld [vmem:[%s1148 + $0xdc] sm:%s1141]
                %1371 = vst [vmem:[%s1149 + $0x1ac] sm:%s1141] %v1370
                %v1372 = vld [vmem:[%s1148 + $0xde] sm:%s1141]
                %1373 = vst [vmem:[%s1149 + $0x1ae] sm:%s1141] %v1372
                %v1374 = vld [vmem:[%s1148 + $0xe0] sm:%s1141]
                %1375 = vst [vmem:[%s1149 + $0x1c0] sm:%s1141] %v1374
                %v1376 = vld [vmem:[%s1148 + $0xe2] sm:%s1141]
                %1377 = vst [vmem:[%s1149 + $0x1c2] sm:%s1141] %v1376
                %v1378 = vld [vmem:[%s1148 + $0xe4] sm:%s1141]
                %1379 = vst [vmem:[%s1149 + $0x1c4] sm:%s1141] %v1378
                %v1380 = vld [vmem:[%s1148 + $0xe6] sm:%s1141]
                %1381 = vst [vmem:[%s1149 + $0x1c6] sm:%s1141] %v1380
                %v1382 = vld [vmem:[%s1148 + $0xe8] sm:%s1141]
                %1383 = vst [vmem:[%s1149 + $0x1c8] sm:%s1141] %v1382
                %v1384 = vld [vmem:[%s1148 + $0xea] sm:%s1141]
                %1385 = vst [vmem:[%s1149 + $0x1ca] sm:%s1141] %v1384
                %v1386 = vld [vmem:[%s1148 + $0xec] sm:%s1141]
                %1387 = vst [vmem:[%s1149 + $0x1cc] sm:%s1141] %v1386
                %v1388 = vld [vmem:[%s1148 + $0xee] sm:%s1141]
                %1389 = vst [vmem:[%s1149 + $0x1ce] sm:%s1141] %v1388
                %v1390 = vld [vmem:[%s1148 + $0xf0] sm:%s1141]
                %1391 = vst [vmem:[%s1149 + $0x1e0] sm:%s1141] %v1390
                %v1392 = vld [vmem:[%s1148 + $0xf2] sm:%s1141]
                %1393 = vst [vmem:[%s1149 + $0x1e2] sm:%s1141] %v1392
                %v1394 = vld [vmem:[%s1148 + $0xf4] sm:%s1141]
                %1395 = vst [vmem:[%s1149 + $0x1e4] sm:%s1141] %v1394
                %v1396 = vld [vmem:[%s1148 + $0xf6] sm:%s1141]
                %1397 = vst [vmem:[%s1149 + $0x1e6] sm:%s1141] %v1396
                %v1398 = vld [vmem:[%s1148 + $0xf8] sm:%s1141]
                %1399 = vst [vmem:[%s1149 + $0x1e8] sm:%s1141] %v1398
                %v1400 = vld [vmem:[%s1148 + $0xfa] sm:%s1141]
                %1401 = vst [vmem:[%s1149 + $0x1ea] sm:%s1141] %v1400
                %v1402 = vld [vmem:[%s1148 + $0xfc] sm:%s1141]
                %1403 = vst [vmem:[%s1149 + $0x1ec] sm:%s1141] %v1402
                %v1404 = vld [vmem:[%s1148 + $0xfe] sm:%s1141]
                %1405 = vst [vmem:[%s1149 + $0x1ee] sm:%s1141] %v1404
              $region53: #{up_forward.5} parent=47 // loop_footer
                %s1147 = sadd.s32 1, %s1143
              $region54: #{up_forward.5} parent=47 // loop_footer_branch
                %1142 = sbr.rel target = $region50
              $region55: #{up_forward.5} parent=47 // loop_exit
                _
            $region48: #{up_forward.5} parent=39 // pred_fallthru
              _
          $region40: #{up_forward.5} parent=35 // pred_fallthru
            _
          %1682 = vnop
        $region36: #{up_forward.5} parent=31 // pred_fallthru
          _
      $region32: #{up_forward.5} parent=5 // pred_fallthru
        _
      %p1683 = scmp.le.s32.totalorder 2, %s9
      // Predicated region
      $region74: #{up_forward.5} parent=5 // pred_check
        %p1684 = pneg %p1683
      $region75: #{up_forward.5} parent=5 // pred_check_branch
        %1686 = sbr.rel (%p1684) target = $region77
      $region76: #{up_forward.5} parent=5 // pred_region
        %s1687 = ssub.s32 %s9, 2
        // Predicated region
        $region78: #{up_forward.5} parent=76 // pred_check
          %p1688 = pneg %p125
        $region79: #{up_forward.5} parent=76 // pred_check_branch
          %1690 = sbr.rel (%p1688) target = $region81
        $region80: #{up_forward.5} parent=76 // pred_region
          %s1691 = sand.u32 %s110, 1
          %s1692 = sand.u32 %s110, 1
          %s1693 = smul.addr %s1692, 256
          %s1694 = scalar_lea.vmem [#allocation2], %s1693
        $region81: #{up_forward.5} parent=76 // pred_fallthru
          _
      $region77: #{up_forward.5} parent=5 // pred_fallthru
        _
    $region6: #{up_forward.5} parent=1 // loop_footer
      %s13 = sadd.s32 1, %s9
    $region7: #{up_forward.5} parent=1 // loop_footer_branch
      %8 = sbr.rel target = $region3
    $region8: #{up_forward.5} parent=1 // loop_exit
      _

// kernel: up_forward.8
$region0: #{up_forward.8}
  #allocation0 [shape = 'u32[]', space=smem, size = 0x4, offset = 0x4, fixed_abs, tag = 'smem constant byte address 0x4 - core index']
  #allocation1 [shape = 'u32[72,128]{1,0:T(1,128)}', space=vmem, size = 0x9000, scoped, tag = 'internal scratch']
  #allocation2 [shape = 'f32[18,18,128]{2,1,0:T(8,128)}', space=vmem, size = 0x36000, scoped, tag = 'scratch operand']
  %s0 = inlined_call_operand.vmem [shape: f32[2,18,18,128], index: 0, kind: input, shape index: {}, may-alias: {0,1,2}]
  %s1 = inlined_call_operand.vmem [shape: f32[2,18,18,128], index: 1, kind: input, shape index: {}, may-alias: {0,1,2}]
  %s2 = inlined_call_operand.vmem [shape: f32[2,18,18,128], index: 2, kind: input, shape index: {}, may-alias: {0,1,2}]
  %s3 = inlined_call_operand.vmem [shape: f32[3,3,128,128], index: 3, kind: input, shape index: {}]
  %s4 = inlined_call_operand.vmem [shape: f32[1,128], index: 4, kind: input, shape index: {}]
  %s5 = inlined_call_operand.vmem [shape: f32[2,16,16,128], index: 5, kind: output, shape index: {0}]
  %s6 = inlined_call_operand.vmem [shape: f32[2,1,2,128], index: 6, kind: output, shape index: {1}]
  %7 = xla_tuple %s5, %s6
  %s8 = sld [smem:[#allocation0]]
  $region61: #{up_forward.8} parent=0
    _
  %s10 = ssub.s32 1, %s8
  %s11 = scalar_select 0, %s10, %s8
  loop: start=0, step=1, limit=4
  $region2: #{up_forward.8} parent=0 // loop_pre_header
    _
  $region3: #{up_forward.8} parent=0 // loop_header
    %s13 = sphi 0, %s17
    %p14 = scmp.ge.s32.totalorder %s13, 4
    %s20 = sphi 0, %s32
    %s21 = sphi 0, %s28
    %s22 = sphi 0, %s20
    %s23 = sphi 0, %s21
    %s24 = sphi 0, %s22
    %s25 = sphi 0, %s23
    %s37 = sphi 0, %s39
    %s40 = sphi 0, %s37
    %s41 = sphi 0, %s40
    %s57 = sphi 0, %s41
    %s69 = sphi 0, %s71
    %s72 = sphi 0, %s69
    %s73 = sphi 0, %s72
    %s89 = sphi 0, %s73
    %s103 = sphi 0, %s105
    %s106 = sphi 0, %s103
    %s107 = sphi 0, %s106
    %s123 = sphi 0, %s107
    %s127 = sphi 0, %s127
    %s129 = sphi 0, %s127
    %s130 = sphi 0, %s129
    %s144 = sphi 0, %s130
    %s148 = sphi 0, %s148
    %s150 = sphi 0, %s148
    %s151 = sphi 0, %s150
    %s165 = sphi 0, %s151
    %s173 = sphi 0, %s175
    %s176 = sphi 0, %s173
    %s177 = sphi 0, %s176
    %s193 = sphi 0, %s177
    %s201 = sphi 0, %s203
    %s204 = sphi 0, %s201
    %s205 = sphi 0, %s204
    %s221 = sphi 0, %s205
  $region4: #{up_forward.8} parent=0 // loop_header_branch
    %16 = sbr.rel (%p14) target = $region8
  $region5: #{up_forward.8} parent=0 // loop_body
    %s18 = ssub.s32 %s13, 1
    %s19 = ssub.s32 %s13, 2
    %s26 = sadd.s32 1, %s21
    %p27 = scmp.ge.s32.totalorder %s26, 1
    %s28 = scalar_select %p27, 0, %s26
    %s29 = sadd.s32 1, %s20
    %s30 = scalar_select %p27, %s29, %s20
    %p31 = scmp.ge.s32.totalorder %s30, 2
    %s32 = scalar_select %p31, 0, %s30
    %s33 = ssub.s32 %s20, %s32
    %s34 = ssub.s32 %s21, %s28
    %s35 = sor.u32 %s33, %s34
    %p36 = scmp.eq.s32.totalorder %s35, 0
    %s38 = sadd.s32 %s37, 1
    %s39 = scalar_select %p36, %s37, %s38
    %p42 = pneg %p36
    %p43 = scmp.eq.s32.totalorder %s13, 1
    %p44 = por %p42, %p43
    %p45 = scmp.ne.s32.totalorder %s37, %s40
    %p46 = scmp.eq.s32.totalorder %s13, 0
    %p47 = por %p45, %p46
    %p48 = scmp.ne.s32.totalorder %s37, %s40
    %p49 = scmp.eq.s32.totalorder %s18, 1
    %p50 = por %p48, %p49
    %p51 = scmp.ne.s32.totalorder %s40, %s41
    %p52 = scmp.eq.s32.totalorder %s18, 0
    %p53 = por %p51, %p52
    %p54 = scmp.ne.s32.totalorder %s40, %s41
    %p55 = scmp.eq.s32.totalorder %s19, 1
    %p56 = por %p54, %p55
    %p58 = scmp.ne.s32.totalorder %s41, %s57
    %p59 = scmp.eq.s32.totalorder %s19, 0
    %p60 = por %p58, %p59
    %s61 = sadd.s32 %s21, 1
    %s62 = smul.u32 %s61, 16
    %s63 = sadd.s32 %s28, 1
    %s64 = smul.u32 %s63, 16
    %s65 = ssub.s32 %s20, %s32
    %s66 = ssub.s32 %s62, %s64
    %s67 = sor.u32 %s65, %s66
    %p68 = scmp.eq.s32.totalorder %s67, 0
    %s70 = sadd.s32 %s69, 1
    %s71 = scalar_select %p68, %s69, %s70
    %p74 = pneg %p68
    %p75 = scmp.eq.s32.totalorder %s13, 1
    %p76 = por %p74, %p75
    %p77 = scmp.ne.s32.totalorder %s69, %s72
    %p78 = scmp.eq.s32.totalorder %s13, 0
    %p79 = por %p77, %p78
    %p80 = scmp.ne.s32.totalorder %s69, %s72
    %p81 = scmp.eq.s32.totalorder %s18, 1
    %p82 = por %p80, %p81
    %p83 = scmp.ne.s32.totalorder %s72, %s73
    %p84 = scmp.eq.s32.totalorder %s18, 0
    %p85 = por %p83, %p84
    %p86 = scmp.ne.s32.totalorder %s72, %s73
    %p87 = scmp.eq.s32.totalorder %s19, 1
    %p88 = por %p86, %p87
    %p90 = scmp.ne.s32.totalorder %s73, %s89
    %p91 = scmp.eq.s32.totalorder %s19, 0
    %p92 = por %p90, %p91
    %s93 = sadd.s32 %s21, 1
    %s94 = smul.u32 %s93, 16
    %s95 = sadd.s32 %s94, 1
    %s96 = sadd.s32 %s28, 1
    %s97 = smul.u32 %s96, 16
    %s98 = sadd.s32 %s97, 1
    %s99 = ssub.s32 %s20, %s32
    %s100 = ssub.s32 %s95, %s98
    %s101 = sor.u32 %s99, %s100
    %p102 = scmp.eq.s32.totalorder %s101, 0
    %s104 = sadd.s32 %s103, 1
    %s105 = scalar_select %p102, %s103, %s104
    %p108 = pneg %p102
    %p109 = scmp.eq.s32.totalorder %s13, 1
    %p110 = por %p108, %p109
    %p111 = scmp.ne.s32.totalorder %s103, %s106
    %p112 = scmp.eq.s32.totalorder %s13, 0
    %p113 = por %p111, %p112
    %p114 = scmp.ne.s32.totalorder %s103, %s106
    %p115 = scmp.eq.s32.totalorder %s18, 1
    %p116 = por %p114, %p115
    %p117 = scmp.ne.s32.totalorder %s106, %s107
    %p118 = scmp.eq.s32.totalorder %s18, 0
    %p119 = por %p117, %p118
    %p120 = scmp.ne.s32.totalorder %s106, %s107
    %p121 = scmp.eq.s32.totalorder %s19, 1
    %p122 = por %p120, %p121
    %p124 = scmp.ne.s32.totalorder %s107, %s123
    %p125 = scmp.eq.s32.totalorder %s19, 0
    %p126 = por %p124, %p125
    %s128 = sadd.s32 %s127, 1
    %p131 = scmp.eq.s32.totalorder %s13, 1
    %p132 = scmp.ne.s32.totalorder %s127, %s129
    %p133 = scmp.eq.s32.totalorder %s13, 0
    %p134 = por %p132, %p133
    %p135 = scmp.ne.s32.totalorder %s127, %s129
    %p136 = scmp.eq.s32.totalorder %s18, 1
    %p137 = por %p135, %p136
    %p138 = scmp.ne.s32.totalorder %s129, %s130
    %p139 = scmp.eq.s32.totalorder %s18, 0
    %p140 = por %p138, %p139
    %p141 = scmp.ne.s32.totalorder %s129, %s130
    %p142 = scmp.eq.s32.totalorder %s19, 1
    %p143 = por %p141, %p142
    %p145 = scmp.ne.s32.totalorder %s130, %s144
    %p146 = scmp.eq.s32.totalorder %s19, 0
    %p147 = por %p145, %p146
    %s149 = sadd.s32 %s148, 1
    %p152 = scmp.eq.s32.totalorder %s13, 1
    %p153 = scmp.ne.s32.totalorder %s148, %s150
    %p154 = scmp.eq.s32.totalorder %s13, 0
    %p155 = por %p153, %p154
    %p156 = scmp.ne.s32.totalorder %s148, %s150
    %p157 = scmp.eq.s32.totalorder %s18, 1
    %p158 = por %p156, %p157
    %p159 = scmp.ne.s32.totalorder %s150, %s151
    %p160 = scmp.eq.s32.totalorder %s18, 0
    %p161 = por %p159, %p160
    %p162 = scmp.ne.s32.totalorder %s150, %s151
    %p163 = scmp.eq.s32.totalorder %s19, 1
    %p164 = por %p162, %p163
    %p166 = scmp.ne.s32.totalorder %s151, %s165
    %p167 = scmp.eq.s32.totalorder %s19, 0
    %p168 = por %p166, %p167
    %s169 = ssub.s32 %s20, %s32
    %s170 = ssub.s32 %s21, %s28
    %s171 = sor.u32 %s169, %s170
    %p172 = scmp.eq.s32.totalorder %s171, 0
    %s174 = sadd.s32 %s173, 1
    %s175 = scalar_select %p172, %s173, %s174
    %p178 = pneg %p172
    %p179 = scmp.eq.s32.totalorder %s13, 1
    %p180 = por %p178, %p179
    %p181 = scmp.ne.s32.totalorder %s173, %s176
    %p182 = scmp.eq.s32.totalorder %s13, 0
    %p183 = por %p181, %p182
    %p184 = scmp.ne.s32.totalorder %s173, %s176
    %p185 = scmp.eq.s32.totalorder %s18, 1
    %p186 = por %p184, %p185
    %p187 = scmp.ne.s32.totalorder %s176, %s177
    %p188 = scmp.eq.s32.totalorder %s18, 0
    %p189 = por %p187, %p188
    %p190 = scmp.ne.s32.totalorder %s176, %s177
    %p191 = scmp.eq.s32.totalorder %s19, 1
    %p192 = por %p190, %p191
    %p194 = scmp.ne.s32.totalorder %s177, %s193
    %p195 = scmp.eq.s32.totalorder %s19, 0
    %p196 = por %p194, %p195
    %s197 = ssub.s32 %s20, %s32
    %s198 = ssub.s32 %s21, %s28
    %s199 = sor.u32 %s197, %s198
    %p200 = scmp.eq.s32.totalorder %s199, 0
    %s202 = sadd.s32 %s201, 1
    %s203 = scalar_select %p200, %s201, %s202
    %p206 = pneg %p200
    %p207 = scmp.eq.s32.totalorder %s13, 1
    %p208 = por %p206, %p207
    %p209 = scmp.ne.s32.totalorder %s201, %s204
    %p210 = scmp.eq.s32.totalorder %s13, 0
    %p211 = por %p209, %p210
    %p212 = scmp.ne.s32.totalorder %s201, %s204
    %p213 = scmp.eq.s32.totalorder %s18, 1
    %p214 = por %p212, %p213
    %p215 = scmp.ne.s32.totalorder %s204, %s205
    %p216 = scmp.eq.s32.totalorder %s18, 0
    %p217 = por %p215, %p216
    %p218 = scmp.ne.s32.totalorder %s204, %s205
    %p219 = scmp.eq.s32.totalorder %s19, 1
    %p220 = por %p218, %p219
    %p222 = scmp.ne.s32.totalorder %s205, %s221
    %p223 = scmp.eq.s32.totalorder %s19, 0
    %p224 = por %p222, %p223
    %p225 = scmp.le.s32.totalorder 1, %s13
    %p226 = scmp.lt.s32.totalorder %s13, 3
    %p227 = pnand %p225, %p226
    %p228 = pneg %p227
    // Predicated region
    $region9: #{up_forward.8} parent=5 // pred_check
      _
    $region10: #{up_forward.8} parent=5 // pred_check_branch
      %230 = sbr.rel (%p227) target = $region12
    $region11: #{up_forward.8} parent=5 // pred_region
      %s231 = ssub.s32 %s13, 1
      // Predicated region
      $region13: #{up_forward.8} parent=11 // pred_check
        %p232 = pneg %p140
      $region14: #{up_forward.8} parent=11 // pred_check_branch
        %234 = sbr.rel (%p232) target = $region16
      $region15: #{up_forward.8} parent=11 // pred_region
        _
      $region16: #{up_forward.8} parent=11 // pred_fallthru
        _
      // Predicated region
      $region17: #{up_forward.8} parent=11 // pred_check
        %p235 = pneg %p161
      $region18: #{up_forward.8} parent=11 // pred_check_branch
        %237 = sbr.rel (%p235) target = $region20
      $region19: #{up_forward.8} parent=11 // pred_region
        _
      $region20: #{up_forward.8} parent=11 // pred_fallthru
        _
    $region12: #{up_forward.8} parent=5 // pred_fallthru
      _
    %p238 = scmp.lt.s32.totalorder %s13, 2
    // Predicated region
    $region21: #{up_forward.8} parent=5 // pred_check
      %p239 = pneg %p238
    $region22: #{up_forward.8} parent=5 // pred_check_branch
      %241 = sbr.rel (%p239) target = $region24
    $region23: #{up_forward.8} parent=5 // pred_region
      // Predicated region
      $region25: #{up_forward.8} parent=23 // pred_check
        %p242 = pneg %p47
      $region26: #{up_forward.8} parent=23 // pred_check_branch
        %244 = sbr.rel (%p242) target = $region28
      $region27: #{up_forward.8} parent=23 // pred_region
        %s245 = smul.u32 16, %s21
        %s246 = ssub.s32 18, %s245
        %p247 = scmp.lt.s32.totalorder %s246, 16
        %s248 = scalar_select %p247, %s246, 16
        %s249 = smul.u32 8, %s248
        %s250 = smul.u32 %s249, 3
        %p251 = scmp.lt.s32.totalorder %s20, 1
        %s252 = scalar_select %p251, %s20, 1
        %p253 = scmp.lt.s32.totalorder %s245, 17
        %s254 = scalar_select %p253, %s245, 17
        %s255 = smul.addr %s254, 3
        %s256 = smul.addr %s252, 54
        %s257 = sadd.s32 %s255, %s256
        %s258 = smul.addr %s257, 8
        %s259 = scalar_lea.vmem %s0, %s258
        %s260 = smul.u32 16, %s21
        %s261 = ssub.s32 18, %s260
        %p262 = scmp.lt.s32.totalorder %s261, 16
        %s263 = scalar_select %p262, %s261, 16
        %s264 = smul.u32 8, %s263
        %s265 = smul.u32 %s264, 3
      $region28: #{up_forward.8} parent=23 // pred_fallthru
        _
      // Predicated region
      $region29: #{up_forward.8} parent=23 // pred_check
        %p266 = pneg %p79
      $region30: #{up_forward.8} parent=23 // pred_check_branch
        %268 = sbr.rel (%p266) target = $region32
      $region31: #{up_forward.8} parent=23 // pred_region
        %s269 = sadd.s32 %s21, 1
        %s270 = smul.u32 %s269, 16
        %p271 = scmp.lt.s32.totalorder %s20, 1
        %s272 = scalar_select %p271, %s20, 1
        %p273 = scmp.lt.s32.totalorder %s270, 17
        %s274 = scalar_select %p273, %s270, 17
        %s275 = smul.addr %s274, 3
        %s276 = smul.addr %s272, 54
        %s277 = sadd.s32 %s275, %s276
        %s278 = smul.addr %s277, 8
        %s279 = scalar_lea.vmem %s1, %s278
        %s280 = sadd.s32 %s21, 1
        %s281 = smul.u32 %s280, 16
      $region32: #{up_forward.8} parent=23 // pred_fallthru
        _
      // Predicated region
      $region33: #{up_forward.8} parent=23 // pred_check
        %p282 = pneg %p113
      $region34: #{up_forward.8} parent=23 // pred_check_branch
        %284 = sbr.rel (%p282) target = $region36
      $region35: #{up_forward.8} parent=23 // pred_region
        %s285 = sadd.s32 %s21, 1
        %s286 = smul.u32 %s285, 16
        %s287 = sadd.s32 %s286, 1
        %p288 = scmp.lt.s32.totalorder %s20, 1
        %s289 = scalar_select %p288, %s20, 1
        %p290 = scmp.lt.s32.totalorder %s287, 17
        %s291 = scalar_select %p290, %s287, 17
        %s292 = smul.addr %s291, 3
        %s293 = smul.addr %s289, 54
        %s294 = sadd.s32 %s292, %s293
        %s295 = smul.addr %s294, 8
        %s296 = scalar_lea.vmem %s2, %s295
        %s297 = sadd.s32 %s21, 1
        %s298 = smul.u32 %s297, 16
        %s299 = sadd.s32 %s298, 1
      $region36: #{up_forward.8} parent=23 // pred_fallthru
        _
    $region24: #{up_forward.8} parent=5 // pred_fallthru
      _
    %p300 = scmp.le.s32.totalorder 1, %s13
    %p301 = scmp.lt.s32.totalorder %s13, 3
    %p302 = pnand %p300, %p301
    %p303 = pneg %p302
    // Predicated region
    $region37: #{up_forward.8} parent=5 // pred_check
      _
    $region38: #{up_forward.8} parent=5 // pred_check_branch
      %305 = sbr.rel (%p302) target = $region40
    $region39: #{up_forward.8} parent=5 // pred_region
      %s306 = ssub.s32 %s13, 1
      %s307 = smul.u32 16, %s23
      %s308 = ssub.s32 18, %s307
      %p309 = scmp.lt.s32.totalorder %s308, 16
      %s310 = scalar_select %p309, %s308, 16
      %s311 = smul.u32 8, %s310
      %s312 = smul.u32 %s311, 3
      %p313 = scmp.lt.s32.totalorder %s22, 1
      %s314 = scalar_select %p313, %s22, 1
      %p315 = scmp.lt.s32.totalorder %s307, 17
      %s316 = scalar_select %p315, %s307, 17
      %s317 = smul.addr %s316, 3
      %s318 = smul.addr %s314, 54
      %s319 = sadd.s32 %s317, %s318
      %s320 = smul.addr %s319, 8
      %s321 = scalar_lea.vmem %s0, %s320
      %p322 = pneg %p53
      %p323 = pneg %p50
      %s324 = sadd.s32 %s23, 1
      %s325 = smul.u32 %s324, 16
      %p326 = scmp.lt.s32.totalorder %s22, 1
      %s327 = scalar_select %p326, %s22, 1
      %p328 = scmp.lt.s32.totalorder %s325, 17
      %s329 = scalar_select %p328, %s325, 17
      %s330 = smul.addr %s329, 3
      %s331 = smul.addr %s327, 54
      %s332 = sadd.s32 %s330, %s331
      %s333 = smul.addr %s332, 8
      %s334 = scalar_lea.vmem %s1, %s333
      %p335 = pneg %p85
      %p336 = pneg %p82
      %s337 = sadd.s32 %s23, 1
      %s338 = smul.u32 %s337, 16
      %s339 = sadd.s32 %s338, 1
      %p340 = scmp.lt.s32.totalorder %s22, 1
      %s341 = scalar_select %p340, %s22, 1
      %p342 = scmp.lt.s32.totalorder %s339, 17
      %s343 = scalar_select %p342, %s339, 17
      %s344 = smul.addr %s343, 3
      %s345 = smul.addr %s341, 54
      %s346 = sadd.s32 %s344, %s345
      %s347 = smul.addr %s346, 8
      %s348 = scalar_lea.vmem %s2, %s347
      %p349 = pneg %p119
      %p350 = pneg %p116
      %p351 = pneg %p140
      %p352 = pneg %p137
      %p353 = pneg %p161
      %p354 = pneg %p158
      %p355 = pneg %p189
      %p356 = pneg %p186
      %s357 = smul.u32 16, %s23
      %p358 = scmp.lt.s32.totalorder %s22, 1
      %s359 = scalar_select %p358, %s22, 1
      %p360 = scmp.lt.s32.totalorder %s357, 15
      %s361 = scalar_select %p360, %s357, 15
      %s362 = smul.addr %s361, 2
      %s363 = smul.addr %s359, 32
      %s364 = sadd.s32 %s362, %s363
      %s365 = smul.addr %s364, 8
      %s366 = scalar_lea.vmem %s5, %s365
      %p367 = pneg %p217
      %p368 = pneg %p214
      %p369 = scmp.lt.s32.totalorder %s22, 1
      %s370 = scalar_select %p369, %s22, 1
      %p371 = scmp.lt.s32.totalorder %s23, 0
      %s372 = scalar_select %p371, %s23, 0
      %s373 = sadd.s32 %s372, %s370
      %s374 = smul.addr %s373, 2
      %s375 = scalar_lea.vmem %s6, %s374
      %s376 = smul.u32 16, %s23
      %s377 = ssub.s32 18, %s376
      %p378 = scmp.lt.s32.totalorder %s377, 16
      %s379 = scalar_select %p378, %s377, 16
      %s380 = smul.u32 8, %s379
      %s381 = smul.u32 %s380, 3
      %p382 = scmp.lt.s32.totalorder %s22, 1
      %s383 = scalar_select %p382, %s22, 1
      %p384 = scmp.lt.s32.totalorder %s376, 17
      %s385 = scalar_select %p384, %s376, 17
      %s386 = smul.addr %s385, 3
      %s387 = smul.addr %s383, 54
      %s388 = sadd.s32 %s386, %s387
      %s389 = smul.addr %s388, 8
      %s390 = scalar_lea.vmem %s0, %s389
      %s391 = smul.u32 16, %s23
      %s392 = ssub.s32 18, %s391
      %p393 = scmp.lt.s32.totalorder %s392, 16
      %s394 = scalar_select %p393, %s392, 16
      %s395 = smul.u32 8, %s394
      %s396 = smul.u32 %s395, 3
      %s397 = sadd.s32 %s23, 1
      %s398 = smul.u32 %s397, 16
      %p399 = scmp.lt.s32.totalorder %s22, 1
      %s400 = scalar_select %p399, %s22, 1
      %p401 = scmp.lt.s32.totalorder %s398, 17
      %s402 = scalar_select %p401, %s398, 17
      %s403 = smul.addr %s402, 3
      %s404 = smul.addr %s400, 54
      %s405 = sadd.s32 %s403, %s404
      %s406 = smul.addr %s405, 8
      %s407 = scalar_lea.vmem %s1, %s406
      %s408 = sadd.s32 %s23, 1
      %s409 = smul.u32 %s408, 16
      %s410 = sadd.s32 %s23, 1
      %s411 = smul.u32 %s410, 16
      %s412 = sadd.s32 %s411, 1
      %p413 = scmp.lt.s32.totalorder %s22, 1
      %s414 = scalar_select %p413, %s22, 1
      %p415 = scmp.lt.s32.totalorder %s412, 17
      %s416 = scalar_select %p415, %s412, 17
      %s417 = smul.addr %s416, 3
      %s418 = smul.addr %s414, 54
      %s419 = sadd.s32 %s417, %s418
      %s420 = smul.addr %s419, 8
      %s421 = scalar_lea.vmem %s2, %s420
      %s422 = sadd.s32 %s23, 1
      %s423 = smul.u32 %s422, 16
      %s424 = sadd.s32 %s423, 1
      %s425 = smul.u32 16, %s23
      %p426 = scmp.lt.s32.totalorder %s22, 1
      %s427 = scalar_select %p426, %s22, 1
      %p428 = scmp.lt.s32.totalorder %s425, 15
      %s429 = scalar_select %p428, %s425, 15
      %s430 = smul.addr %s429, 2
      %s431 = smul.addr %s427, 32
      %s432 = sadd.s32 %s430, %s431
      %s433 = smul.addr %s432, 8
      %s434 = scalar_lea.vmem %s5, %s433
      %s435 = smul.u32 16, %s23
      %p436 = scmp.lt.s32.totalorder %s22, 1
      %s437 = scalar_select %p436, %s22, 1
      %p438 = scmp.lt.s32.totalorder %s23, 0
      %s439 = scalar_select %p438, %s23, 0
      %s440 = sadd.s32 %s439, %s437
      %s441 = smul.addr %s440, 2
      %s442 = scalar_lea.vmem %s6, %s441
      %v443 = vld [vmem:[%s390] sm:$0xff]
      %v444 = vld [vmem:[%s390 + $0x8] sm:$0xff]
      %v445 = vld [vmem:[%s390 + $0x10] sm:$0x3]
      %v446 = vld [vmem:[%s390 + $0x18] sm:$0xff]
      %v447 = vld [vmem:[%s390 + $0x20] sm:$0xff]
      %v448 = vld [vmem:[%s390 + $0x28] sm:$0x3]
      %v449 = vld [vmem:[%s390 + $0x30] sm:$0xff]
      %v450 = vld [vmem:[%s390 + $0x38] sm:$0xff]
      %v451 = vld [vmem:[%s390 + $0x40] sm:$0x3]
      %v452 = vld [vmem:[%s390 + $0x48] sm:$0xff]
      %v453 = vld [vmem:[%s390 + $0x50] sm:$0xff]
      %v454 = vld [vmem:[%s390 + $0x58] sm:$0x3]
      %v455 = vld [vmem:[%s390 + $0x60] sm:$0xff]
      %v456 = vld [vmem:[%s390 + $0x68] sm:$0xff]
      %v457 = vld [vmem:[%s390 + $0x70] sm:$0x3]
      %v458 = vld [vmem:[%s390 + $0x78] sm:$0xff]
      %v459 = vld [vmem:[%s390 + $0x80] sm:$0xff]
      %v460 = vld [vmem:[%s390 + $0x88] sm:$0x3]
      %v461 = vld [vmem:[%s390 + $0x90] sm:$0xff]
      %v462 = vld [vmem:[%s390 + $0x98] sm:$0xff]
      %v463 = vld [vmem:[%s390 + $0xa0] sm:$0x3]
      %v464 = vld [vmem:[%s390 + $0xa8] sm:$0xff]
      %v465 = vld [vmem:[%s390 + $0xb0] sm:$0xff]
      %v466 = vld [vmem:[%s390 + $0xb8] sm:$0x3]
      %v467 = vld [vmem:[%s390 + $0xc0] sm:$0xff]
      %v468 = vld [vmem:[%s390 + $0xc8] sm:$0xff]
      %v469 = vld [vmem:[%s390 + $0xd0] sm:$0x3]
      %v470 = vld [vmem:[%s390 + $0xd8] sm:$0xff]
      %v471 = vld [vmem:[%s390 + $0xe0] sm:$0xff]
      %v472 = vld [vmem:[%s390 + $0xe8] sm:$0x3]
      %v473 = vld [vmem:[%s390 + $0xf0] sm:$0xff]
      %v474 = vld [vmem:[%s390 + $0xf8] sm:$0xff]
      %v475 = vld [vmem:[%s390 + $0x100] sm:$0x3]
      %v476 = vld [vmem:[%s390 + $0x108] sm:$0xff]
      %v477 = vld [vmem:[%s390 + $0x110] sm:$0xff]
      %v478 = vld [vmem:[%s390 + $0x118] sm:$0x3]
      %v479 = vld [vmem:[%s390 + $0x120] sm:$0xff]
      %v480 = vld [vmem:[%s390 + $0x128] sm:$0xff]
      %v481 = vld [vmem:[%s390 + $0x130] sm:$0x3]
      %v482 = vld [vmem:[%s390 + $0x138] sm:$0xff]
      %v483 = vld [vmem:[%s390 + $0x140] sm:$0xff]
      %v484 = vld [vmem:[%s390 + $0x148] sm:$0x3]
      %v485 = vld [vmem:[%s390 + $0x150] sm:$0xff]
      %v486 = vld [vmem:[%s390 + $0x158] sm:$0xff]
      %v487 = vld [vmem:[%s390 + $0x160] sm:$0x3]
      %v488 = vld [vmem:[%s390 + $0x168] sm:$0xff]
      %v489 = vld [vmem:[%s390 + $0x170] sm:$0xff]
      %v490 = vld [vmem:[%s390 + $0x178] sm:$0x3]
      %491 = vst [vmem:[#allocation2] sm:$0xff] %v443
      %492 = vst [vmem:[#allocation2 + $0x8] sm:$0xff] %v444
      %493 = vst [vmem:[#allocation2 + $0x10] sm:$0x3] %v445
      %494 = vst [vmem:[#allocation2 + $0x18] sm:$0xff] %v446
      %495 = vst [vmem:[#allocation2 + $0x20] sm:$0xff] %v447
      %496 = vst [vmem:[#allocation2 + $0x28] sm:$0x3] %v448
      %497 = vst [vmem:[#allocation2 + $0x30] sm:$0xff] %v449
      %498 = vst [vmem:[#allocation2 + $0x38] sm:$0xff] %v450
      %499 = vst [vmem:[#allocation2 + $0x40] sm:$0x3] %v451
      %500 = vst [vmem:[#allocation2 + $0x48] sm:$0xff] %v452
      %501 = vst [vmem:[#allocation2 + $0x50] sm:$0xff] %v453
      %502 = vst [vmem:[#allocation2 + $0x58] sm:$0x3] %v454
      %503 = vst [vmem:[#allocation2 + $0x60] sm:$0xff] %v455
      %504 = vst [vmem:[#allocation2 + $0x68] sm:$0xff] %v456
      %505 = vst [vmem:[#allocation2 + $0x70] sm:$0x3] %v457
      %506 = vst [vmem:[#allocation2 + $0x78] sm:$0xff] %v458
      %507 = vst [vmem:[#allocation2 + $0x80] sm:$0xff] %v459
      %508 = vst [vmem:[#allocation2 + $0x88] sm:$0x3] %v460
      %509 = vst [vmem:[#allocation2 + $0x90] sm:$0xff] %v461
      %510 = vst [vmem:[#allocation2 + $0x98] sm:$0xff] %v462
      %511 = vst [vmem:[#allocation2 + $0xa0] sm:$0x3] %v463
      %512 = vst [vmem:[#allocation2 + $0xa8] sm:$0xff] %v464
      %513 = vst [vmem:[#allocation2 + $0xb0] sm:$0xff] %v465
      %514 = vst [vmem:[#allocation2 + $0xb8] sm:$0x3] %v466
      %515 = vst [vmem:[#allocation2 + $0xc0] sm:$0xff] %v467
      %516 = vst [vmem:[#allocation2 + $0xc8] sm:$0xff] %v468
      %517 = vst [vmem:[#allocation2 + $0xd0] sm:$0x3] %v469
      %518 = vst [vmem:[#allocation2 + $0xd8] sm:$0xff] %v470
      %519 = vst [vmem:[#allocation2 + $0xe0] sm:$0xff] %v471
      %520 = vst [vmem:[#allocation2 + $0xe8] sm:$0x3] %v472
      %521 = vst [vmem:[#allocation2 + $0xf0] sm:$0xff] %v473
      %522 = vst [vmem:[#allocation2 + $0xf8] sm:$0xff] %v474
      %523 = vst [vmem:[#allocation2 + $0x100] sm:$0x3] %v475
      %524 = vst [vmem:[#allocation2 + $0x108] sm:$0xff] %v476
      %525 = vst [vmem:[#allocation2 + $0x110] sm:$0xff] %v477
      %526 = vst [vmem:[#allocation2 + $0x118] sm:$0x3] %v478
      %527 = vst [vmem:[#allocation2 + $0x120] sm:$0xff] %v479
      %528 = vst [vmem:[#allocation2 + $0x128] sm:$0xff] %v480
      %529 = vst [vmem:[#allocation2 + $0x130] sm:$0x3] %v481
      %530 = vst [vmem:[#allocation2 + $0x138] sm:$0xff] %v482
      %531 = vst [vmem:[#allocation2 + $0x140] sm:$0xff] %v483
      %532 = vst [vmem:[#allocation2 + $0x148] sm:$0x3] %v484
      %533 = vst [vmem:[#allocation2 + $0x150] sm:$0xff] %v485
      %534 = vst [vmem:[#allocation2 + $0x158] sm:$0xff] %v486
      %535 = vst [vmem:[#allocation2 + $0x160] sm:$0x3] %v487
      %536 = vst [vmem:[#allocation2 + $0x168] sm:$0xff] %v488
      %537 = vst [vmem:[#allocation2 + $0x170] sm:$0xff] %v489
      %538 = vst [vmem:[#allocation2 + $0x178] sm:$0x3] %v490
      %v539 = vld [vmem:[%s407] sm:$0xff]
      %v540 = vld [vmem:[%s407 + $0x8] sm:$0xff]
      %v541 = vld [vmem:[%s407 + $0x10] sm:$0x3]
      %s542 = scalar_lea.vmem [#allocation2], 384
      %543 = vst [vmem:[%s542] sm:$0xff] %v539
      %544 = vst [vmem:[%s542 + $0x8] sm:$0xff] %v540
      %545 = vst [vmem:[%s542 + $0x10] sm:$0x3] %v541
      %v546 = vld [vmem:[%s421] sm:$0xff]
      %v547 = vld [vmem:[%s421 + $0x8] sm:$0xff]
      %v548 = vld [vmem:[%s421 + $0x10] sm:$0x3]
      %s549 = scalar_lea.vmem [#allocation2], 408
      %550 = vst [vmem:[%s549] sm:$0xff] %v546
      %551 = vst [vmem:[%s549 + $0x8] sm:$0xff] %v547
      %552 = vst [vmem:[%s549 + $0x10] sm:$0x3] %v548
      %v553 = vld [vmem:[#allocation2] sm:$0xff]
      %v554 = vld [vmem:[#allocation2 + $0x8] sm:$0xff]
      %v555 = vld [vmem:[#allocation2 + $0x18] sm:$0xff]
      %v556 = vld [vmem:[#allocation2 + $0x20] sm:$0xff]
      %v557 = vld [vmem:[#allocation2 + $0x30] sm:$0xff]
      %v558 = vld [vmem:[#allocation2 + $0x38] sm:$0xff]
      %v559 = vld [vmem:[#allocation2 + $0x48] sm:$0xff]
      %v560 = vld [vmem:[#allocation2 + $0x50] sm:$0xff]
      %v561 = vld [vmem:[#allocation2 + $0x60] sm:$0xff]
      %v562 = vld [vmem:[#allocation2 + $0x68] sm:$0xff]
      %v563 = vld [vmem:[#allocation2 + $0x78] sm:$0xff]
      %v564 = vld [vmem:[#allocation2 + $0x80] sm:$0xff]
      %v565 = vld [vmem:[#allocation2 + $0x90] sm:$0xff]
      %v566 = vld [vmem:[#allocation2 + $0x98] sm:$0xff]
      %v567 = vld [vmem:[#allocation2 + $0xa8] sm:$0xff]
      %v568 = vld [vmem:[#allocation2 + $0xb0] sm:$0xff]
      %v569 = vld [vmem:[#allocation2 + $0xc0] sm:$0xff]
      %v570 = vld [vmem:[#allocation2 + $0xc8] sm:$0xff]
      %v571 = vld [vmem:[#allocation2 + $0xd8] sm:$0xff]
      %v572 = vld [vmem:[#allocation2 + $0xe0] sm:$0xff]
      %v573 = vld [vmem:[#allocation2 + $0xf0] sm:$0xff]
      %v574 = vld [vmem:[#allocation2 + $0xf8] sm:$0xff]
      %v575 = vld [vmem:[#allocation2 + $0x108] sm:$0xff]
      %v576 = vld [vmem:[#allocation2 + $0x110] sm:$0xff]
      %v577 = vld [vmem:[#allocation2 + $0x120] sm:$0xff]
      %v578 = vld [vmem:[#allocation2 + $0x128] sm:$0xff]
      %v579 = vld [vmem:[#allocation2 + $0x138] sm:$0xff]
      %v580 = vld [vmem:[#allocation2 + $0x140] sm:$0xff]
      %v581 = vld [vmem:[#allocation2 + $0x150] sm:$0xff]
      %v582 = vld [vmem:[#allocation2 + $0x158] sm:$0xff]
      %v583 = vld [vmem:[#allocation2 + $0x168] sm:$0xff]
      %v584 = vld [vmem:[#allocation2 + $0x170] sm:$0xff]
      %v585 = vld [vmem:[%s3] sm:$0xff]
      %v586 = vld [vmem:[%s3 + $0x8] sm:$0xff]
      %v587 = vld [vmem:[%s3 + $0x10] sm:$0xff]
      %v588 = vld [vmem:[%s3 + $0x18] sm:$0xff]
      %v589 = vld [vmem:[%s3 + $0x20] sm:$0xff]
      %v590 = vld [vmem:[%s3 + $0x28] sm:$0xff]
      %v591 = vld [vmem:[%s3 + $0x30] sm:$0xff]
      %v592 = vld [vmem:[%s3 + $0x38] sm:$0xff]
      %v593 = vld [vmem:[%s3 + $0x40] sm:$0xff]
      %v594 = vld [vmem:[%s3 + $0x48] sm:$0xff]
      %v595 = vld [vmem:[%s3 + $0x50] sm:$0xff]
      %v596 = vld [vmem:[%s3 + $0x58] sm:$0xff]
      %v597 = vld [vmem:[%s3 + $0x60] sm:$0xff]
      %v598 = vld [vmem:[%s3 + $0x68] sm:$0xff]
      %v599 = vld [vmem:[%s3 + $0x70] sm:$0xff]
      %v600 = vld [vmem:[%s3 + $0x78] sm:$0xff]
      %v601 = vld [vmem:[#allocation2 + $0x1] sm:$0xff]
      %v602 = vld [vmem:[#allocation2 + $0x9] sm:$0xff]
      %v603 = vld [vmem:[#allocation2 + $0x19] sm:$0xff]
      %v604 = vld [vmem:[#allocation2 + $0x21] sm:$0xff]
      %v605 = vld [vmem:[#allocation2 + $0x31] sm:$0xff]
      %v606 = vld [vmem:[#allocation2 + $0x39] sm:$0xff]
      %v607 = vld [vmem:[#allocation2 + $0x49] sm:$0xff]
      %v608 = vld [vmem:[#allocation2 + $0x51] sm:$0xff]
      %v609 = vld [vmem:[#allocation2 + $0x61] sm:$0xff]
      %v610 = vld [vmem:[#allocation2 + $0x69] sm:$0xff]
      %v611 = vld [vmem:[#allocation2 + $0x79] sm:$0xff]
      %v612 = vld [vmem:[#allocation2 + $0x81] sm:$0xff]
      %v613 = vld [vmem:[#allocation2 + $0x91] sm:$0xff]
      %v614 = vld [vmem:[#allocation2 + $0x99] sm:$0xff]
      %v615 = vld [vmem:[#allocation2 + $0xa9] sm:$0xff]
      %v616 = vld [vmem:[#allocation2 + $0xb1] sm:$0xff]
      %v617 = vld [vmem:[#allocation2 + $0xc1] sm:$0xff]
      %v618 = vld [vmem:[#allocation2 + $0xc9] sm:$0xff]
      %v619 = vld [vmem:[#allocation2 + $0xd9] sm:$0xff]
      %v620 = vld [vmem:[#allocation2 + $0xe1] sm:$0xff]
      %v621 = vld [vmem:[#allocation2 + $0xf1] sm:$0xff]
      %v622 = vld [vmem:[#allocation2 + $0xf9] sm:$0xff]
      %v623 = vld [vmem:[#allocation2 + $0x109] sm:$0xff]
      %v624 = vld [vmem:[#allocation2 + $0x111] sm:$0xff]
      %v625 = vld [vmem:[#allocation2 + $0x121] sm:$0xff]
      %v626 = vld [vmem:[#allocation2 + $0x129] sm:$0xff]
      %v627 = vld [vmem:[#allocation2 + $0x139] sm:$0xff]
      %v628 = vld [vmem:[#allocation2 + $0x141] sm:$0xff]
      %v629 = vld [vmem:[#allocation2 + $0x151] sm:$0xff]
      %v630 = vld [vmem:[#allocation2 + $0x159] sm:$0xff]
      %v631 = vld [vmem:[#allocation2 + $0x169] sm:$0xff]
      %v632 = vld [vmem:[#allocation2 + $0x171] sm:$0xff]
      %s633 = scalar_lea.vmem %s3, 128
      %v634 = vld [vmem:[%s633] sm:$0xff]
      %v635 = vld [vmem:[%s633 + $0x8] sm:$0xff]
      %v636 = vld [vmem:[%s633 + $0x10] sm:$0xff]
      %v637 = vld [vmem:[%s633 + $0x18] sm:$0xff]
      %v638 = vld [vmem:[%s633 + $0x20] sm:$0xff]
      %v639 = vld [vmem:[%s633 + $0x28] sm:$0xff]
      %v640 = vld [vmem:[%s633 + $0x30] sm:$0xff]
      %v641 = vld [vmem:[%s633 + $0x38] sm:$0xff]
      %v642 = vld [vmem:[%s633 + $0x40] sm:$0xff]
      %v643 = vld [vmem:[%s633 + $0x48] sm:$0xff]
      %v644 = vld [vmem:[%s633 + $0x50] sm:$0xff]
      %v645 = vld [vmem:[%s633 + $0x58] sm:$0xff]
      %v646 = vld [vmem:[%s633 + $0x60] sm:$0xff]
      %v647 = vld [vmem:[%s633 + $0x68] sm:$0xff]
      %v648 = vld [vmem:[%s633 + $0x70] sm:$0xff]
      %v649 = vld [vmem:[%s633 + $0x78] sm:$0xff]
      %650 = vmatpush.msra.mxu0 %v649
      %651 = vmatpush.msra.mxu0 %v648
      %652 = vmatpush.msra.mxu0 %v647
      %653 = vmatpush.msra.mxu0 %v646
      %654 = vmatpush.msra.mxu0 %v645
      %655 = vmatpush.msra.mxu0 %v644
      %656 = vmatpush.msra.mxu0 %v643
      %657 = vmatpush.msra.mxu0 %v642
      %658 = vmatpush.msra.mxu0 %v641
      %659 = vmatpush.msra.mxu0 %v640
      %660 = vmatpush.msra.mxu0 %v639
      %661 = vmatpush.msra.mxu0 %v638
      %662 = vmatpush.msra.mxu0 %v637
      %663 = vmatpush.msra.mxu0 %v636
      %664 = vmatpush.msra.mxu0 %v635
      %665 = vmatpush.msra.mxu0 %v634
      %666 = vmatmul.f32.gmra.mxu0 %v601
      %v667 = vpop.f32.mrf.mxu0
      %v668 = vadd.f32 0.0, %v667
      %669 = vmatmul.f32.gmra.mxu0 %v602
      %v670 = vpop.f32.mrf.mxu0
      %v671 = vadd.f32 0.0, %v670
      %672 = vmatmul.f32.gmra.mxu0 %v603
      %v673 = vpop.f32.mrf.mxu0
      %v674 = vadd.f32 0.0, %v673
      %675 = vmatmul.f32.gmra.mxu0 %v604
      %v676 = vpop.f32.mrf.mxu0
      %v677 = vadd.f32 0.0, %v676
      %678 = vmatmul.f32.gmra.mxu0 %v605
      %v679 = vpop.f32.mrf.mxu0
      %v680 = vadd.f32 0.0, %v679
      %681 = vmatmul.f32.gmra.mxu0 %v606
      %v682 = vpop.f32.mrf.mxu0
      %v683 = vadd.f32 0.0, %v682
      %684 = vmatmul.f32.gmra.mxu0 %v607
      %v685 = vpop.f32.mrf.mxu0
      %v686 = vadd.f32 0.0, %v685
      %687 = vmatmul.f32.gmra.mxu0 %v608
      %v688 = vpop.f32.mrf.mxu0
      %v689 = vadd.f32 0.0, %v688
      %690 = vmatmul.f32.gmra.mxu0 %v609
      %v691 = vpop.f32.mrf.mxu0
      %v692 = vadd.f32 0.0, %v691
      %693 = vmatmul.f32.gmra.mxu0 %v610
      %v694 = vpop.f32.mrf.mxu0
      %v695 = vadd.f32 0.0, %v694
      %696 = vmatmul.f32.gmra.mxu0 %v611
      %v697 = vpop.f32.mrf.mxu0
      %v698 = vadd.f32 0.0, %v697
      %699 = vmatmul.f32.gmra.mxu0 %v612
      %v700 = vpop.f32.mrf.mxu0
      %v701 = vadd.f32 0.0, %v700
      %702 = vmatmul.f32.gmra.mxu0 %v613
      %v703 = vpop.f32.mrf.mxu0
      %v704 = vadd.f32 0.0, %v703
      %705 = vmatmul.f32.gmra.mxu0 %v614
      %v706 = vpop.f32.mrf.mxu0
      %v707 = vadd.f32 0.0, %v706
      %708 = vmatmul.f32.gmra.mxu0 %v615
      %v709 = vpop.f32.mrf.mxu0
      %v710 = vadd.f32 0.0, %v709
      %711 = vmatmul.f32.gmra.mxu0 %v616
      %v712 = vpop.f32.mrf.mxu0
      %v713 = vadd.f32 0.0, %v712
      %714 = vmatmul.f32.gmra.mxu0 %v617
      %v715 = vpop.f32.mrf.mxu0
      %v716 = vadd.f32 0.0, %v715
      %717 = vmatmul.f32.gmra.mxu0 %v618
      %v718 = vpop.f32.mrf.mxu0
      %v719 = vadd.f32 0.0, %v718
      %720 = vmatmul.f32.gmra.mxu0 %v619
      %v721 = vpop.f32.mrf.mxu0
      %v722 = vadd.f32 0.0, %v721
      %723 = vmatmul.f32.gmra.mxu0 %v620
      %v724 = vpop.f32.mrf.mxu0
      %v725 = vadd.f32 0.0, %v724
      %726 = vmatmul.f32.gmra.mxu0 %v621
      %v727 = vpop.f32.mrf.mxu0
      %v728 = vadd.f32 0.0, %v727
      %729 = vmatmul.f32.gmra.mxu0 %v622
      %v730 = vpop.f32.mrf.mxu0
      %v731 = vadd.f32 0.0, %v730
      %732 = vmatmul.f32.gmra.mxu0 %v623
      %v733 = vpop.f32.mrf.mxu0
      %v734 = vadd.f32 0.0, %v733
      %735 = vmatmul.f32.gmra.mxu0 %v624
      %v736 = vpop.f32.mrf.mxu0
      %v737 = vadd.f32 0.0, %v736
      %738 = vmatmul.f32.gmra.mxu0 %v625
      %v739 = vpop.f32.mrf.mxu0
      %v740 = vadd.f32 0.0, %v739
      %741 = vmatmul.f32.gmra.mxu0 %v626
      %v742 = vpop.f32.mrf.mxu0
      %v743 = vadd.f32 0.0, %v742
      %744 = vmatmul.f32.gmra.mxu0 %v627
      %v745 = vpop.f32.mrf.mxu0
      %v746 = vadd.f32 0.0, %v745
      %747 = vmatmul.f32.gmra.mxu0 %v628
      %v748 = vpop.f32.mrf.mxu0
      %v749 = vadd.f32 0.0, %v748
      %750 = vmatmul.f32.gmra.mxu0 %v629
      %v751 = vpop.f32.mrf.mxu0
      %v752 = vadd.f32 0.0, %v751
      %753 = vmatmul.f32.gmra.mxu0 %v630
      %v754 = vpop.f32.mrf.mxu0
      %v755 = vadd.f32 0.0, %v754
      %756 = vmatmul.f32.gmra.mxu0 %v631
      %v757 = vpop.f32.mrf.mxu0
      %v758 = vadd.f32 0.0, %v757
      %759 = vmatmul.f32.gmra.mxu0 %v632
      %v760 = vpop.f32.mrf.mxu0
      %v761 = vadd.f32 0.0, %v760
      %762 = vdwg.mxu0
      %763 = vmatpush.msra.mxu0 %v600
      %764 = vmatpush.msra.mxu0 %v599
      %765 = vmatpush.msra.mxu0 %v598
      %766 = vmatpush.msra.mxu0 %v597
      %767 = vmatpush.msra.mxu0 %v596
      %768 = vmatpush.msra.mxu0 %v595
      %769 = vmatpush.msra.mxu0 %v594
      %770 = vmatpush.msra.mxu0 %v593
      %771 = vmatpush.msra.mxu0 %v592
      %772 = vmatpush.msra.mxu0 %v591
      %773 = vmatpush.msra.mxu0 %v590
      %774 = vmatpush.msra.mxu0 %v589
      %775 = vmatpush.msra.mxu0 %v588
      %776 = vmatpush.msra.mxu0 %v587
      %777 = vmatpush.msra.mxu0 %v586
      %778 = vmatpush.msra.mxu0 %v585
      %779 = vmatmul.f32.gmra.mxu0 %v553
      %v780 = vpop.f32.mrf.mxu0
      %v781 = vadd.f32 %v668, %v780
      %782 = vmatmul.f32.gmra.mxu0 %v554
      %v783 = vpop.f32.mrf.mxu0
      %v784 = vadd.f32 %v671, %v783
      %785 = vmatmul.f32.gmra.mxu0 %v555
      %v786 = vpop.f32.mrf.mxu0
      %v787 = vadd.f32 %v674, %v786
      %788 = vmatmul.f32.gmra.mxu0 %v556
      %v789 = vpop.f32.mrf.mxu0
      %v790 = vadd.f32 %v677, %v789
      %791 = vmatmul.f32.gmra.mxu0 %v557
      %v792 = vpop.f32.mrf.mxu0
      %v793 = vadd.f32 %v680, %v792
      %794 = vmatmul.f32.gmra.mxu0 %v558
      %v795 = vpop.f32.mrf.mxu0
      %v796 = vadd.f32 %v683, %v795
      %797 = vmatmul.f32.gmra.mxu0 %v559
      %v798 = vpop.f32.mrf.mxu0
      %v799 = vadd.f32 %v686, %v798
      %800 = vmatmul.f32.gmra.mxu0 %v560
      %v801 = vpop.f32.mrf.mxu0
      %v802 = vadd.f32 %v689, %v801
      %803 = vmatmul.f32.gmra.mxu0 %v561
      %v804 = vpop.f32.mrf.mxu0
      %v805 = vadd.f32 %v692, %v804
      %806 = vmatmul.f32.gmra.mxu0 %v562
      %v807 = vpop.f32.mrf.mxu0
      %v808 = vadd.f32 %v695, %v807
      %809 = vmatmul.f32.gmra.mxu0 %v563
      %v810 = vpop.f32.mrf.mxu0
      %v811 = vadd.f32 %v698, %v810
      %812 = vmatmul.f32.gmra.mxu0 %v564
      %v813 = vpop.f32.mrf.mxu0
      %v814 = vadd.f32 %v701, %v813
      %815 = vmatmul.f32.gmra.mxu0 %v565
      %v816 = vpop.f32.mrf.mxu0
      %v817 = vadd.f32 %v704, %v816
      %818 = vmatmul.f32.gmra.mxu0 %v566
      %v819 = vpop.f32.mrf.mxu0
      %v820 = vadd.f32 %v707, %v819
      %821 = vmatmul.f32.gmra.mxu0 %v567
      %v822 = vpop.f32.mrf.mxu0
      %v823 = vadd.f32 %v710, %v822
      %824 = vmatmul.f32.gmra.mxu0 %v568
      %v825 = vpop.f32.mrf.mxu0
      %v826 = vadd.f32 %v713, %v825
      %827 = vmatmul.f32.gmra.mxu0 %v569
      %v828 = vpop.f32.mrf.mxu0
      %v829 = vadd.f32 %v716, %v828
      %830 = vmatmul.f32.gmra.mxu0 %v570
      %v831 = vpop.f32.mrf.mxu0
      %v832 = vadd.f32 %v719, %v831
      %833 = vmatmul.f32.gmra.mxu0 %v571
      %v834 = vpop.f32.mrf.mxu0
      %v835 = vadd.f32 %v722, %v834
      %836 = vmatmul.f32.gmra.mxu0 %v572
      %v837 = vpop.f32.mrf.mxu0
      %v838 = vadd.f32 %v725, %v837
      %839 = vmatmul.f32.gmra.mxu0 %v573
      %v840 = vpop.f32.mrf.mxu0
      %v841 = vadd.f32 %v728, %v840
      %842 = vmatmul.f32.gmra.mxu0 %v574
      %v843 = vpop.f32.mrf.mxu0
      %v844 = vadd.f32 %v731, %v843
      %845 = vmatmul.f32.gmra.mxu0 %v575
      %v846 = vpop.f32.mrf.mxu0
      %v847 = vadd.f32 %v734, %v846
      %848 = vmatmul.f32.gmra.mxu0 %v576
      %v849 = vpop.f32.mrf.mxu0
      %v850 = vadd.f32 %v737, %v849
      %851 = vmatmul.f32.gmra.mxu0 %v577
      %v852 = vpop.f32.mrf.mxu0
      %v853 = vadd.f32 %v740, %v852
      %854 = vmatmul.f32.gmra.mxu0 %v578
      %v855 = vpop.f32.mrf.mxu0
      %v856 = vadd.f32 %v743, %v855
      %857 = vmatmul.f32.gmra.mxu0 %v579
      %v858 = vpop.f32.mrf.mxu0
      %v859 = vadd.f32 %v746, %v858
      %860 = vmatmul.f32.gmra.mxu0 %v580
      %v861 = vpop.f32.mrf.mxu0
      %v862 = vadd.f32 %v749, %v861
      %863 = vmatmul.f32.gmra.mxu0 %v581
      %v864 = vpop.f32.mrf.mxu0
      %v865 = vadd.f32 %v752, %v864
      %866 = vmatmul.f32.gmra.mxu0 %v582
      %v867 = vpop.f32.mrf.mxu0
      %v868 = vadd.f32 %v755, %v867
      %869 = vmatmul.f32.gmra.mxu0 %v583
      %v870 = vpop.f32.mrf.mxu0
      %v871 = vadd.f32 %v758, %v870
      %872 = vmatmul.f32.gmra.mxu0 %v584
      %v873 = vpop.f32.mrf.mxu0
      %v874 = vadd.f32 %v761, %v873
      %875 = vdwg.mxu0
      %v876 = vld [vmem:[#allocation2 + $0x2] sm:$0xff]
      %v877 = vld [vmem:[#allocation2 + $0xa] sm:$0xff]
      %v878 = vld [vmem:[#allocation2 + $0x1a] sm:$0xff]
      %v879 = vld [vmem:[#allocation2 + $0x22] sm:$0xff]
      %v880 = vld [vmem:[#allocation2 + $0x32] sm:$0xff]
      %v881 = vld [vmem:[#allocation2 + $0x3a] sm:$0xff]
      %v882 = vld [vmem:[#allocation2 + $0x4a] sm:$0xff]
      %v883 = vld [vmem:[#allocation2 + $0x52] sm:$0xff]
      %v884 = vld [vmem:[#allocation2 + $0x62] sm:$0xff]
      %v885 = vld [vmem:[#allocation2 + $0x6a] sm:$0xff]
      %v886 = vld [vmem:[#allocation2 + $0x7a] sm:$0xff]
      %v887 = vld [vmem:[#allocation2 + $0x82] sm:$0xff]
      %v888 = vld [vmem:[#allocation2 + $0x92] sm:$0xff]
      %v889 = vld [vmem:[#allocation2 + $0x9a] sm:$0xff]
      %v890 = vld [vmem:[#allocation2 + $0xaa] sm:$0xff]
      %v891 = vld [vmem:[#allocation2 + $0xb2] sm:$0xff]
      %v892 = vld [vmem:[#allocation2 + $0xc2] sm:$0xff]
      %v893 = vld [vmem:[#allocation2 + $0xca] sm:$0xff]
      %v894 = vld [vmem:[#allocation2 + $0xda] sm:$0xff]
      %v895 = vld [vmem:[#allocation2 + $0xe2] sm:$0xff]
      %v896 = vld [vmem:[#allocation2 + $0xf2] sm:$0xff]
      %v897 = vld [vmem:[#allocation2 + $0xfa] sm:$0xff]
      %v898 = vld [vmem:[#allocation2 + $0x10a] sm:$0xff]
      %v899 = vld [vmem:[#allocation2 + $0x112] sm:$0xff]
      %v900 = vld [vmem:[#allocation2 + $0x122] sm:$0xff]
      %v901 = vld [vmem:[#allocation2 + $0x12a] sm:$0xff]
      %v902 = vld [vmem:[#allocation2 + $0x13a] sm:$0xff]
      %v903 = vld [vmem:[#allocation2 + $0x142] sm:$0xff]
      %v904 = vld [vmem:[#allocation2 + $0x152] sm:$0xff]
      %v905 = vld [vmem:[#allocation2 + $0x15a] sm:$0xff]
      %v906 = vld [vmem:[#allocation2 + $0x16a] sm:$0xff]
      %v907 = vld [vmem:[#allocation2 + $0x172] sm:$0xff]
      %s908 = scalar_lea.vmem %s3, 256
      %v909 = vld [vmem:[%s908] sm:$0xff]
      %v910 = vld [vmem:[%s908 + $0x8] sm:$0xff]
      %v911 = vld [vmem:[%s908 + $0x10] sm:$0xff]
      %v912 = vld [vmem:[%s908 + $0x18] sm:$0xff]
      %v913 = vld [vmem:[%s908 + $0x20] sm:$0xff]
      %v914 = vld [vmem:[%s908 + $0x28] sm:$0xff]
      %v915 = vld [vmem:[%s908 + $0x30] sm:$0xff]
      %v916 = vld [vmem:[%s908 + $0x38] sm:$0xff]
      %v917 = vld [vmem:[%s908 + $0x40] sm:$0xff]
      %v918 = vld [vmem:[%s908 + $0x48] sm:$0xff]
      %v919 = vld [vmem:[%s908 + $0x50] sm:$0xff]
      %v920 = vld [vmem:[%s908 + $0x58] sm:$0xff]
      %v921 = vld [vmem:[%s908 + $0x60] sm:$0xff]
      %v922 = vld [vmem:[%s908 + $0x68] sm:$0xff]
      %v923 = vld [vmem:[%s908 + $0x70] sm:$0xff]
      %v924 = vld [vmem:[%s908 + $0x78] sm:$0xff]
      %925 = vmatpush.msra.mxu0 %v924
      %926 = vmatpush.msra.mxu0 %v923
      %927 = vmatpush.msra.mxu0 %v922
      %928 = vmatpush.msra.mxu0 %v921
      %929 = vmatpush.msra.mxu0 %v920
      %930 = vmatpush.msra.mxu0 %v919
      %931 = vmatpush.msra.mxu0 %v918
      %932 = vmatpush.msra.mxu0 %v917
      %933 = vmatpush.msra.mxu0 %v916
      %934 = vmatpush.msra.mxu0 %v915
      %935 = vmatpush.msra.mxu0 %v914
      %936 = vmatpush.msra.mxu0 %v913
      %937 = vmatpush.msra.mxu0 %v912
      %938 = vmatpush.msra.mxu0 %v911
      %939 = vmatpush.msra.mxu0 %v910
      %940 = vmatpush.msra.mxu0 %v909
      %941 = vmatmul.f32.gmra.mxu0 %v876
      %v942 = vpop.f32.mrf.mxu0
      %v943 = vadd.f32 0.0, %v942
      %944 = vmatmul.f32.gmra.mxu0 %v877
      %v945 = vpop.f32.mrf.mxu0
      %v946 = vadd.f32 0.0, %v945
      %947 = vmatmul.f32.gmra.mxu0 %v878
      %v948 = vpop.f32.mrf.mxu0
      %v949 = vadd.f32 0.0, %v948
      %950 = vmatmul.f32.gmra.mxu0 %v879
      %v951 = vpop.f32.mrf.mxu0
      %v952 = vadd.f32 0.0, %v951
      %953 = vmatmul.f32.gmra.mxu0 %v880
      %v954 = vpop.f32.mrf.mxu0
      %v955 = vadd.f32 0.0, %v954
      %956 = vmatmul.f32.gmra.mxu0 %v881
      %v957 = vpop.f32.mrf.mxu0
      %v958 = vadd.f32 0.0, %v957
      %959 = vmatmul.f32.gmra.mxu0 %v882
      %v960 = vpop.f32.mrf.mxu0
      %v961 = vadd.f32 0.0, %v960
      %962 = vmatmul.f32.gmra.mxu0 %v883
      %v963 = vpop.f32.mrf.mxu0
      %v964 = vadd.f32 0.0, %v963
      %965 = vmatmul.f32.gmra.mxu0 %v884
      %v966 = vpop.f32.mrf.mxu0
      %v967 = vadd.f32 0.0, %v966
      %968 = vmatmul.f32.gmra.mxu0 %v885
      %v969 = vpop.f32.mrf.mxu0
      %v970 = vadd.f32 0.0, %v969
      %971 = vmatmul.f32.gmra.mxu0 %v886
      %v972 = vpop.f32.mrf.mxu0
      %v973 = vadd.f32 0.0, %v972
      %974 = vmatmul.f32.gmra.mxu0 %v887
      %v975 = vpop.f32.mrf.mxu0
      %v976 = vadd.f32 0.0, %v975
      %977 = vmatmul.f32.gmra.mxu0 %v888
      %v978 = vpop.f32.mrf.mxu0
      %v979 = vadd.f32 0.0, %v978
      %980 = vmatmul.f32.gmra.mxu0 %v889
      %v981 = vpop.f32.mrf.mxu0
      %v982 = vadd.f32 0.0, %v981
      %983 = vmatmul.f32.gmra.mxu0 %v890
      %v984 = vpop.f32.mrf.mxu0
      %v985 = vadd.f32 0.0, %v984
      %986 = vmatmul.f32.gmra.mxu0 %v891
      %v987 = vpop.f32.mrf.mxu0
      %v988 = vadd.f32 0.0, %v987
      %989 = vmatmul.f32.gmra.mxu0 %v892
      %v990 = vpop.f32.mrf.mxu0
      %v991 = vadd.f32 0.0, %v990
      %992 = vmatmul.f32.gmra.mxu0 %v893
      %v993 = vpop.f32.mrf.mxu0
      %v994 = vadd.f32 0.0, %v993
      %995 = vmatmul.f32.gmra.mxu0 %v894
      %v996 = vpop.f32.mrf.mxu0
      %v997 = vadd.f32 0.0, %v996
      %998 = vmatmul.f32.gmra.mxu0 %v895
      %v999 = vpop.f32.mrf.mxu0
      %v1000 = vadd.f32 0.0, %v999
      %1001 = vmatmul.f32.gmra.mxu0 %v896
      %v1002 = vpop.f32.mrf.mxu0
      %v1003 = vadd.f32 0.0, %v1002
      %1004 = vmatmul.f32.gmra.mxu0 %v897
      %v1005 = vpop.f32.mrf.mxu0
      %v1006 = vadd.f32 0.0, %v1005
      %1007 = vmatmul.f32.gmra.mxu0 %v898
      %v1008 = vpop.f32.mrf.mxu0
      %v1009 = vadd.f32 0.0, %v1008
      %1010 = vmatmul.f32.gmra.mxu0 %v899
      %v1011 = vpop.f32.mrf.mxu0
      %v1012 = vadd.f32 0.0, %v1011
      %1013 = vmatmul.f32.gmra.mxu0 %v900
      %v1014 = vpop.f32.mrf.mxu0
      %v1015 = vadd.f32 0.0, %v1014
      %1016 = vmatmul.f32.gmra.mxu0 %v901
      %v1017 = vpop.f32.mrf.mxu0
      %v1018 = vadd.f32 0.0, %v1017
      %1019 = vmatmul.f32.gmra.mxu0 %v902
      %v1020 = vpop.f32.mrf.mxu0
      %v1021 = vadd.f32 0.0, %v1020
      %1022 = vmatmul.f32.gmra.mxu0 %v903
      %v1023 = vpop.f32.mrf.mxu0
      %v1024 = vadd.f32 0.0, %v1023
      %1025 = vmatmul.f32.gmra.mxu0 %v904
      %v1026 = vpop.f32.mrf.mxu0
      %v1027 = vadd.f32 0.0, %v1026
      %1028 = vmatmul.f32.gmra.mxu0 %v905
      %v1029 = vpop.f32.mrf.mxu0
      %v1030 = vadd.f32 0.0, %v1029
      %1031 = vmatmul.f32.gmra.mxu0 %v906
      %v1032 = vpop.f32.mrf.mxu0
      %v1033 = vadd.f32 0.0, %v1032
      %1034 = vmatmul.f32.gmra.mxu0 %v907
      %v1035 = vpop.f32.mrf.mxu0
      %v1036 = vadd.f32 0.0, %v1035
      %1037 = vdwg.mxu0
      %v1038 = vadd.f32 %v781, %v943
      %v1039 = vadd.f32 %v784, %v946
      %v1040 = vadd.f32 %v787, %v949
      %v1041 = vadd.f32 %v790, %v952
      %v1042 = vadd.f32 %v793, %v955
      %v1043 = vadd.f32 %v796, %v958
      %v1044 = vadd.f32 %v799, %v961
      %v1045 = vadd.f32 %v802, %v964
      %v1046 = vadd.f32 %v805, %v967
      %v1047 = vadd.f32 %v808, %v970
      %v1048 = vadd.f32 %v811, %v973
      %v1049 = vadd.f32 %v814, %v976
      %v1050 = vadd.f32 %v817, %v979
      %v1051 = vadd.f32 %v820, %v982
      %v1052 = vadd.f32 %v823, %v985
      %v1053 = vadd.f32 %v826, %v988
      %v1054 = vadd.f32 %v829, %v991
      %v1055 = vadd.f32 %v832, %v994
      %v1056 = vadd.f32 %v835, %v997
      %v1057 = vadd.f32 %v838, %v1000
      %v1058 = vadd.f32 %v841, %v1003
      %v1059 = vadd.f32 %v844, %v1006
      %v1060 = vadd.f32 %v847, %v1009
      %v1061 = vadd.f32 %v850, %v1012
      %v1062 = vadd.f32 %v853, %v1015
      %v1063 = vadd.f32 %v856, %v1018
      %v1064 = vadd.f32 %v859, %v1021
      %v1065 = vadd.f32 %v862, %v1024
      %v1066 = vadd.f32 %v865, %v1027
      %v1067 = vadd.f32 %v868, %v1030
      %v1068 = vadd.f32 %v871, %v1033
      %v1069 = vadd.f32 %v874, %v1036
      %s1070 = scalar_lea.vmem [#allocation2], 24
      %v1071 = vld [vmem:[%s1070] sm:$0xff]
      %v1072 = vld [vmem:[%s1070 + $0x8] sm:$0xff]
      %v1073 = vld [vmem:[%s1070 + $0x18] sm:$0xff]
      %v1074 = vld [vmem:[%s1070 + $0x20] sm:$0xff]
      %v1075 = vld [vmem:[%s1070 + $0x30] sm:$0xff]
      %v1076 = vld [vmem:[%s1070 + $0x38] sm:$0xff]
      %v1077 = vld [vmem:[%s1070 + $0x48] sm:$0xff]
      %v1078 = vld [vmem:[%s1070 + $0x50] sm:$0xff]
      %v1079 = vld [vmem:[%s1070 + $0x60] sm:$0xff]
      %v1080 = vld [vmem:[%s1070 + $0x68] sm:$0xff]
      %v1081 = vld [vmem:[%s1070 + $0x78] sm:$0xff]
      %v1082 = vld [vmem:[%s1070 + $0x80] sm:$0xff]
      %v1083 = vld [vmem:[%s1070 + $0x90] sm:$0xff]
      %v1084 = vld [vmem:[%s1070 + $0x98] sm:$0xff]
      %v1085 = vld [vmem:[%s1070 + $0xa8] sm:$0xff]
      %v1086 = vld [vmem:[%s1070 + $0xb0] sm:$0xff]
      %v1087 = vld [vmem:[%s1070 + $0xc0] sm:$0xff]
      %v1088 = vld [vmem:[%s1070 + $0xc8] sm:$0xff]
      %v1089 = vld [vmem:[%s1070 + $0xd8] sm:$0xff]
      %v1090 = vld [vmem:[%s1070 + $0xe0] sm:$0xff]
      %v1091 = vld [vmem:[%s1070 + $0xf0] sm:$0xff]
      %v1092 = vld [vmem:[%s1070 + $0xf8] sm:$0xff]
      %v1093 = vld [vmem:[%s1070 + $0x108] sm:$0xff]
      %v1094 = vld [vmem:[%s1070 + $0x110] sm:$0xff]
      %v1095 = vld [vmem:[%s1070 + $0x120] sm:$0xff]
      %v1096 = vld [vmem:[%s1070 + $0x128] sm:$0xff]
      %v1097 = vld [vmem:[%s1070 + $0x138] sm:$0xff]
      %v1098 = vld [vmem:[%s1070 + $0x140] sm:$0xff]
      %v1099 = vld [vmem:[%s1070 + $0x150] sm:$0xff]
      %v1100 = vld [vmem:[%s1070 + $0x158] sm:$0xff]
      %v1101 = vld [vmem:[%s1070 + $0x168] sm:$0xff]
      %v1102 = vld [vmem:[%s1070 + $0x170] sm:$0xff]
      %s1103 = scalar_lea.vmem %s3, 384
      %v1104 = vld [vmem:[%s1103] sm:$0xff]
      %v1105 = vld [vmem:[%s1103 + $0x8] sm:$0xff]
      %v1106 = vld [vmem:[%s1103 + $0x10] sm:$0xff]
      %v1107 = vld [vmem:[%s1103 + $0x18] sm:$0xff]
      %v1108 = vld [vmem:[%s1103 + $0x20] sm:$0xff]
      %v1109 = vld [vmem:[%s1103 + $0x28] sm:$0xff]
      %v1110 = vld [vmem:[%s1103 + $0x30] sm:$0xff]
      %v1111 = vld [vmem:[%s1103 + $0x38] sm:$0xff]
      %v1112 = vld [vmem:[%s1103 + $0x40] sm:$0xff]
      %v1113 = vld [vmem:[%s1103 + $0x48] sm:$0xff]
      %v1114 = vld [vmem:[%s1103 + $0x50] sm:$0xff]
      %v1115 = vld [vmem:[%s1103 + $0x58] sm:$0xff]
      %v1116 = vld [vmem:[%s1103 + $0x60] sm:$0xff]
      %v1117 = vld [vmem:[%s1103 + $0x68] sm:$0xff]
      %v1118 = vld [vmem:[%s1103 + $0x70] sm:$0xff]
      %v1119 = vld [vmem:[%s1103 + $0x78] sm:$0xff]
      %1120 = vmatpush.msra.mxu0 %v1119
      %1121 = vmatpush.msra.mxu0 %v1118
      %1122 = vmatpush.msra.mxu0 %v1117
      %1123 = vmatpush.msra.mxu0 %v1116
      %1124 = vmatpush.msra.mxu0 %v1115
      %1125 = vmatpush.msra.mxu0 %v1114
      %1126 = vmatpush.msra.mxu0 %v1113
      %1127 = vmatpush.msra.mxu0 %v1112
      %1128 = vmatpush.msra.mxu0 %v1111
      %1129 = vmatpush.msra.mxu0 %v1110
      %1130 = vmatpush.msra.mxu0 %v1109
      %1131 = vmatpush.msra.mxu0 %v1108
      %1132 = vmatpush.msra.mxu0 %v1107
      %1133 = vmatpush.msra.mxu0 %v1106
      %1134 = vmatpush.msra.mxu0 %v1105
      %1135 = vmatpush.msra.mxu0 %v1104
      %1136 = vmatmul.f32.gmra.mxu0 %v1071
      %v1137 = vpop.f32.mrf.mxu0
      %v1138 = vadd.f32 0.0, %v1137
      %1139 = vmatmul.f32.gmra.mxu0 %v1072
      %v1140 = vpop.f32.mrf.mxu0
      %v1141 = vadd.f32 0.0, %v1140
      %1142 = vmatmul.f32.gmra.mxu0 %v1073
      %v1143 = vpop.f32.mrf.mxu0
      %v1144 = vadd.f32 0.0, %v1143
      %1145 = vmatmul.f32.gmra.mxu0 %v1074
      %v1146 = vpop.f32.mrf.mxu0
      %v1147 = vadd.f32 0.0, %v1146
      %1148 = vmatmul.f32.gmra.mxu0 %v1075
      %v1149 = vpop.f32.mrf.mxu0
      %v1150 = vadd.f32 0.0, %v1149
      %1151 = vmatmul.f32.gmra.mxu0 %v1076
      %v1152 = vpop.f32.mrf.mxu0
      %v1153 = vadd.f32 0.0, %v1152
      %1154 = vmatmul.f32.gmra.mxu0 %v1077
      %v1155 = vpop.f32.mrf.mxu0
      %v1156 = vadd.f32 0.0, %v1155
      %1157 = vmatmul.f32.gmra.mxu0 %v1078
      %v1158 = vpop.f32.mrf.mxu0
      %v1159 = vadd.f32 0.0, %v1158
      %1160 = vmatmul.f32.gmra.mxu0 %v1079
      %v1161 = vpop.f32.mrf.mxu0
      %v1162 = vadd.f32 0.0, %v1161
      %1163 = vmatmul.f32.gmra.mxu0 %v1080
      %v1164 = vpop.f32.mrf.mxu0
      %v1165 = vadd.f32 0.0, %v1164
      %1166 = vmatmul.f32.gmra.mxu0 %v1081
      %v1167 = vpop.f32.mrf.mxu0
      %v1168 = vadd.f32 0.0, %v1167
      %1169 = vmatmul.f32.gmra.mxu0 %v1082
      %v1170 = vpop.f32.mrf.mxu0
      %v1171 = vadd.f32 0.0, %v1170
      %1172 = vmatmul.f32.gmra.mxu0 %v1083
      %v1173 = vpop.f32.mrf.mxu0
      %v1174 = vadd.f32 0.0, %v1173
      %1175 = vmatmul.f32.gmra.mxu0 %v1084
      %v1176 = vpop.f32.mrf.mxu0
      %v1177 = vadd.f32 0.0, %v1176
      %1178 = vmatmul.f32.gmra.mxu0 %v1085
      %v1179 = vpop.f32.mrf.mxu0
      %v1180 = vadd.f32 0.0, %v1179
      %1181 = vmatmul.f32.gmra.mxu0 %v1086
      %v1182 = vpop.f32.mrf.mxu0
      %v1183 = vadd.f32 0.0, %v1182
      %1184 = vmatmul.f32.gmra.mxu0 %v1087
      %v1185 = vpop.f32.mrf.mxu0
      %v1186 = vadd.f32 0.0, %v1185
      %1187 = vmatmul.f32.gmra.mxu0 %v1088
      %v1188 = vpop.f32.mrf.mxu0
      %v1189 = vadd.f32 0.0, %v1188
      %1190 = vmatmul.f32.gmra.mxu0 %v1089
      %v1191 = vpop.f32.mrf.mxu0
      %v1192 = vadd.f32 0.0, %v1191
      %1193 = vmatmul.f32.gmra.mxu0 %v1090
      %v1194 = vpop.f32.mrf.mxu0
      %v1195 = vadd.f32 0.0, %v1194
      %1196 = vmatmul.f32.gmra.mxu0 %v1091
      %v1197 = vpop.f32.mrf.mxu0
      %v1198 = vadd.f32 0.0, %v1197
      %1199 = vmatmul.f32.gmra.mxu0 %v1092
      %v1200 = vpop.f32.mrf.mxu0
      %v1201 = vadd.f32 0.0, %v1200
      %1202 = vmatmul.f32.gmra.mxu0 %v1093
      %v1203 = vpop.f32.mrf.mxu0
      %v1204 = vadd.f32 0.0, %v1203
      %1205 = vmatmul.f32.gmra.mxu0 %v1094
      %v1206 = vpop.f32.mrf.mxu0
      %v1207 = vadd.f32 0.0, %v1206
      %1208 = vmatmul.f32.gmra.mxu0 %v1095
      %v1209 = vpop.f32.mrf.mxu0
      %v1210 = vadd.f32 0.0, %v1209
      %1211 = vmatmul.f32.gmra.mxu0 %v1096
      %v1212 = vpop.f32.mrf.mxu0
      %v1213 = vadd.f32 0.0, %v1212
      %1214 = vmatmul.f32.gmra.mxu0 %v1097
      %v1215 = vpop.f32.mrf.mxu0
      %v1216 = vadd.f32 0.0, %v1215
      %1217 = vmatmul.f32.gmra.mxu0 %v1098
      %v1218 = vpop.f32.mrf.mxu0
      %v1219 = vadd.f32 0.0, %v1218
      %1220 = vmatmul.f32.gmra.mxu0 %v1099
      %v1221 = vpop.f32.mrf.mxu0
      %v1222 = vadd.f32 0.0, %v1221
      %1223 = vmatmul.f32.gmra.mxu0 %v1100
      %v1224 = vpop.f32.mrf.mxu0
      %v1225 = vadd.f32 0.0, %v1224
      %1226 = vmatmul.f32.gmra.mxu0 %v1101
      %v1227 = vpop.f32.mrf.mxu0
      %v1228 = vadd.f32 0.0, %v1227
      %1229 = vmatmul.f32.gmra.mxu0 %v1102
      %v1230 = vpop.f32.mrf.mxu0
      %v1231 = vadd.f32 0.0, %v1230
      %1232 = vdwg.mxu0
      %v1233 = vadd.f32 %v1038, %v1138
      %v1234 = vadd.f32 %v1039, %v1141
      %v1235 = vadd.f32 %v1040, %v1144
      %v1236 = vadd.f32 %v1041, %v1147
      %v1237 = vadd.f32 %v1042, %v1150
      %v1238 = vadd.f32 %v1043, %v1153
      %v1239 = vadd.f32 %v1044, %v1156
      %v1240 = vadd.f32 %v1045, %v1159
      %v1241 = vadd.f32 %v1046, %v1162
      %v1242 = vadd.f32 %v1047, %v1165
      %v1243 = vadd.f32 %v1048, %v1168
      %v1244 = vadd.f32 %v1049, %v1171
      %v1245 = vadd.f32 %v1050, %v1174
      %v1246 = vadd.f32 %v1051, %v1177
      %v1247 = vadd.f32 %v1052, %v1180
      %v1248 = vadd.f32 %v1053, %v1183
      %v1249 = vadd.f32 %v1054, %v1186
      %v1250 = vadd.f32 %v1055, %v1189
      %v1251 = vadd.f32 %v1056, %v1192
      %v1252 = vadd.f32 %v1057, %v1195
      %v1253 = vadd.f32 %v1058, %v1198
      %v1254 = vadd.f32 %v1059, %v1201
      %v1255 = vadd.f32 %v1060, %v1204
      %v1256 = vadd.f32 %v1061, %v1207
      %v1257 = vadd.f32 %v1062, %v1210
      %v1258 = vadd.f32 %v1063, %v1213
      %v1259 = vadd.f32 %v1064, %v1216
      %v1260 = vadd.f32 %v1065, %v1219
      %v1261 = vadd.f32 %v1066, %v1222
      %v1262 = vadd.f32 %v1067, %v1225
      %v1263 = vadd.f32 %v1068, %v1228
      %v1264 = vadd.f32 %v1069, %v1231
      %v1265 = vld [vmem:[%s1070 + $0x1] sm:$0xff]
      %v1266 = vld [vmem:[%s1070 + $0x9] sm:$0xff]
      %v1267 = vld [vmem:[%s1070 + $0x19] sm:$0xff]
      %v1268 = vld [vmem:[%s1070 + $0x21] sm:$0xff]
      %v1269 = vld [vmem:[%s1070 + $0x31] sm:$0xff]
      %v1270 = vld [vmem:[%s1070 + $0x39] sm:$0xff]
      %v1271 = vld [vmem:[%s1070 + $0x49] sm:$0xff]
      %v1272 = vld [vmem:[%s1070 + $0x51] sm:$0xff]
      %v1273 = vld [vmem:[%s1070 + $0x61] sm:$0xff]
      %v1274 = vld [vmem:[%s1070 + $0x69] sm:$0xff]
      %v1275 = vld [vmem:[%s1070 + $0x79] sm:$0xff]
      %v1276 = vld [vmem:[%s1070 + $0x81] sm:$0xff]
      %v1277 = vld [vmem:[%s1070 + $0x91] sm:$0xff]
      %v1278 = vld [vmem:[%s1070 + $0x99] sm:$0xff]
      %v1279 = vld [vmem:[%s1070 + $0xa9] sm:$0xff]
      %v1280 = vld [vmem:[%s1070 + $0xb1] sm:$0xff]
      %v1281 = vld [vmem:[%s1070 + $0xc1] sm:$0xff]
      %v1282 = vld [vmem:[%s1070 + $0xc9] sm:$0xff]
      %v1283 = vld [vmem:[%s1070 + $0xd9] sm:$0xff]
      %v1284 = vld [vmem:[%s1070 + $0xe1] sm:$0xff]
      %v1285 = vld [vmem:[%s1070 + $0xf1] sm:$0xff]
      %v1286 = vld [vmem:[%s1070 + $0xf9] sm:$0xff]
      %v1287 = vld [vmem:[%s1070 + $0x109] sm:$0xff]
      %v1288 = vld [vmem:[%s1070 + $0x111] sm:$0xff]
      %v1289 = vld [vmem:[%s1070 + $0x121] sm:$0xff]
      %v1290 = vld [vmem:[%s1070 + $0x129] sm:$0xff]
      %v1291 = vld [vmem:[%s1070 + $0x139] sm:$0xff]
      %v1292 = vld [vmem:[%s1070 + $0x141] sm:$0xff]
      %v1293 = vld [vmem:[%s1070 + $0x151] sm:$0xff]
      %v1294 = vld [vmem:[%s1070 + $0x159] sm:$0xff]
      %v1295 = vld [vmem:[%s1070 + $0x169] sm:$0xff]
      %v1296 = vld [vmem:[%s1070 + $0x171] sm:$0xff]
      %s1297 = scalar_lea.vmem %s3, 512
      %v1298 = vld [vmem:[%s1297] sm:$0xff]
      %v1299 = vld [vmem:[%s1297 + $0x8] sm:$0xff]
      %v1300 = vld [vmem:[%s1297 + $0x10] sm:$0xff]
      %v1301 = vld [vmem:[%s1297 + $0x18] sm:$0xff]
      %v1302 = vld [vmem:[%s1297 + $0x20] sm:$0xff]
      %v1303 = vld [vmem:[%s1297 + $0x28] sm:$0xff]
      %v1304 = vld [vmem:[%s1297 + $0x30] sm:$0xff]
      %v1305 = vld [vmem:[%s1297 + $0x38] sm:$0xff]
      %v1306 = vld [vmem:[%s1297 + $0x40] sm:$0xff]
      %v1307 = vld [vmem:[%s1297 + $0x48] sm:$0xff]
      %v1308 = vld [vmem:[%s1297 + $0x50] sm:$0xff]
      %v1309 = vld [vmem:[%s1297 + $0x58] sm:$0xff]
      %v1310 = vld [vmem:[%s1297 + $0x60] sm:$0xff]
      %v1311 = vld [vmem:[%s1297 + $0x68] sm:$0xff]
      %v1312 = vld [vmem:[%s1297 + $0x70] sm:$0xff]
      %v1313 = vld [vmem:[%s1297 + $0x78] sm:$0xff]
      %1314 = vmatpush.msra.mxu0 %v1313
      %1315 = vmatpush.msra.mxu0 %v1312
      %1316 = vmatpush.msra.mxu0 %v1311
      %1317 = vmatpush.msra.mxu0 %v1310
      %1318 = vmatpush.msra.mxu0 %v1309
      %1319 = vmatpush.msra.mxu0 %v1308
      %1320 = vmatpush.msra.mxu0 %v1307
      %1321 = vmatpush.msra.mxu0 %v1306
      %1322 = vmatpush.msra.mxu0 %v1305
      %1323 = vmatpush.msra.mxu0 %v1304
      %1324 = vmatpush.msra.mxu0 %v1303
      %1325 = vmatpush.msra.mxu0 %v1302
      %1326 = vmatpush.msra.mxu0 %v1301
      %1327 = vmatpush.msra.mxu0 %v1300
      %1328 = vmatpush.msra.mxu0 %v1299
      %1329 = vmatpush.msra.mxu0 %v1298
      %1330 = vmatmul.f32.gmra.mxu0 %v1265
      %v1331 = vpop.f32.mrf.mxu0
      %v1332 = vadd.f32 0.0, %v1331
      %1333 = vmatmul.f32.gmra.mxu0 %v1266
      %v1334 = vpop.f32.mrf.mxu0
      %v1335 = vadd.f32 0.0, %v1334
      %1336 = vmatmul.f32.gmra.mxu0 %v1267
      %v1337 = vpop.f32.mrf.mxu0
      %v1338 = vadd.f32 0.0, %v1337
      %1339 = vmatmul.f32.gmra.mxu0 %v1268
      %v1340 = vpop.f32.mrf.mxu0
      %v1341 = vadd.f32 0.0, %v1340
      %1342 = vmatmul.f32.gmra.mxu0 %v1269
      %v1343 = vpop.f32.mrf.mxu0
      %v1344 = vadd.f32 0.0, %v1343
      %1345 = vmatmul.f32.gmra.mxu0 %v1270
      %v1346 = vpop.f32.mrf.mxu0
      %v1347 = vadd.f32 0.0, %v1346
      %1348 = vmatmul.f32.gmra.mxu0 %v1271
      %v1349 = vpop.f32.mrf.mxu0
      %v1350 = vadd.f32 0.0, %v1349
      %1351 = vmatmul.f32.gmra.mxu0 %v1272
      %v1352 = vpop.f32.mrf.mxu0
      %v1353 = vadd.f32 0.0, %v1352
      %1354 = vmatmul.f32.gmra.mxu0 %v1273
      %v1355 = vpop.f32.mrf.mxu0
      %v1356 = vadd.f32 0.0, %v1355
      %1357 = vmatmul.f32.gmra.mxu0 %v1274
      %v1358 = vpop.f32.mrf.mxu0
      %v1359 = vadd.f32 0.0, %v1358
      %1360 = vmatmul.f32.gmra.mxu0 %v1275
      %v1361 = vpop.f32.mrf.mxu0
      %v1362 = vadd.f32 0.0, %v1361
      %1363 = vmatmul.f32.gmra.mxu0 %v1276
      %v1364 = vpop.f32.mrf.mxu0
      %v1365 = vadd.f32 0.0, %v1364
      %1366 = vmatmul.f32.gmra.mxu0 %v1277
      %v1367 = vpop.f32.mrf.mxu0
      %v1368 = vadd.f32 0.0, %v1367
      %1369 = vmatmul.f32.gmra.mxu0 %v1278
      %v1370 = vpop.f32.mrf.mxu0
      %v1371 = vadd.f32 0.0, %v1370
      %1372 = vmatmul.f32.gmra.mxu0 %v1279
      %v1373 = vpop.f32.mrf.mxu0
      %v1374 = vadd.f32 0.0, %v1373
      %1375 = vmatmul.f32.gmra.mxu0 %v1280
      %v1376 = vpop.f32.mrf.mxu0
      %v1377 = vadd.f32 0.0, %v1376
      %1378 = vmatmul.f32.gmra.mxu0 %v1281
      %v1379 = vpop.f32.mrf.mxu0
      %v1380 = vadd.f32 0.0, %v1379
      %1381 = vmatmul.f32.gmra.mxu0 %v1282
      %v1382 = vpop.f32.mrf.mxu0
      %v1383 = vadd.f32 0.0, %v1382
      %1384 = vmatmul.f32.gmra.mxu0 %v1283
      %v1385 = vpop.f32.mrf.mxu0
      %v1386 = vadd.f32 0.0, %v1385
      %1387 = vmatmul.f32.gmra.mxu0 %v1284
      %v1388 = vpop.f32.mrf.mxu0
      %v1389 = vadd.f32 0.0, %v1388
      %1390 = vmatmul.f32.gmra.mxu0 %v1285
      %v1391 = vpop.f32.mrf.mxu0
      %v1392 = vadd.f32 0.0, %v1391
      %1393 = vmatmul.f32.gmra.mxu0 %v1286
      %v1394 = vpop.f32.mrf.mxu0
      %v1395 = vadd.f32 0.0, %v1394
      %1396 = vmatmul.f32.gmra.mxu0 %v1287
      %v1397 = vpop.f32.mrf.mxu0
      %v1398 = vadd.f32 0.0, %v1397
      %1399 = vmatmul.f32.gmra.mxu0 %v1288
      %v1400 = vpop.f32.mrf.mxu0
      %v1401 = vadd.f32 0.0, %v1400
      %1402 = vmatmul.f32.gmra.mxu0 %v1289
      %v1403 = vpop.f32.mrf.mxu0
      %v1404 = vadd.f32 0.0, %v1403
      %1405 = vmatmul.f32.gmra.mxu0 %v1290
      %v1406 = vpop.f32.mrf.mxu0
      %v1407 = vadd.f32 0.0, %v1406
      %1408 = vmatmul.f32.gmra.mxu0 %v1291
      %v1409 = vpop.f32.mrf.mxu0
      %v1410 = vadd.f32 0.0, %v1409
      %1411 = vmatmul.f32.gmra.mxu0 %v1292
      %v1412 = vpop.f32.mrf.mxu0
      %v1413 = vadd.f32 0.0, %v1412
      %1414 = vmatmul.f32.gmra.mxu0 %v1293
      %v1415 = vpop.f32.mrf.mxu0
      %v1416 = vadd.f32 0.0, %v1415
      %1417 = vmatmul.f32.gmra.mxu0 %v1294
      %v1418 = vpop.f32.mrf.mxu0
      %v1419 = vadd.f32 0.0, %v1418
      %1420 = vmatmul.f32.gmra.mxu0 %v1295
      %v1421 = vpop.f32.mrf.mxu0
      %v1422 = vadd.f32 0.0, %v1421
      %1423 = vmatmul.f32.gmra.mxu0 %v1296
      %v1424 = vpop.f32.mrf.mxu0
      %v1425 = vadd.f32 0.0, %v1424
      %1426 = vdwg.mxu0
      %v1427 = vadd.f32 %v1233, %v1332
      %v1428 = vadd.f32 %v1234, %v1335
      %v1429 = vadd.f32 %v1235, %v1338
      %v1430 = vadd.f32 %v1236, %v1341
      %v1431 = vadd.f32 %v1237, %v1344
      %v1432 = vadd.f32 %v1238, %v1347
      %v1433 = vadd.f32 %v1239, %v1350
      %v1434 = vadd.f32 %v1240, %v1353
      %v1435 = vadd.f32 %v1241, %v1356
      %v1436 = vadd.f32 %v1242, %v1359
      %v1437 = vadd.f32 %v1243, %v1362
      %v1438 = vadd.f32 %v1244, %v1365
      %v1439 = vadd.f32 %v1245, %v1368
      %v1440 = vadd.f32 %v1246, %v1371
      %v1441 = vadd.f32 %v1247, %v1374
      %v1442 = vadd.f32 %v1248, %v1377
      %v1443 = vadd.f32 %v1249, %v1380
      %v1444 = vadd.f32 %v1250, %v1383
      %v1445 = vadd.f32 %v1251, %v1386
      %v1446 = vadd.f32 %v1252, %v1389
      %v1447 = vadd.f32 %v1253, %v1392
      %v1448 = vadd.f32 %v1254, %v1395
      %v1449 = vadd.f32 %v1255, %v1398
      %v1450 = vadd.f32 %v1256, %v1401
      %v1451 = vadd.f32 %v1257, %v1404
      %v1452 = vadd.f32 %v1258, %v1407
      %v1453 = vadd.f32 %v1259, %v1410
      %v1454 = vadd.f32 %v1260, %v1413
      %v1455 = vadd.f32 %v1261, %v1416
      %v1456 = vadd.f32 %v1262, %v1419
      %v1457 = vadd.f32 %v1263, %v1422
      %v1458 = vadd.f32 %v1264, %v1425
      %v1459 = vld [vmem:[%s1070 + $0x2] sm:$0xff]
      %v1460 = vld [vmem:[%s1070 + $0xa] sm:$0xff]
      %v1461 = vld [vmem:[%s1070 + $0x1a] sm:$0xff]
      %v1462 = vld [vmem:[%s1070 + $0x22] sm:$0xff]
      %v1463 = vld [vmem:[%s1070 + $0x32] sm:$0xff]
      %v1464 = vld [vmem:[%s1070 + $0x3a] sm:$0xff]
      %v1465 = vld [vmem:[%s1070 + $0x4a] sm:$0xff]
      %v1466 = vld [vmem:[%s1070 + $0x52] sm:$0xff]
      %v1467 = vld [vmem:[%s1070 + $0x62] sm:$0xff]
      %v1468 = vld [vmem:[%s1070 + $0x6a] sm:$0xff]
      %v1469 = vld [vmem:[%s1070 + $0x7a] sm:$0xff]
      %v1470 = vld [vmem:[%s1070 + $0x82] sm:$0xff]
      %v1471 = vld [vmem:[%s1070 + $0x92] sm:$0xff]
      %v1472 = vld [vmem:[%s1070 + $0x9a] sm:$0xff]
      %v1473 = vld [vmem:[%s1070 + $0xaa] sm:$0xff]
      %v1474 = vld [vmem:[%s1070 + $0xb2] sm:$0xff]
      %v1475 = vld [vmem:[%s1070 + $0xc2] sm:$0xff]
      %v1476 = vld [vmem:[%s1070 + $0xca] sm:$0xff]
      %v1477 = vld [vmem:[%s1070 + $0xda] sm:$0xff]
      %v1478 = vld [vmem:[%s1070 + $0xe2] sm:$0xff]
      %v1479 = vld [vmem:[%s1070 + $0xf2] sm:$0xff]
      %v1480 = vld [vmem:[%s1070 + $0xfa] sm:$0xff]
      %v1481 = vld [vmem:[%s1070 + $0x10a] sm:$0xff]
      %v1482 = vld [vmem:[%s1070 + $0x112] sm:$0xff]
      %v1483 = vld [vmem:[%s1070 + $0x122] sm:$0xff]
      %v1484 = vld [vmem:[%s1070 + $0x12a] sm:$0xff]
      %v1485 = vld [vmem:[%s1070 + $0x13a] sm:$0xff]
      %v1486 = vld [vmem:[%s1070 + $0x142] sm:$0xff]
      %v1487 = vld [vmem:[%s1070 + $0x152] sm:$0xff]
      %v1488 = vld [vmem:[%s1070 + $0x15a] sm:$0xff]
      %v1489 = vld [vmem:[%s1070 + $0x16a] sm:$0xff]
      %v1490 = vld [vmem:[%s1070 + $0x172] sm:$0xff]
      %s1491 = scalar_lea.vmem %s3, 640
      %v1492 = vld [vmem:[%s1491] sm:$0xff]
      %v1493 = vld [vmem:[%s1491 + $0x8] sm:$0xff]
      %v1494 = vld [vmem:[%s1491 + $0x10] sm:$0xff]
      %v1495 = vld [vmem:[%s1491 + $0x18] sm:$0xff]
      %v1496 = vld [vmem:[%s1491 + $0x20] sm:$0xff]
      %v1497 = vld [vmem:[%s1491 + $0x28] sm:$0xff]
      %v1498 = vld [vmem:[%s1491 + $0x30] sm:$0xff]
      %v1499 = vld [vmem:[%s1491 + $0x38] sm:$0xff]
      %v1500 = vld [vmem:[%s1491 + $0x40] sm:$0xff]
      %v1501 = vld [vmem:[%s1491 + $0x48] sm:$0xff]
      %v1502 = vld [vmem:[%s1491 + $0x50] sm:$0xff]
      %v1503 = vld [vmem:[%s1491 + $0x58] sm:$0xff]
      %v1504 = vld [vmem:[%s1491 + $0x60] sm:$0xff]
      %v1505 = vld [vmem:[%s1491 + $0x68] sm:$0xff]
      %v1506 = vld [vmem:[%s1491 + $0x70] sm:$0xff]
      %v1507 = vld [vmem:[%s1491 + $0x78] sm:$0xff]
      %1508 = vmatpush.msra.mxu0 %v1507
      %1509 = vmatpush.msra.mxu0 %v1506
      %1510 = vmatpush.msra.mxu0 %v1505
      %1511 = vmatpush.msra.mxu0 %v1504
      %1512 = vmatpush.msra.mxu0 %v1503
      %1513 = vmatpush.msra.mxu0 %v1502
      %1514 = vmatpush.msra.mxu0 %v1501
      %1515 = vmatpush.msra.mxu0 %v1500
      %1516 = vmatpush.msra.mxu0 %v1499
      %1517 = vmatpush.msra.mxu0 %v1498
      %1518 = vmatpush.msra.mxu0 %v1497
      %1519 = vmatpush.msra.mxu0 %v1496
      %1520 = vmatpush.msra.mxu0 %v1495
      %1521 = vmatpush.msra.mxu0 %v1494
      %1522 = vmatpush.msra.mxu0 %v1493
      %1523 = vmatpush.msra.mxu0 %v1492
      %1524 = vmatmul.f32.gmra.mxu0 %v1459
      %v1525 = vpop.f32.mrf.mxu0
      %v1526 = vadd.f32 0.0, %v1525
      %1527 = vmatmul.f32.gmra.mxu0 %v1460
      %v1528 = vpop.f32.mrf.mxu0
      %v1529 = vadd.f32 0.0, %v1528
      %1530 = vmatmul.f32.gmra.mxu0 %v1461
      %v1531 = vpop.f32.mrf.mxu0
      %v1532 = vadd.f32 0.0, %v1531
      %1533 = vmatmul.f32.gmra.mxu0 %v1462
      %v1534 = vpop.f32.mrf.mxu0
      %v1535 = vadd.f32 0.0, %v1534
      %1536 = vmatmul.f32.gmra.mxu0 %v1463
      %v1537 = vpop.f32.mrf.mxu0
      %v1538 = vadd.f32 0.0, %v1537
      %1539 = vmatmul.f32.gmra.mxu0 %v1464
      %v1540 = vpop.f32.mrf.mxu0
      %v1541 = vadd.f32 0.0, %v1540
      %1542 = vmatmul.f32.gmra.mxu0 %v1465
      %v1543 = vpop.f32.mrf.mxu0
      %v1544 = vadd.f32 0.0, %v1543
      %1545 = vmatmul.f32.gmra.mxu0 %v1466
      %v1546 = vpop.f32.mrf.mxu0
      %v1547 = vadd.f32 0.0, %v1546
      %1548 = vmatmul.f32.gmra.mxu0 %v1467
      %v1549 = vpop.f32.mrf.mxu0
      %v1550 = vadd.f32 0.0, %v1549
      %1551 = vmatmul.f32.gmra.mxu0 %v1468
      %v1552 = vpop.f32.mrf.mxu0
      %v1553 = vadd.f32 0.0, %v1552
      %1554 = vmatmul.f32.gmra.mxu0 %v1469
      %v1555 = vpop.f32.mrf.mxu0
      %v1556 = vadd.f32 0.0, %v1555
      %1557 = vmatmul.f32.gmra.mxu0 %v1470
      %v1558 = vpop.f32.mrf.mxu0
      %v1559 = vadd.f32 0.0, %v1558
      %1560 = vmatmul.f32.gmra.mxu0 %v1471
      %v1561 = vpop.f32.mrf.mxu0
      %v1562 = vadd.f32 0.0, %v1561
      %1563 = vmatmul.f32.gmra.mxu0 %v1472
      %v1564 = vpop.f32.mrf.mxu0
      %v1565 = vadd.f32 0.0, %v1564
      %1566 = vmatmul.f32.gmra.mxu0 %v1473
      %v1567 = vpop.f32.mrf.mxu0
      %v1568 = vadd.f32 0.0, %v1567
      %1569 = vmatmul.f32.gmra.mxu0 %v1474
      %v1570 = vpop.f32.mrf.mxu0
      %v1571 = vadd.f32 0.0, %v1570
      %1572 = vmatmul.f32.gmra.mxu0 %v1475
      %v1573 = vpop.f32.mrf.mxu0
      %v1574 = vadd.f32 0.0, %v1573
      %1575 = vmatmul.f32.gmra.mxu0 %v1476
      %v1576 = vpop.f32.mrf.mxu0
      %v1577 = vadd.f32 0.0, %v1576
      %1578 = vmatmul.f32.gmra.mxu0 %v1477
      %v1579 = vpop.f32.mrf.mxu0
      %v1580 = vadd.f32 0.0, %v1579
      %1581 = vmatmul.f32.gmra.mxu0 %v1478
      %v1582 = vpop.f32.mrf.mxu0
      %v1583 = vadd.f32 0.0, %v1582
      %1584 = vmatmul.f32.gmra.mxu0 %v1479
      %v1585 = vpop.f32.mrf.mxu0
      %v1586 = vadd.f32 0.0, %v1585
      %1587 = vmatmul.f32.gmra.mxu0 %v1480
      %v1588 = vpop.f32.mrf.mxu0
      %v1589 = vadd.f32 0.0, %v1588
      %1590 = vmatmul.f32.gmra.mxu0 %v1481
      %v1591 = vpop.f32.mrf.mxu0
      %v1592 = vadd.f32 0.0, %v1591
      %1593 = vmatmul.f32.gmra.mxu0 %v1482
      %v1594 = vpop.f32.mrf.mxu0
      %v1595 = vadd.f32 0.0, %v1594
      %1596 = vmatmul.f32.gmra.mxu0 %v1483
      %v1597 = vpop.f32.mrf.mxu0
      %v1598 = vadd.f32 0.0, %v1597
      %1599 = vmatmul.f32.gmra.mxu0 %v1484
      %v1600 = vpop.f32.mrf.mxu0
      %v1601 = vadd.f32 0.0, %v1600
      %1602 = vmatmul.f32.gmra.mxu0 %v1485
      %v1603 = vpop.f32.mrf.mxu0
      %v1604 = vadd.f32 0.0, %v1603
      %1605 = vmatmul.f32.gmra.mxu0 %v1486
      %v1606 = vpop.f32.mrf.mxu0
      %v1607 = vadd.f32 0.0, %v1606
      %1608 = vmatmul.f32.gmra.mxu0 %v1487
      %v1609 = vpop.f32.mrf.mxu0
      %v1610 = vadd.f32 0.0, %v1609
      %1611 = vmatmul.f32.gmra.mxu0 %v1488
      %v1612 = vpop.f32.mrf.mxu0
      %v1613 = vadd.f32 0.0, %v1612
      %1614 = vmatmul.f32.gmra.mxu0 %v1489
      %v1615 = vpop.f32.mrf.mxu0
      %v1616 = vadd.f32 0.0, %v1615
      %1617 = vmatmul.f32.gmra.mxu0 %v1490
      %v1618 = vpop.f32.mrf.mxu0
      %v1619 = vadd.f32 0.0, %v1618
      %1620 = vdwg.mxu0
      %v1621 = vadd.f32 %v1427, %v1526
      %v1622 = vadd.f32 %v1428, %v1529
      %v1623 = vadd.f32 %v1429, %v1532
      %v1624 = vadd.f32 %v1430, %v1535
      %v1625 = vadd.f32 %v1431, %v1538
      %v1626 = vadd.f32 %v1432, %v1541
      %v1627 = vadd.f32 %v1433, %v1544
      %v1628 = vadd.f32 %v1434, %v1547
      %v1629 = vadd.f32 %v1435, %v1550
      %v1630 = vadd.f32 %v1436, %v1553
      %v1631 = vadd.f32 %v1437, %v1556
      %v1632 = vadd.f32 %v1438, %v1559
      %v1633 = vadd.f32 %v1439, %v1562
      %v1634 = vadd.f32 %v1440, %v1565
      %v1635 = vadd.f32 %v1441, %v1568
      %v1636 = vadd.f32 %v1442, %v1571
      %v1637 = vadd.f32 %v1443, %v1574
      %v1638 = vadd.f32 %v1444, %v1577
      %v1639 = vadd.f32 %v1445, %v1580
      %v1640 = vadd.f32 %v1446, %v1583
      %v1641 = vadd.f32 %v1447, %v1586
      %v1642 = vadd.f32 %v1448, %v1589
      %v1643 = vadd.f32 %v1449, %v1592
      %v1644 = vadd.f32 %v1450, %v1595
      %v1645 = vadd.f32 %v1451, %v1598
      %v1646 = vadd.f32 %v1452, %v1601
      %v1647 = vadd.f32 %v1453, %v1604
      %v1648 = vadd.f32 %v1454, %v1607
      %v1649 = vadd.f32 %v1455, %v1610
      %v1650 = vadd.f32 %v1456, %v1613
      %v1651 = vadd.f32 %v1457, %v1616
      %v1652 = vadd.f32 %v1458, %v1619
      %s1653 = scalar_lea.vmem [#allocation2], 48
      %v1654 = vld [vmem:[%s1653] sm:$0xff]
      %v1655 = vld [vmem:[%s1653 + $0x8] sm:$0xff]
      %v1656 = vld [vmem:[%s1653 + $0x18] sm:$0xff]
      %v1657 = vld [vmem:[%s1653 + $0x20] sm:$0xff]
      %v1658 = vld [vmem:[%s1653 + $0x30] sm:$0xff]
      %v1659 = vld [vmem:[%s1653 + $0x38] sm:$0xff]
      %v1660 = vld [vmem:[%s1653 + $0x48] sm:$0xff]
      %v1661 = vld [vmem:[%s1653 + $0x50] sm:$0xff]
      %v1662 = vld [vmem:[%s1653 + $0x60] sm:$0xff]
      %v1663 = vld [vmem:[%s1653 + $0x68] sm:$0xff]
      %v1664 = vld [vmem:[%s1653 + $0x78] sm:$0xff]
      %v1665 = vld [vmem:[%s1653 + $0x80] sm:$0xff]
      %v1666 = vld [vmem:[%s1653 + $0x90] sm:$0xff]
      %v1667 = vld [vmem:[%s1653 + $0x98] sm:$0xff]
      %v1668 = vld [vmem:[%s1653 + $0xa8] sm:$0xff]
      %v1669 = vld [vmem:[%s1653 + $0xb0] sm:$0xff]
      %v1670 = vld [vmem:[%s1653 + $0xc0] sm:$0xff]
      %v1671 = vld [vmem:[%s1653 + $0xc8] sm:$0xff]
      %v1672 = vld [vmem:[%s1653 + $0xd8] sm:$0xff]
      %v1673 = vld [vmem:[%s1653 + $0xe0] sm:$0xff]
      %v1674 = vld [vmem:[%s1653 + $0xf0] sm:$0xff]
      %v1675 = vld [vmem:[%s1653 + $0xf8] sm:$0xff]
      %v1676 = vld [vmem:[%s1653 + $0x108] sm:$0xff]
      %v1677 = vld [vmem:[%s1653 + $0x110] sm:$0xff]
      %v1678 = vld [vmem:[%s1653 + $0x120] sm:$0xff]
      %v1679 = vld [vmem:[%s1653 + $0x128] sm:$0xff]
      %v1680 = vld [vmem:[%s1653 + $0x138] sm:$0xff]
      %v1681 = vld [vmem:[%s1653 + $0x140] sm:$0xff]
      %v1682 = vld [vmem:[%s1653 + $0x150] sm:$0xff]
      %v1683 = vld [vmem:[%s1653 + $0x158] sm:$0xff]
      %v1684 = vld [vmem:[%s1653 + $0x168] sm:$0xff]
      %v1685 = vld [vmem:[%s1653 + $0x170] sm:$0xff]
      %s1686 = scalar_lea.vmem %s3, 768
      %v1687 = vld [vmem:[%s1686] sm:$0xff]
      %v1688 = vld [vmem:[%s1686 + $0x8] sm:$0xff]
      %v1689 = vld [vmem:[%s1686 + $0x10] sm:$0xff]
      %v1690 = vld [vmem:[%s1686 + $0x18] sm:$0xff]
      %v1691 = vld [vmem:[%s1686 + $0x20] sm:$0xff]
      %v1692 = vld [vmem:[%s1686 + $0x28] sm:$0xff]
      %v1693 = vld [vmem:[%s1686 + $0x30] sm:$0xff]
      %v1694 = vld [vmem:[%s1686 + $0x38] sm:$0xff]
      %v1695 = vld [vmem:[%s1686 + $0x40] sm:$0xff]
      %v1696 = vld [vmem:[%s1686 + $0x48] sm:$0xff]
      %v1697 = vld [vmem:[%s1686 + $0x50] sm:$0xff]
      %v1698 = vld [vmem:[%s1686 + $0x58] sm:$0xff]
      %v1699 = vld [vmem:[%s1686 + $0x60] sm:$0xff]
      %v1700 = vld [vmem:[%s1686 + $0x68] sm:$0xff]
      %v1701 = vld [vmem:[%s1686 + $0x70] sm:$0xff]
      %v1702 = vld [vmem:[%s1686 + $0x78] sm:$0xff]
      %1703 = vmatpush.msra.mxu0 %v1702
      %1704 = vmatpush.msra.mxu0 %v1701
      %1705 = vmatpush.msra.mxu0 %v1700
      %1706 = vmatpush.msra.mxu0 %v1699
      %1707 = vmatpush.msra.mxu0 %v1698
      %1708 = vmatpush.msra.mxu0 %v1697
      %1709 = vmatpush.msra.mxu0 %v1696
      %1710 = vmatpush.msra.mxu0 %v1695
      %1711 = vmatpush.msra.mxu0 %v1694
      %1712 = vmatpush.msra.mxu0 %v1693
      %1713 = vmatpush.msra.mxu0 %v1692
      %1714 = vmatpush.msra.mxu0 %v1691
      %1715 = vmatpush.msra.mxu0 %v1690
      %1716 = vmatpush.msra.mxu0 %v1689
      %1717 = vmatpush.msra.mxu0 %v1688
      %1718 = vmatpush.msra.mxu0 %v1687
      %1719 = vmatmul.f32.gmra.mxu0 %v1654
      %v1720 = vpop.f32.mrf.mxu0
      %v1721 = vadd.f32 0.0, %v1720
      %1722 = vmatmul.f32.gmra.mxu0 %v1655
      %v1723 = vpop.f32.mrf.mxu0
      %v1724 = vadd.f32 0.0, %v1723
      %1725 = vmatmul.f32.gmra.mxu0 %v1656
      %v1726 = vpop.f32.mrf.mxu0
      %v1727 = vadd.f32 0.0, %v1726
      %1728 = vmatmul.f32.gmra.mxu0 %v1657
      %v1729 = vpop.f32.mrf.mxu0
      %v1730 = vadd.f32 0.0, %v1729
      %1731 = vmatmul.f32.gmra.mxu0 %v1658
      %v1732 = vpop.f32.mrf.mxu0
      %v1733 = vadd.f32 0.0, %v1732
      %1734 = vmatmul.f32.gmra.mxu0 %v1659
      %v1735 = vpop.f32.mrf.mxu0
      %v1736 = vadd.f32 0.0, %v1735
      %1737 = vmatmul.f32.gmra.mxu0 %v1660
      %v1738 = vpop.f32.mrf.mxu0
      %v1739 = vadd.f32 0.0, %v1738
      %1740 = vmatmul.f32.gmra.mxu0 %v1661
      %v1741 = vpop.f32.mrf.mxu0
      %v1742 = vadd.f32 0.0, %v1741
      %1743 = vmatmul.f32.gmra.mxu0 %v1662
      %v1744 = vpop.f32.mrf.mxu0
      %v1745 = vadd.f32 0.0, %v1744
      %1746 = vmatmul.f32.gmra.mxu0 %v1663
      %v1747 = vpop.f32.mrf.mxu0
      %v1748 = vadd.f32 0.0, %v1747
      %1749 = vmatmul.f32.gmra.mxu0 %v1664
      %v1750 = vpop.f32.mrf.mxu0
      %v1751 = vadd.f32 0.0, %v1750
      %1752 = vmatmul.f32.gmra.mxu0 %v1665
      %v1753 = vpop.f32.mrf.mxu0
      %v1754 = vadd.f32 0.0, %v1753
      %1755 = vmatmul.f32.gmra.mxu0 %v1666
      %v1756 = vpop.f32.mrf.mxu0
      %v1757 = vadd.f32 0.0, %v1756
      %1758 = vmatmul.f32.gmra.mxu0 %v1667
      %v1759 = vpop.f32.mrf.mxu0
      %v1760 = vadd.f32 0.0, %v1759
      %1761 = vmatmul.f32.gmra.mxu0 %v1668
      %v1762 = vpop.f32.mrf.mxu0
      %v1763 = vadd.f32 0.0, %v1762
      %1764 = vmatmul.f32.gmra.mxu0 %v1669
      %v1765 = vpop.f32.mrf.mxu0
      %v1766 = vadd.f32 0.0, %v1765
      %1767 = vmatmul.f32.gmra.mxu0 %v1670
      %v1768 = vpop.f32.mrf.mxu0
      %v1769 = vadd.f32 0.0, %v1768
      %1770 = vmatmul.f32.gmra.mxu0 %v1671
      %v1771 = vpop.f32.mrf.mxu0
      %v1772 = vadd.f32 0.0, %v1771
      %1773 = vmatmul.f32.gmra.mxu0 %v1672
      %v1774 = vpop.f32.mrf.mxu0
      %v1775 = vadd.f32 0.0, %v1774
      %1776 = vmatmul.f32.gmra.mxu0 %v1673
      %v1777 = vpop.f32.mrf.mxu0
      %v1778 = vadd.f32 0.0, %v1777
      %1779 = vmatmul.f32.gmra.mxu0 %v1674
      %v1780 = vpop.f32.mrf.mxu0
      %v1781 = vadd.f32 0.0, %v1780
      %1782 = vmatmul.f32.gmra.mxu0 %v1675
      %v1783 = vpop.f32.mrf.mxu0
      %v1784 = vadd.f32 0.0, %v1783
      %1785 = vmatmul.f32.gmra.mxu0 %v1676
      %v1786 = vpop.f32.mrf.mxu0
      %v1787 = vadd.f32 0.0, %v1786
      %1788 = vmatmul.f32.gmra.mxu0 %v1677
      %v1789 = vpop.f32.mrf.mxu0
      %v1790 = vadd.f32 0.0, %v1789
      %1791 = vmatmul.f32.gmra.mxu0 %v1678
      %v1792 = vpop.f32.mrf.mxu0
      %v1793 = vadd.f32 0.0, %v1792
      %1794 = vmatmul.f32.gmra.mxu0 %v1679
      %v1795 = vpop.f32.mrf.mxu0
      %v1796 = vadd.f32 0.0, %v1795
      %1797 = vmatmul.f32.gmra.mxu0 %v1680
      %v1798 = vpop.f32.mrf.mxu0
      %v1799 = vadd.f32 0.0, %v1798
      %1800 = vmatmul.f32.gmra.mxu0 %v1681
      %v1801 = vpop.f32.mrf.mxu0
      %v1802 = vadd.f32 0.0, %v1801
      %1803 = vmatmul.f32.gmra.mxu0 %v1682
      %v1804 = vpop.f32.mrf.mxu0
      %v1805 = vadd.f32 0.0, %v1804
      %1806 = vmatmul.f32.gmra.mxu0 %v1683
      %v1807 = vpop.f32.mrf.mxu0
      %v1808 = vadd.f32 0.0, %v1807
      %1809 = vmatmul.f32.gmra.mxu0 %v1684
      %v1810 = vpop.f32.mrf.mxu0
      %v1811 = vadd.f32 0.0, %v1810
      %1812 = vmatmul.f32.gmra.mxu0 %v1685
      %v1813 = vpop.f32.mrf.mxu0
      %v1814 = vadd.f32 0.0, %v1813
      %1815 = vdwg.mxu0
      %v1816 = vadd.f32 %v1621, %v1721
      %v1817 = vadd.f32 %v1622, %v1724
      %v1818 = vadd.f32 %v1623, %v1727
      %v1819 = vadd.f32 %v1624, %v1730
      %v1820 = vadd.f32 %v1625, %v1733
      %v1821 = vadd.f32 %v1626, %v1736
      %v1822 = vadd.f32 %v1627, %v1739
      %v1823 = vadd.f32 %v1628, %v1742
      %v1824 = vadd.f32 %v1629, %v1745
      %v1825 = vadd.f32 %v1630, %v1748
      %v1826 = vadd.f32 %v1631, %v1751
      %v1827 = vadd.f32 %v1632, %v1754
      %v1828 = vadd.f32 %v1633, %v1757
      %v1829 = vadd.f32 %v1634, %v1760
      %v1830 = vadd.f32 %v1635, %v1763
      %v1831 = vadd.f32 %v1636, %v1766
      %v1832 = vadd.f32 %v1637, %v1769
      %v1833 = vadd.f32 %v1638, %v1772
      %v1834 = vadd.f32 %v1639, %v1775
      %v1835 = vadd.f32 %v1640, %v1778
      %v1836 = vadd.f32 %v1641, %v1781
      %v1837 = vadd.f32 %v1642, %v1784
      %v1838 = vadd.f32 %v1643, %v1787
      %v1839 = vadd.f32 %v1644, %v1790
      %v1840 = vadd.f32 %v1645, %v1793
      %v1841 = vadd.f32 %v1646, %v1796
      %v1842 = vadd.f32 %v1647, %v1799
      %v1843 = vadd.f32 %v1648, %v1802
      %v1844 = vadd.f32 %v1649, %v1805
      %v1845 = vadd.f32 %v1650, %v1808
      %v1846 = vadd.f32 %v1651, %v1811
      %v1847 = vadd.f32 %v1652, %v1814
      %v1848 = vld [vmem:[%s1653 + $0x1] sm:$0xff]
      %v1849 = vld [vmem:[%s1653 + $0x9] sm:$0xff]
      %v1850 = vld [vmem:[%s1653 + $0x19] sm:$0xff]
      %v1851 = vld [vmem:[%s1653 + $0x21] sm:$0xff]
      %v1852 = vld [vmem:[%s1653 + $0x31] sm:$0xff]
      %v1853 = vld [vmem:[%s1653 + $0x39] sm:$0xff]
      %v1854 = vld [vmem:[%s1653 + $0x49] sm:$0xff]
      %v1855 = vld [vmem:[%s1653 + $0x51] sm:$0xff]
      %v1856 = vld [vmem:[%s1653 + $0x61] sm:$0xff]
      %v1857 = vld [vmem:[%s1653 + $0x69] sm:$0xff]
      %v1858 = vld [vmem:[%s1653 + $0x79] sm:$0xff]
      %v1859 = vld [vmem:[%s1653 + $0x81] sm:$0xff]
      %v1860 = vld [vmem:[%s1653 + $0x91] sm:$0xff]
      %v1861 = vld [vmem:[%s1653 + $0x99] sm:$0xff]
      %v1862 = vld [vmem:[%s1653 + $0xa9] sm:$0xff]
      %v1863 = vld [vmem:[%s1653 + $0xb1] sm:$0xff]
      %v1864 = vld [vmem:[%s1653 + $0xc1] sm:$0xff]
      %v1865 = vld [vmem:[%s1653 + $0xc9] sm:$0xff]
      %v1866 = vld [vmem:[%s1653 + $0xd9] sm:$0xff]
      %v1867 = vld [vmem:[%s1653 + $0xe1] sm:$0xff]
      %v1868 = vld [vmem:[%s1653 + $0xf1] sm:$0xff]
      %v1869 = vld [vmem:[%s1653 + $0xf9] sm:$0xff]
      %v1870 = vld [vmem:[%s1653 + $0x109] sm:$0xff]
      %v1871 = vld [vmem:[%s1653 + $0x111] sm:$0xff]
      %v1872 = vld [vmem:[%s1653 + $0x121] sm:$0xff]
      %v1873 = vld [vmem:[%s1653 + $0x129] sm:$0xff]
      %v1874 = vld [vmem:[%s1653 + $0x139] sm:$0xff]
      %v1875 = vld [vmem:[%s1653 + $0x141] sm:$0xff]
      %v1876 = vld [vmem:[%s1653 + $0x151] sm:$0xff]
      %v1877 = vld [vmem:[%s1653 + $0x159] sm:$0xff]
      %v1878 = vld [vmem:[%s1653 + $0x169] sm:$0xff]
      %v1879 = vld [vmem:[%s1653 + $0x171] sm:$0xff]
      %s1880 = scalar_lea.vmem %s3, 896
      %v1881 = vld [vmem:[%s1880] sm:$0xff]
      %v1882 = vld [vmem:[%s1880 + $0x8] sm:$0xff]
      %v1883 = vld [vmem:[%s1880 + $0x10] sm:$0xff]
      %v1884 = vld [vmem:[%s1880 + $0x18] sm:$0xff]
      %v1885 = vld [vmem:[%s1880 + $0x20] sm:$0xff]
      %v1886 = vld [vmem:[%s1880 + $0x28] sm:$0xff]
      %v1887 = vld [vmem:[%s1880 + $0x30] sm:$0xff]
      %v1888 = vld [vmem:[%s1880 + $0x38] sm:$0xff]
      %v1889 = vld [vmem:[%s1880 + $0x40] sm:$0xff]
      %v1890 = vld [vmem:[%s1880 + $0x48] sm:$0xff]
      %v1891 = vld [vmem:[%s1880 + $0x50] sm:$0xff]
      %v1892 = vld [vmem:[%s1880 + $0x58] sm:$0xff]
      %v1893 = vld [vmem:[%s1880 + $0x60] sm:$0xff]
      %v1894 = vld [vmem:[%s1880 + $0x68] sm:$0xff]
      %v1895 = vld [vmem:[%s1880 + $0x70] sm:$0xff]
      %v1896 = vld [vmem:[%s1880 + $0x78] sm:$0xff]
      %1897 = vmatpush.msra.mxu0 %v1896
      %1898 = vmatpush.msra.mxu0 %v1895
      %1899 = vmatpush.msra.mxu0 %v1894
      %1900 = vmatpush.msra.mxu0 %v1893
      %1901 = vmatpush.msra.mxu0 %v1892
      %1902 = vmatpush.msra.mxu0 %v1891
      %1903 = vmatpush.msra.mxu0 %v1890
      %1904 = vmatpush.msra.mxu0 %v1889
      %1905 = vmatpush.msra.mxu0 %v1888
      %1906 = vmatpush.msra.mxu0 %v1887
      %1907 = vmatpush.msra.mxu0 %v1886
      %1908 = vmatpush.msra.mxu0 %v1885
      %1909 = vmatpush.msra.mxu0 %v1884
      %1910 = vmatpush.msra.mxu0 %v1883
      %1911 = vmatpush.msra.mxu0 %v1882
      %1912 = vmatpush.msra.mxu0 %v1881
      %1913 = vmatmul.f32.gmra.mxu0 %v1848
      %v1914 = vpop.f32.mrf.mxu0
      %v1915 = vadd.f32 0.0, %v1914
      %1916 = vmatmul.f32.gmra.mxu0 %v1849
      %v1917 = vpop.f32.mrf.mxu0
      %v1918 = vadd.f32 0.0, %v1917
      %1919 = vmatmul.f32.gmra.mxu0 %v1850
      %v1920 = vpop.f32.mrf.mxu0
      %v1921 = vadd.f32 0.0, %v1920
      %1922 = vmatmul.f32.gmra.mxu0 %v1851
      %v1923 = vpop.f32.mrf.mxu0
      %v1924 = vadd.f32 0.0, %v1923
      %1925 = vmatmul.f32.gmra.mxu0 %v1852
      %v1926 = vpop.f32.mrf.mxu0
      %v1927 = vadd.f32 0.0, %v1926
      %1928 = vmatmul.f32.gmra.mxu0 %v1853
      %v1929 = vpop.f32.mrf.mxu0
      %v1930 = vadd.f32 0.0, %v1929
      %1931 = vmatmul.f32.gmra.mxu0 %v1854
      %v1932 = vpop.f32.mrf.mxu0
      %v1933 = vadd.f32 0.0, %v1932
      %1934 = vmatmul.f32.gmra.mxu0 %v1855
      %v1935 = vpop.f32.mrf.mxu0
      %v1936 = vadd.f32 0.0, %v1935
      %1937 = vmatmul.f32.gmra.mxu0 %v1856
      %v1938 = vpop.f32.mrf.mxu0
      %v1939 = vadd.f32 0.0, %v1938
      %1940 = vmatmul.f32.gmra.mxu0 %v1857
      %v1941 = vpop.f32.mrf.mxu0
      %v1942 = vadd.f32 0.0, %v1941
      %1943 = vmatmul.f32.gmra.mxu0 %v1858
      %v1944 = vpop.f32.mrf.mxu0
      %v1945 = vadd.f32 0.0, %v1944
      %1946 = vmatmul.f32.gmra.mxu0 %v1859
      %v1947 = vpop.f32.mrf.mxu0
      %v1948 = vadd.f32 0.0, %v1947
      %1949 = vmatmul.f32.gmra.mxu0 %v1860
      %v1950 = vpop.f32.mrf.mxu0
      %v1951 = vadd.f32 0.0, %v1950
      %1952 = vmatmul.f32.gmra.mxu0 %v1861
      %v1953 = vpop.f32.mrf.mxu0
      %v1954 = vadd.f32 0.0, %v1953
      %1955 = vmatmul.f32.gmra.mxu0 %v1862
      %v1956 = vpop.f32.mrf.mxu0
      %v1957 = vadd.f32 0.0, %v1956
      %1958 = vmatmul.f32.gmra.mxu0 %v1863
      %v1959 = vpop.f32.mrf.mxu0
      %v1960 = vadd.f32 0.0, %v1959
      %1961 = vmatmul.f32.gmra.mxu0 %v1864
      %v1962 = vpop.f32.mrf.mxu0
      %v1963 = vadd.f32 0.0, %v1962
      %1964 = vmatmul.f32.gmra.mxu0 %v1865
      %v1965 = vpop.f32.mrf.mxu0
      %v1966 = vadd.f32 0.0, %v1965
      %1967 = vmatmul.f32.gmra.mxu0 %v1866
      %v1968 = vpop.f32.mrf.mxu0
      %v1969 = vadd.f32 0.0, %v1968
      %1970 = vmatmul.f32.gmra.mxu0 %v1867
      %v1971 = vpop.f32.mrf.mxu0
      %v1972 = vadd.f32 0.0, %v1971
      %1973 = vmatmul.f32.gmra.mxu0 %v1868
      %v1974 = vpop.f32.mrf.mxu0
      %v1975 = vadd.f32 0.0, %v1974
      %1976 = vmatmul.f32.gmra.mxu0 %v1869
      %v1977 = vpop.f32.mrf.mxu0
      %v1978 = vadd.f32 0.0, %v1977
      %1979 = vmatmul.f32.gmra.mxu0 %v1870
      %v1980 = vpop.f32.mrf.mxu0
      %v1981 = vadd.f32 0.0, %v1980
      %1982 = vmatmul.f32.gmra.mxu0 %v1871
      %v1983 = vpop.f32.mrf.mxu0
      %v1984 = vadd.f32 0.0, %v1983
      %1985 = vmatmul.f32.gmra.mxu0 %v1872
      %v1986 = vpop.f32.mrf.mxu0
      %v1987 = vadd.f32 0.0, %v1986
      %1988 = vmatmul.f32.gmra.mxu0 %v1873
      %v1989 = vpop.f32.mrf.mxu0
      %v1990 = vadd.f32 0.0, %v1989
      %1991 = vmatmul.f32.gmra.mxu0 %v1874
      %v1992 = vpop.f32.mrf.mxu0
      %v1993 = vadd.f32 0.0, %v1992
      %1994 = vmatmul.f32.gmra.mxu0 %v1875
      %v1995 = vpop.f32.mrf.mxu0
      %v1996 = vadd.f32 0.0, %v1995
      %1997 = vmatmul.f32.gmra.mxu0 %v1876
      %v1998 = vpop.f32.mrf.mxu0
      %v1999 = vadd.f32 0.0, %v1998
      %2000 = vmatmul.f32.gmra.mxu0 %v1877
      %v2001 = vpop.f32.mrf.mxu0
      %v2002 = vadd.f32 0.0, %v2001
      %2003 = vmatmul.f32.gmra.mxu0 %v1878
      %v2004 = vpop.f32.mrf.mxu0
      %v2005 = vadd.f32 0.0, %v2004
      %2006 = vmatmul.f32.gmra.mxu0 %v1879
      %v2007 = vpop.f32.mrf.mxu0
      %v2008 = vadd.f32 0.0, %v2007
      %2009 = vdwg.mxu0
      %v2010 = vadd.f32 %v1816, %v1915
      %v2011 = vadd.f32 %v1817, %v1918
      %v2012 = vadd.f32 %v1818, %v1921
      %v2013 = vadd.f32 %v1819, %v1924
      %v2014 = vadd.f32 %v1820, %v1927
      %v2015 = vadd.f32 %v1821, %v1930
      %v2016 = vadd.f32 %v1822, %v1933
      %v2017 = vadd.f32 %v1823, %v1936
      %v2018 = vadd.f32 %v1824, %v1939
      %v2019 = vadd.f32 %v1825, %v1942
      %v2020 = vadd.f32 %v1826, %v1945
      %v2021 = vadd.f32 %v1827, %v1948
      %v2022 = vadd.f32 %v1828, %v1951
      %v2023 = vadd.f32 %v1829, %v1954
      %v2024 = vadd.f32 %v1830, %v1957
      %v2025 = vadd.f32 %v1831, %v1960
      %v2026 = vadd.f32 %v1832, %v1963
      %v2027 = vadd.f32 %v1833, %v1966
      %v2028 = vadd.f32 %v1834, %v1969
      %v2029 = vadd.f32 %v1835, %v1972
      %v2030 = vadd.f32 %v1836, %v1975
      %v2031 = vadd.f32 %v1837, %v1978
      %v2032 = vadd.f32 %v1838, %v1981
      %v2033 = vadd.f32 %v1839, %v1984
      %v2034 = vadd.f32 %v1840, %v1987
      %v2035 = vadd.f32 %v1841, %v1990
      %v2036 = vadd.f32 %v1842, %v1993
      %v2037 = vadd.f32 %v1843, %v1996
      %v2038 = vadd.f32 %v1844, %v1999
      %v2039 = vadd.f32 %v1845, %v2002
      %v2040 = vadd.f32 %v1846, %v2005
      %v2041 = vadd.f32 %v1847, %v2008
      %v2042 = vld [vmem:[%s1653 + $0x2] sm:$0xff]
      %v2043 = vld [vmem:[%s1653 + $0xa] sm:$0xff]
      %v2044 = vld [vmem:[%s1653 + $0x1a] sm:$0xff]
      %v2045 = vld [vmem:[%s1653 + $0x22] sm:$0xff]
      %v2046 = vld [vmem:[%s1653 + $0x32] sm:$0xff]
      %v2047 = vld [vmem:[%s1653 + $0x3a] sm:$0xff]
      %v2048 = vld [vmem:[%s1653 + $0x4a] sm:$0xff]
      %v2049 = vld [vmem:[%s1653 + $0x52] sm:$0xff]
      %v2050 = vld [vmem:[%s1653 + $0x62] sm:$0xff]
      %v2051 = vld [vmem:[%s1653 + $0x6a] sm:$0xff]
      %v2052 = vld [vmem:[%s1653 + $0x7a] sm:$0xff]
      %v2053 = vld [vmem:[%s1653 + $0x82] sm:$0xff]
      %v2054 = vld [vmem:[%s1653 + $0x92] sm:$0xff]
      %v2055 = vld [vmem:[%s1653 + $0x9a] sm:$0xff]
      %v2056 = vld [vmem:[%s1653 + $0xaa] sm:$0xff]
      %v2057 = vld [vmem:[%s1653 + $0xb2] sm:$0xff]
      %v2058 = vld [vmem:[%s1653 + $0xc2] sm:$0xff]
      %v2059 = vld [vmem:[%s1653 + $0xca] sm:$0xff]
      %v2060 = vld [vmem:[%s1653 + $0xda] sm:$0xff]
      %v2061 = vld [vmem:[%s1653 + $0xe2] sm:$0xff]
      %v2062 = vld [vmem:[%s1653 + $0xf2] sm:$0xff]
      %v2063 = vld [vmem:[%s1653 + $0xfa] sm:$0xff]
      %v2064 = vld [vmem:[%s1653 + $0x10a] sm:$0xff]
      %v2065 = vld [vmem:[%s1653 + $0x112] sm:$0xff]
      %v2066 = vld [vmem:[%s1653 + $0x122] sm:$0xff]
      %v2067 = vld [vmem:[%s1653 + $0x12a] sm:$0xff]
      %v2068 = vld [vmem:[%s1653 + $0x13a] sm:$0xff]
      %v2069 = vld [vmem:[%s1653 + $0x142] sm:$0xff]
      %v2070 = vld [vmem:[%s1653 + $0x152] sm:$0xff]
      %v2071 = vld [vmem:[%s1653 + $0x15a] sm:$0xff]
      %v2072 = vld [vmem:[%s1653 + $0x16a] sm:$0xff]
      %v2073 = vld [vmem:[%s1653 + $0x172] sm:$0xff]
      %s2074 = scalar_lea.vmem %s3, 1024
      %v2075 = vld [vmem:[%s2074] sm:$0xff]
      %v2076 = vld [vmem:[%s2074 + $0x8] sm:$0xff]
      %v2077 = vld [vmem:[%s2074 + $0x10] sm:$0xff]
      %v2078 = vld [vmem:[%s2074 + $0x18] sm:$0xff]
      %v2079 = vld [vmem:[%s2074 + $0x20] sm:$0xff]
      %v2080 = vld [vmem:[%s2074 + $0x28] sm:$0xff]
      %v2081 = vld [vmem:[%s2074 + $0x30] sm:$0xff]
      %v2082 = vld [vmem:[%s2074 + $0x38] sm:$0xff]
      %v2083 = vld [vmem:[%s2074 + $0x40] sm:$0xff]
      %v2084 = vld [vmem:[%s2074 + $0x48] sm:$0xff]
      %v2085 = vld [vmem:[%s2074 + $0x50] sm:$0xff]
      %v2086 = vld [vmem:[%s2074 + $0x58] sm:$0xff]
      %v2087 = vld [vmem:[%s2074 + $0x60] sm:$0xff]
      %v2088 = vld [vmem:[%s2074 + $0x68] sm:$0xff]
      %v2089 = vld [vmem:[%s2074 + $0x70] sm:$0xff]
      %v2090 = vld [vmem:[%s2074 + $0x78] sm:$0xff]
      %2091 = vmatpush.msra.mxu0 %v2090
      %2092 = vmatpush.msra.mxu0 %v2089
      %2093 = vmatpush.msra.mxu0 %v2088
      %2094 = vmatpush.msra.mxu0 %v2087
      %2095 = vmatpush.msra.mxu0 %v2086
      %2096 = vmatpush.msra.mxu0 %v2085
      %2097 = vmatpush.msra.mxu0 %v2084
      %2098 = vmatpush.msra.mxu0 %v2083
      %2099 = vmatpush.msra.mxu0 %v2082
      %2100 = vmatpush.msra.mxu0 %v2081
      %2101 = vmatpush.msra.mxu0 %v2080
      %2102 = vmatpush.msra.mxu0 %v2079
      %2103 = vmatpush.msra.mxu0 %v2078
      %2104 = vmatpush.msra.mxu0 %v2077
      %2105 = vmatpush.msra.mxu0 %v2076
      %2106 = vmatpush.msra.mxu0 %v2075
      %2107 = vmatmul.f32.gmra.mxu0 %v2042
      %v2108 = vpop.f32.mrf.mxu0
      %v2109 = vadd.f32 0.0, %v2108
      %2110 = vmatmul.f32.gmra.mxu0 %v2043
      %v2111 = vpop.f32.mrf.mxu0
      %v2112 = vadd.f32 0.0, %v2111
      %2113 = vmatmul.f32.gmra.mxu0 %v2044
      %v2114 = vpop.f32.mrf.mxu0
      %v2115 = vadd.f32 0.0, %v2114
      %2116 = vmatmul.f32.gmra.mxu0 %v2045
      %v2117 = vpop.f32.mrf.mxu0
      %v2118 = vadd.f32 0.0, %v2117
      %2119 = vmatmul.f32.gmra.mxu0 %v2046
      %v2120 = vpop.f32.mrf.mxu0
      %v2121 = vadd.f32 0.0, %v2120
      %2122 = vmatmul.f32.gmra.mxu0 %v2047
      %v2123 = vpop.f32.mrf.mxu0
      %v2124 = vadd.f32 0.0, %v2123
      %2125 = vmatmul.f32.gmra.mxu0 %v2048
      %v2126 = vpop.f32.mrf.mxu0
      %v2127 = vadd.f32 0.0, %v2126
      %2128 = vmatmul.f32.gmra.mxu0 %v2049
      %v2129 = vpop.f32.mrf.mxu0
      %v2130 = vadd.f32 0.0, %v2129
      %2131 = vmatmul.f32.gmra.mxu0 %v2050
      %v2132 = vpop.f32.mrf.mxu0
      %v2133 = vadd.f32 0.0, %v2132
      %2134 = vmatmul.f32.gmra.mxu0 %v2051
      %v2135 = vpop.f32.mrf.mxu0
      %v2136 = vadd.f32 0.0, %v2135
      %2137 = vmatmul.f32.gmra.mxu0 %v2052
      %v2138 = vpop.f32.mrf.mxu0
      %v2139 = vadd.f32 0.0, %v2138
      %2140 = vmatmul.f32.gmra.mxu0 %v2053
      %v2141 = vpop.f32.mrf.mxu0
      %v2142 = vadd.f32 0.0, %v2141
      %2143 = vmatmul.f32.gmra.mxu0 %v2054
      %v2144 = vpop.f32.mrf.mxu0
      %v2145 = vadd.f32 0.0, %v2144
      %2146 = vmatmul.f32.gmra.mxu0 %v2055
      %v2147 = vpop.f32.mrf.mxu0
      %v2148 = vadd.f32 0.0, %v2147
      %2149 = vmatmul.f32.gmra.mxu0 %v2056
      %v2150 = vpop.f32.mrf.mxu0
      %v2151 = vadd.f32 0.0, %v2150
      %2152 = vmatmul.f32.gmra.mxu0 %v2057
      %v2153 = vpop.f32.mrf.mxu0
      %v2154 = vadd.f32 0.0, %v2153
      %2155 = vmatmul.f32.gmra.mxu0 %v2058
      %v2156 = vpop.f32.mrf.mxu0
      %v2157 = vadd.f32 0.0, %v2156
      %2158 = vmatmul.f32.gmra.mxu0 %v2059
      %v2159 = vpop.f32.mrf.mxu0
      %v2160 = vadd.f32 0.0, %v2159
      %2161 = vmatmul.f32.gmra.mxu0 %v2060
      %v2162 = vpop.f32.mrf.mxu0
      %v2163 = vadd.f32 0.0, %v2162
      %2164 = vmatmul.f32.gmra.mxu0 %v2061
      %v2165 = vpop.f32.mrf.mxu0
      %v2166 = vadd.f32 0.0, %v2165
      %2167 = vmatmul.f32.gmra.mxu0 %v2062
      %v2168 = vpop.f32.mrf.mxu0
      %v2169 = vadd.f32 0.0, %v2168
      %2170 = vmatmul.f32.gmra.mxu0 %v2063
      %v2171 = vpop.f32.mrf.mxu0
      %v2172 = vadd.f32 0.0, %v2171
      %2173 = vmatmul.f32.gmra.mxu0 %v2064
      %v2174 = vpop.f32.mrf.mxu0
      %v2175 = vadd.f32 0.0, %v2174
      %2176 = vmatmul.f32.gmra.mxu0 %v2065
      %v2177 = vpop.f32.mrf.mxu0
      %v2178 = vadd.f32 0.0, %v2177
      %2179 = vmatmul.f32.gmra.mxu0 %v2066
      %v2180 = vpop.f32.mrf.mxu0
      %v2181 = vadd.f32 0.0, %v2180
      %2182 = vmatmul.f32.gmra.mxu0 %v2067
      %v2183 = vpop.f32.mrf.mxu0
      %v2184 = vadd.f32 0.0, %v2183
      %2185 = vmatmul.f32.gmra.mxu0 %v2068
      %v2186 = vpop.f32.mrf.mxu0
      %v2187 = vadd.f32 0.0, %v2186
      %2188 = vmatmul.f32.gmra.mxu0 %v2069
      %v2189 = vpop.f32.mrf.mxu0
      %v2190 = vadd.f32 0.0, %v2189
      %2191 = vmatmul.f32.gmra.mxu0 %v2070
      %v2192 = vpop.f32.mrf.mxu0
      %v2193 = vadd.f32 0.0, %v2192
      %2194 = vmatmul.f32.gmra.mxu0 %v2071
      %v2195 = vpop.f32.mrf.mxu0
      %v2196 = vadd.f32 0.0, %v2195
      %2197 = vmatmul.f32.gmra.mxu0 %v2072
      %v2198 = vpop.f32.mrf.mxu0
      %v2199 = vadd.f32 0.0, %v2198
      %2200 = vmatmul.f32.gmra.mxu0 %v2073
      %v2201 = vpop.f32.mrf.mxu0
      %v2202 = vadd.f32 0.0, %v2201
      %2203 = vdwg.mxu0
      %v2204 = vadd.f32 %v2010, %v2109
      %v2205 = vadd.f32 %v2011, %v2112
      %v2206 = vadd.f32 %v2012, %v2115
      %v2207 = vadd.f32 %v2013, %v2118
      %v2208 = vadd.f32 %v2014, %v2121
      %v2209 = vadd.f32 %v2015, %v2124
      %v2210 = vadd.f32 %v2016, %v2127
      %v2211 = vadd.f32 %v2017, %v2130
      %v2212 = vadd.f32 %v2018, %v2133
      %v2213 = vadd.f32 %v2019, %v2136
      %v2214 = vadd.f32 %v2020, %v2139
      %v2215 = vadd.f32 %v2021, %v2142
      %v2216 = vadd.f32 %v2022, %v2145
      %v2217 = vadd.f32 %v2023, %v2148
      %v2218 = vadd.f32 %v2024, %v2151
      %v2219 = vadd.f32 %v2025, %v2154
      %v2220 = vadd.f32 %v2026, %v2157
      %v2221 = vadd.f32 %v2027, %v2160
      %v2222 = vadd.f32 %v2028, %v2163
      %v2223 = vadd.f32 %v2029, %v2166
      %v2224 = vadd.f32 %v2030, %v2169
      %v2225 = vadd.f32 %v2031, %v2172
      %v2226 = vadd.f32 %v2032, %v2175
      %v2227 = vadd.f32 %v2033, %v2178
      %v2228 = vadd.f32 %v2034, %v2181
      %v2229 = vadd.f32 %v2035, %v2184
      %v2230 = vadd.f32 %v2036, %v2187
      %v2231 = vadd.f32 %v2037, %v2190
      %v2232 = vadd.f32 %v2038, %v2193
      %v2233 = vadd.f32 %v2039, %v2196
      %v2234 = vadd.f32 %v2040, %v2199
      %v2235 = vadd.f32 %v2041, %v2202
      %v2236 = vld [vmem:[%s4] sm:$0x1]
      %v2238 = vperm.slane %v2236, 0
      %v2240 = vadd.f32 %v2204, %v2238
      %v2241 = vadd.f32 %v2205, %v2238
      %v2242 = vadd.f32 %v2206, %v2238
      %v2243 = vadd.f32 %v2207, %v2238
      %v2244 = vadd.f32 %v2208, %v2238
      %v2245 = vadd.f32 %v2209, %v2238
      %v2246 = vadd.f32 %v2210, %v2238
      %v2247 = vadd.f32 %v2211, %v2238
      %v2248 = vadd.f32 %v2212, %v2238
      %v2249 = vadd.f32 %v2213, %v2238
      %v2250 = vadd.f32 %v2214, %v2238
      %v2251 = vadd.f32 %v2215, %v2238
      %v2252 = vadd.f32 %v2216, %v2238
      %v2253 = vadd.f32 %v2217, %v2238
      %v2254 = vadd.f32 %v2218, %v2238
      %v2255 = vadd.f32 %v2219, %v2238
      %v2256 = vadd.f32 %v2220, %v2238
      %v2257 = vadd.f32 %v2221, %v2238
      %v2258 = vadd.f32 %v2222, %v2238
      %v2259 = vadd.f32 %v2223, %v2238
      %v2260 = vadd.f32 %v2224, %v2238
      %v2261 = vadd.f32 %v2225, %v2238
      %v2262 = vadd.f32 %v2226, %v2238
      %v2263 = vadd.f32 %v2227, %v2238
      %v2264 = vadd.f32 %v2228, %v2238
      %v2265 = vadd.f32 %v2229, %v2238
      %v2266 = vadd.f32 %v2230, %v2238
      %v2267 = vadd.f32 %v2231, %v2238
      %v2268 = vadd.f32 %v2232, %v2238
      %v2269 = vadd.f32 %v2233, %v2238
      %v2270 = vadd.f32 %v2234, %v2238
      %v2271 = vadd.f32 %v2235, %v2238
      %2272 = vst [vmem:[%s434] sm:$0xff] %v2240
      %2273 = vst [vmem:[%s434 + $0x8] sm:$0xff] %v2241
      %2274 = vst [vmem:[%s434 + $0x10] sm:$0xff] %v2242
      %2275 = vst [vmem:[%s434 + $0x18] sm:$0xff] %v2243
      %2276 = vst [vmem:[%s434 + $0x20] sm:$0xff] %v2244
      %2277 = vst [vmem:[%s434 + $0x28] sm:$0xff] %v2245
      %2278 = vst [vmem:[%s434 + $0x30] sm:$0xff] %v2246
      %2279 = vst [vmem:[%s434 + $0x38] sm:$0xff] %v2247
      %2280 = vst [vmem:[%s434 + $0x40] sm:$0xff] %v2248
      %2281 = vst [vmem:[%s434 + $0x48] sm:$0xff] %v2249
      %2282 = vst [vmem:[%s434 + $0x50] sm:$0xff] %v2250
      %2283 = vst [vmem:[%s434 + $0x58] sm:$0xff] %v2251
      %2284 = vst [vmem:[%s434 + $0x60] sm:$0xff] %v2252
      %2285 = vst [vmem:[%s434 + $0x68] sm:$0xff] %v2253
      %2286 = vst [vmem:[%s434 + $0x70] sm:$0xff] %v2254
      %2287 = vst [vmem:[%s434 + $0x78] sm:$0xff] %v2255
      %2288 = vst [vmem:[%s434 + $0x80] sm:$0xff] %v2256
      %2289 = vst [vmem:[%s434 + $0x88] sm:$0xff] %v2257
      %2290 = vst [vmem:[%s434 + $0x90] sm:$0xff] %v2258
      %2291 = vst [vmem:[%s434 + $0x98] sm:$0xff] %v2259
      %2292 = vst [vmem:[%s434 + $0xa0] sm:$0xff] %v2260
      %2293 = vst [vmem:[%s434 + $0xa8] sm:$0xff] %v2261
      %2294 = vst [vmem:[%s434 + $0xb0] sm:$0xff] %v2262
      %2295 = vst [vmem:[%s434 + $0xb8] sm:$0xff] %v2263
      %2296 = vst [vmem:[%s434 + $0xc0] sm:$0xff] %v2264
      %2297 = vst [vmem:[%s434 + $0xc8] sm:$0xff] %v2265
      %2298 = vst [vmem:[%s434 + $0xd0] sm:$0xff] %v2266
      %2299 = vst [vmem:[%s434 + $0xd8] sm:$0xff] %v2267
      %2300 = vst [vmem:[%s434 + $0xe0] sm:$0xff] %v2268
      %2301 = vst [vmem:[%s434 + $0xe8] sm:$0xff] %v2269
      %2302 = vst [vmem:[%s434 + $0xf0] sm:$0xff] %v2270
      %2303 = vst [vmem:[%s434 + $0xf8] sm:$0xff] %v2271
      %v2304 = vadd.f32 %v2240, %v2241
      %v2305 = vadd.f32 %v2304, %v2242
      %v2306 = vadd.f32 %v2305, %v2243
      %v2307 = vadd.f32 %v2306, %v2244
      %v2308 = vadd.f32 %v2307, %v2245
      %v2309 = vadd.f32 %v2308, %v2246
      %v2310 = vadd.f32 %v2309, %v2247
      %v2311 = vadd.f32 %v2310, %v2248
      %v2312 = vadd.f32 %v2311, %v2249
      %v2313 = vadd.f32 %v2312, %v2250
      %v2314 = vadd.f32 %v2313, %v2251
      %v2315 = vadd.f32 %v2314, %v2252
      %v2316 = vadd.f32 %v2315, %v2253
      %v2317 = vadd.f32 %v2316, %v2254
      %v2318 = vadd.f32 %v2317, %v2255
      %v2319 = vadd.f32 %v2318, %v2256
      %v2320 = vadd.f32 %v2319, %v2257
      %v2321 = vadd.f32 %v2320, %v2258
      %v2322 = vadd.f32 %v2321, %v2259
      %v2323 = vadd.f32 %v2322, %v2260
      %v2324 = vadd.f32 %v2323, %v2261
      %v2325 = vadd.f32 %v2324, %v2262
      %v2326 = vadd.f32 %v2325, %v2263
      %v2327 = vadd.f32 %v2326, %v2264
      %v2328 = vadd.f32 %v2327, %v2265
      %v2329 = vadd.f32 %v2328, %v2266
      %v2330 = vadd.f32 %v2329, %v2267
      %v2331 = vadd.f32 %v2330, %v2268
      %v2332 = vadd.f32 %v2331, %v2269
      %v2333 = vadd.f32 %v2332, %v2270
      %v2334 = vadd.f32 %v2333, %v2271
      %v2335 = vrot.slane %v2334, 4
      %v2336 = vadd.f32 %v2334, %v2335
      %v2337 = vrot.slane %v2336, 2
      %v2338 = vadd.f32 %v2336, %v2337
      %v2339 = vrot.slane %v2338, 1
      %v2340 = vadd.f32 %v2338, %v2339
      %2341 = vst [vmem:[%s442] sm:$0x1] %v2340
      %v2342 = vmul.f32 %v2240, %v2240
      %v2343 = vmul.f32 %v2241, %v2241
      %v2344 = vmul.f32 %v2242, %v2242
      %v2345 = vmul.f32 %v2243, %v2243
      %v2346 = vmul.f32 %v2244, %v2244
      %v2347 = vmul.f32 %v2245, %v2245
      %v2348 = vmul.f32 %v2246, %v2246
      %v2349 = vmul.f32 %v2247, %v2247
      %v2350 = vmul.f32 %v2248, %v2248
      %v2351 = vmul.f32 %v2249, %v2249
      %v2352 = vmul.f32 %v2250, %v2250
      %v2353 = vmul.f32 %v2251, %v2251
      %v2354 = vmul.f32 %v2252, %v2252
      %v2355 = vmul.f32 %v2253, %v2253
      %v2356 = vmul.f32 %v2254, %v2254
      %v2357 = vmul.f32 %v2255, %v2255
      %v2358 = vmul.f32 %v2256, %v2256
      %v2359 = vmul.f32 %v2257, %v2257
      %v2360 = vmul.f32 %v2258, %v2258
      %v2361 = vmul.f32 %v2259, %v2259
      %v2362 = vmul.f32 %v2260, %v2260
      %v2363 = vmul.f32 %v2261, %v2261
      %v2364 = vmul.f32 %v2262, %v2262
      %v2365 = vmul.f32 %v2263, %v2263
      %v2366 = vmul.f32 %v2264, %v2264
      %v2367 = vmul.f32 %v2265, %v2265
      %v2368 = vmul.f32 %v2266, %v2266
      %v2369 = vmul.f32 %v2267, %v2267
      %v2370 = vmul.f32 %v2268, %v2268
      %v2371 = vmul.f32 %v2269, %v2269
      %v2372 = vmul.f32 %v2270, %v2270
      %v2373 = vmul.f32 %v2271, %v2271
      %v2374 = vadd.f32 %v2342, %v2343
      %v2375 = vadd.f32 %v2374, %v2344
      %v2376 = vadd.f32 %v2375, %v2345
      %v2377 = vadd.f32 %v2376, %v2346
      %v2378 = vadd.f32 %v2377, %v2347
      %v2379 = vadd.f32 %v2378, %v2348
      %v2380 = vadd.f32 %v2379, %v2349
      %v2381 = vadd.f32 %v2380, %v2350
      %v2382 = vadd.f32 %v2381, %v2351
      %v2383 = vadd.f32 %v2382, %v2352
      %v2384 = vadd.f32 %v2383, %v2353
      %v2385 = vadd.f32 %v2384, %v2354
      %v2386 = vadd.f32 %v2385, %v2355
      %v2387 = vadd.f32 %v2386, %v2356
      %v2388 = vadd.f32 %v2387, %v2357
      %v2389 = vadd.f32 %v2388, %v2358
      %v2390 = vadd.f32 %v2389, %v2359
      %v2391 = vadd.f32 %v2390, %v2360
      %v2392 = vadd.f32 %v2391, %v2361
      %v2393 = vadd.f32 %v2392, %v2362
      %v2394 = vadd.f32 %v2393, %v2363
      %v2395 = vadd.f32 %v2394, %v2364
      %v2396 = vadd.f32 %v2395, %v2365
      %v2397 = vadd.f32 %v2396, %v2366
      %v2398 = vadd.f32 %v2397, %v2367
      %v2399 = vadd.f32 %v2398, %v2368
      %v2400 = vadd.f32 %v2399, %v2369
      %v2401 = vadd.f32 %v2400, %v2370
      %v2402 = vadd.f32 %v2401, %v2371
      %v2403 = vadd.f32 %v2402, %v2372
      %v2404 = vadd.f32 %v2403, %v2373
      %v2405 = vrot.slane %v2404, 4
      %v2406 = vadd.f32 %v2404, %v2405
      %v2407 = vrot.slane %v2406, 2
      %v2408 = vadd.f32 %v2406, %v2407
      %v2409 = vrot.slane %v2408, 1
      %v2410 = vadd.f32 %v2408, %v2409
      %2411 = vst [vmem:[%s442 + $0x1] sm:$0x1] %v2410
      %s2412 = smul.u32 16, %s23
      %p2413 = scmp.lt.s32.totalorder %s22, 1
      %s2414 = scalar_select %p2413, %s22, 1
      %p2415 = scmp.lt.s32.totalorder %s2412, 15
      %s2416 = scalar_select %p2415, %s2412, 15
      %s2417 = smul.addr %s2416, 2
      %s2418 = smul.addr %s2414, 32
      %s2419 = sadd.s32 %s2417, %s2418
      %s2420 = smul.addr %s2419, 8
      %s2421 = scalar_lea.vmem %s5, %s2420
      %p2422 = scmp.lt.s32.totalorder %s22, 1
      %s2423 = scalar_select %p2422, %s22, 1
      %p2424 = scmp.lt.s32.totalorder %s23, 0
      %s2425 = scalar_select %p2424, %s23, 0
      %s2426 = sadd.s32 %s2425, %s2423
      %s2427 = smul.addr %s2426, 2
      %s2428 = scalar_lea.vmem %s6, %s2427
      // Predicated region
      $region41: #{up_forward.8} parent=39 // pred_check
        %p2429 = pneg %p186
      $region42: #{up_forward.8} parent=39 // pred_check_branch
        %2431 = sbr.rel (%p2429) target = $region44
      $region43: #{up_forward.8} parent=39 // pred_region
        %s2432 = smul.u32 16, %s23
      $region44: #{up_forward.8} parent=39 // pred_fallthru
        _
      // Predicated region
      $region45: #{up_forward.8} parent=39 // pred_check
        %p2433 = pneg %p214
      $region46: #{up_forward.8} parent=39 // pred_check_branch
        %2435 = sbr.rel (%p2433) target = $region48
      $region47: #{up_forward.8} parent=39 // pred_region
        _
      $region48: #{up_forward.8} parent=39 // pred_fallthru
        _
    $region40: #{up_forward.8} parent=5 // pred_fallthru
      _
    %p2436 = scmp.le.s32.totalorder 2, %s13
    // Predicated region
    $region49: #{up_forward.8} parent=5 // pred_check
      %p2437 = pneg %p2436
    $region50: #{up_forward.8} parent=5 // pred_check_branch
      %2439 = sbr.rel (%p2437) target = $region52
    $region51: #{up_forward.8} parent=5 // pred_region
      %s2440 = ssub.s32 %s13, 2
      // Predicated region
      $region53: #{up_forward.8} parent=51 // pred_check
        %p2441 = pneg %p192
      $region54: #{up_forward.8} parent=51 // pred_check_branch
        %2443 = sbr.rel (%p2441) target = $region56
      $region55: #{up_forward.8} parent=51 // pred_region
        %s2444 = smul.u32 16, %s25
        %p2445 = scmp.lt.s32.totalorder %s24, 1
        %s2446 = scalar_select %p2445, %s24, 1
        %p2447 = scmp.lt.s32.totalorder %s2444, 15
        %s2448 = scalar_select %p2447, %s2444, 15
        %s2449 = smul.addr %s2448, 2
        %s2450 = smul.addr %s2446, 32
        %s2451 = sadd.s32 %s2449, %s2450
        %s2452 = smul.addr %s2451, 8
        %s2453 = scalar_lea.vmem %s5, %s2452
      $region56: #{up_forward.8} parent=51 // pred_fallthru
        _
      // Predicated region
      $region57: #{up_forward.8} parent=51 // pred_check
        %p2454 = pneg %p220
      $region58: #{up_forward.8} parent=51 // pred_check_branch
        %2456 = sbr.rel (%p2454) target = $region60
      $region59: #{up_forward.8} parent=51 // pred_region
        %p2457 = scmp.lt.s32.totalorder %s24, 1
        %s2458 = scalar_select %p2457, %s24, 1
        %p2459 = scmp.lt.s32.totalorder %s25, 0
        %s2460 = scalar_select %p2459, %s25, 0
        %s2461 = sadd.s32 %s2460, %s2458
        %s2462 = smul.addr %s2461, 2
        %s2463 = scalar_lea.vmem %s6, %s2462
      $region60: #{up_forward.8} parent=51 // pred_fallthru
        _
    $region52: #{up_forward.8} parent=5 // pred_fallthru
      _
  $region6: #{up_forward.8} parent=0 // loop_footer
    %s17 = sadd.s32 1, %s13
  $region7: #{up_forward.8} parent=0 // loop_footer_branch
    %12 = sbr.rel target = $region3
  $region8: #{up_forward.8} parent=0 // loop_exit
    _

// kernel: up_forward.6
$region0: #{up_forward.6}
  #allocation0 [shape = 'u32[]', space=smem, size = 0x4, offset = 0x4, fixed_abs, tag = 'smem constant byte address 0x4 - core index']
  #allocation1 [shape = 'u32[72,128]{1,0:T(1,128)}', space=vmem, size = 0x9000, scoped, tag = 'internal scratch']
  #allocation2 [shape = 'f32[18,18,256]{2,1,0:T(8,128)}', space=vmem, size = 0x6c000, scoped, tag = 'scratch operand']
  %s0 = inlined_call_operand.vmem [shape: f32[2,18,18,256], index: 0, kind: input, shape index: {}, may-alias: {0,1,2}]
  %s1 = inlined_call_operand.vmem [shape: f32[2,18,18,256], index: 1, kind: input, shape index: {}, may-alias: {0,1,2}]
  %s2 = inlined_call_operand.vmem [shape: f32[2,18,18,256], index: 2, kind: input, shape index: {}, may-alias: {0,1,2}]
  %s3 = inlined_call_operand.vmem [shape: f32[3,3,256,128], index: 3, kind: input, shape index: {}]
  %s4 = inlined_call_operand.vmem [shape: f32[1,128], index: 4, kind: input, shape index: {}]
  %s5 = inlined_call_operand.vmem [shape: f32[2,16,16,128], index: 5, kind: output, shape index: {0}]
  %s6 = inlined_call_operand.vmem [shape: f32[2,1,2,128], index: 6, kind: output, shape index: {1}]
  %7 = xla_tuple %s5, %s6
  %s8 = sld [smem:[#allocation0]]
  $region61: #{up_forward.6} parent=0
    _
  %s10 = ssub.s32 1, %s8
  %s11 = scalar_select 0, %s10, %s8
  loop: start=0, step=1, limit=4
  $region2: #{up_forward.6} parent=0 // loop_pre_header
    _
  $region3: #{up_forward.6} parent=0 // loop_header
    %s13 = sphi 0, %s17
    %p14 = scmp.ge.s32.totalorder %s13, 4
    %s20 = sphi 0, %s32
    %s21 = sphi 0, %s28
    %s22 = sphi 0, %s20
    %s23 = sphi 0, %s21
    %s24 = sphi 0, %s22
    %s25 = sphi 0, %s23
    %s37 = sphi 0, %s39
    %s40 = sphi 0, %s37
    %s41 = sphi 0, %s40
    %s57 = sphi 0, %s41
    %s69 = sphi 0, %s71
    %s72 = sphi 0, %s69
    %s73 = sphi 0, %s72
    %s89 = sphi 0, %s73
    %s103 = sphi 0, %s105
    %s106 = sphi 0, %s103
    %s107 = sphi 0, %s106
    %s123 = sphi 0, %s107
    %s127 = sphi 0, %s127
    %s129 = sphi 0, %s127
    %s130 = sphi 0, %s129
    %s144 = sphi 0, %s130
    %s148 = sphi 0, %s148
    %s150 = sphi 0, %s148
    %s151 = sphi 0, %s150
    %s165 = sphi 0, %s151
    %s173 = sphi 0, %s175
    %s176 = sphi 0, %s173
    %s177 = sphi 0, %s176
    %s193 = sphi 0, %s177
    %s201 = sphi 0, %s203
    %s204 = sphi 0, %s201
    %s205 = sphi 0, %s204
    %s221 = sphi 0, %s205
  $region4: #{up_forward.6} parent=0 // loop_header_branch
    %16 = sbr.rel (%p14) target = $region8
  $region5: #{up_forward.6} parent=0 // loop_body
    %s18 = ssub.s32 %s13, 1
    %s19 = ssub.s32 %s13, 2
    %s26 = sadd.s32 1, %s21
    %p27 = scmp.ge.s32.totalorder %s26, 1
    %s28 = scalar_select %p27, 0, %s26
    %s29 = sadd.s32 1, %s20
    %s30 = scalar_select %p27, %s29, %s20
    %p31 = scmp.ge.s32.totalorder %s30, 2
    %s32 = scalar_select %p31, 0, %s30
    %s33 = ssub.s32 %s20, %s32
    %s34 = ssub.s32 %s21, %s28
    %s35 = sor.u32 %s33, %s34
    %p36 = scmp.eq.s32.totalorder %s35, 0
    %s38 = sadd.s32 %s37, 1
    %s39 = scalar_select %p36, %s37, %s38
    %p42 = pneg %p36
    %p43 = scmp.eq.s32.totalorder %s13, 1
    %p44 = por %p42, %p43
    %p45 = scmp.ne.s32.totalorder %s37, %s40
    %p46 = scmp.eq.s32.totalorder %s13, 0
    %p47 = por %p45, %p46
    %p48 = scmp.ne.s32.totalorder %s37, %s40
    %p49 = scmp.eq.s32.totalorder %s18, 1
    %p50 = por %p48, %p49
    %p51 = scmp.ne.s32.totalorder %s40, %s41
    %p52 = scmp.eq.s32.totalorder %s18, 0
    %p53 = por %p51, %p52
    %p54 = scmp.ne.s32.totalorder %s40, %s41
    %p55 = scmp.eq.s32.totalorder %s19, 1
    %p56 = por %p54, %p55
    %p58 = scmp.ne.s32.totalorder %s41, %s57
    %p59 = scmp.eq.s32.totalorder %s19, 0
    %p60 = por %p58, %p59
    %s61 = sadd.s32 %s21, 1
    %s62 = smul.u32 %s61, 16
    %s63 = sadd.s32 %s28, 1
    %s64 = smul.u32 %s63, 16
    %s65 = ssub.s32 %s20, %s32
    %s66 = ssub.s32 %s62, %s64
    %s67 = sor.u32 %s65, %s66
    %p68 = scmp.eq.s32.totalorder %s67, 0
    %s70 = sadd.s32 %s69, 1
    %s71 = scalar_select %p68, %s69, %s70
    %p74 = pneg %p68
    %p75 = scmp.eq.s32.totalorder %s13, 1
    %p76 = por %p74, %p75
    %p77 = scmp.ne.s32.totalorder %s69, %s72
    %p78 = scmp.eq.s32.totalorder %s13, 0
    %p79 = por %p77, %p78
    %p80 = scmp.ne.s32.totalorder %s69, %s72
    %p81 = scmp.eq.s32.totalorder %s18, 1
    %p82 = por %p80, %p81
    %p83 = scmp.ne.s32.totalorder %s72, %s73
    %p84 = scmp.eq.s32.totalorder %s18, 0
    %p85 = por %p83, %p84
    %p86 = scmp.ne.s32.totalorder %s72, %s73
    %p87 = scmp.eq.s32.totalorder %s19, 1
    %p88 = por %p86, %p87
    %p90 = scmp.ne.s32.totalorder %s73, %s89
    %p91 = scmp.eq.s32.totalorder %s19, 0
    %p92 = por %p90, %p91
    %s93 = sadd.s32 %s21, 1
    %s94 = smul.u32 %s93, 16
    %s95 = sadd.s32 %s94, 1
    %s96 = sadd.s32 %s28, 1
    %s97 = smul.u32 %s96, 16
    %s98 = sadd.s32 %s97, 1
    %s99 = ssub.s32 %s20, %s32
    %s100 = ssub.s32 %s95, %s98
    %s101 = sor.u32 %s99, %s100
    %p102 = scmp.eq.s32.totalorder %s101, 0
    %s104 = sadd.s32 %s103, 1
    %s105 = scalar_select %p102, %s103, %s104
    %p108 = pneg %p102
    %p109 = scmp.eq.s32.totalorder %s13, 1
    %p110 = por %p108, %p109
    %p111 = scmp.ne.s32.totalorder %s103, %s106
    %p112 = scmp.eq.s32.totalorder %s13, 0
    %p113 = por %p111, %p112
    %p114 = scmp.ne.s32.totalorder %s103, %s106
    %p115 = scmp.eq.s32.totalorder %s18, 1
    %p116 = por %p114, %p115
    %p117 = scmp.ne.s32.totalorder %s106, %s107
    %p118 = scmp.eq.s32.totalorder %s18, 0
    %p119 = por %p117, %p118
    %p120 = scmp.ne.s32.totalorder %s106, %s107
    %p121 = scmp.eq.s32.totalorder %s19, 1
    %p122 = por %p120, %p121
    %p124 = scmp.ne.s32.totalorder %s107, %s123
    %p125 = scmp.eq.s32.totalorder %s19, 0
    %p126 = por %p124, %p125
    %s128 = sadd.s32 %s127, 1
    %p131 = scmp.eq.s32.totalorder %s13, 1
    %p132 = scmp.ne.s32.totalorder %s127, %s129
    %p133 = scmp.eq.s32.totalorder %s13, 0
    %p134 = por %p132, %p133
    %p135 = scmp.ne.s32.totalorder %s127, %s129
    %p136 = scmp.eq.s32.totalorder %s18, 1
    %p137 = por %p135, %p136
    %p138 = scmp.ne.s32.totalorder %s129, %s130
    %p139 = scmp.eq.s32.totalorder %s18, 0
    %p140 = por %p138, %p139
    %p141 = scmp.ne.s32.totalorder %s129, %s130
    %p142 = scmp.eq.s32.totalorder %s19, 1
    %p143 = por %p141, %p142
    %p145 = scmp.ne.s32.totalorder %s130, %s144
    %p146 = scmp.eq.s32.totalorder %s19, 0
    %p147 = por %p145, %p146
    %s149 = sadd.s32 %s148, 1
    %p152 = scmp.eq.s32.totalorder %s13, 1
    %p153 = scmp.ne.s32.totalorder %s148, %s150
    %p154 = scmp.eq.s32.totalorder %s13, 0
    %p155 = por %p153, %p154
    %p156 = scmp.ne.s32.totalorder %s148, %s150
    %p157 = scmp.eq.s32.totalorder %s18, 1
    %p158 = por %p156, %p157
    %p159 = scmp.ne.s32.totalorder %s150, %s151
    %p160 = scmp.eq.s32.totalorder %s18, 0
    %p161 = por %p159, %p160
    %p162 = scmp.ne.s32.totalorder %s150, %s151
    %p163 = scmp.eq.s32.totalorder %s19, 1
    %p164 = por %p162, %p163
    %p166 = scmp.ne.s32.totalorder %s151, %s165
    %p167 = scmp.eq.s32.totalorder %s19, 0
    %p168 = por %p166, %p167
    %s169 = ssub.s32 %s20, %s32
    %s170 = ssub.s32 %s21, %s28
    %s171 = sor.u32 %s169, %s170
    %p172 = scmp.eq.s32.totalorder %s171, 0
    %s174 = sadd.s32 %s173, 1
    %s175 = scalar_select %p172, %s173, %s174
    %p178 = pneg %p172
    %p179 = scmp.eq.s32.totalorder %s13, 1
    %p180 = por %p178, %p179
    %p181 = scmp.ne.s32.totalorder %s173, %s176
    %p182 = scmp.eq.s32.totalorder %s13, 0
    %p183 = por %p181, %p182
    %p184 = scmp.ne.s32.totalorder %s173, %s176
    %p185 = scmp.eq.s32.totalorder %s18, 1
    %p186 = por %p184, %p185
    %p187 = scmp.ne.s32.totalorder %s176, %s177
    %p188 = scmp.eq.s32.totalorder %s18, 0
    %p189 = por %p187, %p188
    %p190 = scmp.ne.s32.totalorder %s176, %s177
    %p191 = scmp.eq.s32.totalorder %s19, 1
    %p192 = por %p190, %p191
    %p194 = scmp.ne.s32.totalorder %s177, %s193
    %p195 = scmp.eq.s32.totalorder %s19, 0
    %p196 = por %p194, %p195
    %s197 = ssub.s32 %s20, %s32
    %s198 = ssub.s32 %s21, %s28
    %s199 = sor.u32 %s197, %s198
    %p200 = scmp.eq.s32.totalorder %s199, 0
    %s202 = sadd.s32 %s201, 1
    %s203 = scalar_select %p200, %s201, %s202
    %p206 = pneg %p200
    %p207 = scmp.eq.s32.totalorder %s13, 1
    %p208 = por %p206, %p207
    %p209 = scmp.ne.s32.totalorder %s201, %s204
    %p210 = scmp.eq.s32.totalorder %s13, 0
    %p211 = por %p209, %p210
    %p212 = scmp.ne.s32.totalorder %s201, %s204
    %p213 = scmp.eq.s32.totalorder %s18, 1
    %p214 = por %p212, %p213
    %p215 = scmp.ne.s32.totalorder %s204, %s205
    %p216 = scmp.eq.s32.totalorder %s18, 0
    %p217 = por %p215, %p216
    %p218 = scmp.ne.s32.totalorder %s204, %s205
    %p219 = scmp.eq.s32.totalorder %s19, 1
    %p220 = por %p218, %p219
    %p222 = scmp.ne.s32.totalorder %s205, %s221
    %p223 = scmp.eq.s32.totalorder %s19, 0
    %p224 = por %p222, %p223
    %p225 = scmp.le.s32.totalorder 1, %s13
    %p226 = scmp.lt.s32.totalorder %s13, 3
    %p227 = pnand %p225, %p226
    %p228 = pneg %p227
    // Predicated region
    $region9: #{up_forward.6} parent=5 // pred_check
      _
    $region10: #{up_forward.6} parent=5 // pred_check_branch
      %230 = sbr.rel (%p227) target = $region12
    $region11: #{up_forward.6} parent=5 // pred_region
      %s231 = ssub.s32 %s13, 1
      // Predicated region
      $region13: #{up_forward.6} parent=11 // pred_check
        %p232 = pneg %p140
      $region14: #{up_forward.6} parent=11 // pred_check_branch
        %234 = sbr.rel (%p232) target = $region16
      $region15: #{up_forward.6} parent=11 // pred_region
        _
      $region16: #{up_forward.6} parent=11 // pred_fallthru
        _
      // Predicated region
      $region17: #{up_forward.6} parent=11 // pred_check
        %p235 = pneg %p161
      $region18: #{up_forward.6} parent=11 // pred_check_branch
        %237 = sbr.rel (%p235) target = $region20
      $region19: #{up_forward.6} parent=11 // pred_region
        _
      $region20: #{up_forward.6} parent=11 // pred_fallthru
        _
    $region12: #{up_forward.6} parent=5 // pred_fallthru
      _
    %p238 = scmp.lt.s32.totalorder %s13, 2
    // Predicated region
    $region21: #{up_forward.6} parent=5 // pred_check
      %p239 = pneg %p238
    $region22: #{up_forward.6} parent=5 // pred_check_branch
      %241 = sbr.rel (%p239) target = $region24
    $region23: #{up_forward.6} parent=5 // pred_region
      // Predicated region
      $region25: #{up_forward.6} parent=23 // pred_check
        %p242 = pneg %p47
      $region26: #{up_forward.6} parent=23 // pred_check_branch
        %244 = sbr.rel (%p242) target = $region28
      $region27: #{up_forward.6} parent=23 // pred_region
        %s245 = smul.u32 16, %s21
        %s246 = ssub.s32 18, %s245
        %p247 = scmp.lt.s32.totalorder %s246, 16
        %s248 = scalar_select %p247, %s246, 16
        %s249 = smul.u32 8, %s248
        %s250 = smul.u32 %s249, 3
        %s251 = smul.u32 %s250, 2
        %p252 = scmp.lt.s32.totalorder %s20, 1
        %s253 = scalar_select %p252, %s20, 1
        %p254 = scmp.lt.s32.totalorder %s245, 17
        %s255 = scalar_select %p254, %s245, 17
        %s256 = smul.addr %s255, 6
        %s257 = smul.addr %s253, 108
        %s258 = sadd.s32 %s256, %s257
        %s259 = smul.addr %s258, 8
        %s260 = scalar_lea.vmem %s0, %s259
        %s261 = smul.u32 16, %s21
        %s262 = ssub.s32 18, %s261
        %p263 = scmp.lt.s32.totalorder %s262, 16
        %s264 = scalar_select %p263, %s262, 16
        %s265 = smul.u32 8, %s264
        %s266 = smul.u32 %s265, 3
        %s267 = smul.u32 %s266, 2
      $region28: #{up_forward.6} parent=23 // pred_fallthru
        _
      // Predicated region
      $region29: #{up_forward.6} parent=23 // pred_check
        %p268 = pneg %p79
      $region30: #{up_forward.6} parent=23 // pred_check_branch
        %270 = sbr.rel (%p268) target = $region32
      $region31: #{up_forward.6} parent=23 // pred_region
        %s271 = sadd.s32 %s21, 1
        %s272 = smul.u32 %s271, 16
        %p273 = scmp.lt.s32.totalorder %s20, 1
        %s274 = scalar_select %p273, %s20, 1
        %p275 = scmp.lt.s32.totalorder %s272, 17
        %s276 = scalar_select %p275, %s272, 17
        %s277 = smul.addr %s276, 6
        %s278 = smul.addr %s274, 108
        %s279 = sadd.s32 %s277, %s278
        %s280 = smul.addr %s279, 8
        %s281 = scalar_lea.vmem %s1, %s280
        %s282 = sadd.s32 %s21, 1
        %s283 = smul.u32 %s282, 16
      $region32: #{up_forward.6} parent=23 // pred_fallthru
        _
      // Predicated region
      $region33: #{up_forward.6} parent=23 // pred_check
        %p284 = pneg %p113
      $region34: #{up_forward.6} parent=23 // pred_check_branch
        %286 = sbr.rel (%p284) target = $region36
      $region35: #{up_forward.6} parent=23 // pred_region
        %s287 = sadd.s32 %s21, 1
        %s288 = smul.u32 %s287, 16
        %s289 = sadd.s32 %s288, 1
        %p290 = scmp.lt.s32.totalorder %s20, 1
        %s291 = scalar_select %p290, %s20, 1
        %p292 = scmp.lt.s32.totalorder %s289, 17
        %s293 = scalar_select %p292, %s289, 17
        %s294 = smul.addr %s293, 6
        %s295 = smul.addr %s291, 108
        %s296 = sadd.s32 %s294, %s295
        %s297 = smul.addr %s296, 8
        %s298 = scalar_lea.vmem %s2, %s297
        %s299 = sadd.s32 %s21, 1
        %s300 = smul.u32 %s299, 16
        %s301 = sadd.s32 %s300, 1
      $region36: #{up_forward.6} parent=23 // pred_fallthru
        _
    $region24: #{up_forward.6} parent=5 // pred_fallthru
      _
    %p302 = scmp.le.s32.totalorder 1, %s13
    %p303 = scmp.lt.s32.totalorder %s13, 3
    %p304 = pnand %p302, %p303
    %p305 = pneg %p304
    // Predicated region
    $region37: #{up_forward.6} parent=5 // pred_check
      _
    $region38: #{up_forward.6} parent=5 // pred_check_branch
      %307 = sbr.rel (%p304) target = $region40
    $region39: #{up_forward.6} parent=5 // pred_region
      %s308 = ssub.s32 %s13, 1
      %s309 = smul.u32 16, %s23
      %s310 = ssub.s32 18, %s309
      %p311 = scmp.lt.s32.totalorder %s310, 16
      %s312 = scalar_select %p311, %s310, 16
      %s313 = smul.u32 8, %s312
      %s314 = smul.u32 %s313, 3
      %s315 = smul.u32 %s314, 2
      %p316 = scmp.lt.s32.totalorder %s22, 1
      %s317 = scalar_select %p316, %s22, 1
      %p318 = scmp.lt.s32.totalorder %s309, 17
      %s319 = scalar_select %p318, %s309, 17
      %s320 = smul.addr %s319, 6
      %s321 = smul.addr %s317, 108
      %s322 = sadd.s32 %s320, %s321
      %s323 = smul.addr %s322, 8
      %s324 = scalar_lea.vmem %s0, %s323
      %p325 = pneg %p53
      %p326 = pneg %p50
      %s327 = sadd.s32 %s23, 1
      %s328 = smul.u32 %s327, 16
      %p329 = scmp.lt.s32.totalorder %s22, 1
      %s330 = scalar_select %p329, %s22, 1
      %p331 = scmp.lt.s32.totalorder %s328, 17
      %s332 = scalar_select %p331, %s328, 17
      %s333 = smul.addr %s332, 6
      %s334 = smul.addr %s330, 108
      %s335 = sadd.s32 %s333, %s334
      %s336 = smul.addr %s335, 8
      %s337 = scalar_lea.vmem %s1, %s336
      %p338 = pneg %p85
      %p339 = pneg %p82
      %s340 = sadd.s32 %s23, 1
      %s341 = smul.u32 %s340, 16
      %s342 = sadd.s32 %s341, 1
      %p343 = scmp.lt.s32.totalorder %s22, 1
      %s344 = scalar_select %p343, %s22, 1
      %p345 = scmp.lt.s32.totalorder %s342, 17
      %s346 = scalar_select %p345, %s342, 17
      %s347 = smul.addr %s346, 6
      %s348 = smul.addr %s344, 108
      %s349 = sadd.s32 %s347, %s348
      %s350 = smul.addr %s349, 8
      %s351 = scalar_lea.vmem %s2, %s350
      %p352 = pneg %p119
      %p353 = pneg %p116
      %p354 = pneg %p140
      %p355 = pneg %p137
      %p356 = pneg %p161
      %p357 = pneg %p158
      %p358 = pneg %p189
      %p359 = pneg %p186
      %s360 = smul.u32 16, %s23
      %p361 = scmp.lt.s32.totalorder %s22, 1
      %s362 = scalar_select %p361, %s22, 1
      %p363 = scmp.lt.s32.totalorder %s360, 15
      %s364 = scalar_select %p363, %s360, 15
      %s365 = smul.addr %s364, 2
      %s366 = smul.addr %s362, 32
      %s367 = sadd.s32 %s365, %s366
      %s368 = smul.addr %s367, 8
      %s369 = scalar_lea.vmem %s5, %s368
      %p370 = pneg %p217
      %p371 = pneg %p214
      %p372 = scmp.lt.s32.totalorder %s22, 1
      %s373 = scalar_select %p372, %s22, 1
      %p374 = scmp.lt.s32.totalorder %s23, 0
      %s375 = scalar_select %p374, %s23, 0
      %s376 = sadd.s32 %s375, %s373
      %s377 = smul.addr %s376, 2
      %s378 = scalar_lea.vmem %s6, %s377
      %s379 = smul.u32 16, %s23
      %s380 = ssub.s32 18, %s379
      %p381 = scmp.lt.s32.totalorder %s380, 16
      %s382 = scalar_select %p381, %s380, 16
      %s383 = smul.u32 8, %s382
      %s384 = smul.u32 %s383, 3
      %s385 = smul.u32 %s384, 2
      %p386 = scmp.lt.s32.totalorder %s22, 1
      %s387 = scalar_select %p386, %s22, 1
      %p388 = scmp.lt.s32.totalorder %s379, 17
      %s389 = scalar_select %p388, %s379, 17
      %s390 = smul.addr %s389, 6
      %s391 = smul.addr %s387, 108
      %s392 = sadd.s32 %s390, %s391
      %s393 = smul.addr %s392, 8
      %s394 = scalar_lea.vmem %s0, %s393
      %s395 = smul.u32 16, %s23
      %s396 = ssub.s32 18, %s395
      %p397 = scmp.lt.s32.totalorder %s396, 16
      %s398 = scalar_select %p397, %s396, 16
      %s399 = smul.u32 8, %s398
      %s400 = smul.u32 %s399, 3
      %s401 = smul.u32 %s400, 2
      %s402 = sadd.s32 %s23, 1
      %s403 = smul.u32 %s402, 16
      %p404 = scmp.lt.s32.totalorder %s22, 1
      %s405 = scalar_select %p404, %s22, 1
      %p406 = scmp.lt.s32.totalorder %s403, 17
      %s407 = scalar_select %p406, %s403, 17
      %s408 = smul.addr %s407, 6
      %s409 = smul.addr %s405, 108
      %s410 = sadd.s32 %s408, %s409
      %s411 = smul.addr %s410, 8
      %s412 = scalar_lea.vmem %s1, %s411
      %s413 = sadd.s32 %s23, 1
      %s414 = smul.u32 %s413, 16
      %s415 = sadd.s32 %s23, 1
      %s416 = smul.u32 %s415, 16
      %s417 = sadd.s32 %s416, 1
      %p418 = scmp.lt.s32.totalorder %s22, 1
      %s419 = scalar_select %p418, %s22, 1
      %p420 = scmp.lt.s32.totalorder %s417, 17
      %s421 = scalar_select %p420, %s417, 17
      %s422 = smul.addr %s421, 6
      %s423 = smul.addr %s419, 108
      %s424 = sadd.s32 %s422, %s423
      %s425 = smul.addr %s424, 8
      %s426 = scalar_lea.vmem %s2, %s425
      %s427 = sadd.s32 %s23, 1
      %s428 = smul.u32 %s427, 16
      %s429 = sadd.s32 %s428, 1
      %s430 = smul.u32 16, %s23
      %p431 = scmp.lt.s32.totalorder %s22, 1
      %s432 = scalar_select %p431, %s22, 1
      %p433 = scmp.lt.s32.totalorder %s430, 15
      %s434 = scalar_select %p433, %s430, 15
      %s435 = smul.addr %s434, 2
      %s436 = smul.addr %s432, 32
      %s437 = sadd.s32 %s435, %s436
      %s438 = smul.addr %s437, 8
      %s439 = scalar_lea.vmem %s5, %s438
      %s440 = smul.u32 16, %s23
      %p441 = scmp.lt.s32.totalorder %s22, 1
      %s442 = scalar_select %p441, %s22, 1
      %p443 = scmp.lt.s32.totalorder %s23, 0
      %s444 = scalar_select %p443, %s23, 0
      %s445 = sadd.s32 %s444, %s442
      %s446 = smul.addr %s445, 2
      %s447 = scalar_lea.vmem %s6, %s446
      %v448 = vld [vmem:[%s394] sm:$0xff]
      %v449 = vld [vmem:[%s394 + $0x8] sm:$0xff]
      %v450 = vld [vmem:[%s394 + $0x10] sm:$0xff]
      %v451 = vld [vmem:[%s394 + $0x18] sm:$0xff]
      %v452 = vld [vmem:[%s394 + $0x20] sm:$0x3]
      %v453 = vld [vmem:[%s394 + $0x28] sm:$0x3]
      %v454 = vld [vmem:[%s394 + $0x30] sm:$0xff]
      %v455 = vld [vmem:[%s394 + $0x38] sm:$0xff]
      %v456 = vld [vmem:[%s394 + $0x40] sm:$0xff]
      %v457 = vld [vmem:[%s394 + $0x48] sm:$0xff]
      %v458 = vld [vmem:[%s394 + $0x50] sm:$0x3]
      %v459 = vld [vmem:[%s394 + $0x58] sm:$0x3]
      %v460 = vld [vmem:[%s394 + $0x60] sm:$0xff]
      %v461 = vld [vmem:[%s394 + $0x68] sm:$0xff]
      %v462 = vld [vmem:[%s394 + $0x70] sm:$0xff]
      %v463 = vld [vmem:[%s394 + $0x78] sm:$0xff]
      %v464 = vld [vmem:[%s394 + $0x80] sm:$0x3]
      %v465 = vld [vmem:[%s394 + $0x88] sm:$0x3]
      %v466 = vld [vmem:[%s394 + $0x90] sm:$0xff]
      %v467 = vld [vmem:[%s394 + $0x98] sm:$0xff]
      %v468 = vld [vmem:[%s394 + $0xa0] sm:$0xff]
      %v469 = vld [vmem:[%s394 + $0xa8] sm:$0xff]
      %v470 = vld [vmem:[%s394 + $0xb0] sm:$0x3]
      %v471 = vld [vmem:[%s394 + $0xb8] sm:$0x3]
      %v472 = vld [vmem:[%s394 + $0xc0] sm:$0xff]
      %v473 = vld [vmem:[%s394 + $0xc8] sm:$0xff]
      %v474 = vld [vmem:[%s394 + $0xd0] sm:$0xff]
      %v475 = vld [vmem:[%s394 + $0xd8] sm:$0xff]
      %v476 = vld [vmem:[%s394 + $0xe0] sm:$0x3]
      %v477 = vld [vmem:[%s394 + $0xe8] sm:$0x3]
      %v478 = vld [vmem:[%s394 + $0xf0] sm:$0xff]
      %v479 = vld [vmem:[%s394 + $0xf8] sm:$0xff]
      %v480 = vld [vmem:[%s394 + $0x100] sm:$0xff]
      %v481 = vld [vmem:[%s394 + $0x108] sm:$0xff]
      %v482 = vld [vmem:[%s394 + $0x110] sm:$0x3]
      %v483 = vld [vmem:[%s394 + $0x118] sm:$0x3]
      %v484 = vld [vmem:[%s394 + $0x120] sm:$0xff]
      %v485 = vld [vmem:[%s394 + $0x128] sm:$0xff]
      %v486 = vld [vmem:[%s394 + $0x130] sm:$0xff]
      %v487 = vld [vmem:[%s394 + $0x138] sm:$0xff]
      %v488 = vld [vmem:[%s394 + $0x140] sm:$0x3]
      %v489 = vld [vmem:[%s394 + $0x148] sm:$0x3]
      %v490 = vld [vmem:[%s394 + $0x150] sm:$0xff]
      %v491 = vld [vmem:[%s394 + $0x158] sm:$0xff]
      %v492 = vld [vmem:[%s394 + $0x160] sm:$0xff]
      %v493 = vld [vmem:[%s394 + $0x168] sm:$0xff]
      %v494 = vld [vmem:[%s394 + $0x170] sm:$0x3]
      %v495 = vld [vmem:[%s394 + $0x178] sm:$0x3]
      %v496 = vld [vmem:[%s394 + $0x180] sm:$0xff]
      %v497 = vld [vmem:[%s394 + $0x188] sm:$0xff]
      %v498 = vld [vmem:[%s394 + $0x190] sm:$0xff]
      %v499 = vld [vmem:[%s394 + $0x198] sm:$0xff]
      %v500 = vld [vmem:[%s394 + $0x1a0] sm:$0x3]
      %v501 = vld [vmem:[%s394 + $0x1a8] sm:$0x3]
      %v502 = vld [vmem:[%s394 + $0x1b0] sm:$0xff]
      %v503 = vld [vmem:[%s394 + $0x1b8] sm:$0xff]
      %v504 = vld [vmem:[%s394 + $0x1c0] sm:$0xff]
      %v505 = vld [vmem:[%s394 + $0x1c8] sm:$0xff]
      %v506 = vld [vmem:[%s394 + $0x1d0] sm:$0x3]
      %v507 = vld [vmem:[%s394 + $0x1d8] sm:$0x3]
      %v508 = vld [vmem:[%s394 + $0x1e0] sm:$0xff]
      %v509 = vld [vmem:[%s394 + $0x1e8] sm:$0xff]
      %v510 = vld [vmem:[%s394 + $0x1f0] sm:$0xff]
      %v511 = vld [vmem:[%s394 + $0x1f8] sm:$0xff]
      %v512 = vld [vmem:[%s394 + $0x200] sm:$0x3]
      %v513 = vld [vmem:[%s394 + $0x208] sm:$0x3]
      %v514 = vld [vmem:[%s394 + $0x210] sm:$0xff]
      %v515 = vld [vmem:[%s394 + $0x218] sm:$0xff]
      %v516 = vld [vmem:[%s394 + $0x220] sm:$0xff]
      %v517 = vld [vmem:[%s394 + $0x228] sm:$0xff]
      %v518 = vld [vmem:[%s394 + $0x230] sm:$0x3]
      %v519 = vld [vmem:[%s394 + $0x238] sm:$0x3]
      %v520 = vld [vmem:[%s394 + $0x240] sm:$0xff]
      %v521 = vld [vmem:[%s394 + $0x248] sm:$0xff]
      %v522 = vld [vmem:[%s394 + $0x250] sm:$0xff]
      %v523 = vld [vmem:[%s394 + $0x258] sm:$0xff]
      %v524 = vld [vmem:[%s394 + $0x260] sm:$0x3]
      %v525 = vld [vmem:[%s394 + $0x268] sm:$0x3]
      %v526 = vld [vmem:[%s394 + $0x270] sm:$0xff]
      %v527 = vld [vmem:[%s394 + $0x278] sm:$0xff]
      %v528 = vld [vmem:[%s394 + $0x280] sm:$0xff]
      %v529 = vld [vmem:[%s394 + $0x288] sm:$0xff]
      %v530 = vld [vmem:[%s394 + $0x290] sm:$0x3]
      %v531 = vld [vmem:[%s394 + $0x298] sm:$0x3]
      %v532 = vld [vmem:[%s394 + $0x2a0] sm:$0xff]
      %v533 = vld [vmem:[%s394 + $0x2a8] sm:$0xff]
      %v534 = vld [vmem:[%s394 + $0x2b0] sm:$0xff]
      %v535 = vld [vmem:[%s394 + $0x2b8] sm:$0xff]
      %v536 = vld [vmem:[%s394 + $0x2c0] sm:$0x3]
      %v537 = vld [vmem:[%s394 + $0x2c8] sm:$0x3]
      %v538 = vld [vmem:[%s394 + $0x2d0] sm:$0xff]
      %v539 = vld [vmem:[%s394 + $0x2d8] sm:$0xff]
      %v540 = vld [vmem:[%s394 + $0x2e0] sm:$0xff]
      %v541 = vld [vmem:[%s394 + $0x2e8] sm:$0xff]
      %v542 = vld [vmem:[%s394 + $0x2f0] sm:$0x3]
      %v543 = vld [vmem:[%s394 + $0x2f8] sm:$0x3]
      %544 = vst [vmem:[#allocation2] sm:$0xff] %v448
      %545 = vst [vmem:[#allocation2 + $0x8] sm:$0xff] %v449
      %546 = vst [vmem:[#allocation2 + $0x10] sm:$0xff] %v450
      %547 = vst [vmem:[#allocation2 + $0x18] sm:$0xff] %v451
      %548 = vst [vmem:[#allocation2 + $0x20] sm:$0x3] %v452
      %549 = vst [vmem:[#allocation2 + $0x28] sm:$0x3] %v453
      %550 = vst [vmem:[#allocation2 + $0x30] sm:$0xff] %v454
      %551 = vst [vmem:[#allocation2 + $0x38] sm:$0xff] %v455
      %552 = vst [vmem:[#allocation2 + $0x40] sm:$0xff] %v456
      %553 = vst [vmem:[#allocation2 + $0x48] sm:$0xff] %v457
      %554 = vst [vmem:[#allocation2 + $0x50] sm:$0x3] %v458
      %555 = vst [vmem:[#allocation2 + $0x58] sm:$0x3] %v459
      %556 = vst [vmem:[#allocation2 + $0x60] sm:$0xff] %v460
      %557 = vst [vmem:[#allocation2 + $0x68] sm:$0xff] %v461
      %558 = vst [vmem:[#allocation2 + $0x70] sm:$0xff] %v462
      %559 = vst [vmem:[#allocation2 + $0x78] sm:$0xff] %v463
      %560 = vst [vmem:[#allocation2 + $0x80] sm:$0x3] %v464
      %561 = vst [vmem:[#allocation2 + $0x88] sm:$0x3] %v465
      %562 = vst [vmem:[#allocation2 + $0x90] sm:$0xff] %v466
      %563 = vst [vmem:[#allocation2 + $0x98] sm:$0xff] %v467
      %564 = vst [vmem:[#allocation2 + $0xa0] sm:$0xff] %v468
      %565 = vst [vmem:[#allocation2 + $0xa8] sm:$0xff] %v469
      %566 = vst [vmem:[#allocation2 + $0xb0] sm:$0x3] %v470
      %567 = vst [vmem:[#allocation2 + $0xb8] sm:$0x3] %v471
      %568 = vst [vmem:[#allocation2 + $0xc0] sm:$0xff] %v472
      %569 = vst [vmem:[#allocation2 + $0xc8] sm:$0xff] %v473
      %570 = vst [vmem:[#allocation2 + $0xd0] sm:$0xff] %v474
      %571 = vst [vmem:[#allocation2 + $0xd8] sm:$0xff] %v475
      %572 = vst [vmem:[#allocation2 + $0xe0] sm:$0x3] %v476
      %573 = vst [vmem:[#allocation2 + $0xe8] sm:$0x3] %v477
      %574 = vst [vmem:[#allocation2 + $0xf0] sm:$0xff] %v478
      %575 = vst [vmem:[#allocation2 + $0xf8] sm:$0xff] %v479
      %576 = vst [vmem:[#allocation2 + $0x100] sm:$0xff] %v480
      %577 = vst [vmem:[#allocation2 + $0x108] sm:$0xff] %v481
      %578 = vst [vmem:[#allocation2 + $0x110] sm:$0x3] %v482
      %579 = vst [vmem:[#allocation2 + $0x118] sm:$0x3] %v483
      %580 = vst [vmem:[#allocation2 + $0x120] sm:$0xff] %v484
      %581 = vst [vmem:[#allocation2 + $0x128] sm:$0xff] %v485
      %582 = vst [vmem:[#allocation2 + $0x130] sm:$0xff] %v486
      %583 = vst [vmem:[#allocation2 + $0x138] sm:$0xff] %v487
      %584 = vst [vmem:[#allocation2 + $0x140] sm:$0x3] %v488
      %585 = vst [vmem:[#allocation2 + $0x148] sm:$0x3] %v489
      %586 = vst [vmem:[#allocation2 + $0x150] sm:$0xff] %v490
      %587 = vst [vmem:[#allocation2 + $0x158] sm:$0xff] %v491
      %588 = vst [vmem:[#allocation2 + $0x160] sm:$0xff] %v492
      %589 = vst [vmem:[#allocation2 + $0x168] sm:$0xff] %v493
      %590 = vst [vmem:[#allocation2 + $0x170] sm:$0x3] %v494
      %591 = vst [vmem:[#allocation2 + $0x178] sm:$0x3] %v495
      %592 = vst [vmem:[#allocation2 + $0x180] sm:$0xff] %v496
      %593 = vst [vmem:[#allocation2 + $0x188] sm:$0xff] %v497
      %594 = vst [vmem:[#allocation2 + $0x190] sm:$0xff] %v498
      %595 = vst [vmem:[#allocation2 + $0x198] sm:$0xff] %v499
      %596 = vst [vmem:[#allocation2 + $0x1a0] sm:$0x3] %v500
      %597 = vst [vmem:[#allocation2 + $0x1a8] sm:$0x3] %v501
      %598 = vst [vmem:[#allocation2 + $0x1b0] sm:$0xff] %v502
      %599 = vst [vmem:[#allocation2 + $0x1b8] sm:$0xff] %v503
      %600 = vst [vmem:[#allocation2 + $0x1c0] sm:$0xff] %v504
      %601 = vst [vmem:[#allocation2 + $0x1c8] sm:$0xff] %v505
      %602 = vst [vmem:[#allocation2 + $0x1d0] sm:$0x3] %v506
      %603 = vst [vmem:[#allocation2 + $0x1d8] sm:$0x3] %v507
      %604 = vst [vmem:[#allocation2 + $0x1e0] sm:$0xff] %v508
      %605 = vst [vmem:[#allocation2 + $0x1e8] sm:$0xff] %v509
      %606 = vst [vmem:[#allocation2 + $0x1f0] sm:$0xff] %v510
      %607 = vst [vmem:[#allocation2 + $0x1f8] sm:$0xff] %v511
      %608 = vst [vmem:[#allocation2 + $0x200] sm:$0x3] %v512
      %609 = vst [vmem:[#allocation2 + $0x208] sm:$0x3] %v513
      %610 = vst [vmem:[#allocation2 + $0x210] sm:$0xff] %v514
      %611 = vst [vmem:[#allocation2 + $0x218] sm:$0xff] %v515
      %612 = vst [vmem:[#allocation2 + $0x220] sm:$0xff] %v516
      %613 = vst [vmem:[#allocation2 + $0x228] sm:$0xff] %v517
      %614 = vst [vmem:[#allocation2 + $0x230] sm:$0x3] %v518
      %615 = vst [vmem:[#allocation2 + $0x238] sm:$0x3] %v519
      %616 = vst [vmem:[#allocation2 + $0x240] sm:$0xff] %v520
      %617 = vst [vmem:[#allocation2 + $0x248] sm:$0xff] %v521
      %618 = vst [vmem:[#allocation2 + $0x250] sm:$0xff] %v522
      %619 = vst [vmem:[#allocation2 + $0x258] sm:$0xff] %v523
      %620 = vst [vmem:[#allocation2 + $0x260] sm:$0x3] %v524
      %621 = vst [vmem:[#allocation2 + $0x268] sm:$0x3] %v525
      %622 = vst [vmem:[#allocation2 + $0x270] sm:$0xff] %v526
      %623 = vst [vmem:[#allocation2 + $0x278] sm:$0xff] %v527
      %624 = vst [vmem:[#allocation2 + $0x280] sm:$0xff] %v528
      %625 = vst [vmem:[#allocation2 + $0x288] sm:$0xff] %v529
      %626 = vst [vmem:[#allocation2 + $0x290] sm:$0x3] %v530
      %627 = vst [vmem:[#allocation2 + $0x298] sm:$0x3] %v531
      %628 = vst [vmem:[#allocation2 + $0x2a0] sm:$0xff] %v532
      %629 = vst [vmem:[#allocation2 + $0x2a8] sm:$0xff] %v533
      %630 = vst [vmem:[#allocation2 + $0x2b0] sm:$0xff] %v534
      %631 = vst [vmem:[#allocation2 + $0x2b8] sm:$0xff] %v535
      %632 = vst [vmem:[#allocation2 + $0x2c0] sm:$0x3] %v536
      %633 = vst [vmem:[#allocation2 + $0x2c8] sm:$0x3] %v537
      %634 = vst [vmem:[#allocation2 + $0x2d0] sm:$0xff] %v538
      %635 = vst [vmem:[#allocation2 + $0x2d8] sm:$0xff] %v539
      %636 = vst [vmem:[#allocation2 + $0x2e0] sm:$0xff] %v540
      %637 = vst [vmem:[#allocation2 + $0x2e8] sm:$0xff] %v541
      %638 = vst [vmem:[#allocation2 + $0x2f0] sm:$0x3] %v542
      %639 = vst [vmem:[#allocation2 + $0x2f8] sm:$0x3] %v543
      %v640 = vld [vmem:[%s412] sm:$0xff]
      %v641 = vld [vmem:[%s412 + $0x8] sm:$0xff]
      %v642 = vld [vmem:[%s412 + $0x10] sm:$0xff]
      %v643 = vld [vmem:[%s412 + $0x18] sm:$0xff]
      %v644 = vld [vmem:[%s412 + $0x20] sm:$0x3]
      %v645 = vld [vmem:[%s412 + $0x28] sm:$0x3]
      %s646 = scalar_lea.vmem [#allocation2], 768
      %647 = vst [vmem:[%s646] sm:$0xff] %v640
      %648 = vst [vmem:[%s646 + $0x8] sm:$0xff] %v641
      %649 = vst [vmem:[%s646 + $0x10] sm:$0xff] %v642
      %650 = vst [vmem:[%s646 + $0x18] sm:$0xff] %v643
      %651 = vst [vmem:[%s646 + $0x20] sm:$0x3] %v644
      %652 = vst [vmem:[%s646 + $0x28] sm:$0x3] %v645
      %v653 = vld [vmem:[%s426] sm:$0xff]
      %v654 = vld [vmem:[%s426 + $0x8] sm:$0xff]
      %v655 = vld [vmem:[%s426 + $0x10] sm:$0xff]
      %v656 = vld [vmem:[%s426 + $0x18] sm:$0xff]
      %v657 = vld [vmem:[%s426 + $0x20] sm:$0x3]
      %v658 = vld [vmem:[%s426 + $0x28] sm:$0x3]
      %s659 = scalar_lea.vmem [#allocation2], 816
      %660 = vst [vmem:[%s659] sm:$0xff] %v653
      %661 = vst [vmem:[%s659 + $0x8] sm:$0xff] %v654
      %662 = vst [vmem:[%s659 + $0x10] sm:$0xff] %v655
      %663 = vst [vmem:[%s659 + $0x18] sm:$0xff] %v656
      %664 = vst [vmem:[%s659 + $0x20] sm:$0x3] %v657
      %665 = vst [vmem:[%s659 + $0x28] sm:$0x3] %v658
      %v666 = vld [vmem:[#allocation2] sm:$0xff]
      %v667 = vld [vmem:[#allocation2 + $0x8] sm:$0xff]
      %v668 = vld [vmem:[#allocation2 + $0x10] sm:$0xff]
      %v669 = vld [vmem:[#allocation2 + $0x18] sm:$0xff]
      %v670 = vld [vmem:[#allocation2 + $0x30] sm:$0xff]
      %v671 = vld [vmem:[#allocation2 + $0x38] sm:$0xff]
      %v672 = vld [vmem:[#allocation2 + $0x40] sm:$0xff]
      %v673 = vld [vmem:[#allocation2 + $0x48] sm:$0xff]
      %v674 = vld [vmem:[#allocation2 + $0x60] sm:$0xff]
      %v675 = vld [vmem:[#allocation2 + $0x68] sm:$0xff]
      %v676 = vld [vmem:[#allocation2 + $0x70] sm:$0xff]
      %v677 = vld [vmem:[#allocation2 + $0x78] sm:$0xff]
      %v678 = vld [vmem:[#allocation2 + $0x90] sm:$0xff]
      %v679 = vld [vmem:[#allocation2 + $0x98] sm:$0xff]
      %v680 = vld [vmem:[#allocation2 + $0xa0] sm:$0xff]
      %v681 = vld [vmem:[#allocation2 + $0xa8] sm:$0xff]
      %v682 = vld [vmem:[#allocation2 + $0xc0] sm:$0xff]
      %v683 = vld [vmem:[#allocation2 + $0xc8] sm:$0xff]
      %v684 = vld [vmem:[#allocation2 + $0xd0] sm:$0xff]
      %v685 = vld [vmem:[#allocation2 + $0xd8] sm:$0xff]
      %v686 = vld [vmem:[#allocation2 + $0xf0] sm:$0xff]
      %v687 = vld [vmem:[#allocation2 + $0xf8] sm:$0xff]
      %v688 = vld [vmem:[#allocation2 + $0x100] sm:$0xff]
      %v689 = vld [vmem:[#allocation2 + $0x108] sm:$0xff]
      %v690 = vld [vmem:[#allocation2 + $0x120] sm:$0xff]
      %v691 = vld [vmem:[#allocation2 + $0x128] sm:$0xff]
      %v692 = vld [vmem:[#allocation2 + $0x130] sm:$0xff]
      %v693 = vld [vmem:[#allocation2 + $0x138] sm:$0xff]
      %v694 = vld [vmem:[#allocation2 + $0x150] sm:$0xff]
      %v695 = vld [vmem:[#allocation2 + $0x158] sm:$0xff]
      %v696 = vld [vmem:[#allocation2 + $0x160] sm:$0xff]
      %v697 = vld [vmem:[#allocation2 + $0x168] sm:$0xff]
      %v698 = vld [vmem:[#allocation2 + $0x180] sm:$0xff]
      %v699 = vld [vmem:[#allocation2 + $0x188] sm:$0xff]
      %v700 = vld [vmem:[#allocation2 + $0x190] sm:$0xff]
      %v701 = vld [vmem:[#allocation2 + $0x198] sm:$0xff]
      %v702 = vld [vmem:[#allocation2 + $0x1b0] sm:$0xff]
      %v703 = vld [vmem:[#allocation2 + $0x1b8] sm:$0xff]
      %v704 = vld [vmem:[#allocation2 + $0x1c0] sm:$0xff]
      %v705 = vld [vmem:[#allocation2 + $0x1c8] sm:$0xff]
      %v706 = vld [vmem:[#allocation2 + $0x1e0] sm:$0xff]
      %v707 = vld [vmem:[#allocation2 + $0x1e8] sm:$0xff]
      %v708 = vld [vmem:[#allocation2 + $0x1f0] sm:$0xff]
      %v709 = vld [vmem:[#allocation2 + $0x1f8] sm:$0xff]
      %v710 = vld [vmem:[#allocation2 + $0x210] sm:$0xff]
      %v711 = vld [vmem:[#allocation2 + $0x218] sm:$0xff]
      %v712 = vld [vmem:[#allocation2 + $0x220] sm:$0xff]
      %v713 = vld [vmem:[#allocation2 + $0x228] sm:$0xff]
      %v714 = vld [vmem:[#allocation2 + $0x240] sm:$0xff]
      %v715 = vld [vmem:[#allocation2 + $0x248] sm:$0xff]
      %v716 = vld [vmem:[#allocation2 + $0x250] sm:$0xff]
      %v717 = vld [vmem:[#allocation2 + $0x258] sm:$0xff]
      %v718 = vld [vmem:[#allocation2 + $0x270] sm:$0xff]
      %v719 = vld [vmem:[#allocation2 + $0x278] sm:$0xff]
      %v720 = vld [vmem:[#allocation2 + $0x280] sm:$0xff]
      %v721 = vld [vmem:[#allocation2 + $0x288] sm:$0xff]
      %v722 = vld [vmem:[#allocation2 + $0x2a0] sm:$0xff]
      %v723 = vld [vmem:[#allocation2 + $0x2a8] sm:$0xff]
      %v724 = vld [vmem:[#allocation2 + $0x2b0] sm:$0xff]
      %v725 = vld [vmem:[#allocation2 + $0x2b8] sm:$0xff]
      %v726 = vld [vmem:[#allocation2 + $0x2d0] sm:$0xff]
      %v727 = vld [vmem:[#allocation2 + $0x2d8] sm:$0xff]
      %v728 = vld [vmem:[#allocation2 + $0x2e0] sm:$0xff]
      %v729 = vld [vmem:[#allocation2 + $0x2e8] sm:$0xff]
      %v730 = vld [vmem:[%s3] sm:$0xff]
      %v731 = vld [vmem:[%s3 + $0x8] sm:$0xff]
      %v732 = vld [vmem:[%s3 + $0x10] sm:$0xff]
      %v733 = vld [vmem:[%s3 + $0x18] sm:$0xff]
      %v734 = vld [vmem:[%s3 + $0x20] sm:$0xff]
      %v735 = vld [vmem:[%s3 + $0x28] sm:$0xff]
      %v736 = vld [vmem:[%s3 + $0x30] sm:$0xff]
      %v737 = vld [vmem:[%s3 + $0x38] sm:$0xff]
      %v738 = vld [vmem:[%s3 + $0x40] sm:$0xff]
      %v739 = vld [vmem:[%s3 + $0x48] sm:$0xff]
      %v740 = vld [vmem:[%s3 + $0x50] sm:$0xff]
      %v741 = vld [vmem:[%s3 + $0x58] sm:$0xff]
      %v742 = vld [vmem:[%s3 + $0x60] sm:$0xff]
      %v743 = vld [vmem:[%s3 + $0x68] sm:$0xff]
      %v744 = vld [vmem:[%s3 + $0x70] sm:$0xff]
      %v745 = vld [vmem:[%s3 + $0x78] sm:$0xff]
      %v746 = vld [vmem:[%s3 + $0x80] sm:$0xff]
      %v747 = vld [vmem:[%s3 + $0x88] sm:$0xff]
      %v748 = vld [vmem:[%s3 + $0x90] sm:$0xff]
      %v749 = vld [vmem:[%s3 + $0x98] sm:$0xff]
      %v750 = vld [vmem:[%s3 + $0xa0] sm:$0xff]
      %v751 = vld [vmem:[%s3 + $0xa8] sm:$0xff]
      %v752 = vld [vmem:[%s3 + $0xb0] sm:$0xff]
      %v753 = vld [vmem:[%s3 + $0xb8] sm:$0xff]
      %v754 = vld [vmem:[%s3 + $0xc0] sm:$0xff]
      %v755 = vld [vmem:[%s3 + $0xc8] sm:$0xff]
      %v756 = vld [vmem:[%s3 + $0xd0] sm:$0xff]
      %v757 = vld [vmem:[%s3 + $0xd8] sm:$0xff]
      %v758 = vld [vmem:[%s3 + $0xe0] sm:$0xff]
      %v759 = vld [vmem:[%s3 + $0xe8] sm:$0xff]
      %v760 = vld [vmem:[%s3 + $0xf0] sm:$0xff]
      %v761 = vld [vmem:[%s3 + $0xf8] sm:$0xff]
      %v762 = vld [vmem:[#allocation2] sm:$0xfe]
      %v763 = vld [vmem:[#allocation2 + $0x8] sm:$0xfe]
      %v764 = vld [vmem:[#allocation2 + $0x20] sm:$0x1]
      %v765 = vld [vmem:[#allocation2 + $0x28] sm:$0x1]
      %v766 = vld [vmem:[#allocation2 + $0x30] sm:$0xfe]
      %v767 = vld [vmem:[#allocation2 + $0x38] sm:$0xfe]
      %v768 = vld [vmem:[#allocation2 + $0x50] sm:$0x1]
      %v769 = vld [vmem:[#allocation2 + $0x58] sm:$0x1]
      %v770 = vld [vmem:[#allocation2 + $0x60] sm:$0xfe]
      %v771 = vld [vmem:[#allocation2 + $0x68] sm:$0xfe]
      %v772 = vld [vmem:[#allocation2 + $0x80] sm:$0x1]
      %v773 = vld [vmem:[#allocation2 + $0x88] sm:$0x1]
      %v774 = vld [vmem:[#allocation2 + $0x90] sm:$0xfe]
      %v775 = vld [vmem:[#allocation2 + $0x98] sm:$0xfe]
      %v776 = vld [vmem:[#allocation2 + $0xb0] sm:$0x1]
      %v777 = vld [vmem:[#allocation2 + $0xb8] sm:$0x1]
      %v778 = vld [vmem:[#allocation2 + $0xc0] sm:$0xfe]
      %v779 = vld [vmem:[#allocation2 + $0xc8] sm:$0xfe]
      %v780 = vld [vmem:[#allocation2 + $0xe0] sm:$0x1]
      %v781 = vld [vmem:[#allocation2 + $0xe8] sm:$0x1]
      %v782 = vld [vmem:[#allocation2 + $0xf0] sm:$0xfe]
      %v783 = vld [vmem:[#allocation2 + $0xf8] sm:$0xfe]
      %v784 = vld [vmem:[#allocation2 + $0x110] sm:$0x1]
      %v785 = vld [vmem:[#allocation2 + $0x118] sm:$0x1]
      %v786 = vld [vmem:[#allocation2 + $0x120] sm:$0xfe]
      %v787 = vld [vmem:[#allocation2 + $0x128] sm:$0xfe]
      %v788 = vld [vmem:[#allocation2 + $0x140] sm:$0x1]
      %v789 = vld [vmem:[#allocation2 + $0x148] sm:$0x1]
      %v790 = vld [vmem:[#allocation2 + $0x150] sm:$0xfe]
      %v791 = vld [vmem:[#allocation2 + $0x158] sm:$0xfe]
      %v792 = vld [vmem:[#allocation2 + $0x170] sm:$0x1]
      %v793 = vld [vmem:[#allocation2 + $0x178] sm:$0x1]
      %v794 = vld [vmem:[#allocation2 + $0x180] sm:$0xfe]
      %v795 = vld [vmem:[#allocation2 + $0x188] sm:$0xfe]
      %v796 = vld [vmem:[#allocation2 + $0x1a0] sm:$0x1]
      %v797 = vld [vmem:[#allocation2 + $0x1a8] sm:$0x1]
      %v798 = vld [vmem:[#allocation2 + $0x1b0] sm:$0xfe]
      %v799 = vld [vmem:[#allocation2 + $0x1b8] sm:$0xfe]
      %v800 = vld [vmem:[#allocation2 + $0x1d0] sm:$0x1]
      %v801 = vld [vmem:[#allocation2 + $0x1d8] sm:$0x1]
      %v802 = vld [vmem:[#allocation2 + $0x1e0] sm:$0xfe]
      %v803 = vld [vmem:[#allocation2 + $0x1e8] sm:$0xfe]
      %v804 = vld [vmem:[#allocation2 + $0x200] sm:$0x1]
      %v805 = vld [vmem:[#allocation2 + $0x208] sm:$0x1]
      %v806 = vld [vmem:[#allocation2 + $0x210] sm:$0xfe]
      %v807 = vld [vmem:[#allocation2 + $0x218] sm:$0xfe]
      %v808 = vld [vmem:[#allocation2 + $0x230] sm:$0x1]
      %v809 = vld [vmem:[#allocation2 + $0x238] sm:$0x1]
      %v810 = vld [vmem:[#allocation2 + $0x240] sm:$0xfe]
      %v811 = vld [vmem:[#allocation2 + $0x248] sm:$0xfe]
      %v812 = vld [vmem:[#allocation2 + $0x260] sm:$0x1]
      %v813 = vld [vmem:[#allocation2 + $0x268] sm:$0x1]
      %v814 = vld [vmem:[#allocation2 + $0x270] sm:$0xfe]
      %v815 = vld [vmem:[#allocation2 + $0x278] sm:$0xfe]
      %v816 = vld [vmem:[#allocation2 + $0x290] sm:$0x1]
      %v817 = vld [vmem:[#allocation2 + $0x298] sm:$0x1]
      %v818 = vld [vmem:[#allocation2 + $0x2a0] sm:$0xfe]
      %v819 = vld [vmem:[#allocation2 + $0x2a8] sm:$0xfe]
      %v820 = vld [vmem:[#allocation2 + $0x2c0] sm:$0x1]
      %v821 = vld [vmem:[#allocation2 + $0x2c8] sm:$0x1]
      %v822 = vld [vmem:[#allocation2 + $0x2d0] sm:$0xfe]
      %v823 = vld [vmem:[#allocation2 + $0x2d8] sm:$0xfe]
      %v824 = vld [vmem:[#allocation2 + $0x2f0] sm:$0x1]
      %v825 = vld [vmem:[#allocation2 + $0x2f8] sm:$0x1]
      %vm922 = vcmask 1046528
      %v923 = vrot.slane %v762, 1
      %v924 = vrot.slane %v668, 1
      %v925 = vsel %vm922, %v923, %v924
      %v926 = vrot.slane %v763, 1
      %v927 = vrot.slane %v669, 1
      %v928 = vsel %vm922, %v926, %v927
      %v929 = vrot.slane %v764, 1
      %v930 = vsel %vm922, %v924, %v929
      %v931 = vrot.slane %v765, 1
      %v932 = vsel %vm922, %v927, %v931
      %v933 = vrot.slane %v766, 1
      %v934 = vrot.slane %v672, 1
      %v935 = vsel %vm922, %v933, %v934
      %v936 = vrot.slane %v767, 1
      %v937 = vrot.slane %v673, 1
      %v938 = vsel %vm922, %v936, %v937
      %v939 = vrot.slane %v768, 1
      %v940 = vsel %vm922, %v934, %v939
      %v941 = vrot.slane %v769, 1
      %v942 = vsel %vm922, %v937, %v941
      %v943 = vrot.slane %v770, 1
      %v944 = vrot.slane %v676, 1
      %v945 = vsel %vm922, %v943, %v944
      %v946 = vrot.slane %v771, 1
      %v947 = vrot.slane %v677, 1
      %v948 = vsel %vm922, %v946, %v947
      %v949 = vrot.slane %v772, 1
      %v950 = vsel %vm922, %v944, %v949
      %v951 = vrot.slane %v773, 1
      %v952 = vsel %vm922, %v947, %v951
      %v953 = vrot.slane %v774, 1
      %v954 = vrot.slane %v680, 1
      %v955 = vsel %vm922, %v953, %v954
      %v956 = vrot.slane %v775, 1
      %v957 = vrot.slane %v681, 1
      %v958 = vsel %vm922, %v956, %v957
      %v959 = vrot.slane %v776, 1
      %v960 = vsel %vm922, %v954, %v959
      %v961 = vrot.slane %v777, 1
      %v962 = vsel %vm922, %v957, %v961
      %v963 = vrot.slane %v778, 1
      %v964 = vrot.slane %v684, 1
      %v965 = vsel %vm922, %v963, %v964
      %v966 = vrot.slane %v779, 1
      %v967 = vrot.slane %v685, 1
      %v968 = vsel %vm922, %v966, %v967
      %v969 = vrot.slane %v780, 1
      %v970 = vsel %vm922, %v964, %v969
      %v971 = vrot.slane %v781, 1
      %v972 = vsel %vm922, %v967, %v971
      %v973 = vrot.slane %v782, 1
      %v974 = vrot.slane %v688, 1
      %v975 = vsel %vm922, %v973, %v974
      %v976 = vrot.slane %v783, 1
      %v977 = vrot.slane %v689, 1
      %v978 = vsel %vm922, %v976, %v977
      %v979 = vrot.slane %v784, 1
      %v980 = vsel %vm922, %v974, %v979
      %v981 = vrot.slane %v785, 1
      %v982 = vsel %vm922, %v977, %v981
      %v983 = vrot.slane %v786, 1
      %v984 = vrot.slane %v692, 1
      %v985 = vsel %vm922, %v983, %v984
      %v986 = vrot.slane %v787, 1
      %v987 = vrot.slane %v693, 1
      %v988 = vsel %vm922, %v986, %v987
      %v989 = vrot.slane %v788, 1
      %v990 = vsel %vm922, %v984, %v989
      %v991 = vrot.slane %v789, 1
      %v992 = vsel %vm922, %v987, %v991
      %v993 = vrot.slane %v790, 1
      %v994 = vrot.slane %v696, 1
      %v995 = vsel %vm922, %v993, %v994
      %v996 = vrot.slane %v791, 1
      %v997 = vrot.slane %v697, 1
      %v998 = vsel %vm922, %v996, %v997
      %v999 = vrot.slane %v792, 1
      %v1000 = vsel %vm922, %v994, %v999
      %v1001 = vrot.slane %v793, 1
      %v1002 = vsel %vm922, %v997, %v1001
      %v1003 = vrot.slane %v794, 1
      %v1004 = vrot.slane %v700, 1
      %v1005 = vsel %vm922, %v1003, %v1004
      %v1006 = vrot.slane %v795, 1
      %v1007 = vrot.slane %v701, 1
      %v1008 = vsel %vm922, %v1006, %v1007
      %v1009 = vrot.slane %v796, 1
      %v1010 = vsel %vm922, %v1004, %v1009
      %v1011 = vrot.slane %v797, 1
      %v1012 = vsel %vm922, %v1007, %v1011
      %v1013 = vrot.slane %v798, 1
      %v1014 = vrot.slane %v704, 1
      %v1015 = vsel %vm922, %v1013, %v1014
      %v1016 = vrot.slane %v799, 1
      %v1017 = vrot.slane %v705, 1
      %v1018 = vsel %vm922, %v1016, %v1017
      %v1019 = vrot.slane %v800, 1
      %v1020 = vsel %vm922, %v1014, %v1019
      %v1021 = vrot.slane %v801, 1
      %v1022 = vsel %vm922, %v1017, %v1021
      %v1023 = vrot.slane %v802, 1
      %v1024 = vrot.slane %v708, 1
      %v1025 = vsel %vm922, %v1023, %v1024
      %v1026 = vrot.slane %v803, 1
      %v1027 = vrot.slane %v709, 1
      %v1028 = vsel %vm922, %v1026, %v1027
      %v1029 = vrot.slane %v804, 1
      %v1030 = vsel %vm922, %v1024, %v1029
      %v1031 = vrot.slane %v805, 1
      %v1032 = vsel %vm922, %v1027, %v1031
      %v1033 = vrot.slane %v806, 1
      %v1034 = vrot.slane %v712, 1
      %v1035 = vsel %vm922, %v1033, %v1034
      %v1036 = vrot.slane %v807, 1
      %v1037 = vrot.slane %v713, 1
      %v1038 = vsel %vm922, %v1036, %v1037
      %v1039 = vrot.slane %v808, 1
      %v1040 = vsel %vm922, %v1034, %v1039
      %v1041 = vrot.slane %v809, 1
      %v1042 = vsel %vm922, %v1037, %v1041
      %v1043 = vrot.slane %v810, 1
      %v1044 = vrot.slane %v716, 1
      %v1045 = vsel %vm922, %v1043, %v1044
      %v1046 = vrot.slane %v811, 1
      %v1047 = vrot.slane %v717, 1
      %v1048 = vsel %vm922, %v1046, %v1047
      %v1049 = vrot.slane %v812, 1
      %v1050 = vsel %vm922, %v1044, %v1049
      %v1051 = vrot.slane %v813, 1
      %v1052 = vsel %vm922, %v1047, %v1051
      %v1053 = vrot.slane %v814, 1
      %v1054 = vrot.slane %v720, 1
      %v1055 = vsel %vm922, %v1053, %v1054
      %v1056 = vrot.slane %v815, 1
      %v1057 = vrot.slane %v721, 1
      %v1058 = vsel %vm922, %v1056, %v1057
      %v1059 = vrot.slane %v816, 1
      %v1060 = vsel %vm922, %v1054, %v1059
      %v1061 = vrot.slane %v817, 1
      %v1062 = vsel %vm922, %v1057, %v1061
      %v1063 = vrot.slane %v818, 1
      %v1064 = vrot.slane %v724, 1
      %v1065 = vsel %vm922, %v1063, %v1064
      %v1066 = vrot.slane %v819, 1
      %v1067 = vrot.slane %v725, 1
      %v1068 = vsel %vm922, %v1066, %v1067
      %v1069 = vrot.slane %v820, 1
      %v1070 = vsel %vm922, %v1064, %v1069
      %v1071 = vrot.slane %v821, 1
      %v1072 = vsel %vm922, %v1067, %v1071
      %v1073 = vrot.slane %v822, 1
      %v1074 = vrot.slane %v728, 1
      %v1075 = vsel %vm922, %v1073, %v1074
      %v1076 = vrot.slane %v823, 1
      %v1077 = vrot.slane %v729, 1
      %v1078 = vsel %vm922, %v1076, %v1077
      %v1079 = vrot.slane %v824, 1
      %v1080 = vsel %vm922, %v1074, %v1079
      %v1081 = vrot.slane %v825, 1
      %v1082 = vsel %vm922, %v1077, %v1081
      %s1147 = scalar_lea.vmem %s3, 256
      %v1148 = vld [vmem:[%s1147] sm:$0xff]
      %v1149 = vld [vmem:[%s1147 + $0x8] sm:$0xff]
      %v1150 = vld [vmem:[%s1147 + $0x10] sm:$0xff]
      %v1151 = vld [vmem:[%s1147 + $0x18] sm:$0xff]
      %v1152 = vld [vmem:[%s1147 + $0x20] sm:$0xff]
      %v1153 = vld [vmem:[%s1147 + $0x28] sm:$0xff]
      %v1154 = vld [vmem:[%s1147 + $0x30] sm:$0xff]
      %v1155 = vld [vmem:[%s1147 + $0x38] sm:$0xff]
      %v1156 = vld [vmem:[%s1147 + $0x40] sm:$0xff]
      %v1157 = vld [vmem:[%s1147 + $0x48] sm:$0xff]
      %v1158 = vld [vmem:[%s1147 + $0x50] sm:$0xff]
      %v1159 = vld [vmem:[%s1147 + $0x58] sm:$0xff]
      %v1160 = vld [vmem:[%s1147 + $0x60] sm:$0xff]
      %v1161 = vld [vmem:[%s1147 + $0x68] sm:$0xff]
      %v1162 = vld [vmem:[%s1147 + $0x70] sm:$0xff]
      %v1163 = vld [vmem:[%s1147 + $0x78] sm:$0xff]
      %v1164 = vld [vmem:[%s1147 + $0x80] sm:$0xff]
      %v1165 = vld [vmem:[%s1147 + $0x88] sm:$0xff]
      %v1166 = vld [vmem:[%s1147 + $0x90] sm:$0xff]
      %v1167 = vld [vmem:[%s1147 + $0x98] sm:$0xff]
      %v1168 = vld [vmem:[%s1147 + $0xa0] sm:$0xff]
      %v1169 = vld [vmem:[%s1147 + $0xa8] sm:$0xff]
      %v1170 = vld [vmem:[%s1147 + $0xb0] sm:$0xff]
      %v1171 = vld [vmem:[%s1147 + $0xb8] sm:$0xff]
      %v1172 = vld [vmem:[%s1147 + $0xc0] sm:$0xff]
      %v1173 = vld [vmem:[%s1147 + $0xc8] sm:$0xff]
      %v1174 = vld [vmem:[%s1147 + $0xd0] sm:$0xff]
      %v1175 = vld [vmem:[%s1147 + $0xd8] sm:$0xff]
      %v1176 = vld [vmem:[%s1147 + $0xe0] sm:$0xff]
      %v1177 = vld [vmem:[%s1147 + $0xe8] sm:$0xff]
      %v1178 = vld [vmem:[%s1147 + $0xf0] sm:$0xff]
      %v1179 = vld [vmem:[%s1147 + $0xf8] sm:$0xff]
      %1180 = vmatpush.msra.mxu0 %v1163
      %1181 = vmatpush.msra.mxu0 %v1162
      %1182 = vmatpush.msra.mxu0 %v1161
      %1183 = vmatpush.msra.mxu0 %v1160
      %1184 = vmatpush.msra.mxu0 %v1159
      %1185 = vmatpush.msra.mxu0 %v1158
      %1186 = vmatpush.msra.mxu0 %v1157
      %1187 = vmatpush.msra.mxu0 %v1156
      %1188 = vmatpush.msra.mxu0 %v1155
      %1189 = vmatpush.msra.mxu0 %v1154
      %1190 = vmatpush.msra.mxu0 %v1153
      %1191 = vmatpush.msra.mxu0 %v1152
      %1192 = vmatpush.msra.mxu0 %v1151
      %1193 = vmatpush.msra.mxu0 %v1150
      %1194 = vmatpush.msra.mxu0 %v1149
      %1195 = vmatpush.msra.mxu0 %v1148
      %1196 = vmatmul.f32.gmra.mxu0 %v925
      %v1197 = vpop.f32.mrf.mxu0
      %v1198 = vadd.f32 0.0, %v1197
      %1199 = vmatmul.f32.gmra.mxu0 %v930
      %v1200 = vpop.f32.mrf.mxu0
      %v1201 = vadd.f32 0.0, %v1200
      %1202 = vmatmul.f32.gmra.mxu0 %v935
      %v1203 = vpop.f32.mrf.mxu0
      %v1204 = vadd.f32 0.0, %v1203
      %1205 = vmatmul.f32.gmra.mxu0 %v940
      %v1206 = vpop.f32.mrf.mxu0
      %v1207 = vadd.f32 0.0, %v1206
      %1208 = vmatmul.f32.gmra.mxu0 %v945
      %v1209 = vpop.f32.mrf.mxu0
      %v1210 = vadd.f32 0.0, %v1209
      %1211 = vmatmul.f32.gmra.mxu0 %v950
      %v1212 = vpop.f32.mrf.mxu0
      %v1213 = vadd.f32 0.0, %v1212
      %1214 = vmatmul.f32.gmra.mxu0 %v955
      %v1215 = vpop.f32.mrf.mxu0
      %v1216 = vadd.f32 0.0, %v1215
      %1217 = vmatmul.f32.gmra.mxu0 %v960
      %v1218 = vpop.f32.mrf.mxu0
      %v1219 = vadd.f32 0.0, %v1218
      %1220 = vmatmul.f32.gmra.mxu0 %v965
      %v1221 = vpop.f32.mrf.mxu0
      %v1222 = vadd.f32 0.0, %v1221
      %1223 = vmatmul.f32.gmra.mxu0 %v970
      %v1224 = vpop.f32.mrf.mxu0
      %v1225 = vadd.f32 0.0, %v1224
      %1226 = vmatmul.f32.gmra.mxu0 %v975
      %v1227 = vpop.f32.mrf.mxu0
      %v1228 = vadd.f32 0.0, %v1227
      %1229 = vmatmul.f32.gmra.mxu0 %v980
      %v1230 = vpop.f32.mrf.mxu0
      %v1231 = vadd.f32 0.0, %v1230
      %1232 = vmatmul.f32.gmra.mxu0 %v985
      %v1233 = vpop.f32.mrf.mxu0
      %v1234 = vadd.f32 0.0, %v1233
      %1235 = vmatmul.f32.gmra.mxu0 %v990
      %v1236 = vpop.f32.mrf.mxu0
      %v1237 = vadd.f32 0.0, %v1236
      %1238 = vmatmul.f32.gmra.mxu0 %v995
      %v1239 = vpop.f32.mrf.mxu0
      %v1240 = vadd.f32 0.0, %v1239
      %1241 = vmatmul.f32.gmra.mxu0 %v1000
      %v1242 = vpop.f32.mrf.mxu0
      %v1243 = vadd.f32 0.0, %v1242
      %1244 = vmatmul.f32.gmra.mxu0 %v1005
      %v1245 = vpop.f32.mrf.mxu0
      %v1246 = vadd.f32 0.0, %v1245
      %1247 = vmatmul.f32.gmra.mxu0 %v1010
      %v1248 = vpop.f32.mrf.mxu0
      %v1249 = vadd.f32 0.0, %v1248
      %1250 = vmatmul.f32.gmra.mxu0 %v1015
      %v1251 = vpop.f32.mrf.mxu0
      %v1252 = vadd.f32 0.0, %v1251
      %1253 = vmatmul.f32.gmra.mxu0 %v1020
      %v1254 = vpop.f32.mrf.mxu0
      %v1255 = vadd.f32 0.0, %v1254
      %1256 = vmatmul.f32.gmra.mxu0 %v1025
      %v1257 = vpop.f32.mrf.mxu0
      %v1258 = vadd.f32 0.0, %v1257
      %1259 = vmatmul.f32.gmra.mxu0 %v1030
      %v1260 = vpop.f32.mrf.mxu0
      %v1261 = vadd.f32 0.0, %v1260
      %1262 = vmatmul.f32.gmra.mxu0 %v1035
      %v1263 = vpop.f32.mrf.mxu0
      %v1264 = vadd.f32 0.0, %v1263
      %1265 = vmatmul.f32.gmra.mxu0 %v1040
      %v1266 = vpop.f32.mrf.mxu0
      %v1267 = vadd.f32 0.0, %v1266
      %1268 = vmatmul.f32.gmra.mxu0 %v1045
      %v1269 = vpop.f32.mrf.mxu0
      %v1270 = vadd.f32 0.0, %v1269
      %1271 = vmatmul.f32.gmra.mxu0 %v1050
      %v1272 = vpop.f32.mrf.mxu0
      %v1273 = vadd.f32 0.0, %v1272
      %1274 = vmatmul.f32.gmra.mxu0 %v1055
      %v1275 = vpop.f32.mrf.mxu0
      %v1276 = vadd.f32 0.0, %v1275
      %1277 = vmatmul.f32.gmra.mxu0 %v1060
      %v1278 = vpop.f32.mrf.mxu0
      %v1279 = vadd.f32 0.0, %v1278
      %1280 = vmatmul.f32.gmra.mxu0 %v1065
      %v1281 = vpop.f32.mrf.mxu0
      %v1282 = vadd.f32 0.0, %v1281
      %1283 = vmatmul.f32.gmra.mxu0 %v1070
      %v1284 = vpop.f32.mrf.mxu0
      %v1285 = vadd.f32 0.0, %v1284
      %1286 = vmatmul.f32.gmra.mxu0 %v1075
      %v1287 = vpop.f32.mrf.mxu0
      %v1288 = vadd.f32 0.0, %v1287
      %1289 = vmatmul.f32.gmra.mxu0 %v1080
      %v1290 = vpop.f32.mrf.mxu0
      %v1291 = vadd.f32 0.0, %v1290
      %1292 = vdwg.mxu0
      %1293 = vmatpush.msra.mxu0 %v1179
      %1294 = vmatpush.msra.mxu0 %v1178
      %1295 = vmatpush.msra.mxu0 %v1177
      %1296 = vmatpush.msra.mxu0 %v1176
      %1297 = vmatpush.msra.mxu0 %v1175
      %1298 = vmatpush.msra.mxu0 %v1174
      %1299 = vmatpush.msra.mxu0 %v1173
      %1300 = vmatpush.msra.mxu0 %v1172
      %1301 = vmatpush.msra.mxu0 %v1171
      %1302 = vmatpush.msra.mxu0 %v1170
      %1303 = vmatpush.msra.mxu0 %v1169
      %1304 = vmatpush.msra.mxu0 %v1168
      %1305 = vmatpush.msra.mxu0 %v1167
      %1306 = vmatpush.msra.mxu0 %v1166
      %1307 = vmatpush.msra.mxu0 %v1165
      %1308 = vmatpush.msra.mxu0 %v1164
      %1309 = vmatmul.f32.gmra.mxu0 %v928
      %v1310 = vpop.f32.mrf.mxu0
      %v1311 = vadd.f32 %v1198, %v1310
      %1312 = vmatmul.f32.gmra.mxu0 %v932
      %v1313 = vpop.f32.mrf.mxu0
      %v1314 = vadd.f32 %v1201, %v1313
      %1315 = vmatmul.f32.gmra.mxu0 %v938
      %v1316 = vpop.f32.mrf.mxu0
      %v1317 = vadd.f32 %v1204, %v1316
      %1318 = vmatmul.f32.gmra.mxu0 %v942
      %v1319 = vpop.f32.mrf.mxu0
      %v1320 = vadd.f32 %v1207, %v1319
      %1321 = vmatmul.f32.gmra.mxu0 %v948
      %v1322 = vpop.f32.mrf.mxu0
      %v1323 = vadd.f32 %v1210, %v1322
      %1324 = vmatmul.f32.gmra.mxu0 %v952
      %v1325 = vpop.f32.mrf.mxu0
      %v1326 = vadd.f32 %v1213, %v1325
      %1327 = vmatmul.f32.gmra.mxu0 %v958
      %v1328 = vpop.f32.mrf.mxu0
      %v1329 = vadd.f32 %v1216, %v1328
      %1330 = vmatmul.f32.gmra.mxu0 %v962
      %v1331 = vpop.f32.mrf.mxu0
      %v1332 = vadd.f32 %v1219, %v1331
      %1333 = vmatmul.f32.gmra.mxu0 %v968
      %v1334 = vpop.f32.mrf.mxu0
      %v1335 = vadd.f32 %v1222, %v1334
      %1336 = vmatmul.f32.gmra.mxu0 %v972
      %v1337 = vpop.f32.mrf.mxu0
      %v1338 = vadd.f32 %v1225, %v1337
      %1339 = vmatmul.f32.gmra.mxu0 %v978
      %v1340 = vpop.f32.mrf.mxu0
      %v1341 = vadd.f32 %v1228, %v1340
      %1342 = vmatmul.f32.gmra.mxu0 %v982
      %v1343 = vpop.f32.mrf.mxu0
      %v1344 = vadd.f32 %v1231, %v1343
      %1345 = vmatmul.f32.gmra.mxu0 %v988
      %v1346 = vpop.f32.mrf.mxu0
      %v1347 = vadd.f32 %v1234, %v1346
      %1348 = vmatmul.f32.gmra.mxu0 %v992
      %v1349 = vpop.f32.mrf.mxu0
      %v1350 = vadd.f32 %v1237, %v1349
      %1351 = vmatmul.f32.gmra.mxu0 %v998
      %v1352 = vpop.f32.mrf.mxu0
      %v1353 = vadd.f32 %v1240, %v1352
      %1354 = vmatmul.f32.gmra.mxu0 %v1002
      %v1355 = vpop.f32.mrf.mxu0
      %v1356 = vadd.f32 %v1243, %v1355
      %1357 = vmatmul.f32.gmra.mxu0 %v1008
      %v1358 = vpop.f32.mrf.mxu0
      %v1359 = vadd.f32 %v1246, %v1358
      %1360 = vmatmul.f32.gmra.mxu0 %v1012
      %v1361 = vpop.f32.mrf.mxu0
      %v1362 = vadd.f32 %v1249, %v1361
      %1363 = vmatmul.f32.gmra.mxu0 %v1018
      %v1364 = vpop.f32.mrf.mxu0
      %v1365 = vadd.f32 %v1252, %v1364
      %1366 = vmatmul.f32.gmra.mxu0 %v1022
      %v1367 = vpop.f32.mrf.mxu0
      %v1368 = vadd.f32 %v1255, %v1367
      %1369 = vmatmul.f32.gmra.mxu0 %v1028
      %v1370 = vpop.f32.mrf.mxu0
      %v1371 = vadd.f32 %v1258, %v1370
      %1372 = vmatmul.f32.gmra.mxu0 %v1032
      %v1373 = vpop.f32.mrf.mxu0
      %v1374 = vadd.f32 %v1261, %v1373
      %1375 = vmatmul.f32.gmra.mxu0 %v1038
      %v1376 = vpop.f32.mrf.mxu0
      %v1377 = vadd.f32 %v1264, %v1376
      %1378 = vmatmul.f32.gmra.mxu0 %v1042
      %v1379 = vpop.f32.mrf.mxu0
      %v1380 = vadd.f32 %v1267, %v1379
      %1381 = vmatmul.f32.gmra.mxu0 %v1048
      %v1382 = vpop.f32.mrf.mxu0
      %v1383 = vadd.f32 %v1270, %v1382
      %1384 = vmatmul.f32.gmra.mxu0 %v1052
      %v1385 = vpop.f32.mrf.mxu0
      %v1386 = vadd.f32 %v1273, %v1385
      %1387 = vmatmul.f32.gmra.mxu0 %v1058
      %v1388 = vpop.f32.mrf.mxu0
      %v1389 = vadd.f32 %v1276, %v1388
      %1390 = vmatmul.f32.gmra.mxu0 %v1062
      %v1391 = vpop.f32.mrf.mxu0
      %v1392 = vadd.f32 %v1279, %v1391
      %1393 = vmatmul.f32.gmra.mxu0 %v1068
      %v1394 = vpop.f32.mrf.mxu0
      %v1395 = vadd.f32 %v1282, %v1394
      %1396 = vmatmul.f32.gmra.mxu0 %v1072
      %v1397 = vpop.f32.mrf.mxu0
      %v1398 = vadd.f32 %v1285, %v1397
      %1399 = vmatmul.f32.gmra.mxu0 %v1078
      %v1400 = vpop.f32.mrf.mxu0
      %v1401 = vadd.f32 %v1288, %v1400
      %1402 = vmatmul.f32.gmra.mxu0 %v1082
      %v1403 = vpop.f32.mrf.mxu0
      %v1404 = vadd.f32 %v1291, %v1403
      %1405 = vdwg.mxu0
      %1406 = vmatpush.msra.mxu0 %v745
      %1407 = vmatpush.msra.mxu0 %v744
      %1408 = vmatpush.msra.mxu0 %v743
      %1409 = vmatpush.msra.mxu0 %v742
      %1410 = vmatpush.msra.mxu0 %v741
      %1411 = vmatpush.msra.mxu0 %v740
      %1412 = vmatpush.msra.mxu0 %v739
      %1413 = vmatpush.msra.mxu0 %v738
      %1414 = vmatpush.msra.mxu0 %v737
      %1415 = vmatpush.msra.mxu0 %v736
      %1416 = vmatpush.msra.mxu0 %v735
      %1417 = vmatpush.msra.mxu0 %v734
      %1418 = vmatpush.msra.mxu0 %v733
      %1419 = vmatpush.msra.mxu0 %v732
      %1420 = vmatpush.msra.mxu0 %v731
      %1421 = vmatpush.msra.mxu0 %v730
      %1422 = vmatmul.f32.gmra.mxu0 %v666
      %v1423 = vpop.f32.mrf.mxu0
      %v1424 = vadd.f32 %v1311, %v1423
      %1425 = vmatmul.f32.gmra.mxu0 %v668
      %v1426 = vpop.f32.mrf.mxu0
      %v1427 = vadd.f32 %v1314, %v1426
      %1428 = vmatmul.f32.gmra.mxu0 %v670
      %v1429 = vpop.f32.mrf.mxu0
      %v1430 = vadd.f32 %v1317, %v1429
      %1431 = vmatmul.f32.gmra.mxu0 %v672
      %v1432 = vpop.f32.mrf.mxu0
      %v1433 = vadd.f32 %v1320, %v1432
      %1434 = vmatmul.f32.gmra.mxu0 %v674
      %v1435 = vpop.f32.mrf.mxu0
      %v1436 = vadd.f32 %v1323, %v1435
      %1437 = vmatmul.f32.gmra.mxu0 %v676
      %v1438 = vpop.f32.mrf.mxu0
      %v1439 = vadd.f32 %v1326, %v1438
      %1440 = vmatmul.f32.gmra.mxu0 %v678
      %v1441 = vpop.f32.mrf.mxu0
      %v1442 = vadd.f32 %v1329, %v1441
      %1443 = vmatmul.f32.gmra.mxu0 %v680
      %v1444 = vpop.f32.mrf.mxu0
      %v1445 = vadd.f32 %v1332, %v1444
      %1446 = vmatmul.f32.gmra.mxu0 %v682
      %v1447 = vpop.f32.mrf.mxu0
      %v1448 = vadd.f32 %v1335, %v1447
      %1449 = vmatmul.f32.gmra.mxu0 %v684
      %v1450 = vpop.f32.mrf.mxu0
      %v1451 = vadd.f32 %v1338, %v1450
      %1452 = vmatmul.f32.gmra.mxu0 %v686
      %v1453 = vpop.f32.mrf.mxu0
      %v1454 = vadd.f32 %v1341, %v1453
      %1455 = vmatmul.f32.gmra.mxu0 %v688
      %v1456 = vpop.f32.mrf.mxu0
      %v1457 = vadd.f32 %v1344, %v1456
      %1458 = vmatmul.f32.gmra.mxu0 %v690
      %v1459 = vpop.f32.mrf.mxu0
      %v1460 = vadd.f32 %v1347, %v1459
      %1461 = vmatmul.f32.gmra.mxu0 %v692
      %v1462 = vpop.f32.mrf.mxu0
      %v1463 = vadd.f32 %v1350, %v1462
      %1464 = vmatmul.f32.gmra.mxu0 %v694
      %v1465 = vpop.f32.mrf.mxu0
      %v1466 = vadd.f32 %v1353, %v1465
      %1467 = vmatmul.f32.gmra.mxu0 %v696
      %v1468 = vpop.f32.mrf.mxu0
      %v1469 = vadd.f32 %v1356, %v1468
      %1470 = vmatmul.f32.gmra.mxu0 %v698
      %v1471 = vpop.f32.mrf.mxu0
      %v1472 = vadd.f32 %v1359, %v1471
      %1473 = vmatmul.f32.gmra.mxu0 %v700
      %v1474 = vpop.f32.mrf.mxu0
      %v1475 = vadd.f32 %v1362, %v1474
      %1476 = vmatmul.f32.gmra.mxu0 %v702
      %v1477 = vpop.f32.mrf.mxu0
      %v1478 = vadd.f32 %v1365, %v1477
      %1479 = vmatmul.f32.gmra.mxu0 %v704
      %v1480 = vpop.f32.mrf.mxu0
      %v1481 = vadd.f32 %v1368, %v1480
      %1482 = vmatmul.f32.gmra.mxu0 %v706
      %v1483 = vpop.f32.mrf.mxu0
      %v1484 = vadd.f32 %v1371, %v1483
      %1485 = vmatmul.f32.gmra.mxu0 %v708
      %v1486 = vpop.f32.mrf.mxu0
      %v1487 = vadd.f32 %v1374, %v1486
      %1488 = vmatmul.f32.gmra.mxu0 %v710
      %v1489 = vpop.f32.mrf.mxu0
      %v1490 = vadd.f32 %v1377, %v1489
      %1491 = vmatmul.f32.gmra.mxu0 %v712
      %v1492 = vpop.f32.mrf.mxu0
      %v1493 = vadd.f32 %v1380, %v1492
      %1494 = vmatmul.f32.gmra.mxu0 %v714
      %v1495 = vpop.f32.mrf.mxu0
      %v1496 = vadd.f32 %v1383, %v1495
      %1497 = vmatmul.f32.gmra.mxu0 %v716
      %v1498 = vpop.f32.mrf.mxu0
      %v1499 = vadd.f32 %v1386, %v1498
      %1500 = vmatmul.f32.gmra.mxu0 %v718
      %v1501 = vpop.f32.mrf.mxu0
      %v1502 = vadd.f32 %v1389, %v1501
      %1503 = vmatmul.f32.gmra.mxu0 %v720
      %v1504 = vpop.f32.mrf.mxu0
      %v1505 = vadd.f32 %v1392, %v1504
      %1506 = vmatmul.f32.gmra.mxu0 %v722
      %v1507 = vpop.f32.mrf.mxu0
      %v1508 = vadd.f32 %v1395, %v1507
      %1509 = vmatmul.f32.gmra.mxu0 %v724
      %v1510 = vpop.f32.mrf.mxu0
      %v1511 = vadd.f32 %v1398, %v1510
      %1512 = vmatmul.f32.gmra.mxu0 %v726
      %v1513 = vpop.f32.mrf.mxu0
      %v1514 = vadd.f32 %v1401, %v1513
      %1515 = vmatmul.f32.gmra.mxu0 %v728
      %v1516 = vpop.f32.mrf.mxu0
      %v1517 = vadd.f32 %v1404, %v1516
      %1518 = vdwg.mxu0
      %1519 = vmatpush.msra.mxu0 %v761
      %1520 = vmatpush.msra.mxu0 %v760
      %1521 = vmatpush.msra.mxu0 %v759
      %1522 = vmatpush.msra.mxu0 %v758
      %1523 = vmatpush.msra.mxu0 %v757
      %1524 = vmatpush.msra.mxu0 %v756
      %1525 = vmatpush.msra.mxu0 %v755
      %1526 = vmatpush.msra.mxu0 %v754
      %1527 = vmatpush.msra.mxu0 %v753
      %1528 = vmatpush.msra.mxu0 %v752
      %1529 = vmatpush.msra.mxu0 %v751
      %1530 = vmatpush.msra.mxu0 %v750
      %1531 = vmatpush.msra.mxu0 %v749
      %1532 = vmatpush.msra.mxu0 %v748
      %1533 = vmatpush.msra.mxu0 %v747
      %1534 = vmatpush.msra.mxu0 %v746
      %1535 = vmatmul.f32.gmra.mxu0 %v667
      %v1536 = vpop.f32.mrf.mxu0
      %v1537 = vadd.f32 %v1424, %v1536
      %1538 = vmatmul.f32.gmra.mxu0 %v669
      %v1539 = vpop.f32.mrf.mxu0
      %v1540 = vadd.f32 %v1427, %v1539
      %1541 = vmatmul.f32.gmra.mxu0 %v671
      %v1542 = vpop.f32.mrf.mxu0
      %v1543 = vadd.f32 %v1430, %v1542
      %1544 = vmatmul.f32.gmra.mxu0 %v673
      %v1545 = vpop.f32.mrf.mxu0
      %v1546 = vadd.f32 %v1433, %v1545
      %1547 = vmatmul.f32.gmra.mxu0 %v675
      %v1548 = vpop.f32.mrf.mxu0
      %v1549 = vadd.f32 %v1436, %v1548
      %1550 = vmatmul.f32.gmra.mxu0 %v677
      %v1551 = vpop.f32.mrf.mxu0
      %v1552 = vadd.f32 %v1439, %v1551
      %1553 = vmatmul.f32.gmra.mxu0 %v679
      %v1554 = vpop.f32.mrf.mxu0
      %v1555 = vadd.f32 %v1442, %v1554
      %1556 = vmatmul.f32.gmra.mxu0 %v681
      %v1557 = vpop.f32.mrf.mxu0
      %v1558 = vadd.f32 %v1445, %v1557
      %1559 = vmatmul.f32.gmra.mxu0 %v683
      %v1560 = vpop.f32.mrf.mxu0
      %v1561 = vadd.f32 %v1448, %v1560
      %1562 = vmatmul.f32.gmra.mxu0 %v685
      %v1563 = vpop.f32.mrf.mxu0
      %v1564 = vadd.f32 %v1451, %v1563
      %1565 = vmatmul.f32.gmra.mxu0 %v687
      %v1566 = vpop.f32.mrf.mxu0
      %v1567 = vadd.f32 %v1454, %v1566
      %1568 = vmatmul.f32.gmra.mxu0 %v689
      %v1569 = vpop.f32.mrf.mxu0
      %v1570 = vadd.f32 %v1457, %v1569
      %1571 = vmatmul.f32.gmra.mxu0 %v691
      %v1572 = vpop.f32.mrf.mxu0
      %v1573 = vadd.f32 %v1460, %v1572
      %1574 = vmatmul.f32.gmra.mxu0 %v693
      %v1575 = vpop.f32.mrf.mxu0
      %v1576 = vadd.f32 %v1463, %v1575
      %1577 = vmatmul.f32.gmra.mxu0 %v695
      %v1578 = vpop.f32.mrf.mxu0
      %v1579 = vadd.f32 %v1466, %v1578
      %1580 = vmatmul.f32.gmra.mxu0 %v697
      %v1581 = vpop.f32.mrf.mxu0
      %v1582 = vadd.f32 %v1469, %v1581
      %1583 = vmatmul.f32.gmra.mxu0 %v699
      %v1584 = vpop.f32.mrf.mxu0
      %v1585 = vadd.f32 %v1472, %v1584
      %1586 = vmatmul.f32.gmra.mxu0 %v701
      %v1587 = vpop.f32.mrf.mxu0
      %v1588 = vadd.f32 %v1475, %v1587
      %1589 = vmatmul.f32.gmra.mxu0 %v703
      %v1590 = vpop.f32.mrf.mxu0
      %v1591 = vadd.f32 %v1478, %v1590
      %1592 = vmatmul.f32.gmra.mxu0 %v705
      %v1593 = vpop.f32.mrf.mxu0
      %v1594 = vadd.f32 %v1481, %v1593
      %1595 = vmatmul.f32.gmra.mxu0 %v707
      %v1596 = vpop.f32.mrf.mxu0
      %v1597 = vadd.f32 %v1484, %v1596
      %1598 = vmatmul.f32.gmra.mxu0 %v709
      %v1599 = vpop.f32.mrf.mxu0
      %v1600 = vadd.f32 %v1487, %v1599
      %1601 = vmatmul.f32.gmra.mxu0 %v711
      %v1602 = vpop.f32.mrf.mxu0
      %v1603 = vadd.f32 %v1490, %v1602
      %1604 = vmatmul.f32.gmra.mxu0 %v713
      %v1605 = vpop.f32.mrf.mxu0
      %v1606 = vadd.f32 %v1493, %v1605
      %1607 = vmatmul.f32.gmra.mxu0 %v715
      %v1608 = vpop.f32.mrf.mxu0
      %v1609 = vadd.f32 %v1496, %v1608
      %1610 = vmatmul.f32.gmra.mxu0 %v717
      %v1611 = vpop.f32.mrf.mxu0
      %v1612 = vadd.f32 %v1499, %v1611
      %1613 = vmatmul.f32.gmra.mxu0 %v719
      %v1614 = vpop.f32.mrf.mxu0
      %v1615 = vadd.f32 %v1502, %v1614
      %1616 = vmatmul.f32.gmra.mxu0 %v721
      %v1617 = vpop.f32.mrf.mxu0
      %v1618 = vadd.f32 %v1505, %v1617
      %1619 = vmatmul.f32.gmra.mxu0 %v723
      %v1620 = vpop.f32.mrf.mxu0
      %v1621 = vadd.f32 %v1508, %v1620
      %1622 = vmatmul.f32.gmra.mxu0 %v725
      %v1623 = vpop.f32.mrf.mxu0
      %v1624 = vadd.f32 %v1511, %v1623
      %1625 = vmatmul.f32.gmra.mxu0 %v727
      %v1626 = vpop.f32.mrf.mxu0
      %v1627 = vadd.f32 %v1514, %v1626
      %1628 = vmatmul.f32.gmra.mxu0 %v729
      %v1629 = vpop.f32.mrf.mxu0
      %v1630 = vadd.f32 %v1517, %v1629
      %1631 = vdwg.mxu0
      %v1632 = vld [vmem:[#allocation2] sm:$0xfc]
      %v1633 = vld [vmem:[#allocation2 + $0x8] sm:$0xfc]
      %v1634 = vld [vmem:[#allocation2 + $0x20] sm:$0x3]
      %v1635 = vld [vmem:[#allocation2 + $0x28] sm:$0x3]
      %v1636 = vld [vmem:[#allocation2 + $0x30] sm:$0xfc]
      %v1637 = vld [vmem:[#allocation2 + $0x38] sm:$0xfc]
      %v1638 = vld [vmem:[#allocation2 + $0x50] sm:$0x3]
      %v1639 = vld [vmem:[#allocation2 + $0x58] sm:$0x3]
      %v1640 = vld [vmem:[#allocation2 + $0x60] sm:$0xfc]
      %v1641 = vld [vmem:[#allocation2 + $0x68] sm:$0xfc]
      %v1642 = vld [vmem:[#allocation2 + $0x80] sm:$0x3]
      %v1643 = vld [vmem:[#allocation2 + $0x88] sm:$0x3]
      %v1644 = vld [vmem:[#allocation2 + $0x90] sm:$0xfc]
      %v1645 = vld [vmem:[#allocation2 + $0x98] sm:$0xfc]
      %v1646 = vld [vmem:[#allocation2 + $0xb0] sm:$0x3]
      %v1647 = vld [vmem:[#allocation2 + $0xb8] sm:$0x3]
      %v1648 = vld [vmem:[#allocation2 + $0xc0] sm:$0xfc]
      %v1649 = vld [vmem:[#allocation2 + $0xc8] sm:$0xfc]
      %v1650 = vld [vmem:[#allocation2 + $0xe0] sm:$0x3]
      %v1651 = vld [vmem:[#allocation2 + $0xe8] sm:$0x3]
      %v1652 = vld [vmem:[#allocation2 + $0xf0] sm:$0xfc]
      %v1653 = vld [vmem:[#allocation2 + $0xf8] sm:$0xfc]
      %v1654 = vld [vmem:[#allocation2 + $0x110] sm:$0x3]
      %v1655 = vld [vmem:[#allocation2 + $0x118] sm:$0x3]
      %v1656 = vld [vmem:[#allocation2 + $0x120] sm:$0xfc]
      %v1657 = vld [vmem:[#allocation2 + $0x128] sm:$0xfc]
      %v1658 = vld [vmem:[#allocation2 + $0x140] sm:$0x3]
      %v1659 = vld [vmem:[#allocation2 + $0x148] sm:$0x3]
      %v1660 = vld [vmem:[#allocation2 + $0x150] sm:$0xfc]
      %v1661 = vld [vmem:[#allocation2 + $0x158] sm:$0xfc]
      %v1662 = vld [vmem:[#allocation2 + $0x170] sm:$0x3]
      %v1663 = vld [vmem:[#allocation2 + $0x178] sm:$0x3]
      %v1664 = vld [vmem:[#allocation2 + $0x180] sm:$0xfc]
      %v1665 = vld [vmem:[#allocation2 + $0x188] sm:$0xfc]
      %v1666 = vld [vmem:[#allocation2 + $0x1a0] sm:$0x3]
      %v1667 = vld [vmem:[#allocation2 + $0x1a8] sm:$0x3]
      %v1668 = vld [vmem:[#allocation2 + $0x1b0] sm:$0xfc]
      %v1669 = vld [vmem:[#allocation2 + $0x1b8] sm:$0xfc]
      %v1670 = vld [vmem:[#allocation2 + $0x1d0] sm:$0x3]
      %v1671 = vld [vmem:[#allocation2 + $0x1d8] sm:$0x3]
      %v1672 = vld [vmem:[#allocation2 + $0x1e0] sm:$0xfc]
      %v1673 = vld [vmem:[#allocation2 + $0x1e8] sm:$0xfc]
      %v1674 = vld [vmem:[#allocation2 + $0x200] sm:$0x3]
      %v1675 = vld [vmem:[#allocation2 + $0x208] sm:$0x3]
      %v1676 = vld [vmem:[#allocation2 + $0x210] sm:$0xfc]
      %v1677 = vld [vmem:[#allocation2 + $0x218] sm:$0xfc]
      %v1678 = vld [vmem:[#allocation2 + $0x230] sm:$0x3]
      %v1679 = vld [vmem:[#allocation2 + $0x238] sm:$0x3]
      %v1680 = vld [vmem:[#allocation2 + $0x240] sm:$0xfc]
      %v1681 = vld [vmem:[#allocation2 + $0x248] sm:$0xfc]
      %v1682 = vld [vmem:[#allocation2 + $0x260] sm:$0x3]
      %v1683 = vld [vmem:[#allocation2 + $0x268] sm:$0x3]
      %v1684 = vld [vmem:[#allocation2 + $0x270] sm:$0xfc]
      %v1685 = vld [vmem:[#allocation2 + $0x278] sm:$0xfc]
      %v1686 = vld [vmem:[#allocation2 + $0x290] sm:$0x3]
      %v1687 = vld [vmem:[#allocation2 + $0x298] sm:$0x3]
      %v1688 = vld [vmem:[#allocation2 + $0x2a0] sm:$0xfc]
      %v1689 = vld [vmem:[#allocation2 + $0x2a8] sm:$0xfc]
      %v1690 = vld [vmem:[#allocation2 + $0x2c0] sm:$0x3]
      %v1691 = vld [vmem:[#allocation2 + $0x2c8] sm:$0x3]
      %v1692 = vld [vmem:[#allocation2 + $0x2d0] sm:$0xfc]
      %v1693 = vld [vmem:[#allocation2 + $0x2d8] sm:$0xfc]
      %v1694 = vld [vmem:[#allocation2 + $0x2f0] sm:$0x3]
      %v1695 = vld [vmem:[#allocation2 + $0x2f8] sm:$0x3]
      %vm1760 = vcmask 1045504
      %v1761 = vrot.slane %v1632, 2
      %v1762 = vrot.slane %v668, 2
      %v1763 = vsel %vm1760, %v1761, %v1762
      %v1764 = vrot.slane %v1633, 2
      %v1765 = vrot.slane %v669, 2
      %v1766 = vsel %vm1760, %v1764, %v1765
      %v1767 = vrot.slane %v1634, 2
      %v1768 = vsel %vm1760, %v1762, %v1767
      %v1769 = vrot.slane %v1635, 2
      %v1770 = vsel %vm1760, %v1765, %v1769
      %v1771 = vrot.slane %v1636, 2
      %v1772 = vrot.slane %v672, 2
      %v1773 = vsel %vm1760, %v1771, %v1772
      %v1774 = vrot.slane %v1637, 2
      %v1775 = vrot.slane %v673, 2
      %v1776 = vsel %vm1760, %v1774, %v1775
      %v1777 = vrot.slane %v1638, 2
      %v1778 = vsel %vm1760, %v1772, %v1777
      %v1779 = vrot.slane %v1639, 2
      %v1780 = vsel %vm1760, %v1775, %v1779
      %v1781 = vrot.slane %v1640, 2
      %v1782 = vrot.slane %v676, 2
      %v1783 = vsel %vm1760, %v1781, %v1782
      %v1784 = vrot.slane %v1641, 2
      %v1785 = vrot.slane %v677, 2
      %v1786 = vsel %vm1760, %v1784, %v1785
      %v1787 = vrot.slane %v1642, 2
      %v1788 = vsel %vm1760, %v1782, %v1787
      %v1789 = vrot.slane %v1643, 2
      %v1790 = vsel %vm1760, %v1785, %v1789
      %v1791 = vrot.slane %v1644, 2
      %v1792 = vrot.slane %v680, 2
      %v1793 = vsel %vm1760, %v1791, %v1792
      %v1794 = vrot.slane %v1645, 2
      %v1795 = vrot.slane %v681, 2
      %v1796 = vsel %vm1760, %v1794, %v1795
      %v1797 = vrot.slane %v1646, 2
      %v1798 = vsel %vm1760, %v1792, %v1797
      %v1799 = vrot.slane %v1647, 2
      %v1800 = vsel %vm1760, %v1795, %v1799
      %v1801 = vrot.slane %v1648, 2
      %v1802 = vrot.slane %v684, 2
      %v1803 = vsel %vm1760, %v1801, %v1802
      %v1804 = vrot.slane %v1649, 2
      %v1805 = vrot.slane %v685, 2
      %v1806 = vsel %vm1760, %v1804, %v1805
      %v1807 = vrot.slane %v1650, 2
      %v1808 = vsel %vm1760, %v1802, %v1807
      %v1809 = vrot.slane %v1651, 2
      %v1810 = vsel %vm1760, %v1805, %v1809
      %v1811 = vrot.slane %v1652, 2
      %v1812 = vrot.slane %v688, 2
      %v1813 = vsel %vm1760, %v1811, %v1812
      %v1814 = vrot.slane %v1653, 2
      %v1815 = vrot.slane %v689, 2
      %v1816 = vsel %vm1760, %v1814, %v1815
      %v1817 = vrot.slane %v1654, 2
      %v1818 = vsel %vm1760, %v1812, %v1817
      %v1819 = vrot.slane %v1655, 2
      %v1820 = vsel %vm1760, %v1815, %v1819
      %v1821 = vrot.slane %v1656, 2
      %v1822 = vrot.slane %v692, 2
      %v1823 = vsel %vm1760, %v1821, %v1822
      %v1824 = vrot.slane %v1657, 2
      %v1825 = vrot.slane %v693, 2
      %v1826 = vsel %vm1760, %v1824, %v1825
      %v1827 = vrot.slane %v1658, 2
      %v1828 = vsel %vm1760, %v1822, %v1827
      %v1829 = vrot.slane %v1659, 2
      %v1830 = vsel %vm1760, %v1825, %v1829
      %v1831 = vrot.slane %v1660, 2
      %v1832 = vrot.slane %v696, 2
      %v1833 = vsel %vm1760, %v1831, %v1832
      %v1834 = vrot.slane %v1661, 2
      %v1835 = vrot.slane %v697, 2
      %v1836 = vsel %vm1760, %v1834, %v1835
      %v1837 = vrot.slane %v1662, 2
      %v1838 = vsel %vm1760, %v1832, %v1837
      %v1839 = vrot.slane %v1663, 2
      %v1840 = vsel %vm1760, %v1835, %v1839
      %v1841 = vrot.slane %v1664, 2
      %v1842 = vrot.slane %v700, 2
      %v1843 = vsel %vm1760, %v1841, %v1842
      %v1844 = vrot.slane %v1665, 2
      %v1845 = vrot.slane %v701, 2
      %v1846 = vsel %vm1760, %v1844, %v1845
      %v1847 = vrot.slane %v1666, 2
      %v1848 = vsel %vm1760, %v1842, %v1847
      %v1849 = vrot.slane %v1667, 2
      %v1850 = vsel %vm1760, %v1845, %v1849
      %v1851 = vrot.slane %v1668, 2
      %v1852 = vrot.slane %v704, 2
      %v1853 = vsel %vm1760, %v1851, %v1852
      %v1854 = vrot.slane %v1669, 2
      %v1855 = vrot.slane %v705, 2
      %v1856 = vsel %vm1760, %v1854, %v1855
      %v1857 = vrot.slane %v1670, 2
      %v1858 = vsel %vm1760, %v1852, %v1857
      %v1859 = vrot.slane %v1671, 2
      %v1860 = vsel %vm1760, %v1855, %v1859
      %v1861 = vrot.slane %v1672, 2
      %v1862 = vrot.slane %v708, 2
      %v1863 = vsel %vm1760, %v1861, %v1862
      %v1864 = vrot.slane %v1673, 2
      %v1865 = vrot.slane %v709, 2
      %v1866 = vsel %vm1760, %v1864, %v1865
      %v1867 = vrot.slane %v1674, 2
      %v1868 = vsel %vm1760, %v1862, %v1867
      %v1869 = vrot.slane %v1675, 2
      %v1870 = vsel %vm1760, %v1865, %v1869
      %v1871 = vrot.slane %v1676, 2
      %v1872 = vrot.slane %v712, 2
      %v1873 = vsel %vm1760, %v1871, %v1872
      %v1874 = vrot.slane %v1677, 2
      %v1875 = vrot.slane %v713, 2
      %v1876 = vsel %vm1760, %v1874, %v1875
      %v1877 = vrot.slane %v1678, 2
      %v1878 = vsel %vm1760, %v1872, %v1877
      %v1879 = vrot.slane %v1679, 2
      %v1880 = vsel %vm1760, %v1875, %v1879
      %v1881 = vrot.slane %v1680, 2
      %v1882 = vrot.slane %v716, 2
      %v1883 = vsel %vm1760, %v1881, %v1882
      %v1884 = vrot.slane %v1681, 2
      %v1885 = vrot.slane %v717, 2
      %v1886 = vsel %vm1760, %v1884, %v1885
      %v1887 = vrot.slane %v1682, 2
      %v1888 = vsel %vm1760, %v1882, %v1887
      %v1889 = vrot.slane %v1683, 2
      %v1890 = vsel %vm1760, %v1885, %v1889
      %v1891 = vrot.slane %v1684, 2
      %v1892 = vrot.slane %v720, 2
      %v1893 = vsel %vm1760, %v1891, %v1892
      %v1894 = vrot.slane %v1685, 2
      %v1895 = vrot.slane %v721, 2
      %v1896 = vsel %vm1760, %v1894, %v1895
      %v1897 = vrot.slane %v1686, 2
      %v1898 = vsel %vm1760, %v1892, %v1897
      %v1899 = vrot.slane %v1687, 2
      %v1900 = vsel %vm1760, %v1895, %v1899
      %v1901 = vrot.slane %v1688, 2
      %v1902 = vrot.slane %v724, 2
      %v1903 = vsel %vm1760, %v1901, %v1902
      %v1904 = vrot.slane %v1689, 2
      %v1905 = vrot.slane %v725, 2
      %v1906 = vsel %vm1760, %v1904, %v1905
      %v1907 = vrot.slane %v1690, 2
      %v1908 = vsel %vm1760, %v1902, %v1907
      %v1909 = vrot.slane %v1691, 2
      %v1910 = vsel %vm1760, %v1905, %v1909
      %v1911 = vrot.slane %v1692, 2
      %v1912 = vrot.slane %v728, 2
      %v1913 = vsel %vm1760, %v1911, %v1912
      %v1914 = vrot.slane %v1693, 2
      %v1915 = vrot.slane %v729, 2
      %v1916 = vsel %vm1760, %v1914, %v1915
      %v1917 = vrot.slane %v1694, 2
      %v1918 = vsel %vm1760, %v1912, %v1917
      %v1919 = vrot.slane %v1695, 2
      %v1920 = vsel %vm1760, %v1915, %v1919
      %s1985 = scalar_lea.vmem %s3, 512
      %v1986 = vld [vmem:[%s1985] sm:$0xff]
      %v1987 = vld [vmem:[%s1985 + $0x8] sm:$0xff]
      %v1988 = vld [vmem:[%s1985 + $0x10] sm:$0xff]
      %v1989 = vld [vmem:[%s1985 + $0x18] sm:$0xff]
      %v1990 = vld [vmem:[%s1985 + $0x20] sm:$0xff]
      %v1991 = vld [vmem:[%s1985 + $0x28] sm:$0xff]
      %v1992 = vld [vmem:[%s1985 + $0x30] sm:$0xff]
      %v1993 = vld [vmem:[%s1985 + $0x38] sm:$0xff]
      %v1994 = vld [vmem:[%s1985 + $0x40] sm:$0xff]
      %v1995 = vld [vmem:[%s1985 + $0x48] sm:$0xff]
      %v1996 = vld [vmem:[%s1985 + $0x50] sm:$0xff]
      %v1997 = vld [vmem:[%s1985 + $0x58] sm:$0xff]
      %v1998 = vld [vmem:[%s1985 + $0x60] sm:$0xff]
      %v1999 = vld [vmem:[%s1985 + $0x68] sm:$0xff]
      %v2000 = vld [vmem:[%s1985 + $0x70] sm:$0xff]
      %v2001 = vld [vmem:[%s1985 + $0x78] sm:$0xff]
      %v2002 = vld [vmem:[%s1985 + $0x80] sm:$0xff]
      %v2003 = vld [vmem:[%s1985 + $0x88] sm:$0xff]
      %v2004 = vld [vmem:[%s1985 + $0x90] sm:$0xff]
      %v2005 = vld [vmem:[%s1985 + $0x98] sm:$0xff]
      %v2006 = vld [vmem:[%s1985 + $0xa0] sm:$0xff]
      %v2007 = vld [vmem:[%s1985 + $0xa8] sm:$0xff]
      %v2008 = vld [vmem:[%s1985 + $0xb0] sm:$0xff]
      %v2009 = vld [vmem:[%s1985 + $0xb8] sm:$0xff]
      %v2010 = vld [vmem:[%s1985 + $0xc0] sm:$0xff]
      %v2011 = vld [vmem:[%s1985 + $0xc8] sm:$0xff]
      %v2012 = vld [vmem:[%s1985 + $0xd0] sm:$0xff]
      %v2013 = vld [vmem:[%s1985 + $0xd8] sm:$0xff]
      %v2014 = vld [vmem:[%s1985 + $0xe0] sm:$0xff]
      %v2015 = vld [vmem:[%s1985 + $0xe8] sm:$0xff]
      %v2016 = vld [vmem:[%s1985 + $0xf0] sm:$0xff]
      %v2017 = vld [vmem:[%s1985 + $0xf8] sm:$0xff]
      %2018 = vmatpush.msra.mxu0 %v2001
      %2019 = vmatpush.msra.mxu0 %v2000
      %2020 = vmatpush.msra.mxu0 %v1999
      %2021 = vmatpush.msra.mxu0 %v1998
      %2022 = vmatpush.msra.mxu0 %v1997
      %2023 = vmatpush.msra.mxu0 %v1996
      %2024 = vmatpush.msra.mxu0 %v1995
      %2025 = vmatpush.msra.mxu0 %v1994
      %2026 = vmatpush.msra.mxu0 %v1993
      %2027 = vmatpush.msra.mxu0 %v1992
      %2028 = vmatpush.msra.mxu0 %v1991
      %2029 = vmatpush.msra.mxu0 %v1990
      %2030 = vmatpush.msra.mxu0 %v1989
      %2031 = vmatpush.msra.mxu0 %v1988
      %2032 = vmatpush.msra.mxu0 %v1987
      %2033 = vmatpush.msra.mxu0 %v1986
      %2034 = vmatmul.f32.gmra.mxu0 %v1763
      %v2035 = vpop.f32.mrf.mxu0
      %v2036 = vadd.f32 0.0, %v2035
      %2037 = vmatmul.f32.gmra.mxu0 %v1768
      %v2038 = vpop.f32.mrf.mxu0
      %v2039 = vadd.f32 0.0, %v2038
      %2040 = vmatmul.f32.gmra.mxu0 %v1773
      %v2041 = vpop.f32.mrf.mxu0
      %v2042 = vadd.f32 0.0, %v2041
      %2043 = vmatmul.f32.gmra.mxu0 %v1778
      %v2044 = vpop.f32.mrf.mxu0
      %v2045 = vadd.f32 0.0, %v2044
      %2046 = vmatmul.f32.gmra.mxu0 %v1783
      %v2047 = vpop.f32.mrf.mxu0
      %v2048 = vadd.f32 0.0, %v2047
      %2049 = vmatmul.f32.gmra.mxu0 %v1788
      %v2050 = vpop.f32.mrf.mxu0
      %v2051 = vadd.f32 0.0, %v2050
      %2052 = vmatmul.f32.gmra.mxu0 %v1793
      %v2053 = vpop.f32.mrf.mxu0
      %v2054 = vadd.f32 0.0, %v2053
      %2055 = vmatmul.f32.gmra.mxu0 %v1798
      %v2056 = vpop.f32.mrf.mxu0
      %v2057 = vadd.f32 0.0, %v2056
      %2058 = vmatmul.f32.gmra.mxu0 %v1803
      %v2059 = vpop.f32.mrf.mxu0
      %v2060 = vadd.f32 0.0, %v2059
      %2061 = vmatmul.f32.gmra.mxu0 %v1808
      %v2062 = vpop.f32.mrf.mxu0
      %v2063 = vadd.f32 0.0, %v2062
      %2064 = vmatmul.f32.gmra.mxu0 %v1813
      %v2065 = vpop.f32.mrf.mxu0
      %v2066 = vadd.f32 0.0, %v2065
      %2067 = vmatmul.f32.gmra.mxu0 %v1818
      %v2068 = vpop.f32.mrf.mxu0
      %v2069 = vadd.f32 0.0, %v2068
      %2070 = vmatmul.f32.gmra.mxu0 %v1823
      %v2071 = vpop.f32.mrf.mxu0
      %v2072 = vadd.f32 0.0, %v2071
      %2073 = vmatmul.f32.gmra.mxu0 %v1828
      %v2074 = vpop.f32.mrf.mxu0
      %v2075 = vadd.f32 0.0, %v2074
      %2076 = vmatmul.f32.gmra.mxu0 %v1833
      %v2077 = vpop.f32.mrf.mxu0
      %v2078 = vadd.f32 0.0, %v2077
      %2079 = vmatmul.f32.gmra.mxu0 %v1838
      %v2080 = vpop.f32.mrf.mxu0
      %v2081 = vadd.f32 0.0, %v2080
      %2082 = vmatmul.f32.gmra.mxu0 %v1843
      %v2083 = vpop.f32.mrf.mxu0
      %v2084 = vadd.f32 0.0, %v2083
      %2085 = vmatmul.f32.gmra.mxu0 %v1848
      %v2086 = vpop.f32.mrf.mxu0
      %v2087 = vadd.f32 0.0, %v2086
      %2088 = vmatmul.f32.gmra.mxu0 %v1853
      %v2089 = vpop.f32.mrf.mxu0
      %v2090 = vadd.f32 0.0, %v2089
      %2091 = vmatmul.f32.gmra.mxu0 %v1858
      %v2092 = vpop.f32.mrf.mxu0
      %v2093 = vadd.f32 0.0, %v2092
      %2094 = vmatmul.f32.gmra.mxu0 %v1863
      %v2095 = vpop.f32.mrf.mxu0
      %v2096 = vadd.f32 0.0, %v2095
      %2097 = vmatmul.f32.gmra.mxu0 %v1868
      %v2098 = vpop.f32.mrf.mxu0
      %v2099 = vadd.f32 0.0, %v2098
      %2100 = vmatmul.f32.gmra.mxu0 %v1873
      %v2101 = vpop.f32.mrf.mxu0
      %v2102 = vadd.f32 0.0, %v2101
      %2103 = vmatmul.f32.gmra.mxu0 %v1878
      %v2104 = vpop.f32.mrf.mxu0
      %v2105 = vadd.f32 0.0, %v2104
      %2106 = vmatmul.f32.gmra.mxu0 %v1883
      %v2107 = vpop.f32.mrf.mxu0
      %v2108 = vadd.f32 0.0, %v2107
      %2109 = vmatmul.f32.gmra.mxu0 %v1888
      %v2110 = vpop.f32.mrf.mxu0
      %v2111 = vadd.f32 0.0, %v2110
      %2112 = vmatmul.f32.gmra.mxu0 %v1893
      %v2113 = vpop.f32.mrf.mxu0
      %v2114 = vadd.f32 0.0, %v2113
      %2115 = vmatmul.f32.gmra.mxu0 %v1898
      %v2116 = vpop.f32.mrf.mxu0
      %v2117 = vadd.f32 0.0, %v2116
      %2118 = vmatmul.f32.gmra.mxu0 %v1903
      %v2119 = vpop.f32.mrf.mxu0
      %v2120 = vadd.f32 0.0, %v2119
      %2121 = vmatmul.f32.gmra.mxu0 %v1908
      %v2122 = vpop.f32.mrf.mxu0
      %v2123 = vadd.f32 0.0, %v2122
      %2124 = vmatmul.f32.gmra.mxu0 %v1913
      %v2125 = vpop.f32.mrf.mxu0
      %v2126 = vadd.f32 0.0, %v2125
      %2127 = vmatmul.f32.gmra.mxu0 %v1918
      %v2128 = vpop.f32.mrf.mxu0
      %v2129 = vadd.f32 0.0, %v2128
      %2130 = vdwg.mxu0
      %2131 = vmatpush.msra.mxu0 %v2017
      %2132 = vmatpush.msra.mxu0 %v2016
      %2133 = vmatpush.msra.mxu0 %v2015
      %2134 = vmatpush.msra.mxu0 %v2014
      %2135 = vmatpush.msra.mxu0 %v2013
      %2136 = vmatpush.msra.mxu0 %v2012
      %2137 = vmatpush.msra.mxu0 %v2011
      %2138 = vmatpush.msra.mxu0 %v2010
      %2139 = vmatpush.msra.mxu0 %v2009
      %2140 = vmatpush.msra.mxu0 %v2008
      %2141 = vmatpush.msra.mxu0 %v2007
      %2142 = vmatpush.msra.mxu0 %v2006
      %2143 = vmatpush.msra.mxu0 %v2005
      %2144 = vmatpush.msra.mxu0 %v2004
      %2145 = vmatpush.msra.mxu0 %v2003
      %2146 = vmatpush.msra.mxu0 %v2002
      %2147 = vmatmul.f32.gmra.mxu0 %v1766
      %v2148 = vpop.f32.mrf.mxu0
      %v2149 = vadd.f32 %v2036, %v2148
      %2150 = vmatmul.f32.gmra.mxu0 %v1770
      %v2151 = vpop.f32.mrf.mxu0
      %v2152 = vadd.f32 %v2039, %v2151
      %2153 = vmatmul.f32.gmra.mxu0 %v1776
      %v2154 = vpop.f32.mrf.mxu0
      %v2155 = vadd.f32 %v2042, %v2154
      %2156 = vmatmul.f32.gmra.mxu0 %v1780
      %v2157 = vpop.f32.mrf.mxu0
      %v2158 = vadd.f32 %v2045, %v2157
      %2159 = vmatmul.f32.gmra.mxu0 %v1786
      %v2160 = vpop.f32.mrf.mxu0
      %v2161 = vadd.f32 %v2048, %v2160
      %2162 = vmatmul.f32.gmra.mxu0 %v1790
      %v2163 = vpop.f32.mrf.mxu0
      %v2164 = vadd.f32 %v2051, %v2163
      %2165 = vmatmul.f32.gmra.mxu0 %v1796
      %v2166 = vpop.f32.mrf.mxu0
      %v2167 = vadd.f32 %v2054, %v2166
      %2168 = vmatmul.f32.gmra.mxu0 %v1800
      %v2169 = vpop.f32.mrf.mxu0
      %v2170 = vadd.f32 %v2057, %v2169
      %2171 = vmatmul.f32.gmra.mxu0 %v1806
      %v2172 = vpop.f32.mrf.mxu0
      %v2173 = vadd.f32 %v2060, %v2172
      %2174 = vmatmul.f32.gmra.mxu0 %v1810
      %v2175 = vpop.f32.mrf.mxu0
      %v2176 = vadd.f32 %v2063, %v2175
      %2177 = vmatmul.f32.gmra.mxu0 %v1816
      %v2178 = vpop.f32.mrf.mxu0
      %v2179 = vadd.f32 %v2066, %v2178
      %2180 = vmatmul.f32.gmra.mxu0 %v1820
      %v2181 = vpop.f32.mrf.mxu0
      %v2182 = vadd.f32 %v2069, %v2181
      %2183 = vmatmul.f32.gmra.mxu0 %v1826
      %v2184 = vpop.f32.mrf.mxu0
      %v2185 = vadd.f32 %v2072, %v2184
      %2186 = vmatmul.f32.gmra.mxu0 %v1830
      %v2187 = vpop.f32.mrf.mxu0
      %v2188 = vadd.f32 %v2075, %v2187
      %2189 = vmatmul.f32.gmra.mxu0 %v1836
      %v2190 = vpop.f32.mrf.mxu0
      %v2191 = vadd.f32 %v2078, %v2190
      %2192 = vmatmul.f32.gmra.mxu0 %v1840
      %v2193 = vpop.f32.mrf.mxu0
      %v2194 = vadd.f32 %v2081, %v2193
      %2195 = vmatmul.f32.gmra.mxu0 %v1846
      %v2196 = vpop.f32.mrf.mxu0
      %v2197 = vadd.f32 %v2084, %v2196
      %2198 = vmatmul.f32.gmra.mxu0 %v1850
      %v2199 = vpop.f32.mrf.mxu0
      %v2200 = vadd.f32 %v2087, %v2199
      %2201 = vmatmul.f32.gmra.mxu0 %v1856
      %v2202 = vpop.f32.mrf.mxu0
      %v2203 = vadd.f32 %v2090, %v2202
      %2204 = vmatmul.f32.gmra.mxu0 %v1860
      %v2205 = vpop.f32.mrf.mxu0
      %v2206 = vadd.f32 %v2093, %v2205
      %2207 = vmatmul.f32.gmra.mxu0 %v1866
      %v2208 = vpop.f32.mrf.mxu0
      %v2209 = vadd.f32 %v2096, %v2208
      %2210 = vmatmul.f32.gmra.mxu0 %v1870
      %v2211 = vpop.f32.mrf.mxu0
      %v2212 = vadd.f32 %v2099, %v2211
      %2213 = vmatmul.f32.gmra.mxu0 %v1876
      %v2214 = vpop.f32.mrf.mxu0
      %v2215 = vadd.f32 %v2102, %v2214
      %2216 = vmatmul.f32.gmra.mxu0 %v1880
      %v2217 = vpop.f32.mrf.mxu0
      %v2218 = vadd.f32 %v2105, %v2217
      %2219 = vmatmul.f32.gmra.mxu0 %v1886
      %v2220 = vpop.f32.mrf.mxu0
      %v2221 = vadd.f32 %v2108, %v2220
      %2222 = vmatmul.f32.gmra.mxu0 %v1890
      %v2223 = vpop.f32.mrf.mxu0
      %v2224 = vadd.f32 %v2111, %v2223
      %2225 = vmatmul.f32.gmra.mxu0 %v1896
      %v2226 = vpop.f32.mrf.mxu0
      %v2227 = vadd.f32 %v2114, %v2226
      %2228 = vmatmul.f32.gmra.mxu0 %v1900
      %v2229 = vpop.f32.mrf.mxu0
      %v2230 = vadd.f32 %v2117, %v2229
      %2231 = vmatmul.f32.gmra.mxu0 %v1906
      %v2232 = vpop.f32.mrf.mxu0
      %v2233 = vadd.f32 %v2120, %v2232
      %2234 = vmatmul.f32.gmra.mxu0 %v1910
      %v2235 = vpop.f32.mrf.mxu0
      %v2236 = vadd.f32 %v2123, %v2235
      %2237 = vmatmul.f32.gmra.mxu0 %v1916
      %v2238 = vpop.f32.mrf.mxu0
      %v2239 = vadd.f32 %v2126, %v2238
      %2240 = vmatmul.f32.gmra.mxu0 %v1920
      %v2241 = vpop.f32.mrf.mxu0
      %v2242 = vadd.f32 %v2129, %v2241
      %2243 = vdwg.mxu0
      %v2244 = vadd.f32 %v1537, %v2149
      %v2245 = vadd.f32 %v1540, %v2152
      %v2246 = vadd.f32 %v1543, %v2155
      %v2247 = vadd.f32 %v1546, %v2158
      %v2248 = vadd.f32 %v1549, %v2161
      %v2249 = vadd.f32 %v1552, %v2164
      %v2250 = vadd.f32 %v1555, %v2167
      %v2251 = vadd.f32 %v1558, %v2170
      %v2252 = vadd.f32 %v1561, %v2173
      %v2253 = vadd.f32 %v1564, %v2176
      %v2254 = vadd.f32 %v1567, %v2179
      %v2255 = vadd.f32 %v1570, %v2182
      %v2256 = vadd.f32 %v1573, %v2185
      %v2257 = vadd.f32 %v1576, %v2188
      %v2258 = vadd.f32 %v1579, %v2191
      %v2259 = vadd.f32 %v1582, %v2194
      %v2260 = vadd.f32 %v1585, %v2197
      %v2261 = vadd.f32 %v1588, %v2200
      %v2262 = vadd.f32 %v1591, %v2203
      %v2263 = vadd.f32 %v1594, %v2206
      %v2264 = vadd.f32 %v1597, %v2209
      %v2265 = vadd.f32 %v1600, %v2212
      %v2266 = vadd.f32 %v1603, %v2215
      %v2267 = vadd.f32 %v1606, %v2218
      %v2268 = vadd.f32 %v1609, %v2221
      %v2269 = vadd.f32 %v1612, %v2224
      %v2270 = vadd.f32 %v1615, %v2227
      %v2271 = vadd.f32 %v1618, %v2230
      %v2272 = vadd.f32 %v1621, %v2233
      %v2273 = vadd.f32 %v1624, %v2236
      %v2274 = vadd.f32 %v1627, %v2239
      %v2275 = vadd.f32 %v1630, %v2242
      %s2276 = scalar_lea.vmem [#allocation2], 48
      %v2277 = vld [vmem:[%s2276] sm:$0xff]
      %v2278 = vld [vmem:[%s2276 + $0x8] sm:$0xff]
      %v2279 = vld [vmem:[%s2276 + $0x10] sm:$0xff]
      %v2280 = vld [vmem:[%s2276 + $0x18] sm:$0xff]
      %v2281 = vld [vmem:[%s2276 + $0x30] sm:$0xff]
      %v2282 = vld [vmem:[%s2276 + $0x38] sm:$0xff]
      %v2283 = vld [vmem:[%s2276 + $0x40] sm:$0xff]
      %v2284 = vld [vmem:[%s2276 + $0x48] sm:$0xff]
      %v2285 = vld [vmem:[%s2276 + $0x60] sm:$0xff]
      %v2286 = vld [vmem:[%s2276 + $0x68] sm:$0xff]
      %v2287 = vld [vmem:[%s2276 + $0x70] sm:$0xff]
      %v2288 = vld [vmem:[%s2276 + $0x78] sm:$0xff]
      %v2289 = vld [vmem:[%s2276 + $0x90] sm:$0xff]
      %v2290 = vld [vmem:[%s2276 + $0x98] sm:$0xff]
      %v2291 = vld [vmem:[%s2276 + $0xa0] sm:$0xff]
      %v2292 = vld [vmem:[%s2276 + $0xa8] sm:$0xff]
      %v2293 = vld [vmem:[%s2276 + $0xc0] sm:$0xff]
      %v2294 = vld [vmem:[%s2276 + $0xc8] sm:$0xff]
      %v2295 = vld [vmem:[%s2276 + $0xd0] sm:$0xff]
      %v2296 = vld [vmem:[%s2276 + $0xd8] sm:$0xff]
      %v2297 = vld [vmem:[%s2276 + $0xf0] sm:$0xff]
      %v2298 = vld [vmem:[%s2276 + $0xf8] sm:$0xff]
      %v2299 = vld [vmem:[%s2276 + $0x100] sm:$0xff]
      %v2300 = vld [vmem:[%s2276 + $0x108] sm:$0xff]
      %v2301 = vld [vmem:[%s2276 + $0x120] sm:$0xff]
      %v2302 = vld [vmem:[%s2276 + $0x128] sm:$0xff]
      %v2303 = vld [vmem:[%s2276 + $0x130] sm:$0xff]
      %v2304 = vld [vmem:[%s2276 + $0x138] sm:$0xff]
      %v2305 = vld [vmem:[%s2276 + $0x150] sm:$0xff]
      %v2306 = vld [vmem:[%s2276 + $0x158] sm:$0xff]
      %v2307 = vld [vmem:[%s2276 + $0x160] sm:$0xff]
      %v2308 = vld [vmem:[%s2276 + $0x168] sm:$0xff]
      %v2309 = vld [vmem:[%s2276 + $0x180] sm:$0xff]
      %v2310 = vld [vmem:[%s2276 + $0x188] sm:$0xff]
      %v2311 = vld [vmem:[%s2276 + $0x190] sm:$0xff]
      %v2312 = vld [vmem:[%s2276 + $0x198] sm:$0xff]
      %v2313 = vld [vmem:[%s2276 + $0x1b0] sm:$0xff]
      %v2314 = vld [vmem:[%s2276 + $0x1b8] sm:$0xff]
      %v2315 = vld [vmem:[%s2276 + $0x1c0] sm:$0xff]
      %v2316 = vld [vmem:[%s2276 + $0x1c8] sm:$0xff]
      %v2317 = vld [vmem:[%s2276 + $0x1e0] sm:$0xff]
      %v2318 = vld [vmem:[%s2276 + $0x1e8] sm:$0xff]
      %v2319 = vld [vmem:[%s2276 + $0x1f0] sm:$0xff]
      %v2320 = vld [vmem:[%s2276 + $0x1f8] sm:$0xff]
      %v2321 = vld [vmem:[%s2276 + $0x210] sm:$0xff]
      %v2322 = vld [vmem:[%s2276 + $0x218] sm:$0xff]
      %v2323 = vld [vmem:[%s2276 + $0x220] sm:$0xff]
      %v2324 = vld [vmem:[%s2276 + $0x228] sm:$0xff]
      %v2325 = vld [vmem:[%s2276 + $0x240] sm:$0xff]
      %v2326 = vld [vmem:[%s2276 + $0x248] sm:$0xff]
      %v2327 = vld [vmem:[%s2276 + $0x250] sm:$0xff]
      %v2328 = vld [vmem:[%s2276 + $0x258] sm:$0xff]
      %v2329 = vld [vmem:[%s2276 + $0x270] sm:$0xff]
      %v2330 = vld [vmem:[%s2276 + $0x278] sm:$0xff]
      %v2331 = vld [vmem:[%s2276 + $0x280] sm:$0xff]
      %v2332 = vld [vmem:[%s2276 + $0x288] sm:$0xff]
      %v2333 = vld [vmem:[%s2276 + $0x2a0] sm:$0xff]
      %v2334 = vld [vmem:[%s2276 + $0x2a8] sm:$0xff]
      %v2335 = vld [vmem:[%s2276 + $0x2b0] sm:$0xff]
      %v2336 = vld [vmem:[%s2276 + $0x2b8] sm:$0xff]
      %v2337 = vld [vmem:[%s2276 + $0x2d0] sm:$0xff]
      %v2338 = vld [vmem:[%s2276 + $0x2d8] sm:$0xff]
      %v2339 = vld [vmem:[%s2276 + $0x2e0] sm:$0xff]
      %v2340 = vld [vmem:[%s2276 + $0x2e8] sm:$0xff]
      %s2341 = scalar_lea.vmem %s3, 768
      %v2342 = vld [vmem:[%s2341] sm:$0xff]
      %v2343 = vld [vmem:[%s2341 + $0x8] sm:$0xff]
      %v2344 = vld [vmem:[%s2341 + $0x10] sm:$0xff]
      %v2345 = vld [vmem:[%s2341 + $0x18] sm:$0xff]
      %v2346 = vld [vmem:[%s2341 + $0x20] sm:$0xff]
      %v2347 = vld [vmem:[%s2341 + $0x28] sm:$0xff]
      %v2348 = vld [vmem:[%s2341 + $0x30] sm:$0xff]
      %v2349 = vld [vmem:[%s2341 + $0x38] sm:$0xff]
      %v2350 = vld [vmem:[%s2341 + $0x40] sm:$0xff]
      %v2351 = vld [vmem:[%s2341 + $0x48] sm:$0xff]
      %v2352 = vld [vmem:[%s2341 + $0x50] sm:$0xff]
      %v2353 = vld [vmem:[%s2341 + $0x58] sm:$0xff]
      %v2354 = vld [vmem:[%s2341 + $0x60] sm:$0xff]
      %v2355 = vld [vmem:[%s2341 + $0x68] sm:$0xff]
      %v2356 = vld [vmem:[%s2341 + $0x70] sm:$0xff]
      %v2357 = vld [vmem:[%s2341 + $0x78] sm:$0xff]
      %v2358 = vld [vmem:[%s2341 + $0x80] sm:$0xff]
      %v2359 = vld [vmem:[%s2341 + $0x88] sm:$0xff]
      %v2360 = vld [vmem:[%s2341 + $0x90] sm:$0xff]
      %v2361 = vld [vmem:[%s2341 + $0x98] sm:$0xff]
      %v2362 = vld [vmem:[%s2341 + $0xa0] sm:$0xff]
      %v2363 = vld [vmem:[%s2341 + $0xa8] sm:$0xff]
      %v2364 = vld [vmem:[%s2341 + $0xb0] sm:$0xff]
      %v2365 = vld [vmem:[%s2341 + $0xb8] sm:$0xff]
      %v2366 = vld [vmem:[%s2341 + $0xc0] sm:$0xff]
      %v2367 = vld [vmem:[%s2341 + $0xc8] sm:$0xff]
      %v2368 = vld [vmem:[%s2341 + $0xd0] sm:$0xff]
      %v2369 = vld [vmem:[%s2341 + $0xd8] sm:$0xff]
      %v2370 = vld [vmem:[%s2341 + $0xe0] sm:$0xff]
      %v2371 = vld [vmem:[%s2341 + $0xe8] sm:$0xff]
      %v2372 = vld [vmem:[%s2341 + $0xf0] sm:$0xff]
      %v2373 = vld [vmem:[%s2341 + $0xf8] sm:$0xff]
      %2374 = vmatpush.msra.mxu0 %v2357
      %2375 = vmatpush.msra.mxu0 %v2356
      %2376 = vmatpush.msra.mxu0 %v2355
      %2377 = vmatpush.msra.mxu0 %v2354
      %2378 = vmatpush.msra.mxu0 %v2353
      %2379 = vmatpush.msra.mxu0 %v2352
      %2380 = vmatpush.msra.mxu0 %v2351
      %2381 = vmatpush.msra.mxu0 %v2350
      %2382 = vmatpush.msra.mxu0 %v2349
      %2383 = vmatpush.msra.mxu0 %v2348
      %2384 = vmatpush.msra.mxu0 %v2347
      %2385 = vmatpush.msra.mxu0 %v2346
      %2386 = vmatpush.msra.mxu0 %v2345
      %2387 = vmatpush.msra.mxu0 %v2344
      %2388 = vmatpush.msra.mxu0 %v2343
      %2389 = vmatpush.msra.mxu0 %v2342
      %2390 = vmatmul.f32.gmra.mxu0 %v2277
      %v2391 = vpop.f32.mrf.mxu0
      %v2392 = vadd.f32 0.0, %v2391
      %2393 = vmatmul.f32.gmra.mxu0 %v2279
      %v2394 = vpop.f32.mrf.mxu0
      %v2395 = vadd.f32 0.0, %v2394
      %2396 = vmatmul.f32.gmra.mxu0 %v2281
      %v2397 = vpop.f32.mrf.mxu0
      %v2398 = vadd.f32 0.0, %v2397
      %2399 = vmatmul.f32.gmra.mxu0 %v2283
      %v2400 = vpop.f32.mrf.mxu0
      %v2401 = vadd.f32 0.0, %v2400
      %2402 = vmatmul.f32.gmra.mxu0 %v2285
      %v2403 = vpop.f32.mrf.mxu0
      %v2404 = vadd.f32 0.0, %v2403
      %2405 = vmatmul.f32.gmra.mxu0 %v2287
      %v2406 = vpop.f32.mrf.mxu0
      %v2407 = vadd.f32 0.0, %v2406
      %2408 = vmatmul.f32.gmra.mxu0 %v2289
      %v2409 = vpop.f32.mrf.mxu0
      %v2410 = vadd.f32 0.0, %v2409
      %2411 = vmatmul.f32.gmra.mxu0 %v2291
      %v2412 = vpop.f32.mrf.mxu0
      %v2413 = vadd.f32 0.0, %v2412
      %2414 = vmatmul.f32.gmra.mxu0 %v2293
      %v2415 = vpop.f32.mrf.mxu0
      %v2416 = vadd.f32 0.0, %v2415
      %2417 = vmatmul.f32.gmra.mxu0 %v2295
      %v2418 = vpop.f32.mrf.mxu0
      %v2419 = vadd.f32 0.0, %v2418
      %2420 = vmatmul.f32.gmra.mxu0 %v2297
      %v2421 = vpop.f32.mrf.mxu0
      %v2422 = vadd.f32 0.0, %v2421
      %2423 = vmatmul.f32.gmra.mxu0 %v2299
      %v2424 = vpop.f32.mrf.mxu0
      %v2425 = vadd.f32 0.0, %v2424
      %2426 = vmatmul.f32.gmra.mxu0 %v2301
      %v2427 = vpop.f32.mrf.mxu0
      %v2428 = vadd.f32 0.0, %v2427
      %2429 = vmatmul.f32.gmra.mxu0 %v2303
      %v2430 = vpop.f32.mrf.mxu0
      %v2431 = vadd.f32 0.0, %v2430
      %2432 = vmatmul.f32.gmra.mxu0 %v2305
      %v2433 = vpop.f32.mrf.mxu0
      %v2434 = vadd.f32 0.0, %v2433
      %2435 = vmatmul.f32.gmra.mxu0 %v2307
      %v2436 = vpop.f32.mrf.mxu0
      %v2437 = vadd.f32 0.0, %v2436
      %2438 = vmatmul.f32.gmra.mxu0 %v2309
      %v2439 = vpop.f32.mrf.mxu0
      %v2440 = vadd.f32 0.0, %v2439
      %2441 = vmatmul.f32.gmra.mxu0 %v2311
      %v2442 = vpop.f32.mrf.mxu0
      %v2443 = vadd.f32 0.0, %v2442
      %2444 = vmatmul.f32.gmra.mxu0 %v2313
      %v2445 = vpop.f32.mrf.mxu0
      %v2446 = vadd.f32 0.0, %v2445
      %2447 = vmatmul.f32.gmra.mxu0 %v2315
      %v2448 = vpop.f32.mrf.mxu0
      %v2449 = vadd.f32 0.0, %v2448
      %2450 = vmatmul.f32.gmra.mxu0 %v2317
      %v2451 = vpop.f32.mrf.mxu0
      %v2452 = vadd.f32 0.0, %v2451
      %2453 = vmatmul.f32.gmra.mxu0 %v2319
      %v2454 = vpop.f32.mrf.mxu0
      %v2455 = vadd.f32 0.0, %v2454
      %2456 = vmatmul.f32.gmra.mxu0 %v2321
      %v2457 = vpop.f32.mrf.mxu0
      %v2458 = vadd.f32 0.0, %v2457
      %2459 = vmatmul.f32.gmra.mxu0 %v2323
      %v2460 = vpop.f32.mrf.mxu0
      %v2461 = vadd.f32 0.0, %v2460
      %2462 = vmatmul.f32.gmra.mxu0 %v2325
      %v2463 = vpop.f32.mrf.mxu0
      %v2464 = vadd.f32 0.0, %v2463
      %2465 = vmatmul.f32.gmra.mxu0 %v2327
      %v2466 = vpop.f32.mrf.mxu0
      %v2467 = vadd.f32 0.0, %v2466
      %2468 = vmatmul.f32.gmra.mxu0 %v2329
      %v2469 = vpop.f32.mrf.mxu0
      %v2470 = vadd.f32 0.0, %v2469
      %2471 = vmatmul.f32.gmra.mxu0 %v2331
      %v2472 = vpop.f32.mrf.mxu0
      %v2473 = vadd.f32 0.0, %v2472
      %2474 = vmatmul.f32.gmra.mxu0 %v2333
      %v2475 = vpop.f32.mrf.mxu0
      %v2476 = vadd.f32 0.0, %v2475
      %2477 = vmatmul.f32.gmra.mxu0 %v2335
      %v2478 = vpop.f32.mrf.mxu0
      %v2479 = vadd.f32 0.0, %v2478
      %2480 = vmatmul.f32.gmra.mxu0 %v2337
      %v2481 = vpop.f32.mrf.mxu0
      %v2482 = vadd.f32 0.0, %v2481
      %2483 = vmatmul.f32.gmra.mxu0 %v2339
      %v2484 = vpop.f32.mrf.mxu0
      %v2485 = vadd.f32 0.0, %v2484
      %2486 = vdwg.mxu0
      %2487 = vmatpush.msra.mxu0 %v2373
      %2488 = vmatpush.msra.mxu0 %v2372
      %2489 = vmatpush.msra.mxu0 %v2371
      %2490 = vmatpush.msra.mxu0 %v2370
      %2491 = vmatpush.msra.mxu0 %v2369
      %2492 = vmatpush.msra.mxu0 %v2368
      %2493 = vmatpush.msra.mxu0 %v2367
      %2494 = vmatpush.msra.mxu0 %v2366
      %2495 = vmatpush.msra.mxu0 %v2365
      %2496 = vmatpush.msra.mxu0 %v2364
      %2497 = vmatpush.msra.mxu0 %v2363
      %2498 = vmatpush.msra.mxu0 %v2362
      %2499 = vmatpush.msra.mxu0 %v2361
      %2500 = vmatpush.msra.mxu0 %v2360
      %2501 = vmatpush.msra.mxu0 %v2359
      %2502 = vmatpush.msra.mxu0 %v2358
      %2503 = vmatmul.f32.gmra.mxu0 %v2278
      %v2504 = vpop.f32.mrf.mxu0
      %v2505 = vadd.f32 %v2392, %v2504
      %2506 = vmatmul.f32.gmra.mxu0 %v2280
      %v2507 = vpop.f32.mrf.mxu0
      %v2508 = vadd.f32 %v2395, %v2507
      %2509 = vmatmul.f32.gmra.mxu0 %v2282
      %v2510 = vpop.f32.mrf.mxu0
      %v2511 = vadd.f32 %v2398, %v2510
      %2512 = vmatmul.f32.gmra.mxu0 %v2284
      %v2513 = vpop.f32.mrf.mxu0
      %v2514 = vadd.f32 %v2401, %v2513
      %2515 = vmatmul.f32.gmra.mxu0 %v2286
      %v2516 = vpop.f32.mrf.mxu0
      %v2517 = vadd.f32 %v2404, %v2516
      %2518 = vmatmul.f32.gmra.mxu0 %v2288
      %v2519 = vpop.f32.mrf.mxu0
      %v2520 = vadd.f32 %v2407, %v2519
      %2521 = vmatmul.f32.gmra.mxu0 %v2290
      %v2522 = vpop.f32.mrf.mxu0
      %v2523 = vadd.f32 %v2410, %v2522
      %2524 = vmatmul.f32.gmra.mxu0 %v2292
      %v2525 = vpop.f32.mrf.mxu0
      %v2526 = vadd.f32 %v2413, %v2525
      %2527 = vmatmul.f32.gmra.mxu0 %v2294
      %v2528 = vpop.f32.mrf.mxu0
      %v2529 = vadd.f32 %v2416, %v2528
      %2530 = vmatmul.f32.gmra.mxu0 %v2296
      %v2531 = vpop.f32.mrf.mxu0
      %v2532 = vadd.f32 %v2419, %v2531
      %2533 = vmatmul.f32.gmra.mxu0 %v2298
      %v2534 = vpop.f32.mrf.mxu0
      %v2535 = vadd.f32 %v2422, %v2534
      %2536 = vmatmul.f32.gmra.mxu0 %v2300
      %v2537 = vpop.f32.mrf.mxu0
      %v2538 = vadd.f32 %v2425, %v2537
      %2539 = vmatmul.f32.gmra.mxu0 %v2302
      %v2540 = vpop.f32.mrf.mxu0
      %v2541 = vadd.f32 %v2428, %v2540
      %2542 = vmatmul.f32.gmra.mxu0 %v2304
      %v2543 = vpop.f32.mrf.mxu0
      %v2544 = vadd.f32 %v2431, %v2543
      %2545 = vmatmul.f32.gmra.mxu0 %v2306
      %v2546 = vpop.f32.mrf.mxu0
      %v2547 = vadd.f32 %v2434, %v2546
      %2548 = vmatmul.f32.gmra.mxu0 %v2308
      %v2549 = vpop.f32.mrf.mxu0
      %v2550 = vadd.f32 %v2437, %v2549
      %2551 = vmatmul.f32.gmra.mxu0 %v2310
      %v2552 = vpop.f32.mrf.mxu0
      %v2553 = vadd.f32 %v2440, %v2552
      %2554 = vmatmul.f32.gmra.mxu0 %v2312
      %v2555 = vpop.f32.mrf.mxu0
      %v2556 = vadd.f32 %v2443, %v2555
      %2557 = vmatmul.f32.gmra.mxu0 %v2314
      %v2558 = vpop.f32.mrf.mxu0
      %v2559 = vadd.f32 %v2446, %v2558
      %2560 = vmatmul.f32.gmra.mxu0 %v2316
      %v2561 = vpop.f32.mrf.mxu0
      %v2562 = vadd.f32 %v2449, %v2561
      %2563 = vmatmul.f32.gmra.mxu0 %v2318
      %v2564 = vpop.f32.mrf.mxu0
      %v2565 = vadd.f32 %v2452, %v2564
      %2566 = vmatmul.f32.gmra.mxu0 %v2320
      %v2567 = vpop.f32.mrf.mxu0
      %v2568 = vadd.f32 %v2455, %v2567
      %2569 = vmatmul.f32.gmra.mxu0 %v2322
      %v2570 = vpop.f32.mrf.mxu0
      %v2571 = vadd.f32 %v2458, %v2570
      %2572 = vmatmul.f32.gmra.mxu0 %v2324
      %v2573 = vpop.f32.mrf.mxu0
      %v2574 = vadd.f32 %v2461, %v2573
      %2575 = vmatmul.f32.gmra.mxu0 %v2326
      %v2576 = vpop.f32.mrf.mxu0
      %v2577 = vadd.f32 %v2464, %v2576
      %2578 = vmatmul.f32.gmra.mxu0 %v2328
      %v2579 = vpop.f32.mrf.mxu0
      %v2580 = vadd.f32 %v2467, %v2579
      %2581 = vmatmul.f32.gmra.mxu0 %v2330
      %v2582 = vpop.f32.mrf.mxu0
      %v2583 = vadd.f32 %v2470, %v2582
      %2584 = vmatmul.f32.gmra.mxu0 %v2332
      %v2585 = vpop.f32.mrf.mxu0
      %v2586 = vadd.f32 %v2473, %v2585
      %2587 = vmatmul.f32.gmra.mxu0 %v2334
      %v2588 = vpop.f32.mrf.mxu0
      %v2589 = vadd.f32 %v2476, %v2588
      %2590 = vmatmul.f32.gmra.mxu0 %v2336
      %v2591 = vpop.f32.mrf.mxu0
      %v2592 = vadd.f32 %v2479, %v2591
      %2593 = vmatmul.f32.gmra.mxu0 %v2338
      %v2594 = vpop.f32.mrf.mxu0
      %v2595 = vadd.f32 %v2482, %v2594
      %2596 = vmatmul.f32.gmra.mxu0 %v2340
      %v2597 = vpop.f32.mrf.mxu0
      %v2598 = vadd.f32 %v2485, %v2597
      %2599 = vdwg.mxu0
      %v2600 = vadd.f32 %v2244, %v2505
      %v2601 = vadd.f32 %v2245, %v2508
      %v2602 = vadd.f32 %v2246, %v2511
      %v2603 = vadd.f32 %v2247, %v2514
      %v2604 = vadd.f32 %v2248, %v2517
      %v2605 = vadd.f32 %v2249, %v2520
      %v2606 = vadd.f32 %v2250, %v2523
      %v2607 = vadd.f32 %v2251, %v2526
      %v2608 = vadd.f32 %v2252, %v2529
      %v2609 = vadd.f32 %v2253, %v2532
      %v2610 = vadd.f32 %v2254, %v2535
      %v2611 = vadd.f32 %v2255, %v2538
      %v2612 = vadd.f32 %v2256, %v2541
      %v2613 = vadd.f32 %v2257, %v2544
      %v2614 = vadd.f32 %v2258, %v2547
      %v2615 = vadd.f32 %v2259, %v2550
      %v2616 = vadd.f32 %v2260, %v2553
      %v2617 = vadd.f32 %v2261, %v2556
      %v2618 = vadd.f32 %v2262, %v2559
      %v2619 = vadd.f32 %v2263, %v2562
      %v2620 = vadd.f32 %v2264, %v2565
      %v2621 = vadd.f32 %v2265, %v2568
      %v2622 = vadd.f32 %v2266, %v2571
      %v2623 = vadd.f32 %v2267, %v2574
      %v2624 = vadd.f32 %v2268, %v2577
      %v2625 = vadd.f32 %v2269, %v2580
      %v2626 = vadd.f32 %v2270, %v2583
      %v2627 = vadd.f32 %v2271, %v2586
      %v2628 = vadd.f32 %v2272, %v2589
      %v2629 = vadd.f32 %v2273, %v2592
      %v2630 = vadd.f32 %v2274, %v2595
      %v2631 = vadd.f32 %v2275, %v2598
      %v2632 = vld [vmem:[%s2276] sm:$0xfe]
      %v2633 = vld [vmem:[%s2276 + $0x8] sm:$0xfe]
      %v2634 = vld [vmem:[%s2276 + $0x10] sm:$0xff]
      %v2635 = vld [vmem:[%s2276 + $0x18] sm:$0xff]
      %v2636 = vld [vmem:[%s2276 + $0x20] sm:$0x1]
      %v2637 = vld [vmem:[%s2276 + $0x28] sm:$0x1]
      %v2638 = vld [vmem:[%s2276 + $0x30] sm:$0xfe]
      %v2639 = vld [vmem:[%s2276 + $0x38] sm:$0xfe]
      %v2640 = vld [vmem:[%s2276 + $0x40] sm:$0xff]
      %v2641 = vld [vmem:[%s2276 + $0x48] sm:$0xff]
      %v2642 = vld [vmem:[%s2276 + $0x50] sm:$0x1]
      %v2643 = vld [vmem:[%s2276 + $0x58] sm:$0x1]
      %v2644 = vld [vmem:[%s2276 + $0x60] sm:$0xfe]
      %v2645 = vld [vmem:[%s2276 + $0x68] sm:$0xfe]
      %v2646 = vld [vmem:[%s2276 + $0x70] sm:$0xff]
      %v2647 = vld [vmem:[%s2276 + $0x78] sm:$0xff]
      %v2648 = vld [vmem:[%s2276 + $0x80] sm:$0x1]
      %v2649 = vld [vmem:[%s2276 + $0x88] sm:$0x1]
      %v2650 = vld [vmem:[%s2276 + $0x90] sm:$0xfe]
      %v2651 = vld [vmem:[%s2276 + $0x98] sm:$0xfe]
      %v2652 = vld [vmem:[%s2276 + $0xa0] sm:$0xff]
      %v2653 = vld [vmem:[%s2276 + $0xa8] sm:$0xff]
      %v2654 = vld [vmem:[%s2276 + $0xb0] sm:$0x1]
      %v2655 = vld [vmem:[%s2276 + $0xb8] sm:$0x1]
      %v2656 = vld [vmem:[%s2276 + $0xc0] sm:$0xfe]
      %v2657 = vld [vmem:[%s2276 + $0xc8] sm:$0xfe]
      %v2658 = vld [vmem:[%s2276 + $0xd0] sm:$0xff]
      %v2659 = vld [vmem:[%s2276 + $0xd8] sm:$0xff]
      %v2660 = vld [vmem:[%s2276 + $0xe0] sm:$0x1]
      %v2661 = vld [vmem:[%s2276 + $0xe8] sm:$0x1]
      %v2662 = vld [vmem:[%s2276 + $0xf0] sm:$0xfe]
      %v2663 = vld [vmem:[%s2276 + $0xf8] sm:$0xfe]
      %v2664 = vld [vmem:[%s2276 + $0x100] sm:$0xff]
      %v2665 = vld [vmem:[%s2276 + $0x108] sm:$0xff]
      %v2666 = vld [vmem:[%s2276 + $0x110] sm:$0x1]
      %v2667 = vld [vmem:[%s2276 + $0x118] sm:$0x1]
      %v2668 = vld [vmem:[%s2276 + $0x120] sm:$0xfe]
      %v2669 = vld [vmem:[%s2276 + $0x128] sm:$0xfe]
      %v2670 = vld [vmem:[%s2276 + $0x130] sm:$0xff]
      %v2671 = vld [vmem:[%s2276 + $0x138] sm:$0xff]
      %v2672 = vld [vmem:[%s2276 + $0x140] sm:$0x1]
      %v2673 = vld [vmem:[%s2276 + $0x148] sm:$0x1]
      %v2674 = vld [vmem:[%s2276 + $0x150] sm:$0xfe]
      %v2675 = vld [vmem:[%s2276 + $0x158] sm:$0xfe]
      %v2676 = vld [vmem:[%s2276 + $0x160] sm:$0xff]
      %v2677 = vld [vmem:[%s2276 + $0x168] sm:$0xff]
      %v2678 = vld [vmem:[%s2276 + $0x170] sm:$0x1]
      %v2679 = vld [vmem:[%s2276 + $0x178] sm:$0x1]
      %v2680 = vld [vmem:[%s2276 + $0x180] sm:$0xfe]
      %v2681 = vld [vmem:[%s2276 + $0x188] sm:$0xfe]
      %v2682 = vld [vmem:[%s2276 + $0x190] sm:$0xff]
      %v2683 = vld [vmem:[%s2276 + $0x198] sm:$0xff]
      %v2684 = vld [vmem:[%s2276 + $0x1a0] sm:$0x1]
      %v2685 = vld [vmem:[%s2276 + $0x1a8] sm:$0x1]
      %v2686 = vld [vmem:[%s2276 + $0x1b0] sm:$0xfe]
      %v2687 = vld [vmem:[%s2276 + $0x1b8] sm:$0xfe]
      %v2688 = vld [vmem:[%s2276 + $0x1c0] sm:$0xff]
      %v2689 = vld [vmem:[%s2276 + $0x1c8] sm:$0xff]
      %v2690 = vld [vmem:[%s2276 + $0x1d0] sm:$0x1]
      %v2691 = vld [vmem:[%s2276 + $0x1d8] sm:$0x1]
      %v2692 = vld [vmem:[%s2276 + $0x1e0] sm:$0xfe]
      %v2693 = vld [vmem:[%s2276 + $0x1e8] sm:$0xfe]
      %v2694 = vld [vmem:[%s2276 + $0x1f0] sm:$0xff]
      %v2695 = vld [vmem:[%s2276 + $0x1f8] sm:$0xff]
      %v2696 = vld [vmem:[%s2276 + $0x200] sm:$0x1]
      %v2697 = vld [vmem:[%s2276 + $0x208] sm:$0x1]
      %v2698 = vld [vmem:[%s2276 + $0x210] sm:$0xfe]
      %v2699 = vld [vmem:[%s2276 + $0x218] sm:$0xfe]
      %v2700 = vld [vmem:[%s2276 + $0x220] sm:$0xff]
      %v2701 = vld [vmem:[%s2276 + $0x228] sm:$0xff]
      %v2702 = vld [vmem:[%s2276 + $0x230] sm:$0x1]
      %v2703 = vld [vmem:[%s2276 + $0x238] sm:$0x1]
      %v2704 = vld [vmem:[%s2276 + $0x240] sm:$0xfe]
      %v2705 = vld [vmem:[%s2276 + $0x248] sm:$0xfe]
      %v2706 = vld [vmem:[%s2276 + $0x250] sm:$0xff]
      %v2707 = vld [vmem:[%s2276 + $0x258] sm:$0xff]
      %v2708 = vld [vmem:[%s2276 + $0x260] sm:$0x1]
      %v2709 = vld [vmem:[%s2276 + $0x268] sm:$0x1]
      %v2710 = vld [vmem:[%s2276 + $0x270] sm:$0xfe]
      %v2711 = vld [vmem:[%s2276 + $0x278] sm:$0xfe]
      %v2712 = vld [vmem:[%s2276 + $0x280] sm:$0xff]
      %v2713 = vld [vmem:[%s2276 + $0x288] sm:$0xff]
      %v2714 = vld [vmem:[%s2276 + $0x290] sm:$0x1]
      %v2715 = vld [vmem:[%s2276 + $0x298] sm:$0x1]
      %v2716 = vld [vmem:[%s2276 + $0x2a0] sm:$0xfe]
      %v2717 = vld [vmem:[%s2276 + $0x2a8] sm:$0xfe]
      %v2718 = vld [vmem:[%s2276 + $0x2b0] sm:$0xff]
      %v2719 = vld [vmem:[%s2276 + $0x2b8] sm:$0xff]
      %v2720 = vld [vmem:[%s2276 + $0x2c0] sm:$0x1]
      %v2721 = vld [vmem:[%s2276 + $0x2c8] sm:$0x1]
      %v2722 = vld [vmem:[%s2276 + $0x2d0] sm:$0xfe]
      %v2723 = vld [vmem:[%s2276 + $0x2d8] sm:$0xfe]
      %v2724 = vld [vmem:[%s2276 + $0x2e0] sm:$0xff]
      %v2725 = vld [vmem:[%s2276 + $0x2e8] sm:$0xff]
      %v2726 = vld [vmem:[%s2276 + $0x2f0] sm:$0x1]
      %v2727 = vld [vmem:[%s2276 + $0x2f8] sm:$0x1]
      %v2824 = vrot.slane %v2632, 1
      %v2825 = vrot.slane %v2634, 1
      %v2826 = vsel %vm922, %v2824, %v2825
      %v2827 = vrot.slane %v2633, 1
      %v2828 = vrot.slane %v2635, 1
      %v2829 = vsel %vm922, %v2827, %v2828
      %v2830 = vrot.slane %v2636, 1
      %v2831 = vsel %vm922, %v2825, %v2830
      %v2832 = vrot.slane %v2637, 1
      %v2833 = vsel %vm922, %v2828, %v2832
      %v2834 = vrot.slane %v2638, 1
      %v2835 = vrot.slane %v2640, 1
      %v2836 = vsel %vm922, %v2834, %v2835
      %v2837 = vrot.slane %v2639, 1
      %v2838 = vrot.slane %v2641, 1
      %v2839 = vsel %vm922, %v2837, %v2838
      %v2840 = vrot.slane %v2642, 1
      %v2841 = vsel %vm922, %v2835, %v2840
      %v2842 = vrot.slane %v2643, 1
      %v2843 = vsel %vm922, %v2838, %v2842
      %v2844 = vrot.slane %v2644, 1
      %v2845 = vrot.slane %v2646, 1
      %v2846 = vsel %vm922, %v2844, %v2845
      %v2847 = vrot.slane %v2645, 1
      %v2848 = vrot.slane %v2647, 1
      %v2849 = vsel %vm922, %v2847, %v2848
      %v2850 = vrot.slane %v2648, 1
      %v2851 = vsel %vm922, %v2845, %v2850
      %v2852 = vrot.slane %v2649, 1
      %v2853 = vsel %vm922, %v2848, %v2852
      %v2854 = vrot.slane %v2650, 1
      %v2855 = vrot.slane %v2652, 1
      %v2856 = vsel %vm922, %v2854, %v2855
      %v2857 = vrot.slane %v2651, 1
      %v2858 = vrot.slane %v2653, 1
      %v2859 = vsel %vm922, %v2857, %v2858
      %v2860 = vrot.slane %v2654, 1
      %v2861 = vsel %vm922, %v2855, %v2860
      %v2862 = vrot.slane %v2655, 1
      %v2863 = vsel %vm922, %v2858, %v2862
      %v2864 = vrot.slane %v2656, 1
      %v2865 = vrot.slane %v2658, 1
      %v2866 = vsel %vm922, %v2864, %v2865
      %v2867 = vrot.slane %v2657, 1
      %v2868 = vrot.slane %v2659, 1
      %v2869 = vsel %vm922, %v2867, %v2868
      %v2870 = vrot.slane %v2660, 1
      %v2871 = vsel %vm922, %v2865, %v2870
      %v2872 = vrot.slane %v2661, 1
      %v2873 = vsel %vm922, %v2868, %v2872
      %v2874 = vrot.slane %v2662, 1
      %v2875 = vrot.slane %v2664, 1
      %v2876 = vsel %vm922, %v2874, %v2875
      %v2877 = vrot.slane %v2663, 1
      %v2878 = vrot.slane %v2665, 1
      %v2879 = vsel %vm922, %v2877, %v2878
      %v2880 = vrot.slane %v2666, 1
      %v2881 = vsel %vm922, %v2875, %v2880
      %v2882 = vrot.slane %v2667, 1
      %v2883 = vsel %vm922, %v2878, %v2882
      %v2884 = vrot.slane %v2668, 1
      %v2885 = vrot.slane %v2670, 1
      %v2886 = vsel %vm922, %v2884, %v2885
      %v2887 = vrot.slane %v2669, 1
      %v2888 = vrot.slane %v2671, 1
      %v2889 = vsel %vm922, %v2887, %v2888
      %v2890 = vrot.slane %v2672, 1
      %v2891 = vsel %vm922, %v2885, %v2890
      %v2892 = vrot.slane %v2673, 1
      %v2893 = vsel %vm922, %v2888, %v2892
      %v2894 = vrot.slane %v2674, 1
      %v2895 = vrot.slane %v2676, 1
      %v2896 = vsel %vm922, %v2894, %v2895
      %v2897 = vrot.slane %v2675, 1
      %v2898 = vrot.slane %v2677, 1
      %v2899 = vsel %vm922, %v2897, %v2898
      %v2900 = vrot.slane %v2678, 1
      %v2901 = vsel %vm922, %v2895, %v2900
      %v2902 = vrot.slane %v2679, 1
      %v2903 = vsel %vm922, %v2898, %v2902
      %v2904 = vrot.slane %v2680, 1
      %v2905 = vrot.slane %v2682, 1
      %v2906 = vsel %vm922, %v2904, %v2905
      %v2907 = vrot.slane %v2681, 1
      %v2908 = vrot.slane %v2683, 1
      %v2909 = vsel %vm922, %v2907, %v2908
      %v2910 = vrot.slane %v2684, 1
      %v2911 = vsel %vm922, %v2905, %v2910
      %v2912 = vrot.slane %v2685, 1
      %v2913 = vsel %vm922, %v2908, %v2912
      %v2914 = vrot.slane %v2686, 1
      %v2915 = vrot.slane %v2688, 1
      %v2916 = vsel %vm922, %v2914, %v2915
      %v2917 = vrot.slane %v2687, 1
      %v2918 = vrot.slane %v2689, 1
      %v2919 = vsel %vm922, %v2917, %v2918
      %v2920 = vrot.slane %v2690, 1
      %v2921 = vsel %vm922, %v2915, %v2920
      %v2922 = vrot.slane %v2691, 1
      %v2923 = vsel %vm922, %v2918, %v2922
      %v2924 = vrot.slane %v2692, 1
      %v2925 = vrot.slane %v2694, 1
      %v2926 = vsel %vm922, %v2924, %v2925
      %v2927 = vrot.slane %v2693, 1
      %v2928 = vrot.slane %v2695, 1
      %v2929 = vsel %vm922, %v2927, %v2928
      %v2930 = vrot.slane %v2696, 1
      %v2931 = vsel %vm922, %v2925, %v2930
      %v2932 = vrot.slane %v2697, 1
      %v2933 = vsel %vm922, %v2928, %v2932
      %v2934 = vrot.slane %v2698, 1
      %v2935 = vrot.slane %v2700, 1
      %v2936 = vsel %vm922, %v2934, %v2935
      %v2937 = vrot.slane %v2699, 1
      %v2938 = vrot.slane %v2701, 1
      %v2939 = vsel %vm922, %v2937, %v2938
      %v2940 = vrot.slane %v2702, 1
      %v2941 = vsel %vm922, %v2935, %v2940
      %v2942 = vrot.slane %v2703, 1
      %v2943 = vsel %vm922, %v2938, %v2942
      %v2944 = vrot.slane %v2704, 1
      %v2945 = vrot.slane %v2706, 1
      %v2946 = vsel %vm922, %v2944, %v2945
      %v2947 = vrot.slane %v2705, 1
      %v2948 = vrot.slane %v2707, 1
      %v2949 = vsel %vm922, %v2947, %v2948
      %v2950 = vrot.slane %v2708, 1
      %v2951 = vsel %vm922, %v2945, %v2950
      %v2952 = vrot.slane %v2709, 1
      %v2953 = vsel %vm922, %v2948, %v2952
      %v2954 = vrot.slane %v2710, 1
      %v2955 = vrot.slane %v2712, 1
      %v2956 = vsel %vm922, %v2954, %v2955
      %v2957 = vrot.slane %v2711, 1
      %v2958 = vrot.slane %v2713, 1
      %v2959 = vsel %vm922, %v2957, %v2958
      %v2960 = vrot.slane %v2714, 1
      %v2961 = vsel %vm922, %v2955, %v2960
      %v2962 = vrot.slane %v2715, 1
      %v2963 = vsel %vm922, %v2958, %v2962
      %v2964 = vrot.slane %v2716, 1
      %v2965 = vrot.slane %v2718, 1
      %v2966 = vsel %vm922, %v2964, %v2965
      %v2967 = vrot.slane %v2717, 1
      %v2968 = vrot.slane %v2719, 1
      %v2969 = vsel %vm922, %v2967, %v2968
      %v2970 = vrot.slane %v2720, 1
      %v2971 = vsel %vm922, %v2965, %v2970
      %v2972 = vrot.slane %v2721, 1
      %v2973 = vsel %vm922, %v2968, %v2972
      %v2974 = vrot.slane %v2722, 1
      %v2975 = vrot.slane %v2724, 1
      %v2976 = vsel %vm922, %v2974, %v2975
      %v2977 = vrot.slane %v2723, 1
      %v2978 = vrot.slane %v2725, 1
      %v2979 = vsel %vm922, %v2977, %v2978
      %v2980 = vrot.slane %v2726, 1
      %v2981 = vsel %vm922, %v2975, %v2980
      %v2982 = vrot.slane %v2727, 1
      %v2983 = vsel %vm922, %v2978, %v2982
      %s3048 = scalar_lea.vmem %s3, 1024
      %v3049 = vld [vmem:[%s3048] sm:$0xff]
      %v3050 = vld [vmem:[%s3048 + $0x8] sm:$0xff]
      %v3051 = vld [vmem:[%s3048 + $0x10] sm:$0xff]
      %v3052 = vld [vmem:[%s3048 + $0x18] sm:$0xff]
      %v3053 = vld [vmem:[%s3048 + $0x20] sm:$0xff]
      %v3054 = vld [vmem:[%s3048 + $0x28] sm:$0xff]
      %v3055 = vld [vmem:[%s3048 + $0x30] sm:$0xff]
      %v3056 = vld [vmem:[%s3048 + $0x38] sm:$0xff]
      %v3057 = vld [vmem:[%s3048 + $0x40] sm:$0xff]
      %v3058 = vld [vmem:[%s3048 + $0x48] sm:$0xff]
      %v3059 = vld [vmem:[%s3048 + $0x50] sm:$0xff]
      %v3060 = vld [vmem:[%s3048 + $0x58] sm:$0xff]
      %v3061 = vld [vmem:[%s3048 + $0x60] sm:$0xff]
      %v3062 = vld [vmem:[%s3048 + $0x68] sm:$0xff]
      %v3063 = vld [vmem:[%s3048 + $0x70] sm:$0xff]
      %v3064 = vld [vmem:[%s3048 + $0x78] sm:$0xff]
      %v3065 = vld [vmem:[%s3048 + $0x80] sm:$0xff]
      %v3066 = vld [vmem:[%s3048 + $0x88] sm:$0xff]
      %v3067 = vld [vmem:[%s3048 + $0x90] sm:$0xff]
      %v3068 = vld [vmem:[%s3048 + $0x98] sm:$0xff]
      %v3069 = vld [vmem:[%s3048 + $0xa0] sm:$0xff]
      %v3070 = vld [vmem:[%s3048 + $0xa8] sm:$0xff]
      %v3071 = vld [vmem:[%s3048 + $0xb0] sm:$0xff]
      %v3072 = vld [vmem:[%s3048 + $0xb8] sm:$0xff]
      %v3073 = vld [vmem:[%s3048 + $0xc0] sm:$0xff]
      %v3074 = vld [vmem:[%s3048 + $0xc8] sm:$0xff]
      %v3075 = vld [vmem:[%s3048 + $0xd0] sm:$0xff]
      %v3076 = vld [vmem:[%s3048 + $0xd8] sm:$0xff]
      %v3077 = vld [vmem:[%s3048 + $0xe0] sm:$0xff]
      %v3078 = vld [vmem:[%s3048 + $0xe8] sm:$0xff]
      %v3079 = vld [vmem:[%s3048 + $0xf0] sm:$0xff]
      %v3080 = vld [vmem:[%s3048 + $0xf8] sm:$0xff]
      %3081 = vmatpush.msra.mxu0 %v3064
      %3082 = vmatpush.msra.mxu0 %v3063
      %3083 = vmatpush.msra.mxu0 %v3062
      %3084 = vmatpush.msra.mxu0 %v3061
      %3085 = vmatpush.msra.mxu0 %v3060
      %3086 = vmatpush.msra.mxu0 %v3059
      %3087 = vmatpush.msra.mxu0 %v3058
      %3088 = vmatpush.msra.mxu0 %v3057
      %3089 = vmatpush.msra.mxu0 %v3056
      %3090 = vmatpush.msra.mxu0 %v3055
      %3091 = vmatpush.msra.mxu0 %v3054
      %3092 = vmatpush.msra.mxu0 %v3053
      %3093 = vmatpush.msra.mxu0 %v3052
      %3094 = vmatpush.msra.mxu0 %v3051
      %3095 = vmatpush.msra.mxu0 %v3050
      %3096 = vmatpush.msra.mxu0 %v3049
      %3097 = vmatmul.f32.gmra.mxu0 %v2826
      %v3098 = vpop.f32.mrf.mxu0
      %v3099 = vadd.f32 0.0, %v3098
      %3100 = vmatmul.f32.gmra.mxu0 %v2831
      %v3101 = vpop.f32.mrf.mxu0
      %v3102 = vadd.f32 0.0, %v3101
      %3103 = vmatmul.f32.gmra.mxu0 %v2836
      %v3104 = vpop.f32.mrf.mxu0
      %v3105 = vadd.f32 0.0, %v3104
      %3106 = vmatmul.f32.gmra.mxu0 %v2841
      %v3107 = vpop.f32.mrf.mxu0
      %v3108 = vadd.f32 0.0, %v3107
      %3109 = vmatmul.f32.gmra.mxu0 %v2846
      %v3110 = vpop.f32.mrf.mxu0
      %v3111 = vadd.f32 0.0, %v3110
      %3112 = vmatmul.f32.gmra.mxu0 %v2851
      %v3113 = vpop.f32.mrf.mxu0
      %v3114 = vadd.f32 0.0, %v3113
      %3115 = vmatmul.f32.gmra.mxu0 %v2856
      %v3116 = vpop.f32.mrf.mxu0
      %v3117 = vadd.f32 0.0, %v3116
      %3118 = vmatmul.f32.gmra.mxu0 %v2861
      %v3119 = vpop.f32.mrf.mxu0
      %v3120 = vadd.f32 0.0, %v3119
      %3121 = vmatmul.f32.gmra.mxu0 %v2866
      %v3122 = vpop.f32.mrf.mxu0
      %v3123 = vadd.f32 0.0, %v3122
      %3124 = vmatmul.f32.gmra.mxu0 %v2871
      %v3125 = vpop.f32.mrf.mxu0
      %v3126 = vadd.f32 0.0, %v3125
      %3127 = vmatmul.f32.gmra.mxu0 %v2876
      %v3128 = vpop.f32.mrf.mxu0
      %v3129 = vadd.f32 0.0, %v3128
      %3130 = vmatmul.f32.gmra.mxu0 %v2881
      %v3131 = vpop.f32.mrf.mxu0
      %v3132 = vadd.f32 0.0, %v3131
      %3133 = vmatmul.f32.gmra.mxu0 %v2886
      %v3134 = vpop.f32.mrf.mxu0
      %v3135 = vadd.f32 0.0, %v3134
      %3136 = vmatmul.f32.gmra.mxu0 %v2891
      %v3137 = vpop.f32.mrf.mxu0
      %v3138 = vadd.f32 0.0, %v3137
      %3139 = vmatmul.f32.gmra.mxu0 %v2896
      %v3140 = vpop.f32.mrf.mxu0
      %v3141 = vadd.f32 0.0, %v3140
      %3142 = vmatmul.f32.gmra.mxu0 %v2901
      %v3143 = vpop.f32.mrf.mxu0
      %v3144 = vadd.f32 0.0, %v3143
      %3145 = vmatmul.f32.gmra.mxu0 %v2906
      %v3146 = vpop.f32.mrf.mxu0
      %v3147 = vadd.f32 0.0, %v3146
      %3148 = vmatmul.f32.gmra.mxu0 %v2911
      %v3149 = vpop.f32.mrf.mxu0
      %v3150 = vadd.f32 0.0, %v3149
      %3151 = vmatmul.f32.gmra.mxu0 %v2916
      %v3152 = vpop.f32.mrf.mxu0
      %v3153 = vadd.f32 0.0, %v3152
      %3154 = vmatmul.f32.gmra.mxu0 %v2921
      %v3155 = vpop.f32.mrf.mxu0
      %v3156 = vadd.f32 0.0, %v3155
      %3157 = vmatmul.f32.gmra.mxu0 %v2926
      %v3158 = vpop.f32.mrf.mxu0
      %v3159 = vadd.f32 0.0, %v3158
      %3160 = vmatmul.f32.gmra.mxu0 %v2931
      %v3161 = vpop.f32.mrf.mxu0
      %v3162 = vadd.f32 0.0, %v3161
      %3163 = vmatmul.f32.gmra.mxu0 %v2936
      %v3164 = vpop.f32.mrf.mxu0
      %v3165 = vadd.f32 0.0, %v3164
      %3166 = vmatmul.f32.gmra.mxu0 %v2941
      %v3167 = vpop.f32.mrf.mxu0
      %v3168 = vadd.f32 0.0, %v3167
      %3169 = vmatmul.f32.gmra.mxu0 %v2946
      %v3170 = vpop.f32.mrf.mxu0
      %v3171 = vadd.f32 0.0, %v3170
      %3172 = vmatmul.f32.gmra.mxu0 %v2951
      %v3173 = vpop.f32.mrf.mxu0
      %v3174 = vadd.f32 0.0, %v3173
      %3175 = vmatmul.f32.gmra.mxu0 %v2956
      %v3176 = vpop.f32.mrf.mxu0
      %v3177 = vadd.f32 0.0, %v3176
      %3178 = vmatmul.f32.gmra.mxu0 %v2961
      %v3179 = vpop.f32.mrf.mxu0
      %v3180 = vadd.f32 0.0, %v3179
      %3181 = vmatmul.f32.gmra.mxu0 %v2966
      %v3182 = vpop.f32.mrf.mxu0
      %v3183 = vadd.f32 0.0, %v3182
      %3184 = vmatmul.f32.gmra.mxu0 %v2971
      %v3185 = vpop.f32.mrf.mxu0
      %v3186 = vadd.f32 0.0, %v3185
      %3187 = vmatmul.f32.gmra.mxu0 %v2976
      %v3188 = vpop.f32.mrf.mxu0
      %v3189 = vadd.f32 0.0, %v3188
      %3190 = vmatmul.f32.gmra.mxu0 %v2981
      %v3191 = vpop.f32.mrf.mxu0
      %v3192 = vadd.f32 0.0, %v3191
      %3193 = vdwg.mxu0
      %3194 = vmatpush.msra.mxu0 %v3080
      %3195 = vmatpush.msra.mxu0 %v3079
      %3196 = vmatpush.msra.mxu0 %v3078
      %3197 = vmatpush.msra.mxu0 %v3077
      %3198 = vmatpush.msra.mxu0 %v3076
      %3199 = vmatpush.msra.mxu0 %v3075
      %3200 = vmatpush.msra.mxu0 %v3074
      %3201 = vmatpush.msra.mxu0 %v3073
      %3202 = vmatpush.msra.mxu0 %v3072
      %3203 = vmatpush.msra.mxu0 %v3071
      %3204 = vmatpush.msra.mxu0 %v3070
      %3205 = vmatpush.msra.mxu0 %v3069
      %3206 = vmatpush.msra.mxu0 %v3068
      %3207 = vmatpush.msra.mxu0 %v3067
      %3208 = vmatpush.msra.mxu0 %v3066
      %3209 = vmatpush.msra.mxu0 %v3065
      %3210 = vmatmul.f32.gmra.mxu0 %v2829
      %v3211 = vpop.f32.mrf.mxu0
      %v3212 = vadd.f32 %v3099, %v3211
      %3213 = vmatmul.f32.gmra.mxu0 %v2833
      %v3214 = vpop.f32.mrf.mxu0
      %v3215 = vadd.f32 %v3102, %v3214
      %3216 = vmatmul.f32.gmra.mxu0 %v2839
      %v3217 = vpop.f32.mrf.mxu0
      %v3218 = vadd.f32 %v3105, %v3217
      %3219 = vmatmul.f32.gmra.mxu0 %v2843
      %v3220 = vpop.f32.mrf.mxu0
      %v3221 = vadd.f32 %v3108, %v3220
      %3222 = vmatmul.f32.gmra.mxu0 %v2849
      %v3223 = vpop.f32.mrf.mxu0
      %v3224 = vadd.f32 %v3111, %v3223
      %3225 = vmatmul.f32.gmra.mxu0 %v2853
      %v3226 = vpop.f32.mrf.mxu0
      %v3227 = vadd.f32 %v3114, %v3226
      %3228 = vmatmul.f32.gmra.mxu0 %v2859
      %v3229 = vpop.f32.mrf.mxu0
      %v3230 = vadd.f32 %v3117, %v3229
      %3231 = vmatmul.f32.gmra.mxu0 %v2863
      %v3232 = vpop.f32.mrf.mxu0
      %v3233 = vadd.f32 %v3120, %v3232
      %3234 = vmatmul.f32.gmra.mxu0 %v2869
      %v3235 = vpop.f32.mrf.mxu0
      %v3236 = vadd.f32 %v3123, %v3235
      %3237 = vmatmul.f32.gmra.mxu0 %v2873
      %v3238 = vpop.f32.mrf.mxu0
      %v3239 = vadd.f32 %v3126, %v3238
      %3240 = vmatmul.f32.gmra.mxu0 %v2879
      %v3241 = vpop.f32.mrf.mxu0
      %v3242 = vadd.f32 %v3129, %v3241
      %3243 = vmatmul.f32.gmra.mxu0 %v2883
      %v3244 = vpop.f32.mrf.mxu0
      %v3245 = vadd.f32 %v3132, %v3244
      %3246 = vmatmul.f32.gmra.mxu0 %v2889
      %v3247 = vpop.f32.mrf.mxu0
      %v3248 = vadd.f32 %v3135, %v3247
      %3249 = vmatmul.f32.gmra.mxu0 %v2893
      %v3250 = vpop.f32.mrf.mxu0
      %v3251 = vadd.f32 %v3138, %v3250
      %3252 = vmatmul.f32.gmra.mxu0 %v2899
      %v3253 = vpop.f32.mrf.mxu0
      %v3254 = vadd.f32 %v3141, %v3253
      %3255 = vmatmul.f32.gmra.mxu0 %v2903
      %v3256 = vpop.f32.mrf.mxu0
      %v3257 = vadd.f32 %v3144, %v3256
      %3258 = vmatmul.f32.gmra.mxu0 %v2909
      %v3259 = vpop.f32.mrf.mxu0
      %v3260 = vadd.f32 %v3147, %v3259
      %3261 = vmatmul.f32.gmra.mxu0 %v2913
      %v3262 = vpop.f32.mrf.mxu0
      %v3263 = vadd.f32 %v3150, %v3262
      %3264 = vmatmul.f32.gmra.mxu0 %v2919
      %v3265 = vpop.f32.mrf.mxu0
      %v3266 = vadd.f32 %v3153, %v3265
      %3267 = vmatmul.f32.gmra.mxu0 %v2923
      %v3268 = vpop.f32.mrf.mxu0
      %v3269 = vadd.f32 %v3156, %v3268
      %3270 = vmatmul.f32.gmra.mxu0 %v2929
      %v3271 = vpop.f32.mrf.mxu0
      %v3272 = vadd.f32 %v3159, %v3271
      %3273 = vmatmul.f32.gmra.mxu0 %v2933
      %v3274 = vpop.f32.mrf.mxu0
      %v3275 = vadd.f32 %v3162, %v3274
      %3276 = vmatmul.f32.gmra.mxu0 %v2939
      %v3277 = vpop.f32.mrf.mxu0
      %v3278 = vadd.f32 %v3165, %v3277
      %3279 = vmatmul.f32.gmra.mxu0 %v2943
      %v3280 = vpop.f32.mrf.mxu0
      %v3281 = vadd.f32 %v3168, %v3280
      %3282 = vmatmul.f32.gmra.mxu0 %v2949
      %v3283 = vpop.f32.mrf.mxu0
      %v3284 = vadd.f32 %v3171, %v3283
      %3285 = vmatmul.f32.gmra.mxu0 %v2953
      %v3286 = vpop.f32.mrf.mxu0
      %v3287 = vadd.f32 %v3174, %v3286
      %3288 = vmatmul.f32.gmra.mxu0 %v2959
      %v3289 = vpop.f32.mrf.mxu0
      %v3290 = vadd.f32 %v3177, %v3289
      %3291 = vmatmul.f32.gmra.mxu0 %v2963
      %v3292 = vpop.f32.mrf.mxu0
      %v3293 = vadd.f32 %v3180, %v3292
      %3294 = vmatmul.f32.gmra.mxu0 %v2969
      %v3295 = vpop.f32.mrf.mxu0
      %v3296 = vadd.f32 %v3183, %v3295
      %3297 = vmatmul.f32.gmra.mxu0 %v2973
      %v3298 = vpop.f32.mrf.mxu0
      %v3299 = vadd.f32 %v3186, %v3298
      %3300 = vmatmul.f32.gmra.mxu0 %v2979
      %v3301 = vpop.f32.mrf.mxu0
      %v3302 = vadd.f32 %v3189, %v3301
      %3303 = vmatmul.f32.gmra.mxu0 %v2983
      %v3304 = vpop.f32.mrf.mxu0
      %v3305 = vadd.f32 %v3192, %v3304
      %3306 = vdwg.mxu0
      %v3307 = vadd.f32 %v2600, %v3212
      %v3308 = vadd.f32 %v2601, %v3215
      %v3309 = vadd.f32 %v2602, %v3218
      %v3310 = vadd.f32 %v2603, %v3221
      %v3311 = vadd.f32 %v2604, %v3224
      %v3312 = vadd.f32 %v2605, %v3227
      %v3313 = vadd.f32 %v2606, %v3230
      %v3314 = vadd.f32 %v2607, %v3233
      %v3315 = vadd.f32 %v2608, %v3236
      %v3316 = vadd.f32 %v2609, %v3239
      %v3317 = vadd.f32 %v2610, %v3242
      %v3318 = vadd.f32 %v2611, %v3245
      %v3319 = vadd.f32 %v2612, %v3248
      %v3320 = vadd.f32 %v2613, %v3251
      %v3321 = vadd.f32 %v2614, %v3254
      %v3322 = vadd.f32 %v2615, %v3257
      %v3323 = vadd.f32 %v2616, %v3260
      %v3324 = vadd.f32 %v2617, %v3263
      %v3325 = vadd.f32 %v2618, %v3266
      %v3326 = vadd.f32 %v2619, %v3269
      %v3327 = vadd.f32 %v2620, %v3272
      %v3328 = vadd.f32 %v2621, %v3275
      %v3329 = vadd.f32 %v2622, %v3278
      %v3330 = vadd.f32 %v2623, %v3281
      %v3331 = vadd.f32 %v2624, %v3284
      %v3332 = vadd.f32 %v2625, %v3287
      %v3333 = vadd.f32 %v2626, %v3290
      %v3334 = vadd.f32 %v2627, %v3293
      %v3335 = vadd.f32 %v2628, %v3296
      %v3336 = vadd.f32 %v2629, %v3299
      %v3337 = vadd.f32 %v2630, %v3302
      %v3338 = vadd.f32 %v2631, %v3305
      %v3339 = vld [vmem:[%s2276] sm:$0xfc]
      %v3340 = vld [vmem:[%s2276 + $0x8] sm:$0xfc]
      %v3341 = vld [vmem:[%s2276 + $0x20] sm:$0x3]
      %v3342 = vld [vmem:[%s2276 + $0x28] sm:$0x3]
      %v3343 = vld [vmem:[%s2276 + $0x30] sm:$0xfc]
      %v3344 = vld [vmem:[%s2276 + $0x38] sm:$0xfc]
      %v3345 = vld [vmem:[%s2276 + $0x50] sm:$0x3]
      %v3346 = vld [vmem:[%s2276 + $0x58] sm:$0x3]
      %v3347 = vld [vmem:[%s2276 + $0x60] sm:$0xfc]
      %v3348 = vld [vmem:[%s2276 + $0x68] sm:$0xfc]
      %v3349 = vld [vmem:[%s2276 + $0x80] sm:$0x3]
      %v3350 = vld [vmem:[%s2276 + $0x88] sm:$0x3]
      %v3351 = vld [vmem:[%s2276 + $0x90] sm:$0xfc]
      %v3352 = vld [vmem:[%s2276 + $0x98] sm:$0xfc]
      %v3353 = vld [vmem:[%s2276 + $0xb0] sm:$0x3]
      %v3354 = vld [vmem:[%s2276 + $0xb8] sm:$0x3]
      %v3355 = vld [vmem:[%s2276 + $0xc0] sm:$0xfc]
      %v3356 = vld [vmem:[%s2276 + $0xc8] sm:$0xfc]
      %v3357 = vld [vmem:[%s2276 + $0xe0] sm:$0x3]
      %v3358 = vld [vmem:[%s2276 + $0xe8] sm:$0x3]
      %v3359 = vld [vmem:[%s2276 + $0xf0] sm:$0xfc]
      %v3360 = vld [vmem:[%s2276 + $0xf8] sm:$0xfc]
      %v3361 = vld [vmem:[%s2276 + $0x110] sm:$0x3]
      %v3362 = vld [vmem:[%s2276 + $0x118] sm:$0x3]
      %v3363 = vld [vmem:[%s2276 + $0x120] sm:$0xfc]
      %v3364 = vld [vmem:[%s2276 + $0x128] sm:$0xfc]
      %v3365 = vld [vmem:[%s2276 + $0x140] sm:$0x3]
      %v3366 = vld [vmem:[%s2276 + $0x148] sm:$0x3]
      %v3367 = vld [vmem:[%s2276 + $0x150] sm:$0xfc]
      %v3368 = vld [vmem:[%s2276 + $0x158] sm:$0xfc]
      %v3369 = vld [vmem:[%s2276 + $0x170] sm:$0x3]
      %v3370 = vld [vmem:[%s2276 + $0x178] sm:$0x3]
      %v3371 = vld [vmem:[%s2276 + $0x180] sm:$0xfc]
      %v3372 = vld [vmem:[%s2276 + $0x188] sm:$0xfc]
      %v3373 = vld [vmem:[%s2276 + $0x1a0] sm:$0x3]
      %v3374 = vld [vmem:[%s2276 + $0x1a8] sm:$0x3]
      %v3375 = vld [vmem:[%s2276 + $0x1b0] sm:$0xfc]
      %v3376 = vld [vmem:[%s2276 + $0x1b8] sm:$0xfc]
      %v3377 = vld [vmem:[%s2276 + $0x1d0] sm:$0x3]
      %v3378 = vld [vmem:[%s2276 + $0x1d8] sm:$0x3]
      %v3379 = vld [vmem:[%s2276 + $0x1e0] sm:$0xfc]
      %v3380 = vld [vmem:[%s2276 + $0x1e8] sm:$0xfc]
      %v3381 = vld [vmem:[%s2276 + $0x200] sm:$0x3]
      %v3382 = vld [vmem:[%s2276 + $0x208] sm:$0x3]
      %v3383 = vld [vmem:[%s2276 + $0x210] sm:$0xfc]
      %v3384 = vld [vmem:[%s2276 + $0x218] sm:$0xfc]
      %v3385 = vld [vmem:[%s2276 + $0x230] sm:$0x3]
      %v3386 = vld [vmem:[%s2276 + $0x238] sm:$0x3]
      %v3387 = vld [vmem:[%s2276 + $0x240] sm:$0xfc]
      %v3388 = vld [vmem:[%s2276 + $0x248] sm:$0xfc]
      %v3389 = vld [vmem:[%s2276 + $0x260] sm:$0x3]
      %v3390 = vld [vmem:[%s2276 + $0x268] sm:$0x3]
      %v3391 = vld [vmem:[%s2276 + $0x270] sm:$0xfc]
      %v3392 = vld [vmem:[%s2276 + $0x278] sm:$0xfc]
      %v3393 = vld [vmem:[%s2276 + $0x290] sm:$0x3]
      %v3394 = vld [vmem:[%s2276 + $0x298] sm:$0x3]
      %v3395 = vld [vmem:[%s2276 + $0x2a0] sm:$0xfc]
      %v3396 = vld [vmem:[%s2276 + $0x2a8] sm:$0xfc]
      %v3397 = vld [vmem:[%s2276 + $0x2c0] sm:$0x3]
      %v3398 = vld [vmem:[%s2276 + $0x2c8] sm:$0x3]
      %v3399 = vld [vmem:[%s2276 + $0x2d0] sm:$0xfc]
      %v3400 = vld [vmem:[%s2276 + $0x2d8] sm:$0xfc]
      %v3401 = vld [vmem:[%s2276 + $0x2f0] sm:$0x3]
      %v3402 = vld [vmem:[%s2276 + $0x2f8] sm:$0x3]
      %v3467 = vrot.slane %v3339, 2
      %v3468 = vrot.slane %v2634, 2
      %v3469 = vsel %vm1760, %v3467, %v3468
      %v3470 = vrot.slane %v3340, 2
      %v3471 = vrot.slane %v2635, 2
      %v3472 = vsel %vm1760, %v3470, %v3471
      %v3473 = vrot.slane %v3341, 2
      %v3474 = vsel %vm1760, %v3468, %v3473
      %v3475 = vrot.slane %v3342, 2
      %v3476 = vsel %vm1760, %v3471, %v3475
      %v3477 = vrot.slane %v3343, 2
      %v3478 = vrot.slane %v2640, 2
      %v3479 = vsel %vm1760, %v3477, %v3478
      %v3480 = vrot.slane %v3344, 2
      %v3481 = vrot.slane %v2641, 2
      %v3482 = vsel %vm1760, %v3480, %v3481
      %v3483 = vrot.slane %v3345, 2
      %v3484 = vsel %vm1760, %v3478, %v3483
      %v3485 = vrot.slane %v3346, 2
      %v3486 = vsel %vm1760, %v3481, %v3485
      %v3487 = vrot.slane %v3347, 2
      %v3488 = vrot.slane %v2646, 2
      %v3489 = vsel %vm1760, %v3487, %v3488
      %v3490 = vrot.slane %v3348, 2
      %v3491 = vrot.slane %v2647, 2
      %v3492 = vsel %vm1760, %v3490, %v3491
      %v3493 = vrot.slane %v3349, 2
      %v3494 = vsel %vm1760, %v3488, %v3493
      %v3495 = vrot.slane %v3350, 2
      %v3496 = vsel %vm1760, %v3491, %v3495
      %v3497 = vrot.slane %v3351, 2
      %v3498 = vrot.slane %v2652, 2
      %v3499 = vsel %vm1760, %v3497, %v3498
      %v3500 = vrot.slane %v3352, 2
      %v3501 = vrot.slane %v2653, 2
      %v3502 = vsel %vm1760, %v3500, %v3501
      %v3503 = vrot.slane %v3353, 2
      %v3504 = vsel %vm1760, %v3498, %v3503
      %v3505 = vrot.slane %v3354, 2
      %v3506 = vsel %vm1760, %v3501, %v3505
      %v3507 = vrot.slane %v3355, 2
      %v3508 = vrot.slane %v2658, 2
      %v3509 = vsel %vm1760, %v3507, %v3508
      %v3510 = vrot.slane %v3356, 2
      %v3511 = vrot.slane %v2659, 2
      %v3512 = vsel %vm1760, %v3510, %v3511
      %v3513 = vrot.slane %v3357, 2
      %v3514 = vsel %vm1760, %v3508, %v3513
      %v3515 = vrot.slane %v3358, 2
      %v3516 = vsel %vm1760, %v3511, %v3515
      %v3517 = vrot.slane %v3359, 2
      %v3518 = vrot.slane %v2664, 2
      %v3519 = vsel %vm1760, %v3517, %v3518
      %v3520 = vrot.slane %v3360, 2
      %v3521 = vrot.slane %v2665, 2
      %v3522 = vsel %vm1760, %v3520, %v3521
      %v3523 = vrot.slane %v3361, 2
      %v3524 = vsel %vm1760, %v3518, %v3523
      %v3525 = vrot.slane %v3362, 2
      %v3526 = vsel %vm1760, %v3521, %v3525
      %v3527 = vrot.slane %v3363, 2
      %v3528 = vrot.slane %v2670, 2
      %v3529 = vsel %vm1760, %v3527, %v3528
      %v3530 = vrot.slane %v3364, 2
      %v3531 = vrot.slane %v2671, 2
      %v3532 = vsel %vm1760, %v3530, %v3531
      %v3533 = vrot.slane %v3365, 2
      %v3534 = vsel %vm1760, %v3528, %v3533
      %v3535 = vrot.slane %v3366, 2
      %v3536 = vsel %vm1760, %v3531, %v3535
      %v3537 = vrot.slane %v3367, 2
      %v3538 = vrot.slane %v2676, 2
      %v3539 = vsel %vm1760, %v3537, %v3538
      %v3540 = vrot.slane %v3368, 2
      %v3541 = vrot.slane %v2677, 2
      %v3542 = vsel %vm1760, %v3540, %v3541
      %v3543 = vrot.slane %v3369, 2
      %v3544 = vsel %vm1760, %v3538, %v3543
      %v3545 = vrot.slane %v3370, 2
      %v3546 = vsel %vm1760, %v3541, %v3545
      %v3547 = vrot.slane %v3371, 2
      %v3548 = vrot.slane %v2682, 2
      %v3549 = vsel %vm1760, %v3547, %v3548
      %v3550 = vrot.slane %v3372, 2
      %v3551 = vrot.slane %v2683, 2
      %v3552 = vsel %vm1760, %v3550, %v3551
      %v3553 = vrot.slane %v3373, 2
      %v3554 = vsel %vm1760, %v3548, %v3553
      %v3555 = vrot.slane %v3374, 2
      %v3556 = vsel %vm1760, %v3551, %v3555
      %v3557 = vrot.slane %v3375, 2
      %v3558 = vrot.slane %v2688, 2
      %v3559 = vsel %vm1760, %v3557, %v3558
      %v3560 = vrot.slane %v3376, 2
      %v3561 = vrot.slane %v2689, 2
      %v3562 = vsel %vm1760, %v3560, %v3561
      %v3563 = vrot.slane %v3377, 2
      %v3564 = vsel %vm1760, %v3558, %v3563
      %v3565 = vrot.slane %v3378, 2
      %v3566 = vsel %vm1760, %v3561, %v3565
      %v3567 = vrot.slane %v3379, 2
      %v3568 = vrot.slane %v2694, 2
      %v3569 = vsel %vm1760, %v3567, %v3568
      %v3570 = vrot.slane %v3380, 2
      %v3571 = vrot.slane %v2695, 2
      %v3572 = vsel %vm1760, %v3570, %v3571
      %v3573 = vrot.slane %v3381, 2
      %v3574 = vsel %vm1760, %v3568, %v3573
      %v3575 = vrot.slane %v3382, 2
      %v3576 = vsel %vm1760, %v3571, %v3575
      %v3577 = vrot.slane %v3383, 2
      %v3578 = vrot.slane %v2700, 2
      %v3579 = vsel %vm1760, %v3577, %v3578
      %v3580 = vrot.slane %v3384, 2
      %v3581 = vrot.slane %v2701, 2
      %v3582 = vsel %vm1760, %v3580, %v3581
      %v3583 = vrot.slane %v3385, 2
      %v3584 = vsel %vm1760, %v3578, %v3583
      %v3585 = vrot.slane %v3386, 2
      %v3586 = vsel %vm1760, %v3581, %v3585
      %v3587 = vrot.slane %v3387, 2
      %v3588 = vrot.slane %v2706, 2
      %v3589 = vsel %vm1760, %v3587, %v3588
      %v3590 = vrot.slane %v3388, 2
      %v3591 = vrot.slane %v2707, 2
      %v3592 = vsel %vm1760, %v3590, %v3591
      %v3593 = vrot.slane %v3389, 2
      %v3594 = vsel %vm1760, %v3588, %v3593
      %v3595 = vrot.slane %v3390, 2
      %v3596 = vsel %vm1760, %v3591, %v3595
      %v3597 = vrot.slane %v3391, 2
      %v3598 = vrot.slane %v2712, 2
      %v3599 = vsel %vm1760, %v3597, %v3598
      %v3600 = vrot.slane %v3392, 2
      %v3601 = vrot.slane %v2713, 2
      %v3602 = vsel %vm1760, %v3600, %v3601
      %v3603 = vrot.slane %v3393, 2
      %v3604 = vsel %vm1760, %v3598, %v3603
      %v3605 = vrot.slane %v3394, 2
      %v3606 = vsel %vm1760, %v3601, %v3605
      %v3607 = vrot.slane %v3395, 2
      %v3608 = vrot.slane %v2718, 2
      %v3609 = vsel %vm1760, %v3607, %v3608
      %v3610 = vrot.slane %v3396, 2
      %v3611 = vrot.slane %v2719, 2
      %v3612 = vsel %vm1760, %v3610, %v3611
      %v3613 = vrot.slane %v3397, 2
      %v3614 = vsel %vm1760, %v3608, %v3613
      %v3615 = vrot.slane %v3398, 2
      %v3616 = vsel %vm1760, %v3611, %v3615
      %v3617 = vrot.slane %v3399, 2
      %v3618 = vrot.slane %v2724, 2
      %v3619 = vsel %vm1760, %v3617, %v3618
      %v3620 = vrot.slane %v3400, 2
      %v3621 = vrot.slane %v2725, 2
      %v3622 = vsel %vm1760, %v3620, %v3621
      %v3623 = vrot.slane %v3401, 2
      %v3624 = vsel %vm1760, %v3618, %v3623
      %v3625 = vrot.slane %v3402, 2
      %v3626 = vsel %vm1760, %v3621, %v3625
      %s3691 = scalar_lea.vmem %s3, 1280
      %v3692 = vld [vmem:[%s3691] sm:$0xff]
      %v3693 = vld [vmem:[%s3691 + $0x8] sm:$0xff]
      %v3694 = vld [vmem:[%s3691 + $0x10] sm:$0xff]
      %v3695 = vld [vmem:[%s3691 + $0x18] sm:$0xff]
      %v3696 = vld [vmem:[%s3691 + $0x20] sm:$0xff]
      %v3697 = vld [vmem:[%s3691 + $0x28] sm:$0xff]
      %v3698 = vld [vmem:[%s3691 + $0x30] sm:$0xff]
      %v3699 = vld [vmem:[%s3691 + $0x38] sm:$0xff]
      %v3700 = vld [vmem:[%s3691 + $0x40] sm:$0xff]
      %v3701 = vld [vmem:[%s3691 + $0x48] sm:$0xff]
      %v3702 = vld [vmem:[%s3691 + $0x50] sm:$0xff]
      %v3703 = vld [vmem:[%s3691 + $0x58] sm:$0xff]
      %v3704 = vld [vmem:[%s3691 + $0x60] sm:$0xff]
      %v3705 = vld [vmem:[%s3691 + $0x68] sm:$0xff]
      %v3706 = vld [vmem:[%s3691 + $0x70] sm:$0xff]
      %v3707 = vld [vmem:[%s3691 + $0x78] sm:$0xff]
      %v3708 = vld [vmem:[%s3691 + $0x80] sm:$0xff]
      %v3709 = vld [vmem:[%s3691 + $0x88] sm:$0xff]
      %v3710 = vld [vmem:[%s3691 + $0x90] sm:$0xff]
      %v3711 = vld [vmem:[%s3691 + $0x98] sm:$0xff]
      %v3712 = vld [vmem:[%s3691 + $0xa0] sm:$0xff]
      %v3713 = vld [vmem:[%s3691 + $0xa8] sm:$0xff]
      %v3714 = vld [vmem:[%s3691 + $0xb0] sm:$0xff]
      %v3715 = vld [vmem:[%s3691 + $0xb8] sm:$0xff]
      %v3716 = vld [vmem:[%s3691 + $0xc0] sm:$0xff]
      %v3717 = vld [vmem:[%s3691 + $0xc8] sm:$0xff]
      %v3718 = vld [vmem:[%s3691 + $0xd0] sm:$0xff]
      %v3719 = vld [vmem:[%s3691 + $0xd8] sm:$0xff]
      %v3720 = vld [vmem:[%s3691 + $0xe0] sm:$0xff]
      %v3721 = vld [vmem:[%s3691 + $0xe8] sm:$0xff]
      %v3722 = vld [vmem:[%s3691 + $0xf0] sm:$0xff]
      %v3723 = vld [vmem:[%s3691 + $0xf8] sm:$0xff]
      %3724 = vmatpush.msra.mxu0 %v3707
      %3725 = vmatpush.msra.mxu0 %v3706
      %3726 = vmatpush.msra.mxu0 %v3705
      %3727 = vmatpush.msra.mxu0 %v3704
      %3728 = vmatpush.msra.mxu0 %v3703
      %3729 = vmatpush.msra.mxu0 %v3702
      %3730 = vmatpush.msra.mxu0 %v3701
      %3731 = vmatpush.msra.mxu0 %v3700
      %3732 = vmatpush.msra.mxu0 %v3699
      %3733 = vmatpush.msra.mxu0 %v3698
      %3734 = vmatpush.msra.mxu0 %v3697
      %3735 = vmatpush.msra.mxu0 %v3696
      %3736 = vmatpush.msra.mxu0 %v3695
      %3737 = vmatpush.msra.mxu0 %v3694
      %3738 = vmatpush.msra.mxu0 %v3693
      %3739 = vmatpush.msra.mxu0 %v3692
      %3740 = vmatmul.f32.gmra.mxu0 %v3469
      %v3741 = vpop.f32.mrf.mxu0
      %v3742 = vadd.f32 0.0, %v3741
      %3743 = vmatmul.f32.gmra.mxu0 %v3474
      %v3744 = vpop.f32.mrf.mxu0
      %v3745 = vadd.f32 0.0, %v3744
      %3746 = vmatmul.f32.gmra.mxu0 %v3479
      %v3747 = vpop.f32.mrf.mxu0
      %v3748 = vadd.f32 0.0, %v3747
      %3749 = vmatmul.f32.gmra.mxu0 %v3484
      %v3750 = vpop.f32.mrf.mxu0
      %v3751 = vadd.f32 0.0, %v3750
      %3752 = vmatmul.f32.gmra.mxu0 %v3489
      %v3753 = vpop.f32.mrf.mxu0
      %v3754 = vadd.f32 0.0, %v3753
      %3755 = vmatmul.f32.gmra.mxu0 %v3494
      %v3756 = vpop.f32.mrf.mxu0
      %v3757 = vadd.f32 0.0, %v3756
      %3758 = vmatmul.f32.gmra.mxu0 %v3499
      %v3759 = vpop.f32.mrf.mxu0
      %v3760 = vadd.f32 0.0, %v3759
      %3761 = vmatmul.f32.gmra.mxu0 %v3504
      %v3762 = vpop.f32.mrf.mxu0
      %v3763 = vadd.f32 0.0, %v3762
      %3764 = vmatmul.f32.gmra.mxu0 %v3509
      %v3765 = vpop.f32.mrf.mxu0
      %v3766 = vadd.f32 0.0, %v3765
      %3767 = vmatmul.f32.gmra.mxu0 %v3514
      %v3768 = vpop.f32.mrf.mxu0
      %v3769 = vadd.f32 0.0, %v3768
      %3770 = vmatmul.f32.gmra.mxu0 %v3519
      %v3771 = vpop.f32.mrf.mxu0
      %v3772 = vadd.f32 0.0, %v3771
      %3773 = vmatmul.f32.gmra.mxu0 %v3524
      %v3774 = vpop.f32.mrf.mxu0
      %v3775 = vadd.f32 0.0, %v3774
      %3776 = vmatmul.f32.gmra.mxu0 %v3529
      %v3777 = vpop.f32.mrf.mxu0
      %v3778 = vadd.f32 0.0, %v3777
      %3779 = vmatmul.f32.gmra.mxu0 %v3534
      %v3780 = vpop.f32.mrf.mxu0
      %v3781 = vadd.f32 0.0, %v3780
      %3782 = vmatmul.f32.gmra.mxu0 %v3539
      %v3783 = vpop.f32.mrf.mxu0
      %v3784 = vadd.f32 0.0, %v3783
      %3785 = vmatmul.f32.gmra.mxu0 %v3544
      %v3786 = vpop.f32.mrf.mxu0
      %v3787 = vadd.f32 0.0, %v3786
      %3788 = vmatmul.f32.gmra.mxu0 %v3549
      %v3789 = vpop.f32.mrf.mxu0
      %v3790 = vadd.f32 0.0, %v3789
      %3791 = vmatmul.f32.gmra.mxu0 %v3554
      %v3792 = vpop.f32.mrf.mxu0
      %v3793 = vadd.f32 0.0, %v3792
      %3794 = vmatmul.f32.gmra.mxu0 %v3559
      %v3795 = vpop.f32.mrf.mxu0
      %v3796 = vadd.f32 0.0, %v3795
      %3797 = vmatmul.f32.gmra.mxu0 %v3564
      %v3798 = vpop.f32.mrf.mxu0
      %v3799 = vadd.f32 0.0, %v3798
      %3800 = vmatmul.f32.gmra.mxu0 %v3569
      %v3801 = vpop.f32.mrf.mxu0
      %v3802 = vadd.f32 0.0, %v3801
      %3803 = vmatmul.f32.gmra.mxu0 %v3574
      %v3804 = vpop.f32.mrf.mxu0
      %v3805 = vadd.f32 0.0, %v3804
      %3806 = vmatmul.f32.gmra.mxu0 %v3579
      %v3807 = vpop.f32.mrf.mxu0
      %v3808 = vadd.f32 0.0, %v3807
      %3809 = vmatmul.f32.gmra.mxu0 %v3584
      %v3810 = vpop.f32.mrf.mxu0
      %v3811 = vadd.f32 0.0, %v3810
      %3812 = vmatmul.f32.gmra.mxu0 %v3589
      %v3813 = vpop.f32.mrf.mxu0
      %v3814 = vadd.f32 0.0, %v3813
      %3815 = vmatmul.f32.gmra.mxu0 %v3594
      %v3816 = vpop.f32.mrf.mxu0
      %v3817 = vadd.f32 0.0, %v3816
      %3818 = vmatmul.f32.gmra.mxu0 %v3599
      %v3819 = vpop.f32.mrf.mxu0
      %v3820 = vadd.f32 0.0, %v3819
      %3821 = vmatmul.f32.gmra.mxu0 %v3604
      %v3822 = vpop.f32.mrf.mxu0
      %v3823 = vadd.f32 0.0, %v3822
      %3824 = vmatmul.f32.gmra.mxu0 %v3609
      %v3825 = vpop.f32.mrf.mxu0
      %v3826 = vadd.f32 0.0, %v3825
      %3827 = vmatmul.f32.gmra.mxu0 %v3614
      %v3828 = vpop.f32.mrf.mxu0
      %v3829 = vadd.f32 0.0, %v3828
      %3830 = vmatmul.f32.gmra.mxu0 %v3619
      %v3831 = vpop.f32.mrf.mxu0
      %v3832 = vadd.f32 0.0, %v3831
      %3833 = vmatmul.f32.gmra.mxu0 %v3624
      %v3834 = vpop.f32.mrf.mxu0
      %v3835 = vadd.f32 0.0, %v3834
      %3836 = vdwg.mxu0
      %3837 = vmatpush.msra.mxu0 %v3723
      %3838 = vmatpush.msra.mxu0 %v3722
      %3839 = vmatpush.msra.mxu0 %v3721
      %3840 = vmatpush.msra.mxu0 %v3720
      %3841 = vmatpush.msra.mxu0 %v3719
      %3842 = vmatpush.msra.mxu0 %v3718
      %3843 = vmatpush.msra.mxu0 %v3717
      %3844 = vmatpush.msra.mxu0 %v3716
      %3845 = vmatpush.msra.mxu0 %v3715
      %3846 = vmatpush.msra.mxu0 %v3714
      %3847 = vmatpush.msra.mxu0 %v3713
      %3848 = vmatpush.msra.mxu0 %v3712
      %3849 = vmatpush.msra.mxu0 %v3711
      %3850 = vmatpush.msra.mxu0 %v3710
      %3851 = vmatpush.msra.mxu0 %v3709
      %3852 = vmatpush.msra.mxu0 %v3708
      %3853 = vmatmul.f32.gmra.mxu0 %v3472
      %v3854 = vpop.f32.mrf.mxu0
      %v3855 = vadd.f32 %v3742, %v3854
      %3856 = vmatmul.f32.gmra.mxu0 %v3476
      %v3857 = vpop.f32.mrf.mxu0
      %v3858 = vadd.f32 %v3745, %v3857
      %3859 = vmatmul.f32.gmra.mxu0 %v3482
      %v3860 = vpop.f32.mrf.mxu0
      %v3861 = vadd.f32 %v3748, %v3860
      %3862 = vmatmul.f32.gmra.mxu0 %v3486
      %v3863 = vpop.f32.mrf.mxu0
      %v3864 = vadd.f32 %v3751, %v3863
      %3865 = vmatmul.f32.gmra.mxu0 %v3492
      %v3866 = vpop.f32.mrf.mxu0
      %v3867 = vadd.f32 %v3754, %v3866
      %3868 = vmatmul.f32.gmra.mxu0 %v3496
      %v3869 = vpop.f32.mrf.mxu0
      %v3870 = vadd.f32 %v3757, %v3869
      %3871 = vmatmul.f32.gmra.mxu0 %v3502
      %v3872 = vpop.f32.mrf.mxu0
      %v3873 = vadd.f32 %v3760, %v3872
      %3874 = vmatmul.f32.gmra.mxu0 %v3506
      %v3875 = vpop.f32.mrf.mxu0
      %v3876 = vadd.f32 %v3763, %v3875
      %3877 = vmatmul.f32.gmra.mxu0 %v3512
      %v3878 = vpop.f32.mrf.mxu0
      %v3879 = vadd.f32 %v3766, %v3878
      %3880 = vmatmul.f32.gmra.mxu0 %v3516
      %v3881 = vpop.f32.mrf.mxu0
      %v3882 = vadd.f32 %v3769, %v3881
      %3883 = vmatmul.f32.gmra.mxu0 %v3522
      %v3884 = vpop.f32.mrf.mxu0
      %v3885 = vadd.f32 %v3772, %v3884
      %3886 = vmatmul.f32.gmra.mxu0 %v3526
      %v3887 = vpop.f32.mrf.mxu0
      %v3888 = vadd.f32 %v3775, %v3887
      %3889 = vmatmul.f32.gmra.mxu0 %v3532
      %v3890 = vpop.f32.mrf.mxu0
      %v3891 = vadd.f32 %v3778, %v3890
      %3892 = vmatmul.f32.gmra.mxu0 %v3536
      %v3893 = vpop.f32.mrf.mxu0
      %v3894 = vadd.f32 %v3781, %v3893
      %3895 = vmatmul.f32.gmra.mxu0 %v3542
      %v3896 = vpop.f32.mrf.mxu0
      %v3897 = vadd.f32 %v3784, %v3896
      %3898 = vmatmul.f32.gmra.mxu0 %v3546
      %v3899 = vpop.f32.mrf.mxu0
      %v3900 = vadd.f32 %v3787, %v3899
      %3901 = vmatmul.f32.gmra.mxu0 %v3552
      %v3902 = vpop.f32.mrf.mxu0
      %v3903 = vadd.f32 %v3790, %v3902
      %3904 = vmatmul.f32.gmra.mxu0 %v3556
      %v3905 = vpop.f32.mrf.mxu0
      %v3906 = vadd.f32 %v3793, %v3905
      %3907 = vmatmul.f32.gmra.mxu0 %v3562
      %v3908 = vpop.f32.mrf.mxu0
      %v3909 = vadd.f32 %v3796, %v3908
      %3910 = vmatmul.f32.gmra.mxu0 %v3566
      %v3911 = vpop.f32.mrf.mxu0
      %v3912 = vadd.f32 %v3799, %v3911
      %3913 = vmatmul.f32.gmra.mxu0 %v3572
      %v3914 = vpop.f32.mrf.mxu0
      %v3915 = vadd.f32 %v3802, %v3914
      %3916 = vmatmul.f32.gmra.mxu0 %v3576
      %v3917 = vpop.f32.mrf.mxu0
      %v3918 = vadd.f32 %v3805, %v3917
      %3919 = vmatmul.f32.gmra.mxu0 %v3582
      %v3920 = vpop.f32.mrf.mxu0
      %v3921 = vadd.f32 %v3808, %v3920
      %3922 = vmatmul.f32.gmra.mxu0 %v3586
      %v3923 = vpop.f32.mrf.mxu0
      %v3924 = vadd.f32 %v3811, %v3923
      %3925 = vmatmul.f32.gmra.mxu0 %v3592
      %v3926 = vpop.f32.mrf.mxu0
      %v3927 = vadd.f32 %v3814, %v3926
      %3928 = vmatmul.f32.gmra.mxu0 %v3596
      %v3929 = vpop.f32.mrf.mxu0
      %v3930 = vadd.f32 %v3817, %v3929
      %3931 = vmatmul.f32.gmra.mxu0 %v3602
      %v3932 = vpop.f32.mrf.mxu0
      %v3933 = vadd.f32 %v3820, %v3932
      %3934 = vmatmul.f32.gmra.mxu0 %v3606
      %v3935 = vpop.f32.mrf.mxu0
      %v3936 = vadd.f32 %v3823, %v3935
      %3937 = vmatmul.f32.gmra.mxu0 %v3612
      %v3938 = vpop.f32.mrf.mxu0
      %v3939 = vadd.f32 %v3826, %v3938
      %3940 = vmatmul.f32.gmra.mxu0 %v3616
      %v3941 = vpop.f32.mrf.mxu0
      %v3942 = vadd.f32 %v3829, %v3941
      %3943 = vmatmul.f32.gmra.mxu0 %v3622
      %v3944 = vpop.f32.mrf.mxu0
      %v3945 = vadd.f32 %v3832, %v3944
      %3946 = vmatmul.f32.gmra.mxu0 %v3626
      %v3947 = vpop.f32.mrf.mxu0
      %v3948 = vadd.f32 %v3835, %v3947
      %3949 = vdwg.mxu0
      %v3950 = vadd.f32 %v3307, %v3855
      %v3951 = vadd.f32 %v3308, %v3858
      %v3952 = vadd.f32 %v3309, %v3861
      %v3953 = vadd.f32 %v3310, %v3864
      %v3954 = vadd.f32 %v3311, %v3867
      %v3955 = vadd.f32 %v3312, %v3870
      %v3956 = vadd.f32 %v3313, %v3873
      %v3957 = vadd.f32 %v3314, %v3876
      %v3958 = vadd.f32 %v3315, %v3879
      %v3959 = vadd.f32 %v3316, %v3882
      %v3960 = vadd.f32 %v3317, %v3885
      %v3961 = vadd.f32 %v3318, %v3888
      %v3962 = vadd.f32 %v3319, %v3891
      %v3963 = vadd.f32 %v3320, %v3894
      %v3964 = vadd.f32 %v3321, %v3897
      %v3965 = vadd.f32 %v3322, %v3900
      %v3966 = vadd.f32 %v3323, %v3903
      %v3967 = vadd.f32 %v3324, %v3906
      %v3968 = vadd.f32 %v3325, %v3909
      %v3969 = vadd.f32 %v3326, %v3912
      %v3970 = vadd.f32 %v3327, %v3915
      %v3971 = vadd.f32 %v3328, %v3918
      %v3972 = vadd.f32 %v3329, %v3921
      %v3973 = vadd.f32 %v3330, %v3924
      %v3974 = vadd.f32 %v3331, %v3927
      %v3975 = vadd.f32 %v3332, %v3930
      %v3976 = vadd.f32 %v3333, %v3933
      %v3977 = vadd.f32 %v3334, %v3936
      %v3978 = vadd.f32 %v3335, %v3939
      %v3979 = vadd.f32 %v3336, %v3942
      %v3980 = vadd.f32 %v3337, %v3945
      %v3981 = vadd.f32 %v3338, %v3948
      %s3982 = scalar_lea.vmem [#allocation2], 96
      %v3983 = vld [vmem:[%s3982] sm:$0xff]
      %v3984 = vld [vmem:[%s3982 + $0x8] sm:$0xff]
      %v3985 = vld [vmem:[%s3982 + $0x10] sm:$0xff]
      %v3986 = vld [vmem:[%s3982 + $0x18] sm:$0xff]
      %v3987 = vld [vmem:[%s3982 + $0x30] sm:$0xff]
      %v3988 = vld [vmem:[%s3982 + $0x38] sm:$0xff]
      %v3989 = vld [vmem:[%s3982 + $0x40] sm:$0xff]
      %v3990 = vld [vmem:[%s3982 + $0x48] sm:$0xff]
      %v3991 = vld [vmem:[%s3982 + $0x60] sm:$0xff]
      %v3992 = vld [vmem:[%s3982 + $0x68] sm:$0xff]
      %v3993 = vld [vmem:[%s3982 + $0x70] sm:$0xff]
      %v3994 = vld [vmem:[%s3982 + $0x78] sm:$0xff]
      %v3995 = vld [vmem:[%s3982 + $0x90] sm:$0xff]
      %v3996 = vld [vmem:[%s3982 + $0x98] sm:$0xff]
      %v3997 = vld [vmem:[%s3982 + $0xa0] sm:$0xff]
      %v3998 = vld [vmem:[%s3982 + $0xa8] sm:$0xff]
      %v3999 = vld [vmem:[%s3982 + $0xc0] sm:$0xff]
      %v4000 = vld [vmem:[%s3982 + $0xc8] sm:$0xff]
      %v4001 = vld [vmem:[%s3982 + $0xd0] sm:$0xff]
      %v4002 = vld [vmem:[%s3982 + $0xd8] sm:$0xff]
      %v4003 = vld [vmem:[%s3982 + $0xf0] sm:$0xff]
      %v4004 = vld [vmem:[%s3982 + $0xf8] sm:$0xff]
      %v4005 = vld [vmem:[%s3982 + $0x100] sm:$0xff]
      %v4006 = vld [vmem:[%s3982 + $0x108] sm:$0xff]
      %v4007 = vld [vmem:[%s3982 + $0x120] sm:$0xff]
      %v4008 = vld [vmem:[%s3982 + $0x128] sm:$0xff]
      %v4009 = vld [vmem:[%s3982 + $0x130] sm:$0xff]
      %v4010 = vld [vmem:[%s3982 + $0x138] sm:$0xff]
      %v4011 = vld [vmem:[%s3982 + $0x150] sm:$0xff]
      %v4012 = vld [vmem:[%s3982 + $0x158] sm:$0xff]
      %v4013 = vld [vmem:[%s3982 + $0x160] sm:$0xff]
      %v4014 = vld [vmem:[%s3982 + $0x168] sm:$0xff]
      %v4015 = vld [vmem:[%s3982 + $0x180] sm:$0xff]
      %v4016 = vld [vmem:[%s3982 + $0x188] sm:$0xff]
      %v4017 = vld [vmem:[%s3982 + $0x190] sm:$0xff]
      %v4018 = vld [vmem:[%s3982 + $0x198] sm:$0xff]
      %v4019 = vld [vmem:[%s3982 + $0x1b0] sm:$0xff]
      %v4020 = vld [vmem:[%s3982 + $0x1b8] sm:$0xff]
      %v4021 = vld [vmem:[%s3982 + $0x1c0] sm:$0xff]
      %v4022 = vld [vmem:[%s3982 + $0x1c8] sm:$0xff]
      %v4023 = vld [vmem:[%s3982 + $0x1e0] sm:$0xff]
      %v4024 = vld [vmem:[%s3982 + $0x1e8] sm:$0xff]
      %v4025 = vld [vmem:[%s3982 + $0x1f0] sm:$0xff]
      %v4026 = vld [vmem:[%s3982 + $0x1f8] sm:$0xff]
      %v4027 = vld [vmem:[%s3982 + $0x210] sm:$0xff]
      %v4028 = vld [vmem:[%s3982 + $0x218] sm:$0xff]
      %v4029 = vld [vmem:[%s3982 + $0x220] sm:$0xff]
      %v4030 = vld [vmem:[%s3982 + $0x228] sm:$0xff]
      %v4031 = vld [vmem:[%s3982 + $0x240] sm:$0xff]
      %v4032 = vld [vmem:[%s3982 + $0x248] sm:$0xff]
      %v4033 = vld [vmem:[%s3982 + $0x250] sm:$0xff]
      %v4034 = vld [vmem:[%s3982 + $0x258] sm:$0xff]
      %v4035 = vld [vmem:[%s3982 + $0x270] sm:$0xff]
      %v4036 = vld [vmem:[%s3982 + $0x278] sm:$0xff]
      %v4037 = vld [vmem:[%s3982 + $0x280] sm:$0xff]
      %v4038 = vld [vmem:[%s3982 + $0x288] sm:$0xff]
      %v4039 = vld [vmem:[%s3982 + $0x2a0] sm:$0xff]
      %v4040 = vld [vmem:[%s3982 + $0x2a8] sm:$0xff]
      %v4041 = vld [vmem:[%s3982 + $0x2b0] sm:$0xff]
      %v4042 = vld [vmem:[%s3982 + $0x2b8] sm:$0xff]
      %v4043 = vld [vmem:[%s3982 + $0x2d0] sm:$0xff]
      %v4044 = vld [vmem:[%s3982 + $0x2d8] sm:$0xff]
      %v4045 = vld [vmem:[%s3982 + $0x2e0] sm:$0xff]
      %v4046 = vld [vmem:[%s3982 + $0x2e8] sm:$0xff]
      %s4047 = scalar_lea.vmem %s3, 1536
      %v4048 = vld [vmem:[%s4047] sm:$0xff]
      %v4049 = vld [vmem:[%s4047 + $0x8] sm:$0xff]
      %v4050 = vld [vmem:[%s4047 + $0x10] sm:$0xff]
      %v4051 = vld [vmem:[%s4047 + $0x18] sm:$0xff]
      %v4052 = vld [vmem:[%s4047 + $0x20] sm:$0xff]
      %v4053 = vld [vmem:[%s4047 + $0x28] sm:$0xff]
      %v4054 = vld [vmem:[%s4047 + $0x30] sm:$0xff]
      %v4055 = vld [vmem:[%s4047 + $0x38] sm:$0xff]
      %v4056 = vld [vmem:[%s4047 + $0x40] sm:$0xff]
      %v4057 = vld [vmem:[%s4047 + $0x48] sm:$0xff]
      %v4058 = vld [vmem:[%s4047 + $0x50] sm:$0xff]
      %v4059 = vld [vmem:[%s4047 + $0x58] sm:$0xff]
      %v4060 = vld [vmem:[%s4047 + $0x60] sm:$0xff]
      %v4061 = vld [vmem:[%s4047 + $0x68] sm:$0xff]
      %v4062 = vld [vmem:[%s4047 + $0x70] sm:$0xff]
      %v4063 = vld [vmem:[%s4047 + $0x78] sm:$0xff]
      %v4064 = vld [vmem:[%s4047 + $0x80] sm:$0xff]
      %v4065 = vld [vmem:[%s4047 + $0x88] sm:$0xff]
      %v4066 = vld [vmem:[%s4047 + $0x90] sm:$0xff]
      %v4067 = vld [vmem:[%s4047 + $0x98] sm:$0xff]
      %v4068 = vld [vmem:[%s4047 + $0xa0] sm:$0xff]
      %v4069 = vld [vmem:[%s4047 + $0xa8] sm:$0xff]
      %v4070 = vld [vmem:[%s4047 + $0xb0] sm:$0xff]
      %v4071 = vld [vmem:[%s4047 + $0xb8] sm:$0xff]
      %v4072 = vld [vmem:[%s4047 + $0xc0] sm:$0xff]
      %v4073 = vld [vmem:[%s4047 + $0xc8] sm:$0xff]
      %v4074 = vld [vmem:[%s4047 + $0xd0] sm:$0xff]
      %v4075 = vld [vmem:[%s4047 + $0xd8] sm:$0xff]
      %v4076 = vld [vmem:[%s4047 + $0xe0] sm:$0xff]
      %v4077 = vld [vmem:[%s4047 + $0xe8] sm:$0xff]
      %v4078 = vld [vmem:[%s4047 + $0xf0] sm:$0xff]
      %v4079 = vld [vmem:[%s4047 + $0xf8] sm:$0xff]
      %4080 = vmatpush.msra.mxu0 %v4063
      %4081 = vmatpush.msra.mxu0 %v4062
      %4082 = vmatpush.msra.mxu0 %v4061
      %4083 = vmatpush.msra.mxu0 %v4060
      %4084 = vmatpush.msra.mxu0 %v4059
      %4085 = vmatpush.msra.mxu0 %v4058
      %4086 = vmatpush.msra.mxu0 %v4057
      %4087 = vmatpush.msra.mxu0 %v4056
      %4088 = vmatpush.msra.mxu0 %v4055
      %4089 = vmatpush.msra.mxu0 %v4054
      %4090 = vmatpush.msra.mxu0 %v4053
      %4091 = vmatpush.msra.mxu0 %v4052
      %4092 = vmatpush.msra.mxu0 %v4051
      %4093 = vmatpush.msra.mxu0 %v4050
      %4094 = vmatpush.msra.mxu0 %v4049
      %4095 = vmatpush.msra.mxu0 %v4048
      %4096 = vmatmul.f32.gmra.mxu0 %v3983
      %v4097 = vpop.f32.mrf.mxu0
      %v4098 = vadd.f32 0.0, %v4097
      %4099 = vmatmul.f32.gmra.mxu0 %v3985
      %v4100 = vpop.f32.mrf.mxu0
      %v4101 = vadd.f32 0.0, %v4100
      %4102 = vmatmul.f32.gmra.mxu0 %v3987
      %v4103 = vpop.f32.mrf.mxu0
      %v4104 = vadd.f32 0.0, %v4103
      %4105 = vmatmul.f32.gmra.mxu0 %v3989
      %v4106 = vpop.f32.mrf.mxu0
      %v4107 = vadd.f32 0.0, %v4106
      %4108 = vmatmul.f32.gmra.mxu0 %v3991
      %v4109 = vpop.f32.mrf.mxu0
      %v4110 = vadd.f32 0.0, %v4109
      %4111 = vmatmul.f32.gmra.mxu0 %v3993
      %v4112 = vpop.f32.mrf.mxu0
      %v4113 = vadd.f32 0.0, %v4112
      %4114 = vmatmul.f32.gmra.mxu0 %v3995
      %v4115 = vpop.f32.mrf.mxu0
      %v4116 = vadd.f32 0.0, %v4115
      %4117 = vmatmul.f32.gmra.mxu0 %v3997
      %v4118 = vpop.f32.mrf.mxu0
      %v4119 = vadd.f32 0.0, %v4118
      %4120 = vmatmul.f32.gmra.mxu0 %v3999
      %v4121 = vpop.f32.mrf.mxu0
      %v4122 = vadd.f32 0.0, %v4121
      %4123 = vmatmul.f32.gmra.mxu0 %v4001
      %v4124 = vpop.f32.mrf.mxu0
      %v4125 = vadd.f32 0.0, %v4124
      %4126 = vmatmul.f32.gmra.mxu0 %v4003
      %v4127 = vpop.f32.mrf.mxu0
      %v4128 = vadd.f32 0.0, %v4127
      %4129 = vmatmul.f32.gmra.mxu0 %v4005
      %v4130 = vpop.f32.mrf.mxu0
      %v4131 = vadd.f32 0.0, %v4130
      %4132 = vmatmul.f32.gmra.mxu0 %v4007
      %v4133 = vpop.f32.mrf.mxu0
      %v4134 = vadd.f32 0.0, %v4133
      %4135 = vmatmul.f32.gmra.mxu0 %v4009
      %v4136 = vpop.f32.mrf.mxu0
      %v4137 = vadd.f32 0.0, %v4136
      %4138 = vmatmul.f32.gmra.mxu0 %v4011
      %v4139 = vpop.f32.mrf.mxu0
      %v4140 = vadd.f32 0.0, %v4139
      %4141 = vmatmul.f32.gmra.mxu0 %v4013
      %v4142 = vpop.f32.mrf.mxu0
      %v4143 = vadd.f32 0.0, %v4142
      %4144 = vmatmul.f32.gmra.mxu0 %v4015
      %v4145 = vpop.f32.mrf.mxu0
      %v4146 = vadd.f32 0.0, %v4145
      %4147 = vmatmul.f32.gmra.mxu0 %v4017
      %v4148 = vpop.f32.mrf.mxu0
      %v4149 = vadd.f32 0.0, %v4148
      %4150 = vmatmul.f32.gmra.mxu0 %v4019
      %v4151 = vpop.f32.mrf.mxu0
      %v4152 = vadd.f32 0.0, %v4151
      %4153 = vmatmul.f32.gmra.mxu0 %v4021
      %v4154 = vpop.f32.mrf.mxu0
      %v4155 = vadd.f32 0.0, %v4154
      %4156 = vmatmul.f32.gmra.mxu0 %v4023
      %v4157 = vpop.f32.mrf.mxu0
      %v4158 = vadd.f32 0.0, %v4157
      %4159 = vmatmul.f32.gmra.mxu0 %v4025
      %v4160 = vpop.f32.mrf.mxu0
      %v4161 = vadd.f32 0.0, %v4160
      %4162 = vmatmul.f32.gmra.mxu0 %v4027
      %v4163 = vpop.f32.mrf.mxu0
      %v4164 = vadd.f32 0.0, %v4163
      %4165 = vmatmul.f32.gmra.mxu0 %v4029
      %v4166 = vpop.f32.mrf.mxu0
      %v4167 = vadd.f32 0.0, %v4166
      %4168 = vmatmul.f32.gmra.mxu0 %v4031
      %v4169 = vpop.f32.mrf.mxu0
      %v4170 = vadd.f32 0.0, %v4169
      %4171 = vmatmul.f32.gmra.mxu0 %v4033
      %v4172 = vpop.f32.mrf.mxu0
      %v4173 = vadd.f32 0.0, %v4172
      %4174 = vmatmul.f32.gmra.mxu0 %v4035
      %v4175 = vpop.f32.mrf.mxu0
      %v4176 = vadd.f32 0.0, %v4175
      %4177 = vmatmul.f32.gmra.mxu0 %v4037
      %v4178 = vpop.f32.mrf.mxu0
      %v4179 = vadd.f32 0.0, %v4178
      %4180 = vmatmul.f32.gmra.mxu0 %v4039
      %v4181 = vpop.f32.mrf.mxu0
      %v4182 = vadd.f32 0.0, %v4181
      %4183 = vmatmul.f32.gmra.mxu0 %v4041
      %v4184 = vpop.f32.mrf.mxu0
      %v4185 = vadd.f32 0.0, %v4184
      %4186 = vmatmul.f32.gmra.mxu0 %v4043
      %v4187 = vpop.f32.mrf.mxu0
      %v4188 = vadd.f32 0.0, %v4187
      %4189 = vmatmul.f32.gmra.mxu0 %v4045
      %v4190 = vpop.f32.mrf.mxu0
      %v4191 = vadd.f32 0.0, %v4190
      %4192 = vdwg.mxu0
      %4193 = vmatpush.msra.mxu0 %v4079
      %4194 = vmatpush.msra.mxu0 %v4078
      %4195 = vmatpush.msra.mxu0 %v4077
      %4196 = vmatpush.msra.mxu0 %v4076
      %4197 = vmatpush.msra.mxu0 %v4075
      %4198 = vmatpush.msra.mxu0 %v4074
      %4199 = vmatpush.msra.mxu0 %v4073
      %4200 = vmatpush.msra.mxu0 %v4072
      %4201 = vmatpush.msra.mxu0 %v4071
      %4202 = vmatpush.msra.mxu0 %v4070
      %4203 = vmatpush.msra.mxu0 %v4069
      %4204 = vmatpush.msra.mxu0 %v4068
      %4205 = vmatpush.msra.mxu0 %v4067
      %4206 = vmatpush.msra.mxu0 %v4066
      %4207 = vmatpush.msra.mxu0 %v4065
      %4208 = vmatpush.msra.mxu0 %v4064
      %4209 = vmatmul.f32.gmra.mxu0 %v3984
      %v4210 = vpop.f32.mrf.mxu0
      %v4211 = vadd.f32 %v4098, %v4210
      %4212 = vmatmul.f32.gmra.mxu0 %v3986
      %v4213 = vpop.f32.mrf.mxu0
      %v4214 = vadd.f32 %v4101, %v4213
      %4215 = vmatmul.f32.gmra.mxu0 %v3988
      %v4216 = vpop.f32.mrf.mxu0
      %v4217 = vadd.f32 %v4104, %v4216
      %4218 = vmatmul.f32.gmra.mxu0 %v3990
      %v4219 = vpop.f32.mrf.mxu0
      %v4220 = vadd.f32 %v4107, %v4219
      %4221 = vmatmul.f32.gmra.mxu0 %v3992
      %v4222 = vpop.f32.mrf.mxu0
      %v4223 = vadd.f32 %v4110, %v4222
      %4224 = vmatmul.f32.gmra.mxu0 %v3994
      %v4225 = vpop.f32.mrf.mxu0
      %v4226 = vadd.f32 %v4113, %v4225
      %4227 = vmatmul.f32.gmra.mxu0 %v3996
      %v4228 = vpop.f32.mrf.mxu0
      %v4229 = vadd.f32 %v4116, %v4228
      %4230 = vmatmul.f32.gmra.mxu0 %v3998
      %v4231 = vpop.f32.mrf.mxu0
      %v4232 = vadd.f32 %v4119, %v4231
      %4233 = vmatmul.f32.gmra.mxu0 %v4000
      %v4234 = vpop.f32.mrf.mxu0
      %v4235 = vadd.f32 %v4122, %v4234
      %4236 = vmatmul.f32.gmra.mxu0 %v4002
      %v4237 = vpop.f32.mrf.mxu0
      %v4238 = vadd.f32 %v4125, %v4237
      %4239 = vmatmul.f32.gmra.mxu0 %v4004
      %v4240 = vpop.f32.mrf.mxu0
      %v4241 = vadd.f32 %v4128, %v4240
      %4242 = vmatmul.f32.gmra.mxu0 %v4006
      %v4243 = vpop.f32.mrf.mxu0
      %v4244 = vadd.f32 %v4131, %v4243
      %4245 = vmatmul.f32.gmra.mxu0 %v4008
      %v4246 = vpop.f32.mrf.mxu0
      %v4247 = vadd.f32 %v4134, %v4246
      %4248 = vmatmul.f32.gmra.mxu0 %v4010
      %v4249 = vpop.f32.mrf.mxu0
      %v4250 = vadd.f32 %v4137, %v4249
      %4251 = vmatmul.f32.gmra.mxu0 %v4012
      %v4252 = vpop.f32.mrf.mxu0
      %v4253 = vadd.f32 %v4140, %v4252
      %4254 = vmatmul.f32.gmra.mxu0 %v4014
      %v4255 = vpop.f32.mrf.mxu0
      %v4256 = vadd.f32 %v4143, %v4255
      %4257 = vmatmul.f32.gmra.mxu0 %v4016
      %v4258 = vpop.f32.mrf.mxu0
      %v4259 = vadd.f32 %v4146, %v4258
      %4260 = vmatmul.f32.gmra.mxu0 %v4018
      %v4261 = vpop.f32.mrf.mxu0
      %v4262 = vadd.f32 %v4149, %v4261
      %4263 = vmatmul.f32.gmra.mxu0 %v4020
      %v4264 = vpop.f32.mrf.mxu0
      %v4265 = vadd.f32 %v4152, %v4264
      %4266 = vmatmul.f32.gmra.mxu0 %v4022
      %v4267 = vpop.f32.mrf.mxu0
      %v4268 = vadd.f32 %v4155, %v4267
      %4269 = vmatmul.f32.gmra.mxu0 %v4024
      %v4270 = vpop.f32.mrf.mxu0
      %v4271 = vadd.f32 %v4158, %v4270
      %4272 = vmatmul.f32.gmra.mxu0 %v4026
      %v4273 = vpop.f32.mrf.mxu0
      %v4274 = vadd.f32 %v4161, %v4273
      %4275 = vmatmul.f32.gmra.mxu0 %v4028
      %v4276 = vpop.f32.mrf.mxu0
      %v4277 = vadd.f32 %v4164, %v4276
      %4278 = vmatmul.f32.gmra.mxu0 %v4030
      %v4279 = vpop.f32.mrf.mxu0
      %v4280 = vadd.f32 %v4167, %v4279
      %4281 = vmatmul.f32.gmra.mxu0 %v4032
      %v4282 = vpop.f32.mrf.mxu0
      %v4283 = vadd.f32 %v4170, %v4282
      %4284 = vmatmul.f32.gmra.mxu0 %v4034
      %v4285 = vpop.f32.mrf.mxu0
      %v4286 = vadd.f32 %v4173, %v4285
      %4287 = vmatmul.f32.gmra.mxu0 %v4036
      %v4288 = vpop.f32.mrf.mxu0
      %v4289 = vadd.f32 %v4176, %v4288
      %4290 = vmatmul.f32.gmra.mxu0 %v4038
      %v4291 = vpop.f32.mrf.mxu0
      %v4292 = vadd.f32 %v4179, %v4291
      %4293 = vmatmul.f32.gmra.mxu0 %v4040
      %v4294 = vpop.f32.mrf.mxu0
      %v4295 = vadd.f32 %v4182, %v4294
      %4296 = vmatmul.f32.gmra.mxu0 %v4042
      %v4297 = vpop.f32.mrf.mxu0
      %v4298 = vadd.f32 %v4185, %v4297
      %4299 = vmatmul.f32.gmra.mxu0 %v4044
      %v4300 = vpop.f32.mrf.mxu0
      %v4301 = vadd.f32 %v4188, %v4300
      %4302 = vmatmul.f32.gmra.mxu0 %v4046
      %v4303 = vpop.f32.mrf.mxu0
      %v4304 = vadd.f32 %v4191, %v4303
      %4305 = vdwg.mxu0
      %v4306 = vadd.f32 %v3950, %v4211
      %v4307 = vadd.f32 %v3951, %v4214
      %v4308 = vadd.f32 %v3952, %v4217
      %v4309 = vadd.f32 %v3953, %v4220
      %v4310 = vadd.f32 %v3954, %v4223
      %v4311 = vadd.f32 %v3955, %v4226
      %v4312 = vadd.f32 %v3956, %v4229
      %v4313 = vadd.f32 %v3957, %v4232
      %v4314 = vadd.f32 %v3958, %v4235
      %v4315 = vadd.f32 %v3959, %v4238
      %v4316 = vadd.f32 %v3960, %v4241
      %v4317 = vadd.f32 %v3961, %v4244
      %v4318 = vadd.f32 %v3962, %v4247
      %v4319 = vadd.f32 %v3963, %v4250
      %v4320 = vadd.f32 %v3964, %v4253
      %v4321 = vadd.f32 %v3965, %v4256
      %v4322 = vadd.f32 %v3966, %v4259
      %v4323 = vadd.f32 %v3967, %v4262
      %v4324 = vadd.f32 %v3968, %v4265
      %v4325 = vadd.f32 %v3969, %v4268
      %v4326 = vadd.f32 %v3970, %v4271
      %v4327 = vadd.f32 %v3971, %v4274
      %v4328 = vadd.f32 %v3972, %v4277
      %v4329 = vadd.f32 %v3973, %v4280
      %v4330 = vadd.f32 %v3974, %v4283
      %v4331 = vadd.f32 %v3975, %v4286
      %v4332 = vadd.f32 %v3976, %v4289
      %v4333 = vadd.f32 %v3977, %v4292
      %v4334 = vadd.f32 %v3978, %v4295
      %v4335 = vadd.f32 %v3979, %v4298
      %v4336 = vadd.f32 %v3980, %v4301
      %v4337 = vadd.f32 %v3981, %v4304
      %v4338 = vld [vmem:[%s3982] sm:$0xfe]
      %v4339 = vld [vmem:[%s3982 + $0x8] sm:$0xfe]
      %v4340 = vld [vmem:[%s3982 + $0x10] sm:$0xff]
      %v4341 = vld [vmem:[%s3982 + $0x18] sm:$0xff]
      %v4342 = vld [vmem:[%s3982 + $0x20] sm:$0x1]
      %v4343 = vld [vmem:[%s3982 + $0x28] sm:$0x1]
      %v4344 = vld [vmem:[%s3982 + $0x30] sm:$0xfe]
      %v4345 = vld [vmem:[%s3982 + $0x38] sm:$0xfe]
      %v4346 = vld [vmem:[%s3982 + $0x40] sm:$0xff]
      %v4347 = vld [vmem:[%s3982 + $0x48] sm:$0xff]
      %v4348 = vld [vmem:[%s3982 + $0x50] sm:$0x1]
      %v4349 = vld [vmem:[%s3982 + $0x58] sm:$0x1]
      %v4350 = vld [vmem:[%s3982 + $0x60] sm:$0xfe]
      %v4351 = vld [vmem:[%s3982 + $0x68] sm:$0xfe]
      %v4352 = vld [vmem:[%s3982 + $0x70] sm:$0xff]
      %v4353 = vld [vmem:[%s3982 + $0x78] sm:$0xff]
      %v4354 = vld [vmem:[%s3982 + $0x80] sm:$0x1]
      %v4355 = vld [vmem:[%s3982 + $0x88] sm:$0x1]
      %v4356 = vld [vmem:[%s3982 + $0x90] sm:$0xfe]
      %v4357 = vld [vmem:[%s3982 + $0x98] sm:$0xfe]
      %v4358 = vld [vmem:[%s3982 + $0xa0] sm:$0xff]
      %v4359 = vld [vmem:[%s3982 + $0xa8] sm:$0xff]
      %v4360 = vld [vmem:[%s3982 + $0xb0] sm:$0x1]
      %v4361 = vld [vmem:[%s3982 + $0xb8] sm:$0x1]
      %v4362 = vld [vmem:[%s3982 + $0xc0] sm:$0xfe]
      %v4363 = vld [vmem:[%s3982 + $0xc8] sm:$0xfe]
      %v4364 = vld [vmem:[%s3982 + $0xd0] sm:$0xff]
      %v4365 = vld [vmem:[%s3982 + $0xd8] sm:$0xff]
      %v4366 = vld [vmem:[%s3982 + $0xe0] sm:$0x1]
      %v4367 = vld [vmem:[%s3982 + $0xe8] sm:$0x1]
      %v4368 = vld [vmem:[%s3982 + $0xf0] sm:$0xfe]
      %v4369 = vld [vmem:[%s3982 + $0xf8] sm:$0xfe]
      %v4370 = vld [vmem:[%s3982 + $0x100] sm:$0xff]
      %v4371 = vld [vmem:[%s3982 + $0x108] sm:$0xff]
      %v4372 = vld [vmem:[%s3982 + $0x110] sm:$0x1]
      %v4373 = vld [vmem:[%s3982 + $0x118] sm:$0x1]
      %v4374 = vld [vmem:[%s3982 + $0x120] sm:$0xfe]
      %v4375 = vld [vmem:[%s3982 + $0x128] sm:$0xfe]
      %v4376 = vld [vmem:[%s3982 + $0x130] sm:$0xff]
      %v4377 = vld [vmem:[%s3982 + $0x138] sm:$0xff]
      %v4378 = vld [vmem:[%s3982 + $0x140] sm:$0x1]
      %v4379 = vld [vmem:[%s3982 + $0x148] sm:$0x1]
      %v4380 = vld [vmem:[%s3982 + $0x150] sm:$0xfe]
      %v4381 = vld [vmem:[%s3982 + $0x158] sm:$0xfe]
      %v4382 = vld [vmem:[%s3982 + $0x160] sm:$0xff]
      %v4383 = vld [vmem:[%s3982 + $0x168] sm:$0xff]
      %v4384 = vld [vmem:[%s3982 + $0x170] sm:$0x1]
      %v4385 = vld [vmem:[%s3982 + $0x178] sm:$0x1]
      %v4386 = vld [vmem:[%s3982 + $0x180] sm:$0xfe]
      %v4387 = vld [vmem:[%s3982 + $0x188] sm:$0xfe]
      %v4388 = vld [vmem:[%s3982 + $0x190] sm:$0xff]
      %v4389 = vld [vmem:[%s3982 + $0x198] sm:$0xff]
      %v4390 = vld [vmem:[%s3982 + $0x1a0] sm:$0x1]
      %v4391 = vld [vmem:[%s3982 + $0x1a8] sm:$0x1]
      %v4392 = vld [vmem:[%s3982 + $0x1b0] sm:$0xfe]
      %v4393 = vld [vmem:[%s3982 + $0x1b8] sm:$0xfe]
      %v4394 = vld [vmem:[%s3982 + $0x1c0] sm:$0xff]
      %v4395 = vld [vmem:[%s3982 + $0x1c8] sm:$0xff]
      %v4396 = vld [vmem:[%s3982 + $0x1d0] sm:$0x1]
      %v4397 = vld [vmem:[%s3982 + $0x1d8] sm:$0x1]
      %v4398 = vld [vmem:[%s3982 + $0x1e0] sm:$0xfe]
      %v4399 = vld [vmem:[%s3982 + $0x1e8] sm:$0xfe]
      %v4400 = vld [vmem:[%s3982 + $0x1f0] sm:$0xff]
      %v4401 = vld [vmem:[%s3982 + $0x1f8] sm:$0xff]
      %v4402 = vld [vmem:[%s3982 + $0x200] sm:$0x1]
      %v4403 = vld [vmem:[%s3982 + $0x208] sm:$0x1]
      %v4404 = vld [vmem:[%s3982 + $0x210] sm:$0xfe]
      %v4405 = vld [vmem:[%s3982 + $0x218] sm:$0xfe]
      %v4406 = vld [vmem:[%s3982 + $0x220] sm:$0xff]
      %v4407 = vld [vmem:[%s3982 + $0x228] sm:$0xff]
      %v4408 = vld [vmem:[%s3982 + $0x230] sm:$0x1]
      %v4409 = vld [vmem:[%s3982 + $0x238] sm:$0x1]
      %v4410 = vld [vmem:[%s3982 + $0x240] sm:$0xfe]
      %v4411 = vld [vmem:[%s3982 + $0x248] sm:$0xfe]
      %v4412 = vld [vmem:[%s3982 + $0x250] sm:$0xff]
      %v4413 = vld [vmem:[%s3982 + $0x258] sm:$0xff]
      %v4414 = vld [vmem:[%s3982 + $0x260] sm:$0x1]
      %v4415 = vld [vmem:[%s3982 + $0x268] sm:$0x1]
      %v4416 = vld [vmem:[%s3982 + $0x270] sm:$0xfe]
      %v4417 = vld [vmem:[%s3982 + $0x278] sm:$0xfe]
      %v4418 = vld [vmem:[%s3982 + $0x280] sm:$0xff]
      %v4419 = vld [vmem:[%s3982 + $0x288] sm:$0xff]
      %v4420 = vld [vmem:[%s3982 + $0x290] sm:$0x1]
      %v4421 = vld [vmem:[%s3982 + $0x298] sm:$0x1]
      %v4422 = vld [vmem:[%s3982 + $0x2a0] sm:$0xfe]
      %v4423 = vld [vmem:[%s3982 + $0x2a8] sm:$0xfe]
      %v4424 = vld [vmem:[%s3982 + $0x2b0] sm:$0xff]
      %v4425 = vld [vmem:[%s3982 + $0x2b8] sm:$0xff]
      %v4426 = vld [vmem:[%s3982 + $0x2c0] sm:$0x1]
      %v4427 = vld [vmem:[%s3982 + $0x2c8] sm:$0x1]
      %v4428 = vld [vmem:[%s3982 + $0x2d0] sm:$0xfe]
      %v4429 = vld [vmem:[%s3982 + $0x2d8] sm:$0xfe]
      %v4430 = vld [vmem:[%s3982 + $0x2e0] sm:$0xff]
      %v4431 = vld [vmem:[%s3982 + $0x2e8] sm:$0xff]
      %v4432 = vld [vmem:[%s3982 + $0x2f0] sm:$0x1]
      %v4433 = vld [vmem:[%s3982 + $0x2f8] sm:$0x1]
      %v4530 = vrot.slane %v4338, 1
      %v4531 = vrot.slane %v4340, 1
      %v4532 = vsel %vm922, %v4530, %v4531
      %v4533 = vrot.slane %v4339, 1
      %v4534 = vrot.slane %v4341, 1
      %v4535 = vsel %vm922, %v4533, %v4534
      %v4536 = vrot.slane %v4342, 1
      %v4537 = vsel %vm922, %v4531, %v4536
      %v4538 = vrot.slane %v4343, 1
      %v4539 = vsel %vm922, %v4534, %v4538
      %v4540 = vrot.slane %v4344, 1
      %v4541 = vrot.slane %v4346, 1
      %v4542 = vsel %vm922, %v4540, %v4541
      %v4543 = vrot.slane %v4345, 1
      %v4544 = vrot.slane %v4347, 1
      %v4545 = vsel %vm922, %v4543, %v4544
      %v4546 = vrot.slane %v4348, 1
      %v4547 = vsel %vm922, %v4541, %v4546
      %v4548 = vrot.slane %v4349, 1
      %v4549 = vsel %vm922, %v4544, %v4548
      %v4550 = vrot.slane %v4350, 1
      %v4551 = vrot.slane %v4352, 1
      %v4552 = vsel %vm922, %v4550, %v4551
      %v4553 = vrot.slane %v4351, 1
      %v4554 = vrot.slane %v4353, 1
      %v4555 = vsel %vm922, %v4553, %v4554
      %v4556 = vrot.slane %v4354, 1
      %v4557 = vsel %vm922, %v4551, %v4556
      %v4558 = vrot.slane %v4355, 1
      %v4559 = vsel %vm922, %v4554, %v4558
      %v4560 = vrot.slane %v4356, 1
      %v4561 = vrot.slane %v4358, 1
      %v4562 = vsel %vm922, %v4560, %v4561
      %v4563 = vrot.slane %v4357, 1
      %v4564 = vrot.slane %v4359, 1
      %v4565 = vsel %vm922, %v4563, %v4564
      %v4566 = vrot.slane %v4360, 1
      %v4567 = vsel %vm922, %v4561, %v4566
      %v4568 = vrot.slane %v4361, 1
      %v4569 = vsel %vm922, %v4564, %v4568
      %v4570 = vrot.slane %v4362, 1
      %v4571 = vrot.slane %v4364, 1
      %v4572 = vsel %vm922, %v4570, %v4571
      %v4573 = vrot.slane %v4363, 1
      %v4574 = vrot.slane %v4365, 1
      %v4575 = vsel %vm922, %v4573, %v4574
      %v4576 = vrot.slane %v4366, 1
      %v4577 = vsel %vm922, %v4571, %v4576
      %v4578 = vrot.slane %v4367, 1
      %v4579 = vsel %vm922, %v4574, %v4578
      %v4580 = vrot.slane %v4368, 1
      %v4581 = vrot.slane %v4370, 1
      %v4582 = vsel %vm922, %v4580, %v4581
      %v4583 = vrot.slane %v4369, 1
      %v4584 = vrot.slane %v4371, 1
      %v4585 = vsel %vm922, %v4583, %v4584
      %v4586 = vrot.slane %v4372, 1
      %v4587 = vsel %vm922, %v4581, %v4586
      %v4588 = vrot.slane %v4373, 1
      %v4589 = vsel %vm922, %v4584, %v4588
      %v4590 = vrot.slane %v4374, 1
      %v4591 = vrot.slane %v4376, 1
      %v4592 = vsel %vm922, %v4590, %v4591
      %v4593 = vrot.slane %v4375, 1
      %v4594 = vrot.slane %v4377, 1
      %v4595 = vsel %vm922, %v4593, %v4594
      %v4596 = vrot.slane %v4378, 1
      %v4597 = vsel %vm922, %v4591, %v4596
      %v4598 = vrot.slane %v4379, 1
      %v4599 = vsel %vm922, %v4594, %v4598
      %v4600 = vrot.slane %v4380, 1
      %v4601 = vrot.slane %v4382, 1
      %v4602 = vsel %vm922, %v4600, %v4601
      %v4603 = vrot.slane %v4381, 1
      %v4604 = vrot.slane %v4383, 1
      %v4605 = vsel %vm922, %v4603, %v4604
      %v4606 = vrot.slane %v4384, 1
      %v4607 = vsel %vm922, %v4601, %v4606
      %v4608 = vrot.slane %v4385, 1
      %v4609 = vsel %vm922, %v4604, %v4608
      %v4610 = vrot.slane %v4386, 1
      %v4611 = vrot.slane %v4388, 1
      %v4612 = vsel %vm922, %v4610, %v4611
      %v4613 = vrot.slane %v4387, 1
      %v4614 = vrot.slane %v4389, 1
      %v4615 = vsel %vm922, %v4613, %v4614
      %v4616 = vrot.slane %v4390, 1
      %v4617 = vsel %vm922, %v4611, %v4616
      %v4618 = vrot.slane %v4391, 1
      %v4619 = vsel %vm922, %v4614, %v4618
      %v4620 = vrot.slane %v4392, 1
      %v4621 = vrot.slane %v4394, 1
      %v4622 = vsel %vm922, %v4620, %v4621
      %v4623 = vrot.slane %v4393, 1
      %v4624 = vrot.slane %v4395, 1
      %v4625 = vsel %vm922, %v4623, %v4624
      %v4626 = vrot.slane %v4396, 1
      %v4627 = vsel %vm922, %v4621, %v4626
      %v4628 = vrot.slane %v4397, 1
      %v4629 = vsel %vm922, %v4624, %v4628
      %v4630 = vrot.slane %v4398, 1
      %v4631 = vrot.slane %v4400, 1
      %v4632 = vsel %vm922, %v4630, %v4631
      %v4633 = vrot.slane %v4399, 1
      %v4634 = vrot.slane %v4401, 1
      %v4635 = vsel %vm922, %v4633, %v4634
      %v4636 = vrot.slane %v4402, 1
      %v4637 = vsel %vm922, %v4631, %v4636
      %v4638 = vrot.slane %v4403, 1
      %v4639 = vsel %vm922, %v4634, %v4638
      %v4640 = vrot.slane %v4404, 1
      %v4641 = vrot.slane %v4406, 1
      %v4642 = vsel %vm922, %v4640, %v4641
      %v4643 = vrot.slane %v4405, 1
      %v4644 = vrot.slane %v4407, 1
      %v4645 = vsel %vm922, %v4643, %v4644
      %v4646 = vrot.slane %v4408, 1
      %v4647 = vsel %vm922, %v4641, %v4646
      %v4648 = vrot.slane %v4409, 1
      %v4649 = vsel %vm922, %v4644, %v4648
      %v4650 = vrot.slane %v4410, 1
      %v4651 = vrot.slane %v4412, 1
      %v4652 = vsel %vm922, %v4650, %v4651
      %v4653 = vrot.slane %v4411, 1
      %v4654 = vrot.slane %v4413, 1
      %v4655 = vsel %vm922, %v4653, %v4654
      %v4656 = vrot.slane %v4414, 1
      %v4657 = vsel %vm922, %v4651, %v4656
      %v4658 = vrot.slane %v4415, 1
      %v4659 = vsel %vm922, %v4654, %v4658
      %v4660 = vrot.slane %v4416, 1
      %v4661 = vrot.slane %v4418, 1
      %v4662 = vsel %vm922, %v4660, %v4661
      %v4663 = vrot.slane %v4417, 1
      %v4664 = vrot.slane %v4419, 1
      %v4665 = vsel %vm922, %v4663, %v4664
      %v4666 = vrot.slane %v4420, 1
      %v4667 = vsel %vm922, %v4661, %v4666
      %v4668 = vrot.slane %v4421, 1
      %v4669 = vsel %vm922, %v4664, %v4668
      %v4670 = vrot.slane %v4422, 1
      %v4671 = vrot.slane %v4424, 1
      %v4672 = vsel %vm922, %v4670, %v4671
      %v4673 = vrot.slane %v4423, 1
      %v4674 = vrot.slane %v4425, 1
      %v4675 = vsel %vm922, %v4673, %v4674
      %v4676 = vrot.slane %v4426, 1
      %v4677 = vsel %vm922, %v4671, %v4676
      %v4678 = vrot.slane %v4427, 1
      %v4679 = vsel %vm922, %v4674, %v4678
      %v4680 = vrot.slane %v4428, 1
      %v4681 = vrot.slane %v4430, 1
      %v4682 = vsel %vm922, %v4680, %v4681
      %v4683 = vrot.slane %v4429, 1
      %v4684 = vrot.slane %v4431, 1
      %v4685 = vsel %vm922, %v4683, %v4684
      %v4686 = vrot.slane %v4432, 1
      %v4687 = vsel %vm922, %v4681, %v4686
      %v4688 = vrot.slane %v4433, 1
      %v4689 = vsel %vm922, %v4684, %v4688
      %s4754 = scalar_lea.vmem %s3, 1792
      %v4755 = vld [vmem:[%s4754] sm:$0xff]
      %v4756 = vld [vmem:[%s4754 + $0x8] sm:$0xff]
      %v4757 = vld [vmem:[%s4754 + $0x10] sm:$0xff]
      %v4758 = vld [vmem:[%s4754 + $0x18] sm:$0xff]
      %v4759 = vld [vmem:[%s4754 + $0x20] sm:$0xff]
      %v4760 = vld [vmem:[%s4754 + $0x28] sm:$0xff]
      %v4761 = vld [vmem:[%s4754 + $0x30] sm:$0xff]
      %v4762 = vld [vmem:[%s4754 + $0x38] sm:$0xff]
      %v4763 = vld [vmem:[%s4754 + $0x40] sm:$0xff]
      %v4764 = vld [vmem:[%s4754 + $0x48] sm:$0xff]
      %v4765 = vld [vmem:[%s4754 + $0x50] sm:$0xff]
      %v4766 = vld [vmem:[%s4754 + $0x58] sm:$0xff]
      %v4767 = vld [vmem:[%s4754 + $0x60] sm:$0xff]
      %v4768 = vld [vmem:[%s4754 + $0x68] sm:$0xff]
      %v4769 = vld [vmem:[%s4754 + $0x70] sm:$0xff]
      %v4770 = vld [vmem:[%s4754 + $0x78] sm:$0xff]
      %v4771 = vld [vmem:[%s4754 + $0x80] sm:$0xff]
      %v4772 = vld [vmem:[%s4754 + $0x88] sm:$0xff]
      %v4773 = vld [vmem:[%s4754 + $0x90] sm:$0xff]
      %v4774 = vld [vmem:[%s4754 + $0x98] sm:$0xff]
      %v4775 = vld [vmem:[%s4754 + $0xa0] sm:$0xff]
      %v4776 = vld [vmem:[%s4754 + $0xa8] sm:$0xff]
      %v4777 = vld [vmem:[%s4754 + $0xb0] sm:$0xff]
      %v4778 = vld [vmem:[%s4754 + $0xb8] sm:$0xff]
      %v4779 = vld [vmem:[%s4754 + $0xc0] sm:$0xff]
      %v4780 = vld [vmem:[%s4754 + $0xc8] sm:$0xff]
      %v4781 = vld [vmem:[%s4754 + $0xd0] sm:$0xff]
      %v4782 = vld [vmem:[%s4754 + $0xd8] sm:$0xff]
      %v4783 = vld [vmem:[%s4754 + $0xe0] sm:$0xff]
      %v4784 = vld [vmem:[%s4754 + $0xe8] sm:$0xff]
      %v4785 = vld [vmem:[%s4754 + $0xf0] sm:$0xff]
      %v4786 = vld [vmem:[%s4754 + $0xf8] sm:$0xff]
      %4787 = vmatpush.msra.mxu0 %v4770
      %4788 = vmatpush.msra.mxu0 %v4769
      %4789 = vmatpush.msra.mxu0 %v4768
      %4790 = vmatpush.msra.mxu0 %v4767
      %4791 = vmatpush.msra.mxu0 %v4766
      %4792 = vmatpush.msra.mxu0 %v4765
      %4793 = vmatpush.msra.mxu0 %v4764
      %4794 = vmatpush.msra.mxu0 %v4763
      %4795 = vmatpush.msra.mxu0 %v4762
      %4796 = vmatpush.msra.mxu0 %v4761
      %4797 = vmatpush.msra.mxu0 %v4760
      %4798 = vmatpush.msra.mxu0 %v4759
      %4799 = vmatpush.msra.mxu0 %v4758
      %4800 = vmatpush.msra.mxu0 %v4757
      %4801 = vmatpush.msra.mxu0 %v4756
      %4802 = vmatpush.msra.mxu0 %v4755
      %4803 = vmatmul.f32.gmra.mxu0 %v4532
      %v4804 = vpop.f32.mrf.mxu0
      %v4805 = vadd.f32 0.0, %v4804
      %4806 = vmatmul.f32.gmra.mxu0 %v4537
      %v4807 = vpop.f32.mrf.mxu0
      %v4808 = vadd.f32 0.0, %v4807
      %4809 = vmatmul.f32.gmra.mxu0 %v4542
      %v4810 = vpop.f32.mrf.mxu0
      %v4811 = vadd.f32 0.0, %v4810
      %4812 = vmatmul.f32.gmra.mxu0 %v4547
      %v4813 = vpop.f32.mrf.mxu0
      %v4814 = vadd.f32 0.0, %v4813
      %4815 = vmatmul.f32.gmra.mxu0 %v4552
      %v4816 = vpop.f32.mrf.mxu0
      %v4817 = vadd.f32 0.0, %v4816
      %4818 = vmatmul.f32.gmra.mxu0 %v4557
      %v4819 = vpop.f32.mrf.mxu0
      %v4820 = vadd.f32 0.0, %v4819
      %4821 = vmatmul.f32.gmra.mxu0 %v4562
      %v4822 = vpop.f32.mrf.mxu0
      %v4823 = vadd.f32 0.0, %v4822
      %4824 = vmatmul.f32.gmra.mxu0 %v4567
      %v4825 = vpop.f32.mrf.mxu0
      %v4826 = vadd.f32 0.0, %v4825
      %4827 = vmatmul.f32.gmra.mxu0 %v4572
      %v4828 = vpop.f32.mrf.mxu0
      %v4829 = vadd.f32 0.0, %v4828
      %4830 = vmatmul.f32.gmra.mxu0 %v4577
      %v4831 = vpop.f32.mrf.mxu0
      %v4832 = vadd.f32 0.0, %v4831
      %4833 = vmatmul.f32.gmra.mxu0 %v4582
      %v4834 = vpop.f32.mrf.mxu0
      %v4835 = vadd.f32 0.0, %v4834
      %4836 = vmatmul.f32.gmra.mxu0 %v4587
      %v4837 = vpop.f32.mrf.mxu0
      %v4838 = vadd.f32 0.0, %v4837
      %4839 = vmatmul.f32.gmra.mxu0 %v4592
      %v4840 = vpop.f32.mrf.mxu0
      %v4841 = vadd.f32 0.0, %v4840
      %4842 = vmatmul.f32.gmra.mxu0 %v4597
      %v4843 = vpop.f32.mrf.mxu0
      %v4844 = vadd.f32 0.0, %v4843
      %4845 = vmatmul.f32.gmra.mxu0 %v4602
      %v4846 = vpop.f32.mrf.mxu0
      %v4847 = vadd.f32 0.0, %v4846
      %4848 = vmatmul.f32.gmra.mxu0 %v4607
      %v4849 = vpop.f32.mrf.mxu0
      %v4850 = vadd.f32 0.0, %v4849
      %4851 = vmatmul.f32.gmra.mxu0 %v4612
      %v4852 = vpop.f32.mrf.mxu0
      %v4853 = vadd.f32 0.0, %v4852
      %4854 = vmatmul.f32.gmra.mxu0 %v4617
      %v4855 = vpop.f32.mrf.mxu0
      %v4856 = vadd.f32 0.0, %v4855
      %4857 = vmatmul.f32.gmra.mxu0 %v4622
      %v4858 = vpop.f32.mrf.mxu0
      %v4859 = vadd.f32 0.0, %v4858
      %4860 = vmatmul.f32.gmra.mxu0 %v4627
      %v4861 = vpop.f32.mrf.mxu0
      %v4862 = vadd.f32 0.0, %v4861
      %4863 = vmatmul.f32.gmra.mxu0 %v4632
      %v4864 = vpop.f32.mrf.mxu0
      %v4865 = vadd.f32 0.0, %v4864
      %4866 = vmatmul.f32.gmra.mxu0 %v4637
      %v4867 = vpop.f32.mrf.mxu0
      %v4868 = vadd.f32 0.0, %v4867
      %4869 = vmatmul.f32.gmra.mxu0 %v4642
      %v4870 = vpop.f32.mrf.mxu0
      %v4871 = vadd.f32 0.0, %v4870
      %4872 = vmatmul.f32.gmra.mxu0 %v4647
      %v4873 = vpop.f32.mrf.mxu0
      %v4874 = vadd.f32 0.0, %v4873
      %4875 = vmatmul.f32.gmra.mxu0 %v4652
      %v4876 = vpop.f32.mrf.mxu0
      %v4877 = vadd.f32 0.0, %v4876
      %4878 = vmatmul.f32.gmra.mxu0 %v4657
      %v4879 = vpop.f32.mrf.mxu0
      %v4880 = vadd.f32 0.0, %v4879
      %4881 = vmatmul.f32.gmra.mxu0 %v4662
      %v4882 = vpop.f32.mrf.mxu0
      %v4883 = vadd.f32 0.0, %v4882
      %4884 = vmatmul.f32.gmra.mxu0 %v4667
      %v4885 = vpop.f32.mrf.mxu0
      %v4886 = vadd.f32 0.0, %v4885
      %4887 = vmatmul.f32.gmra.mxu0 %v4672
      %v4888 = vpop.f32.mrf.mxu0
      %v4889 = vadd.f32 0.0, %v4888
      %4890 = vmatmul.f32.gmra.mxu0 %v4677
      %v4891 = vpop.f32.mrf.mxu0
      %v4892 = vadd.f32 0.0, %v4891
      %4893 = vmatmul.f32.gmra.mxu0 %v4682
      %v4894 = vpop.f32.mrf.mxu0
      %v4895 = vadd.f32 0.0, %v4894
      %4896 = vmatmul.f32.gmra.mxu0 %v4687
      %v4897 = vpop.f32.mrf.mxu0
      %v4898 = vadd.f32 0.0, %v4897
      %4899 = vdwg.mxu0
      %4900 = vmatpush.msra.mxu0 %v4786
      %4901 = vmatpush.msra.mxu0 %v4785
      %4902 = vmatpush.msra.mxu0 %v4784
      %4903 = vmatpush.msra.mxu0 %v4783
      %4904 = vmatpush.msra.mxu0 %v4782
      %4905 = vmatpush.msra.mxu0 %v4781
      %4906 = vmatpush.msra.mxu0 %v4780
      %4907 = vmatpush.msra.mxu0 %v4779
      %4908 = vmatpush.msra.mxu0 %v4778
      %4909 = vmatpush.msra.mxu0 %v4777
      %4910 = vmatpush.msra.mxu0 %v4776
      %4911 = vmatpush.msra.mxu0 %v4775
      %4912 = vmatpush.msra.mxu0 %v4774
      %4913 = vmatpush.msra.mxu0 %v4773
      %4914 = vmatpush.msra.mxu0 %v4772
      %4915 = vmatpush.msra.mxu0 %v4771
      %4916 = vmatmul.f32.gmra.mxu0 %v4535
      %v4917 = vpop.f32.mrf.mxu0
      %v4918 = vadd.f32 %v4805, %v4917
      %4919 = vmatmul.f32.gmra.mxu0 %v4539
      %v4920 = vpop.f32.mrf.mxu0
      %v4921 = vadd.f32 %v4808, %v4920
      %4922 = vmatmul.f32.gmra.mxu0 %v4545
      %v4923 = vpop.f32.mrf.mxu0
      %v4924 = vadd.f32 %v4811, %v4923
      %4925 = vmatmul.f32.gmra.mxu0 %v4549
      %v4926 = vpop.f32.mrf.mxu0
      %v4927 = vadd.f32 %v4814, %v4926
      %4928 = vmatmul.f32.gmra.mxu0 %v4555
      %v4929 = vpop.f32.mrf.mxu0
      %v4930 = vadd.f32 %v4817, %v4929
      %4931 = vmatmul.f32.gmra.mxu0 %v4559
      %v4932 = vpop.f32.mrf.mxu0
      %v4933 = vadd.f32 %v4820, %v4932
      %4934 = vmatmul.f32.gmra.mxu0 %v4565
      %v4935 = vpop.f32.mrf.mxu0
      %v4936 = vadd.f32 %v4823, %v4935
      %4937 = vmatmul.f32.gmra.mxu0 %v4569
      %v4938 = vpop.f32.mrf.mxu0
      %v4939 = vadd.f32 %v4826, %v4938
      %4940 = vmatmul.f32.gmra.mxu0 %v4575
      %v4941 = vpop.f32.mrf.mxu0
      %v4942 = vadd.f32 %v4829, %v4941
      %4943 = vmatmul.f32.gmra.mxu0 %v4579
      %v4944 = vpop.f32.mrf.mxu0
      %v4945 = vadd.f32 %v4832, %v4944
      %4946 = vmatmul.f32.gmra.mxu0 %v4585
      %v4947 = vpop.f32.mrf.mxu0
      %v4948 = vadd.f32 %v4835, %v4947
      %4949 = vmatmul.f32.gmra.mxu0 %v4589
      %v4950 = vpop.f32.mrf.mxu0
      %v4951 = vadd.f32 %v4838, %v4950
      %4952 = vmatmul.f32.gmra.mxu0 %v4595
      %v4953 = vpop.f32.mrf.mxu0
      %v4954 = vadd.f32 %v4841, %v4953
      %4955 = vmatmul.f32.gmra.mxu0 %v4599
      %v4956 = vpop.f32.mrf.mxu0
      %v4957 = vadd.f32 %v4844, %v4956
      %4958 = vmatmul.f32.gmra.mxu0 %v4605
      %v4959 = vpop.f32.mrf.mxu0
      %v4960 = vadd.f32 %v4847, %v4959
      %4961 = vmatmul.f32.gmra.mxu0 %v4609
      %v4962 = vpop.f32.mrf.mxu0
      %v4963 = vadd.f32 %v4850, %v4962
      %4964 = vmatmul.f32.gmra.mxu0 %v4615
      %v4965 = vpop.f32.mrf.mxu0
      %v4966 = vadd.f32 %v4853, %v4965
      %4967 = vmatmul.f32.gmra.mxu0 %v4619
      %v4968 = vpop.f32.mrf.mxu0
      %v4969 = vadd.f32 %v4856, %v4968
      %4970 = vmatmul.f32.gmra.mxu0 %v4625
      %v4971 = vpop.f32.mrf.mxu0
      %v4972 = vadd.f32 %v4859, %v4971
      %4973 = vmatmul.f32.gmra.mxu0 %v4629
      %v4974 = vpop.f32.mrf.mxu0
      %v4975 = vadd.f32 %v4862, %v4974
      %4976 = vmatmul.f32.gmra.mxu0 %v4635
      %v4977 = vpop.f32.mrf.mxu0
      %v4978 = vadd.f32 %v4865, %v4977
      %4979 = vmatmul.f32.gmra.mxu0 %v4639
      %v4980 = vpop.f32.mrf.mxu0
      %v4981 = vadd.f32 %v4868, %v4980
      %4982 = vmatmul.f32.gmra.mxu0 %v4645
      %v4983 = vpop.f32.mrf.mxu0
      %v4984 = vadd.f32 %v4871, %v4983
      %4985 = vmatmul.f32.gmra.mxu0 %v4649
      %v4986 = vpop.f32.mrf.mxu0
      %v4987 = vadd.f32 %v4874, %v4986
      %4988 = vmatmul.f32.gmra.mxu0 %v4655
      %v4989 = vpop.f32.mrf.mxu0
      %v4990 = vadd.f32 %v4877, %v4989
      %4991 = vmatmul.f32.gmra.mxu0 %v4659
      %v4992 = vpop.f32.mrf.mxu0
      %v4993 = vadd.f32 %v4880, %v4992
      %4994 = vmatmul.f32.gmra.mxu0 %v4665
      %v4995 = vpop.f32.mrf.mxu0
      %v4996 = vadd.f32 %v4883, %v4995
      %4997 = vmatmul.f32.gmra.mxu0 %v4669
      %v4998 = vpop.f32.mrf.mxu0
      %v4999 = vadd.f32 %v4886, %v4998
      %5000 = vmatmul.f32.gmra.mxu0 %v4675
      %v5001 = vpop.f32.mrf.mxu0
      %v5002 = vadd.f32 %v4889, %v5001
      %5003 = vmatmul.f32.gmra.mxu0 %v4679
      %v5004 = vpop.f32.mrf.mxu0
      %v5005 = vadd.f32 %v4892, %v5004
      %5006 = vmatmul.f32.gmra.mxu0 %v4685
      %v5007 = vpop.f32.mrf.mxu0
      %v5008 = vadd.f32 %v4895, %v5007
      %5009 = vmatmul.f32.gmra.mxu0 %v4689
      %v5010 = vpop.f32.mrf.mxu0
      %v5011 = vadd.f32 %v4898, %v5010
      %5012 = vdwg.mxu0
      %v5013 = vadd.f32 %v4306, %v4918
      %v5014 = vadd.f32 %v4307, %v4921
      %v5015 = vadd.f32 %v4308, %v4924
      %v5016 = vadd.f32 %v4309, %v4927
      %v5017 = vadd.f32 %v4310, %v4930
      %v5018 = vadd.f32 %v4311, %v4933
      %v5019 = vadd.f32 %v4312, %v4936
      %v5020 = vadd.f32 %v4313, %v4939
      %v5021 = vadd.f32 %v4314, %v4942
      %v5022 = vadd.f32 %v4315, %v4945
      %v5023 = vadd.f32 %v4316, %v4948
      %v5024 = vadd.f32 %v4317, %v4951
      %v5025 = vadd.f32 %v4318, %v4954
      %v5026 = vadd.f32 %v4319, %v4957
      %v5027 = vadd.f32 %v4320, %v4960
      %v5028 = vadd.f32 %v4321, %v4963
      %v5029 = vadd.f32 %v4322, %v4966
      %v5030 = vadd.f32 %v4323, %v4969
      %v5031 = vadd.f32 %v4324, %v4972
      %v5032 = vadd.f32 %v4325, %v4975
      %v5033 = vadd.f32 %v4326, %v4978
      %v5034 = vadd.f32 %v4327, %v4981
      %v5035 = vadd.f32 %v4328, %v4984
      %v5036 = vadd.f32 %v4329, %v4987
      %v5037 = vadd.f32 %v4330, %v4990
      %v5038 = vadd.f32 %v4331, %v4993
      %v5039 = vadd.f32 %v4332, %v4996
      %v5040 = vadd.f32 %v4333, %v4999
      %v5041 = vadd.f32 %v4334, %v5002
      %v5042 = vadd.f32 %v4335, %v5005
      %v5043 = vadd.f32 %v4336, %v5008
      %v5044 = vadd.f32 %v4337, %v5011
      %v5045 = vld [vmem:[%s3982] sm:$0xfc]
      %v5046 = vld [vmem:[%s3982 + $0x8] sm:$0xfc]
      %v5047 = vld [vmem:[%s3982 + $0x20] sm:$0x3]
      %v5048 = vld [vmem:[%s3982 + $0x28] sm:$0x3]
      %v5049 = vld [vmem:[%s3982 + $0x30] sm:$0xfc]
      %v5050 = vld [vmem:[%s3982 + $0x38] sm:$0xfc]
      %v5051 = vld [vmem:[%s3982 + $0x50] sm:$0x3]
      %v5052 = vld [vmem:[%s3982 + $0x58] sm:$0x3]
      %v5053 = vld [vmem:[%s3982 + $0x60] sm:$0xfc]
      %v5054 = vld [vmem:[%s3982 + $0x68] sm:$0xfc]
      %v5055 = vld [vmem:[%s3982 + $0x80] sm:$0x3]
      %v5056 = vld [vmem:[%s3982 + $0x88] sm:$0x3]
      %v5057 = vld [vmem:[%s3982 + $0x90] sm:$0xfc]
      %v5058 = vld [vmem:[%s3982 + $0x98] sm:$0xfc]
      %v5059 = vld [vmem:[%s3982 + $0xb0] sm:$0x3]
      %v5060 = vld [vmem:[%s3982 + $0xb8] sm:$0x3]
      %v5061 = vld [vmem:[%s3982 + $0xc0] sm:$0xfc]
      %v5062 = vld [vmem:[%s3982 + $0xc8] sm:$0xfc]
      %v5063 = vld [vmem:[%s3982 + $0xe0] sm:$0x3]
      %v5064 = vld [vmem:[%s3982 + $0xe8] sm:$0x3]
      %v5065 = vld [vmem:[%s3982 + $0xf0] sm:$0xfc]
      %v5066 = vld [vmem:[%s3982 + $0xf8] sm:$0xfc]
      %v5067 = vld [vmem:[%s3982 + $0x110] sm:$0x3]
      %v5068 = vld [vmem:[%s3982 + $0x118] sm:$0x3]
      %v5069 = vld [vmem:[%s3982 + $0x120] sm:$0xfc]
      %v5070 = vld [vmem:[%s3982 + $0x128] sm:$0xfc]
      %v5071 = vld [vmem:[%s3982 + $0x140] sm:$0x3]
      %v5072 = vld [vmem:[%s3982 + $0x148] sm:$0x3]
      %v5073 = vld [vmem:[%s3982 + $0x150] sm:$0xfc]
      %v5074 = vld [vmem:[%s3982 + $0x158] sm:$0xfc]
      %v5075 = vld [vmem:[%s3982 + $0x170] sm:$0x3]
      %v5076 = vld [vmem:[%s3982 + $0x178] sm:$0x3]
      %v5077 = vld [vmem:[%s3982 + $0x180] sm:$0xfc]
      %v5078 = vld [vmem:[%s3982 + $0x188] sm:$0xfc]
      %v5079 = vld [vmem:[%s3982 + $0x1a0] sm:$0x3]
      %v5080 = vld [vmem:[%s3982 + $0x1a8] sm:$0x3]
      %v5081 = vld [vmem:[%s3982 + $0x1b0] sm:$0xfc]
      %v5082 = vld [vmem:[%s3982 + $0x1b8] sm:$0xfc]
      %v5083 = vld [vmem:[%s3982 + $0x1d0] sm:$0x3]
      %v5084 = vld [vmem:[%s3982 + $0x1d8] sm:$0x3]
      %v5085 = vld [vmem:[%s3982 + $0x1e0] sm:$0xfc]
      %v5086 = vld [vmem:[%s3982 + $0x1e8] sm:$0xfc]
      %v5087 = vld [vmem:[%s3982 + $0x200] sm:$0x3]
      %v5088 = vld [vmem:[%s3982 + $0x208] sm:$0x3]
      %v5089 = vld [vmem:[%s3982 + $0x210] sm:$0xfc]
      %v5090 = vld [vmem:[%s3982 + $0x218] sm:$0xfc]
      %v5091 = vld [vmem:[%s3982 + $0x230] sm:$0x3]
      %v5092 = vld [vmem:[%s3982 + $0x238] sm:$0x3]
      %v5093 = vld [vmem:[%s3982 + $0x240] sm:$0xfc]
      %v5094 = vld [vmem:[%s3982 + $0x248] sm:$0xfc]
      %v5095 = vld [vmem:[%s3982 + $0x260] sm:$0x3]
      %v5096 = vld [vmem:[%s3982 + $0x268] sm:$0x3]
      %v5097 = vld [vmem:[%s3982 + $0x270] sm:$0xfc]
      %v5098 = vld [vmem:[%s3982 + $0x278] sm:$0xfc]
      %v5099 = vld [vmem:[%s3982 + $0x290] sm:$0x3]
      %v5100 = vld [vmem:[%s3982 + $0x298] sm:$0x3]
      %v5101 = vld [vmem:[%s3982 + $0x2a0] sm:$0xfc]
      %v5102 = vld [vmem:[%s3982 + $0x2a8] sm:$0xfc]
      %v5103 = vld [vmem:[%s3982 + $0x2c0] sm:$0x3]
      %v5104 = vld [vmem:[%s3982 + $0x2c8] sm:$0x3]
      %v5105 = vld [vmem:[%s3982 + $0x2d0] sm:$0xfc]
      %v5106 = vld [vmem:[%s3982 + $0x2d8] sm:$0xfc]
      %v5107 = vld [vmem:[%s3982 + $0x2f0] sm:$0x3]
      %v5108 = vld [vmem:[%s3982 + $0x2f8] sm:$0x3]
      %v5173 = vrot.slane %v5045, 2
      %v5174 = vrot.slane %v4340, 2
      %v5175 = vsel %vm1760, %v5173, %v5174
      %v5176 = vrot.slane %v5046, 2
      %v5177 = vrot.slane %v4341, 2
      %v5178 = vsel %vm1760, %v5176, %v5177
      %v5179 = vrot.slane %v5047, 2
      %v5180 = vsel %vm1760, %v5174, %v5179
      %v5181 = vrot.slane %v5048, 2
      %v5182 = vsel %vm1760, %v5177, %v5181
      %v5183 = vrot.slane %v5049, 2
      %v5184 = vrot.slane %v4346, 2
      %v5185 = vsel %vm1760, %v5183, %v5184
      %v5186 = vrot.slane %v5050, 2
      %v5187 = vrot.slane %v4347, 2
      %v5188 = vsel %vm1760, %v5186, %v5187
      %v5189 = vrot.slane %v5051, 2
      %v5190 = vsel %vm1760, %v5184, %v5189
      %v5191 = vrot.slane %v5052, 2
      %v5192 = vsel %vm1760, %v5187, %v5191
      %v5193 = vrot.slane %v5053, 2
      %v5194 = vrot.slane %v4352, 2
      %v5195 = vsel %vm1760, %v5193, %v5194
      %v5196 = vrot.slane %v5054, 2
      %v5197 = vrot.slane %v4353, 2
      %v5198 = vsel %vm1760, %v5196, %v5197
      %v5199 = vrot.slane %v5055, 2
      %v5200 = vsel %vm1760, %v5194, %v5199
      %v5201 = vrot.slane %v5056, 2
      %v5202 = vsel %vm1760, %v5197, %v5201
      %v5203 = vrot.slane %v5057, 2
      %v5204 = vrot.slane %v4358, 2
      %v5205 = vsel %vm1760, %v5203, %v5204
      %v5206 = vrot.slane %v5058, 2
      %v5207 = vrot.slane %v4359, 2
      %v5208 = vsel %vm1760, %v5206, %v5207
      %v5209 = vrot.slane %v5059, 2
      %v5210 = vsel %vm1760, %v5204, %v5209
      %v5211 = vrot.slane %v5060, 2
      %v5212 = vsel %vm1760, %v5207, %v5211
      %v5213 = vrot.slane %v5061, 2
      %v5214 = vrot.slane %v4364, 2
      %v5215 = vsel %vm1760, %v5213, %v5214
      %v5216 = vrot.slane %v5062, 2
      %v5217 = vrot.slane %v4365, 2
      %v5218 = vsel %vm1760, %v5216, %v5217
      %v5219 = vrot.slane %v5063, 2
      %v5220 = vsel %vm1760, %v5214, %v5219
      %v5221 = vrot.slane %v5064, 2
      %v5222 = vsel %vm1760, %v5217, %v5221
      %v5223 = vrot.slane %v5065, 2
      %v5224 = vrot.slane %v4370, 2
      %v5225 = vsel %vm1760, %v5223, %v5224
      %v5226 = vrot.slane %v5066, 2
      %v5227 = vrot.slane %v4371, 2
      %v5228 = vsel %vm1760, %v5226, %v5227
      %v5229 = vrot.slane %v5067, 2
      %v5230 = vsel %vm1760, %v5224, %v5229
      %v5231 = vrot.slane %v5068, 2
      %v5232 = vsel %vm1760, %v5227, %v5231
      %v5233 = vrot.slane %v5069, 2
      %v5234 = vrot.slane %v4376, 2
      %v5235 = vsel %vm1760, %v5233, %v5234
      %v5236 = vrot.slane %v5070, 2
      %v5237 = vrot.slane %v4377, 2
      %v5238 = vsel %vm1760, %v5236, %v5237
      %v5239 = vrot.slane %v5071, 2
      %v5240 = vsel %vm1760, %v5234, %v5239
      %v5241 = vrot.slane %v5072, 2
      %v5242 = vsel %vm1760, %v5237, %v5241
      %v5243 = vrot.slane %v5073, 2
      %v5244 = vrot.slane %v4382, 2
      %v5245 = vsel %vm1760, %v5243, %v5244
      %v5246 = vrot.slane %v5074, 2
      %v5247 = vrot.slane %v4383, 2
      %v5248 = vsel %vm1760, %v5246, %v5247
      %v5249 = vrot.slane %v5075, 2
      %v5250 = vsel %vm1760, %v5244, %v5249
      %v5251 = vrot.slane %v5076, 2
      %v5252 = vsel %vm1760, %v5247, %v5251
      %v5253 = vrot.slane %v5077, 2
      %v5254 = vrot.slane %v4388, 2
      %v5255 = vsel %vm1760, %v5253, %v5254
      %v5256 = vrot.slane %v5078, 2
      %v5257 = vrot.slane %v4389, 2
      %v5258 = vsel %vm1760, %v5256, %v5257
      %v5259 = vrot.slane %v5079, 2
      %v5260 = vsel %vm1760, %v5254, %v5259
      %v5261 = vrot.slane %v5080, 2
      %v5262 = vsel %vm1760, %v5257, %v5261
      %v5263 = vrot.slane %v5081, 2
      %v5264 = vrot.slane %v4394, 2
      %v5265 = vsel %vm1760, %v5263, %v5264
      %v5266 = vrot.slane %v5082, 2
      %v5267 = vrot.slane %v4395, 2
      %v5268 = vsel %vm1760, %v5266, %v5267
      %v5269 = vrot.slane %v5083, 2
      %v5270 = vsel %vm1760, %v5264, %v5269
      %v5271 = vrot.slane %v5084, 2
      %v5272 = vsel %vm1760, %v5267, %v5271
      %v5273 = vrot.slane %v5085, 2
      %v5274 = vrot.slane %v4400, 2
      %v5275 = vsel %vm1760, %v5273, %v5274
      %v5276 = vrot.slane %v5086, 2
      %v5277 = vrot.slane %v4401, 2
      %v5278 = vsel %vm1760, %v5276, %v5277
      %v5279 = vrot.slane %v5087, 2
      %v5280 = vsel %vm1760, %v5274, %v5279
      %v5281 = vrot.slane %v5088, 2
      %v5282 = vsel %vm1760, %v5277, %v5281
      %v5283 = vrot.slane %v5089, 2
      %v5284 = vrot.slane %v4406, 2
      %v5285 = vsel %vm1760, %v5283, %v5284
      %v5286 = vrot.slane %v5090, 2
      %v5287 = vrot.slane %v4407, 2
      %v5288 = vsel %vm1760, %v5286, %v5287
      %v5289 = vrot.slane %v5091, 2
      %v5290 = vsel %vm1760, %v5284, %v5289
      %v5291 = vrot.slane %v5092, 2
      %v5292 = vsel %vm1760, %v5287, %v5291
      %v5293 = vrot.slane %v5093, 2
      %v5294 = vrot.slane %v4412, 2
      %v5295 = vsel %vm1760, %v5293, %v5294
      %v5296 = vrot.slane %v5094, 2
      %v5297 = vrot.slane %v4413, 2
      %v5298 = vsel %vm1760, %v5296, %v5297
      %v5299 = vrot.slane %v5095, 2
      %v5300 = vsel %vm1760, %v5294, %v5299
      %v5301 = vrot.slane %v5096, 2
      %v5302 = vsel %vm1760, %v5297, %v5301
      %v5303 = vrot.slane %v5097, 2
      %v5304 = vrot.slane %v4418, 2
      %v5305 = vsel %vm1760, %v5303, %v5304
      %v5306 = vrot.slane %v5098, 2
      %v5307 = vrot.slane %v4419, 2
      %v5308 = vsel %vm1760, %v5306, %v5307
      %v5309 = vrot.slane %v5099, 2
      %v5310 = vsel %vm1760, %v5304, %v5309
      %v5311 = vrot.slane %v5100, 2
      %v5312 = vsel %vm1760, %v5307, %v5311
      %v5313 = vrot.slane %v5101, 2
      %v5314 = vrot.slane %v4424, 2
      %v5315 = vsel %vm1760, %v5313, %v5314
      %v5316 = vrot.slane %v5102, 2
      %v5317 = vrot.slane %v4425, 2
      %v5318 = vsel %vm1760, %v5316, %v5317
      %v5319 = vrot.slane %v5103, 2
      %v5320 = vsel %vm1760, %v5314, %v5319
      %v5321 = vrot.slane %v5104, 2
      %v5322 = vsel %vm1760, %v5317, %v5321
      %v5323 = vrot.slane %v5105, 2
      %v5324 = vrot.slane %v4430, 2
      %v5325 = vsel %vm1760, %v5323, %v5324
      %v5326 = vrot.slane %v5106, 2
      %v5327 = vrot.slane %v4431, 2
      %v5328 = vsel %vm1760, %v5326, %v5327
      %v5329 = vrot.slane %v5107, 2
      %v5330 = vsel %vm1760, %v5324, %v5329
      %v5331 = vrot.slane %v5108, 2
      %v5332 = vsel %vm1760, %v5327, %v5331
      %s5397 = scalar_lea.vmem %s3, 2048
      %v5398 = vld [vmem:[%s5397] sm:$0xff]
      %v5399 = vld [vmem:[%s5397 + $0x8] sm:$0xff]
      %v5400 = vld [vmem:[%s5397 + $0x10] sm:$0xff]
      %v5401 = vld [vmem:[%s5397 + $0x18] sm:$0xff]
      %v5402 = vld [vmem:[%s5397 + $0x20] sm:$0xff]
      %v5403 = vld [vmem:[%s5397 + $0x28] sm:$0xff]
      %v5404 = vld [vmem:[%s5397 + $0x30] sm:$0xff]
      %v5405 = vld [vmem:[%s5397 + $0x38] sm:$0xff]
      %v5406 = vld [vmem:[%s5397 + $0x40] sm:$0xff]
      %v5407 = vld [vmem:[%s5397 + $0x48] sm:$0xff]
      %v5408 = vld [vmem:[%s5397 + $0x50] sm:$0xff]
      %v5409 = vld [vmem:[%s5397 + $0x58] sm:$0xff]
      %v5410 = vld [vmem:[%s5397 + $0x60] sm:$0xff]
      %v5411 = vld [vmem:[%s5397 + $0x68] sm:$0xff]
      %v5412 = vld [vmem:[%s5397 + $0x70] sm:$0xff]
      %v5413 = vld [vmem:[%s5397 + $0x78] sm:$0xff]
      %v5414 = vld [vmem:[%s5397 + $0x80] sm:$0xff]
      %v5415 = vld [vmem:[%s5397 + $0x88] sm:$0xff]
      %v5416 = vld [vmem:[%s5397 + $0x90] sm:$0xff]
      %v5417 = vld [vmem:[%s5397 + $0x98] sm:$0xff]
      %v5418 = vld [vmem:[%s5397 + $0xa0] sm:$0xff]
      %v5419 = vld [vmem:[%s5397 + $0xa8] sm:$0xff]
      %v5420 = vld [vmem:[%s5397 + $0xb0] sm:$0xff]
      %v5421 = vld [vmem:[%s5397 + $0xb8] sm:$0xff]
      %v5422 = vld [vmem:[%s5397 + $0xc0] sm:$0xff]
      %v5423 = vld [vmem:[%s5397 + $0xc8] sm:$0xff]
      %v5424 = vld [vmem:[%s5397 + $0xd0] sm:$0xff]
      %v5425 = vld [vmem:[%s5397 + $0xd8] sm:$0xff]
      %v5426 = vld [vmem:[%s5397 + $0xe0] sm:$0xff]
      %v5427 = vld [vmem:[%s5397 + $0xe8] sm:$0xff]
      %v5428 = vld [vmem:[%s5397 + $0xf0] sm:$0xff]
      %v5429 = vld [vmem:[%s5397 + $0xf8] sm:$0xff]
      %5430 = vmatpush.msra.mxu0 %v5413
      %5431 = vmatpush.msra.mxu0 %v5412
      %5432 = vmatpush.msra.mxu0 %v5411
      %5433 = vmatpush.msra.mxu0 %v5410
      %5434 = vmatpush.msra.mxu0 %v5409
      %5435 = vmatpush.msra.mxu0 %v5408
      %5436 = vmatpush.msra.mxu0 %v5407
      %5437 = vmatpush.msra.mxu0 %v5406
      %5438 = vmatpush.msra.mxu0 %v5405
      %5439 = vmatpush.msra.mxu0 %v5404
      %5440 = vmatpush.msra.mxu0 %v5403
      %5441 = vmatpush.msra.mxu0 %v5402
      %5442 = vmatpush.msra.mxu0 %v5401
      %5443 = vmatpush.msra.mxu0 %v5400
      %5444 = vmatpush.msra.mxu0 %v5399
      %5445 = vmatpush.msra.mxu0 %v5398
      %5446 = vmatmul.f32.gmra.mxu0 %v5175
      %v5447 = vpop.f32.mrf.mxu0
      %v5448 = vadd.f32 0.0, %v5447
      %5449 = vmatmul.f32.gmra.mxu0 %v5180
      %v5450 = vpop.f32.mrf.mxu0
      %v5451 = vadd.f32 0.0, %v5450
      %5452 = vmatmul.f32.gmra.mxu0 %v5185
      %v5453 = vpop.f32.mrf.mxu0
      %v5454 = vadd.f32 0.0, %v5453
      %5455 = vmatmul.f32.gmra.mxu0 %v5190
      %v5456 = vpop.f32.mrf.mxu0
      %v5457 = vadd.f32 0.0, %v5456
      %5458 = vmatmul.f32.gmra.mxu0 %v5195
      %v5459 = vpop.f32.mrf.mxu0
      %v5460 = vadd.f32 0.0, %v5459
      %5461 = vmatmul.f32.gmra.mxu0 %v5200
      %v5462 = vpop.f32.mrf.mxu0
      %v5463 = vadd.f32 0.0, %v5462
      %5464 = vmatmul.f32.gmra.mxu0 %v5205
      %v5465 = vpop.f32.mrf.mxu0
      %v5466 = vadd.f32 0.0, %v5465
      %5467 = vmatmul.f32.gmra.mxu0 %v5210
      %v5468 = vpop.f32.mrf.mxu0
      %v5469 = vadd.f32 0.0, %v5468
      %5470 = vmatmul.f32.gmra.mxu0 %v5215
      %v5471 = vpop.f32.mrf.mxu0
      %v5472 = vadd.f32 0.0, %v5471
      %5473 = vmatmul.f32.gmra.mxu0 %v5220
      %v5474 = vpop.f32.mrf.mxu0
      %v5475 = vadd.f32 0.0, %v5474
      %5476 = vmatmul.f32.gmra.mxu0 %v5225
      %v5477 = vpop.f32.mrf.mxu0
      %v5478 = vadd.f32 0.0, %v5477
      %5479 = vmatmul.f32.gmra.mxu0 %v5230
      %v5480 = vpop.f32.mrf.mxu0
      %v5481 = vadd.f32 0.0, %v5480
      %5482 = vmatmul.f32.gmra.mxu0 %v5235
      %v5483 = vpop.f32.mrf.mxu0
      %v5484 = vadd.f32 0.0, %v5483
      %5485 = vmatmul.f32.gmra.mxu0 %v5240
      %v5486 = vpop.f32.mrf.mxu0
      %v5487 = vadd.f32 0.0, %v5486
      %5488 = vmatmul.f32.gmra.mxu0 %v5245
      %v5489 = vpop.f32.mrf.mxu0
      %v5490 = vadd.f32 0.0, %v5489
      %5491 = vmatmul.f32.gmra.mxu0 %v5250
      %v5492 = vpop.f32.mrf.mxu0
      %v5493 = vadd.f32 0.0, %v5492
      %5494 = vmatmul.f32.gmra.mxu0 %v5255
      %v5495 = vpop.f32.mrf.mxu0
      %v5496 = vadd.f32 0.0, %v5495
      %5497 = vmatmul.f32.gmra.mxu0 %v5260
      %v5498 = vpop.f32.mrf.mxu0
      %v5499 = vadd.f32 0.0, %v5498
      %5500 = vmatmul.f32.gmra.mxu0 %v5265
      %v5501 = vpop.f32.mrf.mxu0
      %v5502 = vadd.f32 0.0, %v5501
      %5503 = vmatmul.f32.gmra.mxu0 %v5270
      %v5504 = vpop.f32.mrf.mxu0
      %v5505 = vadd.f32 0.0, %v5504
      %5506 = vmatmul.f32.gmra.mxu0 %v5275
      %v5507 = vpop.f32.mrf.mxu0
      %v5508 = vadd.f32 0.0, %v5507
      %5509 = vmatmul.f32.gmra.mxu0 %v5280
      %v5510 = vpop.f32.mrf.mxu0
      %v5511 = vadd.f32 0.0, %v5510
      %5512 = vmatmul.f32.gmra.mxu0 %v5285
      %v5513 = vpop.f32.mrf.mxu0
      %v5514 = vadd.f32 0.0, %v5513
      %5515 = vmatmul.f32.gmra.mxu0 %v5290
      %v5516 = vpop.f32.mrf.mxu0
      %v5517 = vadd.f32 0.0, %v5516
      %5518 = vmatmul.f32.gmra.mxu0 %v5295
      %v5519 = vpop.f32.mrf.mxu0
      %v5520 = vadd.f32 0.0, %v5519
      %5521 = vmatmul.f32.gmra.mxu0 %v5300
      %v5522 = vpop.f32.mrf.mxu0
      %v5523 = vadd.f32 0.0, %v5522
      %5524 = vmatmul.f32.gmra.mxu0 %v5305
      %v5525 = vpop.f32.mrf.mxu0
      %v5526 = vadd.f32 0.0, %v5525
      %5527 = vmatmul.f32.gmra.mxu0 %v5310
      %v5528 = vpop.f32.mrf.mxu0
      %v5529 = vadd.f32 0.0, %v5528
      %5530 = vmatmul.f32.gmra.mxu0 %v5315
      %v5531 = vpop.f32.mrf.mxu0
      %v5532 = vadd.f32 0.0, %v5531
      %5533 = vmatmul.f32.gmra.mxu0 %v5320
      %v5534 = vpop.f32.mrf.mxu0
      %v5535 = vadd.f32 0.0, %v5534
      %5536 = vmatmul.f32.gmra.mxu0 %v5325
      %v5537 = vpop.f32.mrf.mxu0
      %v5538 = vadd.f32 0.0, %v5537
      %5539 = vmatmul.f32.gmra.mxu0 %v5330
      %v5540 = vpop.f32.mrf.mxu0
      %v5541 = vadd.f32 0.0, %v5540
      %5542 = vdwg.mxu0
      %5543 = vmatpush.msra.mxu0 %v5429
      %5544 = vmatpush.msra.mxu0 %v5428
      %5545 = vmatpush.msra.mxu0 %v5427
      %5546 = vmatpush.msra.mxu0 %v5426
      %5547 = vmatpush.msra.mxu0 %v5425
      %5548 = vmatpush.msra.mxu0 %v5424
      %5549 = vmatpush.msra.mxu0 %v5423
      %5550 = vmatpush.msra.mxu0 %v5422
      %5551 = vmatpush.msra.mxu0 %v5421
      %5552 = vmatpush.msra.mxu0 %v5420
      %5553 = vmatpush.msra.mxu0 %v5419
      %5554 = vmatpush.msra.mxu0 %v5418
      %5555 = vmatpush.msra.mxu0 %v5417
      %5556 = vmatpush.msra.mxu0 %v5416
      %5557 = vmatpush.msra.mxu0 %v5415
      %5558 = vmatpush.msra.mxu0 %v5414
      %5559 = vmatmul.f32.gmra.mxu0 %v5178
      %v5560 = vpop.f32.mrf.mxu0
      %v5561 = vadd.f32 %v5448, %v5560
      %5562 = vmatmul.f32.gmra.mxu0 %v5182
      %v5563 = vpop.f32.mrf.mxu0
      %v5564 = vadd.f32 %v5451, %v5563
      %5565 = vmatmul.f32.gmra.mxu0 %v5188
      %v5566 = vpop.f32.mrf.mxu0
      %v5567 = vadd.f32 %v5454, %v5566
      %5568 = vmatmul.f32.gmra.mxu0 %v5192
      %v5569 = vpop.f32.mrf.mxu0
      %v5570 = vadd.f32 %v5457, %v5569
      %5571 = vmatmul.f32.gmra.mxu0 %v5198
      %v5572 = vpop.f32.mrf.mxu0
      %v5573 = vadd.f32 %v5460, %v5572
      %5574 = vmatmul.f32.gmra.mxu0 %v5202
      %v5575 = vpop.f32.mrf.mxu0
      %v5576 = vadd.f32 %v5463, %v5575
      %5577 = vmatmul.f32.gmra.mxu0 %v5208
      %v5578 = vpop.f32.mrf.mxu0
      %v5579 = vadd.f32 %v5466, %v5578
      %5580 = vmatmul.f32.gmra.mxu0 %v5212
      %v5581 = vpop.f32.mrf.mxu0
      %v5582 = vadd.f32 %v5469, %v5581
      %5583 = vmatmul.f32.gmra.mxu0 %v5218
      %v5584 = vpop.f32.mrf.mxu0
      %v5585 = vadd.f32 %v5472, %v5584
      %5586 = vmatmul.f32.gmra.mxu0 %v5222
      %v5587 = vpop.f32.mrf.mxu0
      %v5588 = vadd.f32 %v5475, %v5587
      %5589 = vmatmul.f32.gmra.mxu0 %v5228
      %v5590 = vpop.f32.mrf.mxu0
      %v5591 = vadd.f32 %v5478, %v5590
      %5592 = vmatmul.f32.gmra.mxu0 %v5232
      %v5593 = vpop.f32.mrf.mxu0
      %v5594 = vadd.f32 %v5481, %v5593
      %5595 = vmatmul.f32.gmra.mxu0 %v5238
      %v5596 = vpop.f32.mrf.mxu0
      %v5597 = vadd.f32 %v5484, %v5596
      %5598 = vmatmul.f32.gmra.mxu0 %v5242
      %v5599 = vpop.f32.mrf.mxu0
      %v5600 = vadd.f32 %v5487, %v5599
      %5601 = vmatmul.f32.gmra.mxu0 %v5248
      %v5602 = vpop.f32.mrf.mxu0
      %v5603 = vadd.f32 %v5490, %v5602
      %5604 = vmatmul.f32.gmra.mxu0 %v5252
      %v5605 = vpop.f32.mrf.mxu0
      %v5606 = vadd.f32 %v5493, %v5605
      %5607 = vmatmul.f32.gmra.mxu0 %v5258
      %v5608 = vpop.f32.mrf.mxu0
      %v5609 = vadd.f32 %v5496, %v5608
      %5610 = vmatmul.f32.gmra.mxu0 %v5262
      %v5611 = vpop.f32.mrf.mxu0
      %v5612 = vadd.f32 %v5499, %v5611
      %5613 = vmatmul.f32.gmra.mxu0 %v5268
      %v5614 = vpop.f32.mrf.mxu0
      %v5615 = vadd.f32 %v5502, %v5614
      %5616 = vmatmul.f32.gmra.mxu0 %v5272
      %v5617 = vpop.f32.mrf.mxu0
      %v5618 = vadd.f32 %v5505, %v5617
      %5619 = vmatmul.f32.gmra.mxu0 %v5278
      %v5620 = vpop.f32.mrf.mxu0
      %v5621 = vadd.f32 %v5508, %v5620
      %5622 = vmatmul.f32.gmra.mxu0 %v5282
      %v5623 = vpop.f32.mrf.mxu0
      %v5624 = vadd.f32 %v5511, %v5623
      %5625 = vmatmul.f32.gmra.mxu0 %v5288
      %v5626 = vpop.f32.mrf.mxu0
      %v5627 = vadd.f32 %v5514, %v5626
      %5628 = vmatmul.f32.gmra.mxu0 %v5292
      %v5629 = vpop.f32.mrf.mxu0
      %v5630 = vadd.f32 %v5517, %v5629
      %5631 = vmatmul.f32.gmra.mxu0 %v5298
      %v5632 = vpop.f32.mrf.mxu0
      %v5633 = vadd.f32 %v5520, %v5632
      %5634 = vmatmul.f32.gmra.mxu0 %v5302
      %v5635 = vpop.f32.mrf.mxu0
      %v5636 = vadd.f32 %v5523, %v5635
      %5637 = vmatmul.f32.gmra.mxu0 %v5308
      %v5638 = vpop.f32.mrf.mxu0
      %v5639 = vadd.f32 %v5526, %v5638
      %5640 = vmatmul.f32.gmra.mxu0 %v5312
      %v5641 = vpop.f32.mrf.mxu0
      %v5642 = vadd.f32 %v5529, %v5641
      %5643 = vmatmul.f32.gmra.mxu0 %v5318
      %v5644 = vpop.f32.mrf.mxu0
      %v5645 = vadd.f32 %v5532, %v5644
      %5646 = vmatmul.f32.gmra.mxu0 %v5322
      %v5647 = vpop.f32.mrf.mxu0
      %v5648 = vadd.f32 %v5535, %v5647
      %5649 = vmatmul.f32.gmra.mxu0 %v5328
      %v5650 = vpop.f32.mrf.mxu0
      %v5651 = vadd.f32 %v5538, %v5650
      %5652 = vmatmul.f32.gmra.mxu0 %v5332
      %v5653 = vpop.f32.mrf.mxu0
      %v5654 = vadd.f32 %v5541, %v5653
      %5655 = vdwg.mxu0
      %v5656 = vadd.f32 %v5013, %v5561
      %v5657 = vadd.f32 %v5014, %v5564
      %v5658 = vadd.f32 %v5015, %v5567
      %v5659 = vadd.f32 %v5016, %v5570
      %v5660 = vadd.f32 %v5017, %v5573
      %v5661 = vadd.f32 %v5018, %v5576
      %v5662 = vadd.f32 %v5019, %v5579
      %v5663 = vadd.f32 %v5020, %v5582
      %v5664 = vadd.f32 %v5021, %v5585
      %v5665 = vadd.f32 %v5022, %v5588
      %v5666 = vadd.f32 %v5023, %v5591
      %v5667 = vadd.f32 %v5024, %v5594
      %v5668 = vadd.f32 %v5025, %v5597
      %v5669 = vadd.f32 %v5026, %v5600
      %v5670 = vadd.f32 %v5027, %v5603
      %v5671 = vadd.f32 %v5028, %v5606
      %v5672 = vadd.f32 %v5029, %v5609
      %v5673 = vadd.f32 %v5030, %v5612
      %v5674 = vadd.f32 %v5031, %v5615
      %v5675 = vadd.f32 %v5032, %v5618
      %v5676 = vadd.f32 %v5033, %v5621
      %v5677 = vadd.f32 %v5034, %v5624
      %v5678 = vadd.f32 %v5035, %v5627
      %v5679 = vadd.f32 %v5036, %v5630
      %v5680 = vadd.f32 %v5037, %v5633
      %v5681 = vadd.f32 %v5038, %v5636
      %v5682 = vadd.f32 %v5039, %v5639
      %v5683 = vadd.f32 %v5040, %v5642
      %v5684 = vadd.f32 %v5041, %v5645
      %v5685 = vadd.f32 %v5042, %v5648
      %v5686 = vadd.f32 %v5043, %v5651
      %v5687 = vadd.f32 %v5044, %v5654
      %v5688 = vld [vmem:[%s4] sm:$0x1]
      %v5690 = vperm.slane %v5688, 0
      %v5692 = vadd.f32 %v5656, %v5690
      %v5693 = vadd.f32 %v5657, %v5690
      %v5694 = vadd.f32 %v5658, %v5690
      %v5695 = vadd.f32 %v5659, %v5690
      %v5696 = vadd.f32 %v5660, %v5690
      %v5697 = vadd.f32 %v5661, %v5690
      %v5698 = vadd.f32 %v5662, %v5690
      %v5699 = vadd.f32 %v5663, %v5690
      %v5700 = vadd.f32 %v5664, %v5690
      %v5701 = vadd.f32 %v5665, %v5690
      %v5702 = vadd.f32 %v5666, %v5690
      %v5703 = vadd.f32 %v5667, %v5690
      %v5704 = vadd.f32 %v5668, %v5690
      %v5705 = vadd.f32 %v5669, %v5690
      %v5706 = vadd.f32 %v5670, %v5690
      %v5707 = vadd.f32 %v5671, %v5690
      %v5708 = vadd.f32 %v5672, %v5690
      %v5709 = vadd.f32 %v5673, %v5690
      %v5710 = vadd.f32 %v5674, %v5690
      %v5711 = vadd.f32 %v5675, %v5690
      %v5712 = vadd.f32 %v5676, %v5690
      %v5713 = vadd.f32 %v5677, %v5690
      %v5714 = vadd.f32 %v5678, %v5690
      %v5715 = vadd.f32 %v5679, %v5690
      %v5716 = vadd.f32 %v5680, %v5690
      %v5717 = vadd.f32 %v5681, %v5690
      %v5718 = vadd.f32 %v5682, %v5690
      %v5719 = vadd.f32 %v5683, %v5690
      %v5720 = vadd.f32 %v5684, %v5690
      %v5721 = vadd.f32 %v5685, %v5690
      %v5722 = vadd.f32 %v5686, %v5690
      %v5723 = vadd.f32 %v5687, %v5690
      %5724 = vst [vmem:[%s439] sm:$0xff] %v5692
      %5725 = vst [vmem:[%s439 + $0x8] sm:$0xff] %v5693
      %5726 = vst [vmem:[%s439 + $0x10] sm:$0xff] %v5694
      %5727 = vst [vmem:[%s439 + $0x18] sm:$0xff] %v5695
      %5728 = vst [vmem:[%s439 + $0x20] sm:$0xff] %v5696
      %5729 = vst [vmem:[%s439 + $0x28] sm:$0xff] %v5697
      %5730 = vst [vmem:[%s439 + $0x30] sm:$0xff] %v5698
      %5731 = vst [vmem:[%s439 + $0x38] sm:$0xff] %v5699
      %5732 = vst [vmem:[%s439 + $0x40] sm:$0xff] %v5700
      %5733 = vst [vmem:[%s439 + $0x48] sm:$0xff] %v5701
      %5734 = vst [vmem:[%s439 + $0x50] sm:$0xff] %v5702
      %5735 = vst [vmem:[%s439 + $0x58] sm:$0xff] %v5703
      %5736 = vst [vmem:[%s439 + $0x60] sm:$0xff] %v5704
      %5737 = vst [vmem:[%s439 + $0x68] sm:$0xff] %v5705
      %5738 = vst [vmem:[%s439 + $0x70] sm:$0xff] %v5706
      %5739 = vst [vmem:[%s439 + $0x78] sm:$0xff] %v5707
      %5740 = vst [vmem:[%s439 + $0x80] sm:$0xff] %v5708
      %5741 = vst [vmem:[%s439 + $0x88] sm:$0xff] %v5709
      %5742 = vst [vmem:[%s439 + $0x90] sm:$0xff] %v5710
      %5743 = vst [vmem:[%s439 + $0x98] sm:$0xff] %v5711
      %5744 = vst [vmem:[%s439 + $0xa0] sm:$0xff] %v5712
      %5745 = vst [vmem:[%s439 + $0xa8] sm:$0xff] %v5713
      %5746 = vst [vmem:[%s439 + $0xb0] sm:$0xff] %v5714
      %5747 = vst [vmem:[%s439 + $0xb8] sm:$0xff] %v5715
      %5748 = vst [vmem:[%s439 + $0xc0] sm:$0xff] %v5716
      %5749 = vst [vmem:[%s439 + $0xc8] sm:$0xff] %v5717
      %5750 = vst [vmem:[%s439 + $0xd0] sm:$0xff] %v5718
      %5751 = vst [vmem:[%s439 + $0xd8] sm:$0xff] %v5719
      %5752 = vst [vmem:[%s439 + $0xe0] sm:$0xff] %v5720
      %5753 = vst [vmem:[%s439 + $0xe8] sm:$0xff] %v5721
      %5754 = vst [vmem:[%s439 + $0xf0] sm:$0xff] %v5722
      %5755 = vst [vmem:[%s439 + $0xf8] sm:$0xff] %v5723
      %v5756 = vadd.f32 %v5692, %v5693
      %v5757 = vadd.f32 %v5756, %v5694
      %v5758 = vadd.f32 %v5757, %v5695
      %v5759 = vadd.f32 %v5758, %v5696
      %v5760 = vadd.f32 %v5759, %v5697
      %v5761 = vadd.f32 %v5760, %v5698
      %v5762 = vadd.f32 %v5761, %v5699
      %v5763 = vadd.f32 %v5762, %v5700
      %v5764 = vadd.f32 %v5763, %v5701
      %v5765 = vadd.f32 %v5764, %v5702
      %v5766 = vadd.f32 %v5765, %v5703
      %v5767 = vadd.f32 %v5766, %v5704
      %v5768 = vadd.f32 %v5767, %v5705
      %v5769 = vadd.f32 %v5768, %v5706
      %v5770 = vadd.f32 %v5769, %v5707
      %v5771 = vadd.f32 %v5770, %v5708
      %v5772 = vadd.f32 %v5771, %v5709
      %v5773 = vadd.f32 %v5772, %v5710
      %v5774 = vadd.f32 %v5773, %v5711
      %v5775 = vadd.f32 %v5774, %v5712
      %v5776 = vadd.f32 %v5775, %v5713
      %v5777 = vadd.f32 %v5776, %v5714
      %v5778 = vadd.f32 %v5777, %v5715
      %v5779 = vadd.f32 %v5778, %v5716
      %v5780 = vadd.f32 %v5779, %v5717
      %v5781 = vadd.f32 %v5780, %v5718
      %v5782 = vadd.f32 %v5781, %v5719
      %v5783 = vadd.f32 %v5782, %v5720
      %v5784 = vadd.f32 %v5783, %v5721
      %v5785 = vadd.f32 %v5784, %v5722
      %v5786 = vadd.f32 %v5785, %v5723
      %v5787 = vrot.slane %v5786, 4
      %v5788 = vadd.f32 %v5786, %v5787
      %v5789 = vrot.slane %v5788, 2
      %v5790 = vadd.f32 %v5788, %v5789
      %v5791 = vrot.slane %v5790, 1
      %v5792 = vadd.f32 %v5790, %v5791
      %5793 = vst [vmem:[%s447] sm:$0x1] %v5792
      %v5794 = vmul.f32 %v5692, %v5692
      %v5795 = vmul.f32 %v5693, %v5693
      %v5796 = vmul.f32 %v5694, %v5694
      %v5797 = vmul.f32 %v5695, %v5695
      %v5798 = vmul.f32 %v5696, %v5696
      %v5799 = vmul.f32 %v5697, %v5697
      %v5800 = vmul.f32 %v5698, %v5698
      %v5801 = vmul.f32 %v5699, %v5699
      %v5802 = vmul.f32 %v5700, %v5700
      %v5803 = vmul.f32 %v5701, %v5701
      %v5804 = vmul.f32 %v5702, %v5702
      %v5805 = vmul.f32 %v5703, %v5703
      %v5806 = vmul.f32 %v5704, %v5704
      %v5807 = vmul.f32 %v5705, %v5705
      %v5808 = vmul.f32 %v5706, %v5706
      %v5809 = vmul.f32 %v5707, %v5707
      %v5810 = vmul.f32 %v5708, %v5708
      %v5811 = vmul.f32 %v5709, %v5709
      %v5812 = vmul.f32 %v5710, %v5710
      %v5813 = vmul.f32 %v5711, %v5711
      %v5814 = vmul.f32 %v5712, %v5712
      %v5815 = vmul.f32 %v5713, %v5713
      %v5816 = vmul.f32 %v5714, %v5714
      %v5817 = vmul.f32 %v5715, %v5715
      %v5818 = vmul.f32 %v5716, %v5716
      %v5819 = vmul.f32 %v5717, %v5717
      %v5820 = vmul.f32 %v5718, %v5718
      %v5821 = vmul.f32 %v5719, %v5719
      %v5822 = vmul.f32 %v5720, %v5720
      %v5823 = vmul.f32 %v5721, %v5721
      %v5824 = vmul.f32 %v5722, %v5722
      %v5825 = vmul.f32 %v5723, %v5723
      %v5826 = vadd.f32 %v5794, %v5795
      %v5827 = vadd.f32 %v5826, %v5796
      %v5828 = vadd.f32 %v5827, %v5797
      %v5829 = vadd.f32 %v5828, %v5798
      %v5830 = vadd.f32 %v5829, %v5799
      %v5831 = vadd.f32 %v5830, %v5800
      %v5832 = vadd.f32 %v5831, %v5801
      %v5833 = vadd.f32 %v5832, %v5802
      %v5834 = vadd.f32 %v5833, %v5803
      %v5835 = vadd.f32 %v5834, %v5804
      %v5836 = vadd.f32 %v5835, %v5805
      %v5837 = vadd.f32 %v5836, %v5806
      %v5838 = vadd.f32 %v5837, %v5807
      %v5839 = vadd.f32 %v5838, %v5808
      %v5840 = vadd.f32 %v5839, %v5809
      %v5841 = vadd.f32 %v5840, %v5810
      %v5842 = vadd.f32 %v5841, %v5811
      %v5843 = vadd.f32 %v5842, %v5812
      %v5844 = vadd.f32 %v5843, %v5813
      %v5845 = vadd.f32 %v5844, %v5814
      %v5846 = vadd.f32 %v5845, %v5815
      %v5847 = vadd.f32 %v5846, %v5816
      %v5848 = vadd.f32 %v5847, %v5817
      %v5849 = vadd.f32 %v5848, %v5818
      %v5850 = vadd.f32 %v5849, %v5819
      %v5851 = vadd.f32 %v5850, %v5820
      %v5852 = vadd.f32 %v5851, %v5821
      %v5853 = vadd.f32 %v5852, %v5822
      %v5854 = vadd.f32 %v5853, %v5823
      %v5855 = vadd.f32 %v5854, %v5824
      %v5856 = vadd.f32 %v5855, %v5825
      %v5857 = vrot.slane %v5856, 4
      %v5858 = vadd.f32 %v5856, %v5857
      %v5859 = vrot.slane %v5858, 2
      %v5860 = vadd.f32 %v5858, %v5859
      %v5861 = vrot.slane %v5860, 1
      %v5862 = vadd.f32 %v5860, %v5861
      %5863 = vst [vmem:[%s447 + $0x1] sm:$0x1] %v5862
      %s5864 = smul.u32 16, %s23
      %p5865 = scmp.lt.s32.totalorder %s22, 1
      %s5866 = scalar_select %p5865, %s22, 1
      %p5867 = scmp.lt.s32.totalorder %s5864, 15
      %s5868 = scalar_select %p5867, %s5864, 15
      %s5869 = smul.addr %s5868, 2
      %s5870 = smul.addr %s5866, 32
      %s5871 = sadd.s32 %s5869, %s5870
      %s5872 = smul.addr %s5871, 8
      %s5873 = scalar_lea.vmem %s5, %s5872
      %p5874 = scmp.lt.s32.totalorder %s22, 1
      %s5875 = scalar_select %p5874, %s22, 1
      %p5876 = scmp.lt.s32.totalorder %s23, 0
      %s5877 = scalar_select %p5876, %s23, 0
      %s5878 = sadd.s32 %s5877, %s5875
      %s5879 = smul.addr %s5878, 2
      %s5880 = scalar_lea.vmem %s6, %s5879
      // Predicated region
      $region41: #{up_forward.6} parent=39 // pred_check
        %p5881 = pneg %p186
      $region42: #{up_forward.6} parent=39 // pred_check_branch
        %5883 = sbr.rel (%p5881) target = $region44
      $region43: #{up_forward.6} parent=39 // pred_region
        %s5884 = smul.u32 16, %s23
      $region44: #{up_forward.6} parent=39 // pred_fallthru
        _
      // Predicated region
      $region45: #{up_forward.6} parent=39 // pred_check
        %p5885 = pneg %p214
      $region46: #{up_forward.6} parent=39 // pred_check_branch
        %5887 = sbr.rel (%p5885) target = $region48
      $region47: #{up_forward.6} parent=39 // pred_region
        _
      $region48: #{up_forward.6} parent=39 // pred_fallthru
        _
    $region40: #{up_forward.6} parent=5 // pred_fallthru
      _
    %p5888 = scmp.le.s32.totalorder 2, %s13
    // Predicated region
    $region49: #{up_forward.6} parent=5 // pred_check
      %p5889 = pneg %p5888
    $region50: #{up_forward.6} parent=5 // pred_check_branch
      %5891 = sbr.rel (%p5889) target = $region52
    $region51: #{up_forward.6} parent=5 // pred_region
      %s5892 = ssub.s32 %s13, 2
      // Predicated region
      $region53: #{up_forward.6} parent=51 // pred_check
        %p5893 = pneg %p192
      $region54: #{up_forward.6} parent=51 // pred_check_branch
        %5895 = sbr.rel (%p5893) target = $region56
      $region55: #{up_forward.6} parent=51 // pred_region
        %s5896 = smul.u32 16, %s25
        %p5897 = scmp.lt.s32.totalorder %s24, 1
        %s5898 = scalar_select %p5897, %s24, 1
        %p5899 = scmp.lt.s32.totalorder %s5896, 15
        %s5900 = scalar_select %p5899, %s5896, 15
        %s5901 = smul.addr %s5900, 2
        %s5902 = smul.addr %s5898, 32
        %s5903 = sadd.s32 %s5901, %s5902
        %s5904 = smul.addr %s5903, 8
        %s5905 = scalar_lea.vmem %s5, %s5904
      $region56: #{up_forward.6} parent=51 // pred_fallthru
        _
      // Predicated region
      $region57: #{up_forward.6} parent=51 // pred_check
        %p5906 = pneg %p220
      $region58: #{up_forward.6} parent=51 // pred_check_branch
        %5908 = sbr.rel (%p5906) target = $region60
      $region59: #{up_forward.6} parent=51 // pred_region
        %p5909 = scmp.lt.s32.totalorder %s24, 1
        %s5910 = scalar_select %p5909, %s24, 1
        %p5911 = scmp.lt.s32.totalorder %s25, 0
        %s5912 = scalar_select %p5911, %s25, 0
        %s5913 = sadd.s32 %s5912, %s5910
        %s5914 = smul.addr %s5913, 2
        %s5915 = scalar_lea.vmem %s6, %s5914
      $region60: #{up_forward.6} parent=51 // pred_fallthru
        _
    $region52: #{up_forward.6} parent=5 // pred_fallthru
      _
  $region6: #{up_forward.6} parent=0 // loop_footer
    %s17 = sadd.s32 1, %s13
  $region7: #{up_forward.6} parent=0 // loop_footer_branch
    %12 = sbr.rel target = $region3
  $region8: #{up_forward.6} parent=0 // loop_exit
    _

</llo_original>
